<compile_context>
chip_gen: v5e
topology: v5e:2x2
jax: 0.10.0
libtpu: 0.0.40
codegen_flags: <defaults>
</compile_context>

<pallas_src>
import math
from functools import partial

import jax
import jax.numpy as jnp
import numpy as np
from jax.experimental import pallas as pl
from jax.experimental.pallas import tpu as pltpu


# ------------------------------ small helpers -------------------------------

def _ceil_mult(x, m):
    return ((x + m - 1) // m) * m


def _pad2(a, rows, cols):
    r, c = a.shape
    if r == rows and c == cols:
        return a
    return jnp.pad(a, ((0, rows - r), (0, cols - c)))


# ----------------------------- Pallas kernels ------------------------------

def _linear_kernel(*refs, relu, fuse_norm, norm_eps, has_residual):
    # refs = x, w, b, [norm_alpha, norm_bias], [residual], out, acc_scratch
    x_ref, w_ref, b_ref = refs[0], refs[1], refs[2]
    i = 3
    if fuse_norm:
        na_ref, nb_ref = refs[i], refs[i + 1]
        i += 2
    if has_residual:
        res_ref = refs[i]
        i += 1
    o_ref = refs[i]
    acc_ref = refs[i + 1]

    k = pl.program_id(2)
    nk = pl.num_programs(2)

    @pl.when(k == 0)
    def _init():
        acc_ref[...] = jnp.zeros_like(acc_ref)

    x = x_ref[...].astype(jnp.float32)
    if fuse_norm:
        # torch-style Norm: alpha * (x - mean) / (std_unbiased + eps) + bias
        mean = jnp.mean(x, axis=-1, keepdims=True)
        d = x - mean
        var = jnp.sum(d * d, axis=-1, keepdims=True) * (1.0 / (x.shape[-1] - 1))
        inv = pl.reciprocal(jnp.sqrt(var) + norm_eps, approx=True)
        x = na_ref[...] * d * inv + nb_ref[...]

    # bf16 operands on the MXU, f32 accumulation.
    acc_ref[...] += jnp.dot(x.astype(jnp.bfloat16), w_ref[...],
                            preferred_element_type=jnp.float32)

    @pl.when(k == nk - 1)
    def _finalize():
        y = acc_ref[...] + b_ref[...]
        if relu:
            y = jnp.maximum(y, 0.0)
        if has_residual:
            y = y + res_ref[...]
        o_ref[...] = y.astype(o_ref.dtype)


def linear_pallas(x, w, b, *, relu=False, residual=None, norm=None,
                  norm_eps=1e-6, tm=256, tn=512, tk=512):
    """out = [residual +] [relu]( Norm?(x) @ w + b ); f32 in/out, bf16 MXU."""
    M, Kin = x.shape
    Kw, N = w.shape
    assert Kin == Kw

    if norm is not None and Kin > tk:
        tk = Kin                      # fused norm needs a single K block
    tm = M if M <= tm else tm         # full-dim blocks are always legal
    tn = N if N <= tn else tn
    tk = Kin if Kin <= tk else tk

    Mp, Np, Kp = _ceil_mult(M, tm), _ceil_mult(N, tn), _ceil_mult(Kin, tk)

    xp = _pad2(x.astype(jnp.float32), Mp, Kp)
    wp = _pad2(w.astype(jnp.bfloat16), Kp, Np)
    bp = _pad2(b.reshape(1, N).astype(jnp.float32), 1, Np)

    in_specs = [
        pl.BlockSpec((tm, tk), lambda i, j, k: (i, k)),   # x
        pl.BlockSpec((tk, tn), lambda i, j, k: (k, j)),   # w (bf16)
        pl.BlockSpec((1, tn), lambda i, j, k: (0, j)),    # bias
    ]
    args = [xp, wp, bp]
    if norm is not None:
        na, nb = norm
        in_specs += [pl.BlockSpec((1, tk), lambda i, j, k: (0, k)),
                     pl.BlockSpec((1, tk), lambda i, j, k: (0, k))]
        args += [na.reshape(1, Kin).astype(jnp.float32),
                 nb.reshape(1, Kin).astype(jnp.float32)]
    if residual is not None:
        in_specs += [pl.BlockSpec((tm, tn), lambda i, j, k: (i, j))]
        args += [_pad2(residual.astype(jnp.float32), Mp, Np)]

    grid = (Mp // tm, Np // tn, Kp // tk)
    out = pl.pallas_call(
        partial(_linear_kernel, relu=relu, fuse_norm=norm is not None,
                norm_eps=norm_eps, has_residual=residual is not None),
        grid=grid,
        in_specs=in_specs,
        out_specs=pl.BlockSpec((tm, tn), lambda i, j, k: (i, j)),
        out_shape=jax.ShapeDtypeStruct((Mp, Np), jnp.float32),
        scratch_shapes=[pltpu.VMEM((tm, tn), jnp.float32)],
        compiler_params=pltpu.CompilerParams(
            dimension_semantics=("parallel", "parallel", "arbitrary"),
            vmem_limit_bytes=32 * 1024 * 1024),
    )(*args)

    if Mp != M or Np != N:
        out = out[:M, :N]
    return out


def _norm_kernel(x_ref, a_ref, b_ref, o_ref, *, eps):
    x = x_ref[...]
    mean = jnp.mean(x, axis=-1, keepdims=True)
    d = x - mean
    var = jnp.sum(d * d, axis=-1, keepdims=True) * (1.0 / (x.shape[-1] - 1))
    inv = pl.reciprocal(jnp.sqrt(var) + eps, approx=True)
    o_ref[...] = a_ref[...] * d * inv + b_ref[...]


def norm_pallas(x2d, alpha, bias, eps=1e-6, tm=512):
    """Standalone row-tiled layer norm (used only where fusion is not possible)."""
    M, K = x2d.shape
    tm = M if M <= tm else tm
    Mp = _ceil_mult(M, tm)
    xp = _pad2(x2d, Mp, K)
    out = pl.pallas_call(
        partial(_norm_kernel, eps=eps),
        grid=(Mp // tm,),
        in_specs=[pl.BlockSpec((tm, K), lambda i: (i, 0)),
                  pl.BlockSpec((1, K), lambda i: (0, 0)),
                  pl.BlockSpec((1, K), lambda i: (0, 0))],
        out_specs=pl.BlockSpec((tm, K), lambda i: (i, 0)),
        out_shape=jax.ShapeDtypeStruct((Mp, K), jnp.float32),
        compiler_params=pltpu.CompilerParams(
            dimension_semantics=("parallel",)),
    )(xp, alpha.reshape(1, K), bias.reshape(1, K))
    return out[:M]


def _mha_kernel(q_ref, k_ref, v_ref, m_ref, o_ref, *, H, scale):
    # One batch element per grid step; heads are a static in-kernel loop over
    # dk-wide slices of the lane-dense (S, H*dk) activations.
    q = q_ref[0]          # (Sq, K) f32
    k = k_ref[0]          # (Sk, K) f32
    v = v_ref[0]          # (Sk, K) f32
    mask = m_ref[0]       # (Sm, Sk) int32, Sm in {1, Sq}
    dk = q.shape[-1] // H
    for h in range(H):
        lo = h * dk
        qh = q[:, lo:lo + dk]
        kh = k[:, lo:lo + dk]
        vh = v[:, lo:lo + dk]
        s = jax.lax.dot_general(qh, kh, (((1,), (1,)), ((), ())),
                                preferred_element_type=jnp.float32) * scale
        s = jnp.where(mask == 0, jnp.float32(-1e9), s)
        s = s - jnp.max(s, axis=-1, keepdims=True)
        p = jnp.exp(s)
        p = p * pl.reciprocal(jnp.sum(p, axis=-1, keepdims=True), approx=True)
        o_ref[0, :, lo:lo + dk] = jnp.dot(p, vh,
                                          preferred_element_type=jnp.float32)


def attention_pallas(q3, k3, v3, mask, H, scale):
    # q3: (B, Sq, K), k3/v3: (B, Sk, K), mask: (B, Sm, Sk) int32 (Sm in {1, Sq})
    B, Sq, K = q3.shape
    Sk = k3.shape[1]
    Sm = mask.shape[1]
    return pl.pallas_call(
        partial(_mha_kernel, H=H, scale=scale),
        grid=(B,),
        in_specs=[
            pl.BlockSpec((1, Sq, K), lambda b: (b, 0, 0)),
            pl.BlockSpec((1, Sk, K), lambda b: (b, 0, 0)),
            pl.BlockSpec((1, Sk, K), lambda b: (b, 0, 0)),
            pl.BlockSpec((1, Sm, Sk), lambda b: (b, 0, 0)),
        ],
        out_specs=pl.BlockSpec((1, Sq, K), lambda b: (b, 0, 0)),
        out_shape=jax.ShapeDtypeStruct((B, Sq, K), jnp.float32),
        compiler_params=pltpu.CompilerParams(
            dimension_semantics=("parallel",),
            vmem_limit_bytes=32 * 1024 * 1024),
    )(q3, k3, v3, mask.astype(jnp.int32))


# ------------------------------ Model pieces -------------------------------

def positional_encoding(max_len, d_model):
    pe = np.zeros((max_len, d_model), dtype=np.float32)
    for pos in range(max_len):
        for i in range(0, d_model, 2):
            pe[pos, i] = math.sin(pos / (10000 ** ((2 * i) / d_model)))
            pe[pos, i + 1] = math.cos(pos / (10000 ** ((2 * (i + 1)) / d_model)))
    return jnp.asarray(pe)


def embed_and_pe(embed_tbl, pe, tokens, K):
    # TODO(synk): embedding gather + PE add left as plain-JAX glue (not a hot matmul path).
    x = jnp.take(embed_tbl, tokens, axis=0)             # (B, S, K)
    x = x * math.sqrt(K)
    x = x + pe[None, : tokens.shape[1], :]
    return x                                            # dropout(eval) == identity


def encoder_layer(p, x2d, mask, B, S, H, K):
    scale = 1.0 / math.sqrt(K // H)
    # pre-norm fused into the fused-QKV projection
    qkv = linear_pallas(x2d, p["attn"]["wqkv"], p["attn"]["bqkv"],
                        norm=(p["n1"]["a"], p["n1"]["b"]))
    q = qkv[:, 0 * K:1 * K].reshape(B, S, K)
    k = qkv[:, 1 * K:2 * K].reshape(B, S, K)
    v = qkv[:, 2 * K:3 * K].reshape(B, S, K)
    a = attention_pallas(q, k, v, mask, H, scale).reshape(B * S, K)
    x2d = linear_pallas(a, p["attn"]["wo"], p["attn"]["bo"], residual=x2d)
    # pre-norm fused into FF first linear; residual fused into FF second linear
    h = linear_pallas(x2d, p["ff"]["w1"], p["ff"]["b1"], relu=True,
                      norm=(p["n2"]["a"], p["n2"]["b"]))
    x2d = linear_pallas(h, p["ff"]["w2"], p["ff"]["b2"], residual=x2d)
    return x2d


def decoder_layer(p, x2d, e2d, src_mask, trg_mask, B, St, Ss, H, K):
    scale = 1.0 / math.sqrt(K // H)
    # masked self-attention (fused norm + fused QKV)
    qkv = linear_pallas(x2d, p["attn1"]["wqkv"], p["attn1"]["bqkv"],
                        norm=(p["n1"]["a"], p["n1"]["b"]))
    q = qkv[:, 0 * K:1 * K].reshape(B, St, K)
    k = qkv[:, 1 * K:2 * K].reshape(B, St, K)
    v = qkv[:, 2 * K:3 * K].reshape(B, St, K)
    a = attention_pallas(q, k, v, trg_mask, H, scale).reshape(B * St, K)
    x2d = linear_pallas(a, p["attn1"]["wo"], p["attn1"]["bo"], residual=x2d)
    # cross-attention: Q from normed x, K/V from encoder outputs (fused KV)
    q = linear_pallas(x2d, p["attn2"]["wq"], p["attn2"]["bq"],
                      norm=(p["n2"]["a"], p["n2"]["b"])).reshape(B, St, K)
    kv = linear_pallas(e2d, p["attn2"]["wkv"], p["attn2"]["bkv"])
    k = kv[:, 0 * K:1 * K].reshape(B, Ss, K)
    v = kv[:, 1 * K:2 * K].reshape(B, Ss, K)
    a = attention_pallas(q, k, v, src_mask, H, scale).reshape(B * St, K)
    x2d = linear_pallas(a, p["attn2"]["wo"], p["attn2"]["bo"], residual=x2d)
    # feed-forward
    h = linear_pallas(x2d, p["ff"]["w1"], p["ff"]["b1"], relu=True,
                      norm=(p["n3"]["a"], p["n3"]["b"]))
    x2d = linear_pallas(h, p["ff"]["w2"], p["ff"]["b2"], residual=x2d)
    return x2d


def encoder_forward(p, src, mask, H, K, pe):
    B, S = src.shape
    x = embed_and_pe(p["embed"], pe, src, K).reshape(B * S, K)
    for lp in p["layers"]:
        x = encoder_layer(lp, x, mask, B, S, H, K)
    return norm_pallas(x, p["norm"]["a"], p["norm"]["b"])   # e_outputs (B*S, K)


def decoder_forward(p, trg, e2d, src_mask, trg_mask, H, K, pe, Ss):
    B, St = trg.shape
    x = embed_and_pe(p["embed"], pe, trg, K).reshape(B * St, K)
    for lp in p["layers"]:
        x = decoder_layer(lp, x, e2d, src_mask, trg_mask, B, St, Ss, H, K)
    return x    # final decoder norm is fused into the output projection


def transformer_forward(params, src, trg, src_mask, trg_mask, pe, H, K):
    B, Ss = src.shape
    _, St = trg.shape
    e2d = encoder_forward(params["encoder"], src, src_mask, H, K, pe)
    d2d = decoder_forward(params["decoder"], trg, e2d, src_mask, trg_mask,
                          H, K, pe, Ss)
    out = linear_pallas(d2d, params["w_out"], params["b_out"],
                        norm=(params["decoder"]["norm"]["a"],
                              params["decoder"]["norm"]["b"]))
    return out.reshape(B, St, -1)


# ---------------------------- Parameter init --------------------------------

def _lin_init(key, kin, kout):
    w = (jax.random.normal(key, (kin, kout), jnp.float32) * 0.02).astype(jnp.bfloat16)
    b = jnp.zeros((kout,), jnp.float32)
    return w, b


def init_norm(K):
    return dict(a=jnp.ones((K,), jnp.float32), b=jnp.zeros((K,), jnp.float32))


def init_self_attn(key, K):
    k1, k2 = jax.random.split(key)
    wqkv, bqkv = _lin_init(k1, K, 3 * K)     # fused Q|K|V projection
    wo, bo = _lin_init(k2, K, K)
    return dict(wqkv=wqkv, bqkv=bqkv, wo=wo, bo=bo)


def init_cross_attn(key, K):
    k1, k2, k3 = jax.random.split(key, 3)
    wq, bq = _lin_init(k1, K, K)
    wkv, bkv = _lin_init(k2, K, 2 * K)       # fused K|V projection
    wo, bo = _lin_init(k3, K, K)
    return dict(wq=wq, bq=bq, wkv=wkv, bkv=bkv, wo=wo, bo=bo)


def init_ff(key, K, d_ff):
    k1, k2 = jax.random.split(key)
    w1, b1 = _lin_init(k1, K, d_ff)
    w2, b2 = _lin_init(k2, d_ff, K)
    return dict(w1=w1, b1=b1, w2=w2, b2=b2)


def init_encoder(key, vocab, K, N, H, d_ff):
    keys = jax.random.split(key, N * 2 + 1)
    layers = []
    for i in range(N):
        layers.append(dict(
            n1=init_norm(K), n2=init_norm(K),
            attn=init_self_attn(keys[2 * i], K),
            ff=init_ff(keys[2 * i + 1], K, d_ff),
        ))
    embed = jax.random.normal(keys[-1], (vocab, K), jnp.float32)
    return dict(embed=embed, layers=layers, norm=init_norm(K))


def init_decoder(key, vocab, K, N, H, d_ff):
    keys = jax.random.split(key, N * 3 + 1)
    layers = []
    for i in range(N):
        layers.append(dict(
            n1=init_norm(K), n2=init_norm(K), n3=init_norm(K),
            attn1=init_self_attn(keys[3 * i], K),
            attn2=init_cross_attn(keys[3 * i + 1], K),
            ff=init_ff(keys[3 * i + 2], K, d_ff),
        ))
    embed = jax.random.normal(keys[-1], (vocab, K), jnp.float32)
    return dict(embed=embed, layers=layers, norm=init_norm(K))


def init_transformer(key, src_vocab, trg_vocab, K, N, H, d_ff=2048):
    ke, kd, ko = jax.random.split(key, 3)
    w_out, b_out = _lin_init(ko, K, trg_vocab)
    return dict(
        encoder=init_encoder(ke, src_vocab, K, N, H, d_ff),
        decoder=init_decoder(kd, trg_vocab, K, N, H, d_ff),
        w_out=w_out, b_out=b_out,
    )


# --------------------------------- Main -------------------------------------

if __name__ == "__main__":
    src_vocab, trg_vocab = 37, 41
    K, N, H = 32, 2, 4          # d_model, num layers, num heads
    B, S_src, S_trg = 2, 10, 8

    key = jax.random.PRNGKey(0)
    kp, ksrc, ktrg = jax.random.split(key, 3)

    params = init_transformer(kp, src_vocab, trg_vocab, K, N, H)
    pe = positional_encoding(max(S_src, S_trg), K)

    src = jax.random.randint(ksrc, (B, S_src), 0, src_vocab, dtype=jnp.int32)
    trg = jax.random.randint(ktrg, (B, S_trg), 0, trg_vocab, dtype=jnp.int32)
    src_mask = jnp.ones((B, 1, S_src), jnp.int32)                       # no padding
    trg_mask = jnp.broadcast_to(
        jnp.tril(jnp.ones((S_trg, S_trg), jnp.int32))[None], (B, S_trg, S_trg))

    fwd = jax.jit(transformer_forward, static_argnames=("H", "K"))
    out = fwd(params, src, trg, src_mask, trg_mask, pe, H=H, K=K)
    out = jax.block_until_ready(out)

    assert out.shape == (B, S_trg, trg_vocab), out.shape
    assert jnp.all(jnp.isfinite(out))
    print("KERNEL_OK")
</pallas_src>

<mosaic_0001>
module attributes {stable_mosaic.version = 11 : i64} {
  func.func @_linear_kernel(%arg0: i32, %arg1: i32, %arg2: i32, %arg3: memref<20x32xf32, #tpu.memory_space<vmem>>, %arg4: memref<32x32xbf16, #tpu.memory_space<vmem>>, %arg5: memref<1x32xf32, #tpu.memory_space<vmem>>, %arg6: memref<20x32xf32, #tpu.memory_space<vmem>>, %arg7: memref<20x32xf32, #tpu.memory_space<vmem>>, %arg8: memref<20x32xf32, #tpu.memory_space<vmem>>) attributes {dimension_semantics = [#tpu.dimension_semantics<parallel>, #tpu.dimension_semantics<parallel>, #tpu.dimension_semantics<arbitrary>], iteration_bounds = array<i64: 1, 1, 1>, scalar_prefetch = 0 : i64, scratch_operands = 1 : i64, tpu.core_type = #tpu.core_type<tc>, window_params = [{transform_indices = @transform_0, window_bounds = array<i64: 20, 32>}, {transform_indices = @transform_1, window_bounds = array<i64: 32, 32>}, {transform_indices = @transform_2, window_bounds = array<i64: 1, 32>}, {transform_indices = @transform_3, window_bounds = array<i64: 20, 32>}, {transform_indices = @transform_4, window_bounds = array<i64: 20, 32>}]} {
    %c0_i32 = arith.constant 0 : i32
    %0 = arith.cmpi eq, %arg2, %c0_i32 : i32
    %1 = arith.extui %0 : i1 to i32
    %c0_i32_0 = arith.constant 0 : i32
    %2 = arith.cmpi ne, %1, %c0_i32_0 : i32
    scf.if %2 {
      %cst_10 = arith.constant 0.000000e+00 : f32
      %13 = vector.broadcast %cst_10 : f32 to vector<20x32xf32>
      %c0_11 = arith.constant 0 : index
      %c0_12 = arith.constant 0 : index
      %14 = vector.load %arg8[%c0_11, %c0_12] : memref<20x32xf32, #tpu.memory_space<vmem>>, vector<20x32xf32>
      tpu.vector_store %arg8[%c0_11, %c0_12], %13 {strides = array<i32>} : memref<20x32xf32, #tpu.memory_space<vmem>>, vector<20x32xf32>,
    } else {
    }
    %c0 = arith.constant 0 : index
    %c0_1 = arith.constant 0 : index
    %3 = vector.load %arg3[%c0, %c0_1] : memref<20x32xf32, #tpu.memory_space<vmem>>, vector<20x32xf32>
    %c0_2 = arith.constant 0 : index
    %c0_3 = arith.constant 0 : index
    %4 = vector.load %arg8[%c0_2, %c0_3] : memref<20x32xf32, #tpu.memory_space<vmem>>, vector<20x32xf32>
    %5 = arith.truncf %3 : vector<20x32xf32> to vector<20x32xbf16>
    %c0_4 = arith.constant 0 : index
    %c0_5 = arith.constant 0 : index
    %6 = vector.load %arg4[%c0_4, %c0_5] : memref<32x32xbf16, #tpu.memory_space<vmem>>, vector<32x32xbf16>
    %cst = arith.constant dense<0.000000e+00> : vector<20x32xf32>
    %7 = tpu.matmul %5, %6, %cst {dimension_numbers = #tpu.dot_dimension_numbers<[1], [0], [0], [1], [0, 0, 1, 1], [], []>} : vector<20x32xbf16>, vector<32x32xbf16>, vector<20x32xf32> -> vector<20x32xf32>
    %8 = arith.addf %4, %7 : vector<20x32xf32>
    %c0_6 = arith.constant 0 : index
    %c0_7 = arith.constant 0 : index
    %9 = vector.load %arg8[%c0_6, %c0_7] : memref<20x32xf32, #tpu.memory_space<vmem>>, vector<20x32xf32>
    tpu.vector_store %arg8[%c0_6, %c0_7], %8 {strides = array<i32>} : memref<20x32xf32, #tpu.memory_space<vmem>>, vector<20x32xf32>,
    %c0_i32_8 = arith.constant 0 : i32
    %10 = arith.cmpi eq, %arg2, %c0_i32_8 : i32
    %11 = arith.extui %10 : i1 to i32
    %c0_i32_9 = arith.constant 0 : i32
    %12 = arith.cmpi ne, %11, %c0_i32_9 : i32
    scf.if %12 {
      %c0_10 = arith.constant 0 : index
      %c0_11 = arith.constant 0 : index
      %13 = vector.load %arg8[%c0_10, %c0_11] : memref<20x32xf32, #tpu.memory_space<vmem>>, vector<20x32xf32>
      %c0_12 = arith.constant 0 : index
      %c0_13 = arith.constant 0 : index
      %14 = vector.load %arg5[%c0_12, %c0_13] : memref<1x32xf32, #tpu.memory_space<vmem>>, vector<1x32xf32>
      %15 = vector.broadcast %14 : vector<1x32xf32> to vector<20x32xf32>
      %16 = arith.addf %13, %15 : vector<20x32xf32>
      %c0_14 = arith.constant 0 : index
      %c0_15 = arith.constant 0 : index
      %17 = vector.load %arg6[%c0_14, %c0_15] : memref<20x32xf32, #tpu.memory_space<vmem>>, vector<20x32xf32>
      %18 = arith.addf %16, %17 : vector<20x32xf32>
      %c0_16 = arith.constant 0 : index
      %c0_17 = arith.constant 0 : index
      %19 = vector.load %arg7[%c0_16, %c0_17] : memref<20x32xf32, #tpu.memory_space<vmem>>, vector<20x32xf32>
      tpu.vector_store %arg7[%c0_16, %c0_17], %18 {strides = array<i32>} : memref<20x32xf32, #tpu.memory_space<vmem>>, vector<20x32xf32>,
    } else {
    }
    return
  }
  func.func @transform_0(%arg0: i32, %arg1: i32, %arg2: i32) -> (i32, i32) {
    %c0_i32 = arith.constant 0 : i32
    return %arg0, %arg2 : i32, i32
  }
  func.func @transform_1(%arg0: i32, %arg1: i32, %arg2: i32) -> (i32, i32) {
    %c0_i32 = arith.constant 0 : i32
    return %arg2, %arg1 : i32, i32
  }
  func.func @transform_2(%arg0: i32, %arg1: i32, %arg2: i32) -> (i32, i32) {
    %c0_i32 = arith.constant 0 : i32
    %c0_i32_0 = arith.constant 0 : i32
    return %c0_i32, %arg1 : i32, i32
  }
  func.func @transform_3(%arg0: i32, %arg1: i32, %arg2: i32) -> (i32, i32) {
    %c0_i32 = arith.constant 0 : i32
    return %arg0, %arg1 : i32, i32
  }
  func.func @transform_4(%arg0: i32, %arg1: i32, %arg2: i32) -> (i32, i32) {
    %c0_i32 = arith.constant 0 : i32
    return %arg0, %arg1 : i32, i32
  }
}

module attributes {stable_mosaic.version = 11 : i64} {
  func.func @_linear_kernel(%arg0: i32, %arg1: i32, %arg2: i32, %arg3: memref<20x32xf32, #tpu.memory_space<vmem>>, %arg4: memref<32x96xbf16, #tpu.memory_space<vmem>>, %arg5: memref<1x96xf32, #tpu.memory_space<vmem>>, %arg6: memref<1x32xf32, #tpu.memory_space<vmem>>, %arg7: memref<1x32xf32, #tpu.memory_space<vmem>>, %arg8: memref<20x96xf32, #tpu.memory_space<vmem>>, %arg9: memref<20x96xf32, #tpu.memory_space<vmem>>) attributes {dimension_semantics = [#tpu.dimension_semantics<parallel>, #tpu.dimension_semantics<parallel>, #tpu.dimension_semantics<arbitrary>], iteration_bounds = array<i64: 1, 1, 1>, scalar_prefetch = 0 : i64, scratch_operands = 1 : i64, tpu.core_type = #tpu.core_type<tc>, window_params = [{transform_indices = @transform_0, window_bounds = array<i64: 20, 32>}, {transform_indices = @transform_1, window_bounds = array<i64: 32, 96>}, {transform_indices = @transform_2, window_bounds = array<i64: 1, 96>}, {transform_indices = @transform_3, window_bounds = array<i64: 1, 32>}, {transform_indices = @transform_4, window_bounds = array<i64: 1, 32>}, {transform_indices = @transform_5, window_bounds = array<i64: 20, 96>}]} {
    %c0_i32 = arith.constant 0 : i32
    %0 = arith.cmpi eq, %arg2, %c0_i32 : i32
    %1 = arith.extui %0 : i1 to i32
    %c0_i32_0 = arith.constant 0 : i32
    %2 = arith.cmpi ne, %1, %c0_i32_0 : i32
    scf.if %2 {
      %cst_19 = arith.constant 0.000000e+00 : f32
      %36 = vector.broadcast %cst_19 : f32 to vector<20x96xf32>
      %c0_20 = arith.constant 0 : index
      %c0_21 = arith.constant 0 : index
      %37 = vector.load %arg9[%c0_20, %c0_21] : memref<20x96xf32, #tpu.memory_space<vmem>>, vector<20x96xf32>
      tpu.vector_store %arg9[%c0_20, %c0_21], %36 {strides = array<i32>} : memref<20x96xf32, #tpu.memory_space<vmem>>, vector<20x96xf32>,
    } else {
    }
    %c0 = arith.constant 0 : index
    %c0_1 = arith.constant 0 : index
    %3 = vector.load %arg3[%c0, %c0_1] : memref<20x32xf32, #tpu.memory_space<vmem>>, vector<20x32xf32>
    %cst = arith.constant dense<0.000000e+00> : vector<20xf32>
    %4 = vector.multi_reduction <add>, %3, %cst [1] : vector<20x32xf32> to vector<20xf32>
    %5 = vector.shape_cast %4 : vector<20xf32> to vector<20x1xf32>
    %cst_2 = arith.constant 3.200000e+01 : f32
    %6 = vector.broadcast %cst_2 : f32 to vector<20x1xf32>
    %7 = arith.divf %5, %6 : vector<20x1xf32>
    %8 = vector.broadcast %7 : vector<20x1xf32> to vector<20x32xf32>
    %9 = arith.subf %3, %8 : vector<20x32xf32>
    %10 = arith.mulf %9, %9 : vector<20x32xf32>
    %cst_3 = arith.constant dense<0.000000e+00> : vector<20xf32>
    %11 = vector.multi_reduction <add>, %10, %cst_3 [1] : vector<20x32xf32> to vector<20xf32>
    %12 = vector.shape_cast %11 : vector<20xf32> to vector<20x1xf32>
    %cst_4 = arith.constant 0.0322580636 : f32
    %13 = vector.broadcast %cst_4 : f32 to vector<20x1xf32>
    %14 = arith.mulf %12, %13 : vector<20x1xf32>
    %15 = math.sqrt %14 : vector<20x1xf32>
    %cst_5 = arith.constant 9.99999997E-7 : f32
    %16 = vector.broadcast %cst_5 : f32 to vector<20x1xf32>
    %17 = arith.addf %15, %16 : vector<20x1xf32>
    %18 = tpu.reciprocal %17 {approx = true} : vector<20x1xf32> -> vector<20x1xf32>
    %c0_6 = arith.constant 0 : index
    %c0_7 = arith.constant 0 : index
    %19 = vector.load %arg6[%c0_6, %c0_7] : memref<1x32xf32, #tpu.memory_space<vmem>>, vector<1x32xf32>
    %20 = vector.broadcast %19 : vector<1x32xf32> to vector<20x32xf32>
    %21 = arith.mulf %20, %9 : vector<20x32xf32>
    %22 = vector.broadcast %18 : vector<20x1xf32> to vector<20x32xf32>
    %23 = arith.mulf %21, %22 : vector<20x32xf32>
    %c0_8 = arith.constant 0 : index
    %c0_9 = arith.constant 0 : index
    %24 = vector.load %arg7[%c0_8, %c0_9] : memref<1x32xf32, #tpu.memory_space<vmem>>, vector<1x32xf32>
    %25 = vector.broadcast %24 : vector<1x32xf32> to vector<20x32xf32>
    %26 = arith.addf %23, %25 : vector<20x32xf32>
    %c0_10 = arith.constant 0 : index
    %c0_11 = arith.constant 0 : index
    %27 = vector.load %arg9[%c0_10, %c0_11] : memref<20x96xf32, #tpu.memory_space<vmem>>, vector<20x96xf32>
    %28 = arith.truncf %26 : vector<20x32xf32> to vector<20x32xbf16>
    %c0_12 = arith.constant 0 : index
    %c0_13 = arith.constant 0 : index
    %29 = vector.load %arg4[%c0_12, %c0_13] : memref<32x96xbf16, #tpu.memory_space<vmem>>, vector<32x96xbf16>
    %cst_14 = arith.constant dense<0.000000e+00> : vector<20x96xf32>
    %30 = tpu.matmul %28, %29, %cst_14 {dimension_numbers = #tpu.dot_dimension_numbers<[1], [0], [0], [1], [0, 0, 1, 1], [], []>} : vector<20x32xbf16>, vector<32x96xbf16>, vector<20x96xf32> -> vector<20x96xf32>
    %31 = arith.addf %27, %30 : vector<20x96xf32>
    %c0_15 = arith.constant 0 : index
    %c0_16 = arith.constant 0 : index
    %32 = vector.load %arg9[%c0_15, %c0_16] : memref<20x96xf32, #tpu.memory_space<vmem>>, vector<20x96xf32>
    tpu.vector_store %arg9[%c0_15, %c0_16], %31 {strides = array<i32>} : memref<20x96xf32, #tpu.memory_space<vmem>>, vector<20x96xf32>,
    %c0_i32_17 = arith.constant 0 : i32
    %33 = arith.cmpi eq, %arg2, %c0_i32_17 : i32
    %34 = arith.extui %33 : i1 to i32
    %c0_i32_18 = arith.constant 0 : i32
    %35 = arith.cmpi ne, %34, %c0_i32_18 : i32
    scf.if %35 {
      %c0_19 = arith.constant 0 : index
      %c0_20 = arith.constant 0 : index
      %36 = vector.load %arg9[%c0_19, %c0_20] : memref<20x96xf32, #tpu.memory_space<vmem>>, vector<20x96xf32>
      %c0_21 = arith.constant 0 : index
      %c0_22 = arith.constant 0 : index
      %37 = vector.load %arg5[%c0_21, %c0_22] : memref<1x96xf32, #tpu.memory_space<vmem>>, vector<1x96xf32>
      %38 = vector.broadcast %37 : vector<1x96xf32> to vector<20x96xf32>
      %39 = arith.addf %36, %38 : vector<20x96xf32>
      %c0_23 = arith.constant 0 : index
      %c0_24 = arith.constant 0 : index
      %40 = vector.load %arg8[%c0_23, %c0_24] : memref<20x96xf32, #tpu.memory_space<vmem>>, vector<20x96xf32>
      tpu.vector_store %arg8[%c0_23, %c0_24], %39 {strides = array<i32>} : memref<20x96xf32, #tpu.memory_space<vmem>>, vector<20x96xf32>,
    } else {
    }
    return
  }
  func.func @transform_0(%arg0: i32, %arg1: i32, %arg2: i32) -> (i32, i32) {
    %c0_i32 = arith.constant 0 : i32
    return %arg0, %arg2 : i32, i32
  }
  func.func @transform_1(%arg0: i32, %arg1: i32, %arg2: i32) -> (i32, i32) {
    %c0_i32 = arith.constant 0 : i32
    return %arg2, %arg1 : i32, i32
  }
  func.func @transform_2(%arg0: i32, %arg1: i32, %arg2: i32) -> (i32, i32) {
    %c0_i32 = arith.constant 0 : i32
    %c0_i32_0 = arith.constant 0 : i32
    return %c0_i32, %arg1 : i32, i32
  }
  func.func @transform_3(%arg0: i32, %arg1: i32, %arg2: i32) -> (i32, i32) {
    %c0_i32 = arith.constant 0 : i32
    %c0_i32_0 = arith.constant 0 : i32
    return %c0_i32, %arg2 : i32, i32
  }
  func.func @transform_4(%arg0: i32, %arg1: i32, %arg2: i32) -> (i32, i32) {
    %c0_i32 = arith.constant 0 : i32
    %c0_i32_0 = arith.constant 0 : i32
    return %c0_i32, %arg2 : i32, i32
  }
  func.func @transform_5(%arg0: i32, %arg1: i32, %arg2: i32) -> (i32, i32) {
    %c0_i32 = arith.constant 0 : i32
    return %arg0, %arg1 : i32, i32
  }
}

module attributes {stable_mosaic.version = 11 : i64} {
  func.func @_linear_kernel(%arg0: i32, %arg1: i32, %arg2: i32, %arg3: memref<20x32xf32, #tpu.memory_space<vmem>>, %arg4: memref<32x512xbf16, #tpu.memory_space<vmem>>, %arg5: memref<1x512xf32, #tpu.memory_space<vmem>>, %arg6: memref<1x32xf32, #tpu.memory_space<vmem>>, %arg7: memref<1x32xf32, #tpu.memory_space<vmem>>, %arg8: memref<20x512xf32, #tpu.memory_space<vmem>>, %arg9: memref<20x512xf32, #tpu.memory_space<vmem>>) attributes {dimension_semantics = [#tpu.dimension_semantics<parallel>, #tpu.dimension_semantics<parallel>, #tpu.dimension_semantics<arbitrary>], iteration_bounds = array<i64: 1, 4, 1>, scalar_prefetch = 0 : i64, scratch_operands = 1 : i64, tpu.core_type = #tpu.core_type<tc>, window_params = [{transform_indices = @transform_0, window_bounds = array<i64: 20, 32>}, {transform_indices = @transform_1, window_bounds = array<i64: 32, 512>}, {transform_indices = @transform_2, window_bounds = array<i64: 1, 512>}, {transform_indices = @transform_3, window_bounds = array<i64: 1, 32>}, {transform_indices = @transform_4, window_bounds = array<i64: 1, 32>}, {transform_indices = @transform_5, window_bounds = array<i64: 20, 512>}]} {
    %c0_i32 = arith.constant 0 : i32
    %0 = arith.cmpi eq, %arg2, %c0_i32 : i32
    %1 = arith.extui %0 : i1 to i32
    %c0_i32_0 = arith.constant 0 : i32
    %2 = arith.cmpi ne, %1, %c0_i32_0 : i32
    scf.if %2 {
      %cst_19 = arith.constant 0.000000e+00 : f32
      %36 = vector.broadcast %cst_19 : f32 to vector<20x512xf32>
      %c0_20 = arith.constant 0 : index
      %c0_21 = arith.constant 0 : index
      %37 = vector.load %arg9[%c0_20, %c0_21] : memref<20x512xf32, #tpu.memory_space<vmem>>, vector<20x512xf32>
      tpu.vector_store %arg9[%c0_20, %c0_21], %36 {strides = array<i32>} : memref<20x512xf32, #tpu.memory_space<vmem>>, vector<20x512xf32>,
    } else {
    }
    %c0 = arith.constant 0 : index
    %c0_1 = arith.constant 0 : index
    %3 = vector.load %arg3[%c0, %c0_1] : memref<20x32xf32, #tpu.memory_space<vmem>>, vector<20x32xf32>
    %cst = arith.constant dense<0.000000e+00> : vector<20xf32>
    %4 = vector.multi_reduction <add>, %3, %cst [1] : vector<20x32xf32> to vector<20xf32>
    %5 = vector.shape_cast %4 : vector<20xf32> to vector<20x1xf32>
    %cst_2 = arith.constant 3.200000e+01 : f32
    %6 = vector.broadcast %cst_2 : f32 to vector<20x1xf32>
    %7 = arith.divf %5, %6 : vector<20x1xf32>
    %8 = vector.broadcast %7 : vector<20x1xf32> to vector<20x32xf32>
    %9 = arith.subf %3, %8 : vector<20x32xf32>
    %10 = arith.mulf %9, %9 : vector<20x32xf32>
    %cst_3 = arith.constant dense<0.000000e+00> : vector<20xf32>
    %11 = vector.multi_reduction <add>, %10, %cst_3 [1] : vector<20x32xf32> to vector<20xf32>
    %12 = vector.shape_cast %11 : vector<20xf32> to vector<20x1xf32>
    %cst_4 = arith.constant 0.0322580636 : f32
    %13 = vector.broadcast %cst_4 : f32 to vector<20x1xf32>
    %14 = arith.mulf %12, %13 : vector<20x1xf32>
    %15 = math.sqrt %14 : vector<20x1xf32>
    %cst_5 = arith.constant 9.99999997E-7 : f32
    %16 = vector.broadcast %cst_5 : f32 to vector<20x1xf32>
    %17 = arith.addf %15, %16 : vector<20x1xf32>
    %18 = tpu.reciprocal %17 {approx = true} : vector<20x1xf32> -> vector<20x1xf32>
    %c0_6 = arith.constant 0 : index
    %c0_7 = arith.constant 0 : index
    %19 = vector.load %arg6[%c0_6, %c0_7] : memref<1x32xf32, #tpu.memory_space<vmem>>, vector<1x32xf32>
    %20 = vector.broadcast %19 : vector<1x32xf32> to vector<20x32xf32>
    %21 = arith.mulf %20, %9 : vector<20x32xf32>
    %22 = vector.broadcast %18 : vector<20x1xf32> to vector<20x32xf32>
    %23 = arith.mulf %21, %22 : vector<20x32xf32>
    %c0_8 = arith.constant 0 : index
    %c0_9 = arith.constant 0 : index
    %24 = vector.load %arg7[%c0_8, %c0_9] : memref<1x32xf32, #tpu.memory_space<vmem>>, vector<1x32xf32>
    %25 = vector.broadcast %24 : vector<1x32xf32> to vector<20x32xf32>
    %26 = arith.addf %23, %25 : vector<20x32xf32>
    %c0_10 = arith.constant 0 : index
    %c0_11 = arith.constant 0 : index
    %27 = vector.load %arg9[%c0_10, %c0_11] : memref<20x512xf32, #tpu.memory_space<vmem>>, vector<20x512xf32>
    %28 = arith.truncf %26 : vector<20x32xf32> to vector<20x32xbf16>
    %c0_12 = arith.constant 0 : index
    %c0_13 = arith.constant 0 : index
    %29 = vector.load %arg4[%c0_12, %c0_13] : memref<32x512xbf16, #tpu.memory_space<vmem>>, vector<32x512xbf16>
    %cst_14 = arith.constant dense<0.000000e+00> : vector<20x512xf32>
    %30 = tpu.matmul %28, %29, %cst_14 {dimension_numbers = #tpu.dot_dimension_numbers<[1], [0], [0], [1], [0, 0, 1, 1], [], []>} : vector<20x32xbf16>, vector<32x512xbf16>, vector<20x512xf32> -> vector<20x512xf32>
    %31 = arith.addf %27, %30 : vector<20x512xf32>
    %c0_15 = arith.constant 0 : index
    %c0_16 = arith.constant 0 : index
    %32 = vector.load %arg9[%c0_15, %c0_16] : memref<20x512xf32, #tpu.memory_space<vmem>>, vector<20x512xf32>
    tpu.vector_store %arg9[%c0_15, %c0_16], %31 {strides = array<i32>} : memref<20x512xf32, #tpu.memory_space<vmem>>, vector<20x512xf32>,
    %c0_i32_17 = arith.constant 0 : i32
    %33 = arith.cmpi eq, %arg2, %c0_i32_17 : i32
    %34 = arith.extui %33 : i1 to i32
    %c0_i32_18 = arith.constant 0 : i32
    %35 = arith.cmpi ne, %34, %c0_i32_18 : i32
    scf.if %35 {
      %c0_19 = arith.constant 0 : index
      %c0_20 = arith.constant 0 : index
      %36 = vector.load %arg9[%c0_19, %c0_20] : memref<20x512xf32, #tpu.memory_space<vmem>>, vector<20x512xf32>
      %c0_21 = arith.constant 0 : index
      %c0_22 = arith.constant 0 : index
      %37 = vector.load %arg5[%c0_21, %c0_22] : memref<1x512xf32, #tpu.memory_space<vmem>>, vector<1x512xf32>
      %38 = vector.broadcast %37 : vector<1x512xf32> to vector<20x512xf32>
      %39 = arith.addf %36, %38 : vector<20x512xf32>
      %cst_23 = arith.constant 0.000000e+00 : f32
      %40 = vector.broadcast %cst_23 : f32 to vector<20x512xf32>
      %41 = arith.maximumf %39, %40 : vector<20x512xf32>
      %c0_24 = arith.constant 0 : index
      %c0_25 = arith.constant 0 : index
      %42 = vector.load %arg8[%c0_24, %c0_25] : memref<20x512xf32, #tpu.memory_space<vmem>>, vector<20x512xf32>
      tpu.vector_store %arg8[%c0_24, %c0_25], %41 {strides = array<i32>} : memref<20x512xf32, #tpu.memory_space<vmem>>, vector<20x512xf32>,
    } else {
    }
    return
  }
  func.func @transform_0(%arg0: i32, %arg1: i32, %arg2: i32) -> (i32, i32) {
    %c0_i32 = arith.constant 0 : i32
    return %arg0, %arg2 : i32, i32
  }
  func.func @transform_1(%arg0: i32, %arg1: i32, %arg2: i32) -> (i32, i32) {
    %c0_i32 = arith.constant 0 : i32
    return %arg2, %arg1 : i32, i32
  }
  func.func @transform_2(%arg0: i32, %arg1: i32, %arg2: i32) -> (i32, i32) {
    %c0_i32 = arith.constant 0 : i32
    %c0_i32_0 = arith.constant 0 : i32
    return %c0_i32, %arg1 : i32, i32
  }
  func.func @transform_3(%arg0: i32, %arg1: i32, %arg2: i32) -> (i32, i32) {
    %c0_i32 = arith.constant 0 : i32
    %c0_i32_0 = arith.constant 0 : i32
    return %c0_i32, %arg2 : i32, i32
  }
  func.func @transform_4(%arg0: i32, %arg1: i32, %arg2: i32) -> (i32, i32) {
    %c0_i32 = arith.constant 0 : i32
    %c0_i32_0 = arith.constant 0 : i32
    return %c0_i32, %arg2 : i32, i32
  }
  func.func @transform_5(%arg0: i32, %arg1: i32, %arg2: i32) -> (i32, i32) {
    %c0_i32 = arith.constant 0 : i32
    return %arg0, %arg1 : i32, i32
  }
}

module attributes {stable_mosaic.version = 11 : i64} {
  func.func @_mha_kernel(%arg0: i32, %arg1: memref<1x10x32xf32, #tpu.memory_space<vmem>>, %arg2: memref<1x10x32xf32, #tpu.memory_space<vmem>>, %arg3: memref<1x10x32xf32, #tpu.memory_space<vmem>>, %arg4: memref<1x1x10xi32, #tpu.memory_space<vmem>>, %arg5: memref<1x10x32xf32, #tpu.memory_space<vmem>>) attributes {dimension_semantics = [#tpu.dimension_semantics<parallel>], iteration_bounds = array<i64: 2>, scalar_prefetch = 0 : i64, scratch_operands = 0 : i64, tpu.core_type = #tpu.core_type<tc>, window_params = [{transform_indices = @transform_0, window_bounds = array<i64: 1, 10, 32>}, {transform_indices = @transform_1, window_bounds = array<i64: 1, 10, 32>}, {transform_indices = @transform_2, window_bounds = array<i64: 1, 10, 32>}, {transform_indices = @transform_3, window_bounds = array<i64: 1, 1, 10>}, {transform_indices = @transform_4, window_bounds = array<i64: 1, 10, 32>}]} {
    %c0 = arith.constant 0 : index
    %c0_0 = arith.constant 0 : index
    %c0_1 = arith.constant 0 : index
    %0 = vector.load %arg1[%c0, %c0_0, %c0_1] : memref<1x10x32xf32, #tpu.memory_space<vmem>>, vector<1x10x32xf32>
    %1 = vector.shape_cast %0 : vector<1x10x32xf32> to vector<10x32xf32>
    %c0_2 = arith.constant 0 : index
    %c0_3 = arith.constant 0 : index
    %c0_4 = arith.constant 0 : index
    %2 = vector.load %arg2[%c0_2, %c0_3, %c0_4] : memref<1x10x32xf32, #tpu.memory_space<vmem>>, vector<1x10x32xf32>
    %3 = vector.shape_cast %2 : vector<1x10x32xf32> to vector<10x32xf32>
    %c0_5 = arith.constant 0 : index
    %c0_6 = arith.constant 0 : index
    %c0_7 = arith.constant 0 : index
    %4 = vector.load %arg3[%c0_5, %c0_6, %c0_7] : memref<1x10x32xf32, #tpu.memory_space<vmem>>, vector<1x10x32xf32>
    %5 = vector.shape_cast %4 : vector<1x10x32xf32> to vector<10x32xf32>
    %c0_8 = arith.constant 0 : index
    %c0_9 = arith.constant 0 : index
    %c0_10 = arith.constant 0 : index
    %6 = vector.load %arg4[%c0_8, %c0_9, %c0_10] : memref<1x1x10xi32, #tpu.memory_space<vmem>>, vector<1x1x10xi32>
    %7 = vector.shape_cast %6 : vector<1x1x10xi32> to vector<1x10xi32>
    %8 = vector.extract_strided_slice %1 {offsets = [0, 0], sizes = [10, 8], strides = [1, 1]} : vector<10x32xf32> to vector<10x8xf32>
    %9 = vector.extract_strided_slice %3 {offsets = [0, 0], sizes = [10, 8], strides = [1, 1]} : vector<10x32xf32> to vector<10x8xf32>
    %10 = vector.extract_strided_slice %5 {offsets = [0, 0], sizes = [10, 8], strides = [1, 1]} : vector<10x32xf32> to vector<10x8xf32>
    %cst = arith.constant dense<0.000000e+00> : vector<10x10xf32>
    %11 = tpu.matmul %8, %9, %cst {dimension_numbers = #tpu.dot_dimension_numbers<[1], [1], [0], [0], [0, 0, 1, 0], [], []>} : vector<10x8xf32>, vector<10x8xf32>, vector<10x10xf32> -> vector<10x10xf32>
    %cst_11 = arith.constant 0.353553385 : f32
    %12 = vector.broadcast %cst_11 : f32 to vector<10x10xf32>
    %13 = arith.mulf %11, %12 : vector<10x10xf32>
    %c0_i32 = arith.constant 0 : i32
    %14 = vector.broadcast %c0_i32 : i32 to vector<1x10xi32>
    %15 = arith.cmpi eq, %7, %14 : vector<1x10xi32>
    %cst_12 = arith.constant -1.000000e+09 : f32
    %16 = vector.shape_cast %15 : vector<1x10xi1> to vector<1x10xi1>
    %17 = vector.broadcast %16 : vector<1x10xi1> to vector<10x10xi1>
    %18 = vector.broadcast %cst_12 : f32 to vector<10x10xf32>
    %19 = arith.select %17, %18, %13 : vector<10x10xi1>, vector<10x10xf32>
    %cst_13 = arith.constant dense<0xFF800000> : vector<10xf32>
    %20 = vector.multi_reduction <maximumf>, %19, %cst_13 [1] : vector<10x10xf32> to vector<10xf32>
    %21 = vector.shape_cast %20 : vector<10xf32> to vector<10x1xf32>
    %22 = vector.broadcast %21 : vector<10x1xf32> to vector<10x10xf32>
    %23 = arith.subf %19, %22 : vector<10x10xf32>
    %24 = math.exp %23 : vector<10x10xf32>
    %cst_14 = arith.constant dense<0.000000e+00> : vector<10xf32>
    %25 = vector.multi_reduction <add>, %24, %cst_14 [1] : vector<10x10xf32> to vector<10xf32>
    %26 = vector.shape_cast %25 : vector<10xf32> to vector<10x1xf32>
    %27 = tpu.reciprocal %26 {approx = true} : vector<10x1xf32> -> vector<10x1xf32>
    %28 = vector.broadcast %27 : vector<10x1xf32> to vector<10x10xf32>
    %29 = arith.mulf %24, %28 : vector<10x10xf32>
    %cst_15 = arith.constant dense<0.000000e+00> : vector<10x8xf32>
    %30 = tpu.matmul %29, %10, %cst_15 {dimension_numbers = #tpu.dot_dimension_numbers<[1], [0], [0], [1], [0, 0, 1, 1], [], []>} : vector<10x10xf32>, vector<10x8xf32>, vector<10x8xf32> -> vector<10x8xf32>
    %c0_16 = arith.constant 0 : index
    %c0_17 = arith.constant 0 : index
    %c0_18 = arith.constant 0 : index
    %31 = vector.load %arg5[%c0_16, %c0_17, %c0_18] : memref<1x10x32xf32, #tpu.memory_space<vmem>>, vector<1x10x8xf32>
    %32 = vector.shape_cast %31 : vector<1x10x8xf32> to vector<10x8xf32>
    %33 = vector.shape_cast %30 : vector<10x8xf32> to vector<1x10x8xf32>
    tpu.vector_store %arg5[%c0_16, %c0_17, %c0_18], %33 {strides = array<i32>} : memref<1x10x32xf32, #tpu.memory_space<vmem>>, vector<1x10x8xf32>,
    %34 = vector.extract_strided_slice %1 {offsets = [0, 8], sizes = [10, 8], strides = [1, 1]} : vector<10x32xf32> to vector<10x8xf32>
    %35 = vector.extract_strided_slice %3 {offsets = [0, 8], sizes = [10, 8], strides = [1, 1]} : vector<10x32xf32> to vector<10x8xf32>
    %36 = vector.extract_strided_slice %5 {offsets = [0, 8], sizes = [10, 8], strides = [1, 1]} : vector<10x32xf32> to vector<10x8xf32>
    %cst_19 = arith.constant dense<0.000000e+00> : vector<10x10xf32>
    %37 = tpu.matmul %34, %35, %cst_19 {dimension_numbers = #tpu.dot_dimension_numbers<[1], [1], [0], [0], [0, 0, 1, 0], [], []>} : vector<10x8xf32>, vector<10x8xf32>, vector<10x10xf32> -> vector<10x10xf32>
    %cst_20 = arith.constant 0.353553385 : f32
    %38 = vector.broadcast %cst_20 : f32 to vector<10x10xf32>
    %39 = arith.mulf %37, %38 : vector<10x10xf32>
    %c0_i32_21 = arith.constant 0 : i32
    %40 = vector.broadcast %c0_i32_21 : i32 to vector<1x10xi32>
    %41 = arith.cmpi eq, %7, %40 : vector<1x10xi32>
    %cst_22 = arith.constant -1.000000e+09 : f32
    %42 = vector.shape_cast %41 : vector<1x10xi1> to vector<1x10xi1>
    %43 = vector.broadcast %42 : vector<1x10xi1> to vector<10x10xi1>
    %44 = vector.broadcast %cst_22 : f32 to vector<10x10xf32>
    %45 = arith.select %43, %44, %39 : vector<10x10xi1>, vector<10x10xf32>
    %cst_23 = arith.constant dense<0xFF800000> : vector<10xf32>
    %46 = vector.multi_reduction <maximumf>, %45, %cst_23 [1] : vector<10x10xf32> to vector<10xf32>
    %47 = vector.shape_cast %46 : vector<10xf32> to vector<10x1xf32>
    %48 = vector.broadcast %47 : vector<10x1xf32> to vector<10x10xf32>
    %49 = arith.subf %45, %48 : vector<10x10xf32>
    %50 = math.exp %49 : vector<10x10xf32>
    %cst_24 = arith.constant dense<0.000000e+00> : vector<10xf32>
    %51 = vector.multi_reduction <add>, %50, %cst_24 [1] : vector<10x10xf32> to vector<10xf32>
    %52 = vector.shape_cast %51 : vector<10xf32> to vector<10x1xf32>
    %53 = tpu.reciprocal %52 {approx = true} : vector<10x1xf32> -> vector<10x1xf32>
    %54 = vector.broadcast %53 : vector<10x1xf32> to vector<10x10xf32>
    %55 = arith.mulf %50, %54 : vector<10x10xf32>
    %cst_25 = arith.constant dense<0.000000e+00> : vector<10x8xf32>
    %56 = tpu.matmul %55, %36, %cst_25 {dimension_numbers = #tpu.dot_dimension_numbers<[1], [0], [0], [1], [0, 0, 1, 1], [], []>} : vector<10x10xf32>, vector<10x8xf32>, vector<10x8xf32> -> vector<10x8xf32>
    %c0_26 = arith.constant 0 : index
    %c0_27 = arith.constant 0 : index
    %c8 = arith.constant 8 : index
    %57 = vector.load %arg5[%c0_26, %c0_27, %c8] : memref<1x10x32xf32, #tpu.memory_space<vmem>>, vector<1x10x8xf32>
    %58 = vector.shape_cast %57 : vector<1x10x8xf32> to vector<10x8xf32>
    %59 = vector.shape_cast %56 : vector<10x8xf32> to vector<1x10x8xf32>
    tpu.vector_store %arg5[%c0_26, %c0_27, %c8], %59 {strides = array<i32>} : memref<1x10x32xf32, #tpu.memory_space<vmem>>, vector<1x10x8xf32>,
    %60 = vector.extract_strided_slice %1 {offsets = [0, 16], sizes = [10, 8], strides = [1, 1]} : vector<10x32xf32> to vector<10x8xf32>
    %61 = vector.extract_strided_slice %3 {offsets = [0, 16], sizes = [10, 8], strides = [1, 1]} : vector<10x32xf32> to vector<10x8xf32>
    %62 = vector.extract_strided_slice %5 {offsets = [0, 16], sizes = [10, 8], strides = [1, 1]} : vector<10x32xf32> to vector<10x8xf32>
    %cst_28 = arith.constant dense<0.000000e+00> : vector<10x10xf32>
    %63 = tpu.matmul %60, %61, %cst_28 {dimension_numbers = #tpu.dot_dimension_numbers<[1], [1], [0], [0], [0, 0, 1, 0], [], []>} : vector<10x8xf32>, vector<10x8xf32>, vector<10x10xf32> -> vector<10x10xf32>
    %cst_29 = arith.constant 0.353553385 : f32
    %64 = vector.broadcast %cst_29 : f32 to vector<10x10xf32>
    %65 = arith.mulf %63, %64 : vector<10x10xf32>
    %c0_i32_30 = arith.constant 0 : i32
    %66 = vector.broadcast %c0_i32_30 : i32 to vector<1x10xi32>
    %67 = arith.cmpi eq, %7, %66 : vector<1x10xi32>
    %cst_31 = arith.constant -1.000000e+09 : f32
    %68 = vector.shape_cast %67 : vector<1x10xi1> to vector<1x10xi1>
    %69 = vector.broadcast %68 : vector<1x10xi1> to vector<10x10xi1>
    %70 = vector.broadcast %cst_31 : f32 to vector<10x10xf32>
    %71 = arith.select %69, %70, %65 : vector<10x10xi1>, vector<10x10xf32>
    %cst_32 = arith.constant dense<0xFF800000> : vector<10xf32>
    %72 = vector.multi_reduction <maximumf>, %71, %cst_32 [1] : vector<10x10xf32> to vector<10xf32>
    %73 = vector.shape_cast %72 : vector<10xf32> to vector<10x1xf32>
    %74 = vector.broadcast %73 : vector<10x1xf32> to vector<10x10xf32>
    %75 = arith.subf %71, %74 : vector<10x10xf32>
    %76 = math.exp %75 : vector<10x10xf32>
    %cst_33 = arith.constant dense<0.000000e+00> : vector<10xf32>
    %77 = vector.multi_reduction <add>, %76, %cst_33 [1] : vector<10x10xf32> to vector<10xf32>
    %78 = vector.shape_cast %77 : vector<10xf32> to vector<10x1xf32>
    %79 = tpu.reciprocal %78 {approx = true} : vector<10x1xf32> -> vector<10x1xf32>
    %80 = vector.broadcast %79 : vector<10x1xf32> to vector<10x10xf32>
    %81 = arith.mulf %76, %80 : vector<10x10xf32>
    %cst_34 = arith.constant dense<0.000000e+00> : vector<10x8xf32>
    %82 = tpu.matmul %81, %62, %cst_34 {dimension_numbers = #tpu.dot_dimension_numbers<[1], [0], [0], [1], [0, 0, 1, 1], [], []>} : vector<10x10xf32>, vector<10x8xf32>, vector<10x8xf32> -> vector<10x8xf32>
    %c0_35 = arith.constant 0 : index
    %c0_36 = arith.constant 0 : index
    %c16 = arith.constant 16 : index
    %83 = vector.load %arg5[%c0_35, %c0_36, %c16] : memref<1x10x32xf32, #tpu.memory_space<vmem>>, vector<1x10x8xf32>
    %84 = vector.shape_cast %83 : vector<1x10x8xf32> to vector<10x8xf32>
    %85 = vector.shape_cast %82 : vector<10x8xf32> to vector<1x10x8xf32>
    tpu.vector_store %arg5[%c0_35, %c0_36, %c16], %85 {strides = array<i32>} : memref<1x10x32xf32, #tpu.memory_space<vmem>>, vector<1x10x8xf32>,
    %86 = vector.extract_strided_slice %1 {offsets = [0, 24], sizes = [10, 8], strides = [1, 1]} : vector<10x32xf32> to vector<10x8xf32>
    %87 = vector.extract_strided_slice %3 {offsets = [0, 24], sizes = [10, 8], strides = [1, 1]} : vector<10x32xf32> to vector<10x8xf32>
    %88 = vector.extract_strided_slice %5 {offsets = [0, 24], sizes = [10, 8], strides = [1, 1]} : vector<10x32xf32> to vector<10x8xf32>
    %cst_37 = arith.constant dense<0.000000e+00> : vector<10x10xf32>
    %89 = tpu.matmul %86, %87, %cst_37 {dimension_numbers = #tpu.dot_dimension_numbers<[1], [1], [0], [0], [0, 0, 1, 0], [], []>} : vector<10x8xf32>, vector<10x8xf32>, vector<10x10xf32> -> vector<10x10xf32>
    %cst_38 = arith.constant 0.353553385 : f32
    %90 = vector.broadcast %cst_38 : f32 to vector<10x10xf32>
    %91 = arith.mulf %89, %90 : vector<10x10xf32>
    %c0_i32_39 = arith.constant 0 : i32
    %92 = vector.broadcast %c0_i32_39 : i32 to vector<1x10xi32>
    %93 = arith.cmpi eq, %7, %92 : vector<1x10xi32>
    %cst_40 = arith.constant -1.000000e+09 : f32
    %94 = vector.shape_cast %93 : vector<1x10xi1> to vector<1x10xi1>
    %95 = vector.broadcast %94 : vector<1x10xi1> to vector<10x10xi1>
    %96 = vector.broadcast %cst_40 : f32 to vector<10x10xf32>
    %97 = arith.select %95, %96, %91 : vector<10x10xi1>, vector<10x10xf32>
    %cst_41 = arith.constant dense<0xFF800000> : vector<10xf32>
    %98 = vector.multi_reduction <maximumf>, %97, %cst_41 [1] : vector<10x10xf32> to vector<10xf32>
    %99 = vector.shape_cast %98 : vector<10xf32> to vector<10x1xf32>
    %100 = vector.broadcast %99 : vector<10x1xf32> to vector<10x10xf32>
    %101 = arith.subf %97, %100 : vector<10x10xf32>
    %102 = math.exp %101 : vector<10x10xf32>
    %cst_42 = arith.constant dense<0.000000e+00> : vector<10xf32>
    %103 = vector.multi_reduction <add>, %102, %cst_42 [1] : vector<10x10xf32> to vector<10xf32>
    %104 = vector.shape_cast %103 : vector<10xf32> to vector<10x1xf32>
    %105 = tpu.reciprocal %104 {approx = true} : vector<10x1xf32> -> vector<10x1xf32>
    %106 = vector.broadcast %105 : vector<10x1xf32> to vector<10x10xf32>
    %107 = arith.mulf %102, %106 : vector<10x10xf32>
    %cst_43 = arith.constant dense<0.000000e+00> : vector<10x8xf32>
    %108 = tpu.matmul %107, %88, %cst_43 {dimension_numbers = #tpu.dot_dimension_numbers<[1], [0], [0], [1], [0, 0, 1, 1], [], []>} : vector<10x10xf32>, vector<10x8xf32>, vector<10x8xf32> -> vector<10x8xf32>
    %c0_44 = arith.constant 0 : index
    %c0_45 = arith.constant 0 : index
    %c24 = arith.constant 24 : index
    %109 = vector.load %arg5[%c0_44, %c0_45, %c24] : memref<1x10x32xf32, #tpu.memory_space<vmem>>, vector<1x10x8xf32>
    %110 = vector.shape_cast %109 : vector<1x10x8xf32> to vector<10x8xf32>
    %111 = vector.shape_cast %108 : vector<10x8xf32> to vector<1x10x8xf32>
    tpu.vector_store %arg5[%c0_44, %c0_45, %c24], %111 {strides = array<i32>} : memref<1x10x32xf32, #tpu.memory_space<vmem>>, vector<1x10x8xf32>,
    return
  }
  func.func @transform_0(%arg0: i32) -> (i32, i32, i32) {
    %c0_i32 = arith.constant 0 : i32
    %c0_i32_0 = arith.constant 0 : i32
    %c0_i32_1 = arith.constant 0 : i32
    return %arg0, %c0_i32, %c0_i32_0 : i32, i32, i32
  }
  func.func @transform_1(%arg0: i32) -> (i32, i32, i32) {
    %c0_i32 = arith.constant 0 : i32
    %c0_i32_0 = arith.constant 0 : i32
    %c0_i32_1 = arith.constant 0 : i32
    return %arg0, %c0_i32, %c0_i32_0 : i32, i32, i32
  }
  func.func @transform_2(%arg0: i32) -> (i32, i32, i32) {
    %c0_i32 = arith.constant 0 : i32
    %c0_i32_0 = arith.constant 0 : i32
    %c0_i32_1 = arith.constant 0 : i32
    return %arg0, %c0_i32, %c0_i32_0 : i32, i32, i32
  }
  func.func @transform_3(%arg0: i32) -> (i32, i32, i32) {
    %c0_i32 = arith.constant 0 : i32
    %c0_i32_0 = arith.constant 0 : i32
    %c0_i32_1 = arith.constant 0 : i32
    return %arg0, %c0_i32, %c0_i32_0 : i32, i32, i32
  }
  func.func @transform_4(%arg0: i32) -> (i32, i32, i32) {
    %c0_i32 = arith.constant 0 : i32
    %c0_i32_0 = arith.constant 0 : i32
    %c0_i32_1 = arith.constant 0 : i32
    return %arg0, %c0_i32, %c0_i32_0 : i32, i32, i32
  }
}

module attributes {stable_mosaic.version = 11 : i64} {
  func.func @_linear_kernel(%arg0: i32, %arg1: i32, %arg2: i32, %arg3: memref<20x512xf32, #tpu.memory_space<vmem>>, %arg4: memref<512x32xbf16, #tpu.memory_space<vmem>>, %arg5: memref<1x32xf32, #tpu.memory_space<vmem>>, %arg6: memref<20x32xf32, #tpu.memory_space<vmem>>, %arg7: memref<20x32xf32, #tpu.memory_space<vmem>>, %arg8: memref<20x32xf32, #tpu.memory_space<vmem>>) attributes {dimension_semantics = [#tpu.dimension_semantics<parallel>, #tpu.dimension_semantics<parallel>, #tpu.dimension_semantics<arbitrary>], iteration_bounds = array<i64: 1, 1, 4>, scalar_prefetch = 0 : i64, scratch_operands = 1 : i64, tpu.core_type = #tpu.core_type<tc>, window_params = [{transform_indices = @transform_0, window_bounds = array<i64: 20, 512>}, {transform_indices = @transform_1, window_bounds = array<i64: 512, 32>}, {transform_indices = @transform_2, window_bounds = array<i64: 1, 32>}, {transform_indices = @transform_3, window_bounds = array<i64: 20, 32>}, {transform_indices = @transform_4, window_bounds = array<i64: 20, 32>}]} {
    %c0_i32 = arith.constant 0 : i32
    %0 = arith.cmpi eq, %arg2, %c0_i32 : i32
    %1 = arith.extui %0 : i1 to i32
    %c0_i32_0 = arith.constant 0 : i32
    %2 = arith.cmpi ne, %1, %c0_i32_0 : i32
    scf.if %2 {
      %cst_9 = arith.constant 0.000000e+00 : f32
      %13 = vector.broadcast %cst_9 : f32 to vector<20x32xf32>
      %c0_10 = arith.constant 0 : index
      %c0_11 = arith.constant 0 : index
      %14 = vector.load %arg8[%c0_10, %c0_11] : memref<20x32xf32, #tpu.memory_space<vmem>>, vector<20x32xf32>
      tpu.vector_store %arg8[%c0_10, %c0_11], %13 {strides = array<i32>} : memref<20x32xf32, #tpu.memory_space<vmem>>, vector<20x32xf32>,
    } else {
    }
    %c0 = arith.constant 0 : index
    %c0_1 = arith.constant 0 : index
    %3 = vector.load %arg3[%c0, %c0_1] : memref<20x512xf32, #tpu.memory_space<vmem>>, vector<20x512xf32>
    %c0_2 = arith.constant 0 : index
    %c0_3 = arith.constant 0 : index
    %4 = vector.load %arg8[%c0_2, %c0_3] : memref<20x32xf32, #tpu.memory_space<vmem>>, vector<20x32xf32>
    %5 = arith.truncf %3 : vector<20x512xf32> to vector<20x512xbf16>
    %c0_4 = arith.constant 0 : index
    %c0_5 = arith.constant 0 : index
    %6 = vector.load %arg4[%c0_4, %c0_5] : memref<512x32xbf16, #tpu.memory_space<vmem>>, vector<512x32xbf16>
    %cst = arith.constant dense<0.000000e+00> : vector<20x32xf32>
    %7 = tpu.matmul %5, %6, %cst {dimension_numbers = #tpu.dot_dimension_numbers<[1], [0], [0], [1], [0, 0, 1, 1], [], []>} : vector<20x512xbf16>, vector<512x32xbf16>, vector<20x32xf32> -> vector<20x32xf32>
    %8 = arith.addf %4, %7 : vector<20x32xf32>
    %c0_6 = arith.constant 0 : index
    %c0_7 = arith.constant 0 : index
    %9 = vector.load %arg8[%c0_6, %c0_7] : memref<20x32xf32, #tpu.memory_space<vmem>>, vector<20x32xf32>
    tpu.vector_store %arg8[%c0_6, %c0_7], %8 {strides = array<i32>} : memref<20x32xf32, #tpu.memory_space<vmem>>, vector<20x32xf32>,
    %c3_i32 = arith.constant 3 : i32
    %10 = arith.cmpi eq, %arg2, %c3_i32 : i32
    %11 = arith.extui %10 : i1 to i32
    %c0_i32_8 = arith.constant 0 : i32
    %12 = arith.cmpi ne, %11, %c0_i32_8 : i32
    scf.if %12 {
      %c0_9 = arith.constant 0 : index
      %c0_10 = arith.constant 0 : index
      %13 = vector.load %arg8[%c0_9, %c0_10] : memref<20x32xf32, #tpu.memory_space<vmem>>, vector<20x32xf32>
      %c0_11 = arith.constant 0 : index
      %c0_12 = arith.constant 0 : index
      %14 = vector.load %arg5[%c0_11, %c0_12] : memref<1x32xf32, #tpu.memory_space<vmem>>, vector<1x32xf32>
      %15 = vector.broadcast %14 : vector<1x32xf32> to vector<20x32xf32>
      %16 = arith.addf %13, %15 : vector<20x32xf32>
      %c0_13 = arith.constant 0 : index
      %c0_14 = arith.constant 0 : index
      %17 = vector.load %arg6[%c0_13, %c0_14] : memref<20x32xf32, #tpu.memory_space<vmem>>, vector<20x32xf32>
      %18 = arith.addf %16, %17 : vector<20x32xf32>
      %c0_15 = arith.constant 0 : index
      %c0_16 = arith.constant 0 : index
      %19 = vector.load %arg7[%c0_15, %c0_16] : memref<20x32xf32, #tpu.memory_space<vmem>>, vector<20x32xf32>
      tpu.vector_store %arg7[%c0_15, %c0_16], %18 {strides = array<i32>} : memref<20x32xf32, #tpu.memory_space<vmem>>, vector<20x32xf32>,
    } else {
    }
    return
  }
  func.func @transform_0(%arg0: i32, %arg1: i32, %arg2: i32) -> (i32, i32) {
    %c0_i32 = arith.constant 0 : i32
    return %arg0, %arg2 : i32, i32
  }
  func.func @transform_1(%arg0: i32, %arg1: i32, %arg2: i32) -> (i32, i32) {
    %c0_i32 = arith.constant 0 : i32
    return %arg2, %arg1 : i32, i32
  }
  func.func @transform_2(%arg0: i32, %arg1: i32, %arg2: i32) -> (i32, i32) {
    %c0_i32 = arith.constant 0 : i32
    %c0_i32_0 = arith.constant 0 : i32
    return %c0_i32, %arg1 : i32, i32
  }
  func.func @transform_3(%arg0: i32, %arg1: i32, %arg2: i32) -> (i32, i32) {
    %c0_i32 = arith.constant 0 : i32
    return %arg0, %arg1 : i32, i32
  }
  func.func @transform_4(%arg0: i32, %arg1: i32, %arg2: i32) -> (i32, i32) {
    %c0_i32 = arith.constant 0 : i32
    return %arg0, %arg1 : i32, i32
  }
}

module attributes {stable_mosaic.version = 11 : i64} {
  func.func @_norm_kernel(%arg0: i32, %arg1: memref<20x32xf32, #tpu.memory_space<vmem>>, %arg2: memref<1x32xf32, #tpu.memory_space<vmem>>, %arg3: memref<1x32xf32, #tpu.memory_space<vmem>>, %arg4: memref<20x32xf32, #tpu.memory_space<vmem>>) attributes {dimension_semantics = [#tpu.dimension_semantics<parallel>], iteration_bounds = array<i64: 1>, scalar_prefetch = 0 : i64, scratch_operands = 0 : i64, tpu.core_type = #tpu.core_type<tc>, window_params = [{transform_indices = @transform_0, window_bounds = array<i64: 20, 32>}, {pipeline_mode = #tpu.pipeline_mode<synchronous>, transform_indices = @transform_1, window_bounds = array<i64: 1, 32>}, {pipeline_mode = #tpu.pipeline_mode<synchronous>, transform_indices = @transform_2, window_bounds = array<i64: 1, 32>}, {transform_indices = @transform_3, window_bounds = array<i64: 20, 32>}]} {
    %c0 = arith.constant 0 : index
    %c0_0 = arith.constant 0 : index
    %0 = vector.load %arg1[%c0, %c0_0] : memref<20x32xf32, #tpu.memory_space<vmem>>, vector<20x32xf32>
    %cst = arith.constant dense<0.000000e+00> : vector<20xf32>
    %1 = vector.multi_reduction <add>, %0, %cst [1] : vector<20x32xf32> to vector<20xf32>
    %2 = vector.shape_cast %1 : vector<20xf32> to vector<20x1xf32>
    %cst_1 = arith.constant 3.200000e+01 : f32
    %3 = vector.broadcast %cst_1 : f32 to vector<20x1xf32>
    %4 = arith.divf %2, %3 : vector<20x1xf32>
    %5 = vector.broadcast %4 : vector<20x1xf32> to vector<20x32xf32>
    %6 = arith.subf %0, %5 : vector<20x32xf32>
    %7 = arith.mulf %6, %6 : vector<20x32xf32>
    %cst_2 = arith.constant dense<0.000000e+00> : vector<20xf32>
    %8 = vector.multi_reduction <add>, %7, %cst_2 [1] : vector<20x32xf32> to vector<20xf32>
    %9 = vector.shape_cast %8 : vector<20xf32> to vector<20x1xf32>
    %cst_3 = arith.constant 0.0322580636 : f32
    %10 = vector.broadcast %cst_3 : f32 to vector<20x1xf32>
    %11 = arith.mulf %9, %10 : vector<20x1xf32>
    %12 = math.sqrt %11 : vector<20x1xf32>
    %cst_4 = arith.constant 9.99999997E-7 : f32
    %13 = vector.broadcast %cst_4 : f32 to vector<20x1xf32>
    %14 = arith.addf %12, %13 : vector<20x1xf32>
    %15 = tpu.reciprocal %14 {approx = true} : vector<20x1xf32> -> vector<20x1xf32>
    %c0_5 = arith.constant 0 : index
    %c0_6 = arith.constant 0 : index
    %16 = vector.load %arg2[%c0_5, %c0_6] : memref<1x32xf32, #tpu.memory_space<vmem>>, vector<1x32xf32>
    %17 = vector.broadcast %16 : vector<1x32xf32> to vector<20x32xf32>
    %18 = arith.mulf %17, %6 : vector<20x32xf32>
    %19 = vector.broadcast %15 : vector<20x1xf32> to vector<20x32xf32>
    %20 = arith.mulf %18, %19 : vector<20x32xf32>
    %c0_7 = arith.constant 0 : index
    %c0_8 = arith.constant 0 : index
    %21 = vector.load %arg3[%c0_7, %c0_8] : memref<1x32xf32, #tpu.memory_space<vmem>>, vector<1x32xf32>
    %22 = vector.broadcast %21 : vector<1x32xf32> to vector<20x32xf32>
    %23 = arith.addf %20, %22 : vector<20x32xf32>
    %c0_9 = arith.constant 0 : index
    %c0_10 = arith.constant 0 : index
    %24 = vector.load %arg4[%c0_9, %c0_10] : memref<20x32xf32, #tpu.memory_space<vmem>>, vector<20x32xf32>
    tpu.vector_store %arg4[%c0_9, %c0_10], %23 {strides = array<i32>} : memref<20x32xf32, #tpu.memory_space<vmem>>, vector<20x32xf32>,
    return
  }
  func.func @transform_0(%arg0: i32) -> (i32, i32) {
    %c0_i32 = arith.constant 0 : i32
    %c0_i32_0 = arith.constant 0 : i32
    return %arg0, %c0_i32 : i32, i32
  }
  func.func @transform_1(%arg0: i32) -> (i32, i32) {
    %c0_i32 = arith.constant 0 : i32
    %c0_i32_0 = arith.constant 0 : i32
    %c0_i32_1 = arith.constant 0 : i32
    return %c0_i32, %c0_i32_0 : i32, i32
  }
  func.func @transform_2(%arg0: i32) -> (i32, i32) {
    %c0_i32 = arith.constant 0 : i32
    %c0_i32_0 = arith.constant 0 : i32
    %c0_i32_1 = arith.constant 0 : i32
    return %c0_i32, %c0_i32_0 : i32, i32
  }
  func.func @transform_3(%arg0: i32) -> (i32, i32) {
    %c0_i32 = arith.constant 0 : i32
    %c0_i32_0 = arith.constant 0 : i32
    return %arg0, %c0_i32 : i32, i32
  }
}

module attributes {stable_mosaic.version = 11 : i64} {
  func.func @_linear_kernel(%arg0: i32, %arg1: i32, %arg2: i32, %arg3: memref<20x32xf32, #tpu.memory_space<vmem>>, %arg4: memref<32x64xbf16, #tpu.memory_space<vmem>>, %arg5: memref<1x64xf32, #tpu.memory_space<vmem>>, %arg6: memref<20x64xf32, #tpu.memory_space<vmem>>, %arg7: memref<20x64xf32, #tpu.memory_space<vmem>>) attributes {dimension_semantics = [#tpu.dimension_semantics<parallel>, #tpu.dimension_semantics<parallel>, #tpu.dimension_semantics<arbitrary>], iteration_bounds = array<i64: 1, 1, 1>, scalar_prefetch = 0 : i64, scratch_operands = 1 : i64, tpu.core_type = #tpu.core_type<tc>, window_params = [{transform_indices = @transform_0, window_bounds = array<i64: 20, 32>}, {transform_indices = @transform_1, window_bounds = array<i64: 32, 64>}, {transform_indices = @transform_2, window_bounds = array<i64: 1, 64>}, {transform_indices = @transform_3, window_bounds = array<i64: 20, 64>}]} {
    %c0_i32 = arith.constant 0 : i32
    %0 = arith.cmpi eq, %arg2, %c0_i32 : i32
    %1 = arith.extui %0 : i1 to i32
    %c0_i32_0 = arith.constant 0 : i32
    %2 = arith.cmpi ne, %1, %c0_i32_0 : i32
    scf.if %2 {
      %cst_10 = arith.constant 0.000000e+00 : f32
      %13 = vector.broadcast %cst_10 : f32 to vector<20x64xf32>
      %c0_11 = arith.constant 0 : index
      %c0_12 = arith.constant 0 : index
      %14 = vector.load %arg7[%c0_11, %c0_12] : memref<20x64xf32, #tpu.memory_space<vmem>>, vector<20x64xf32>
      tpu.vector_store %arg7[%c0_11, %c0_12], %13 {strides = array<i32>} : memref<20x64xf32, #tpu.memory_space<vmem>>, vector<20x64xf32>,
    } else {
    }
    %c0 = arith.constant 0 : index
    %c0_1 = arith.constant 0 : index
    %3 = vector.load %arg3[%c0, %c0_1] : memref<20x32xf32, #tpu.memory_space<vmem>>, vector<20x32xf32>
    %c0_2 = arith.constant 0 : index
    %c0_3 = arith.constant 0 : index
    %4 = vector.load %arg7[%c0_2, %c0_3] : memref<20x64xf32, #tpu.memory_space<vmem>>, vector<20x64xf32>
    %5 = arith.truncf %3 : vector<20x32xf32> to vector<20x32xbf16>
    %c0_4 = arith.constant 0 : index
    %c0_5 = arith.constant 0 : index
    %6 = vector.load %arg4[%c0_4, %c0_5] : memref<32x64xbf16, #tpu.memory_space<vmem>>, vector<32x64xbf16>
    %cst = arith.constant dense<0.000000e+00> : vector<20x64xf32>
    %7 = tpu.matmul %5, %6, %cst {dimension_numbers = #tpu.dot_dimension_numbers<[1], [0], [0], [1], [0, 0, 1, 1], [], []>} : vector<20x32xbf16>, vector<32x64xbf16>, vector<20x64xf32> -> vector<20x64xf32>
    %8 = arith.addf %4, %7 : vector<20x64xf32>
    %c0_6 = arith.constant 0 : index
    %c0_7 = arith.constant 0 : index
    %9 = vector.load %arg7[%c0_6, %c0_7] : memref<20x64xf32, #tpu.memory_space<vmem>>, vector<20x64xf32>
    tpu.vector_store %arg7[%c0_6, %c0_7], %8 {strides = array<i32>} : memref<20x64xf32, #tpu.memory_space<vmem>>, vector<20x64xf32>,
    %c0_i32_8 = arith.constant 0 : i32
    %10 = arith.cmpi eq, %arg2, %c0_i32_8 : i32
    %11 = arith.extui %10 : i1 to i32
    %c0_i32_9 = arith.constant 0 : i32
    %12 = arith.cmpi ne, %11, %c0_i32_9 : i32
    scf.if %12 {
      %c0_10 = arith.constant 0 : index
      %c0_11 = arith.constant 0 : index
      %13 = vector.load %arg7[%c0_10, %c0_11] : memref<20x64xf32, #tpu.memory_space<vmem>>, vector<20x64xf32>
      %c0_12 = arith.constant 0 : index
      %c0_13 = arith.constant 0 : index
      %14 = vector.load %arg5[%c0_12, %c0_13] : memref<1x64xf32, #tpu.memory_space<vmem>>, vector<1x64xf32>
      %15 = vector.broadcast %14 : vector<1x64xf32> to vector<20x64xf32>
      %16 = arith.addf %13, %15 : vector<20x64xf32>
      %c0_14 = arith.constant 0 : index
      %c0_15 = arith.constant 0 : index
      %17 = vector.load %arg6[%c0_14, %c0_15] : memref<20x64xf32, #tpu.memory_space<vmem>>, vector<20x64xf32>
      tpu.vector_store %arg6[%c0_14, %c0_15], %16 {strides = array<i32>} : memref<20x64xf32, #tpu.memory_space<vmem>>, vector<20x64xf32>,
    } else {
    }
    return
  }
  func.func @transform_0(%arg0: i32, %arg1: i32, %arg2: i32) -> (i32, i32) {
    %c0_i32 = arith.constant 0 : i32
    return %arg0, %arg2 : i32, i32
  }
  func.func @transform_1(%arg0: i32, %arg1: i32, %arg2: i32) -> (i32, i32) {
    %c0_i32 = arith.constant 0 : i32
    return %arg2, %arg1 : i32, i32
  }
  func.func @transform_2(%arg0: i32, %arg1: i32, %arg2: i32) -> (i32, i32) {
    %c0_i32 = arith.constant 0 : i32
    %c0_i32_0 = arith.constant 0 : i32
    return %c0_i32, %arg1 : i32, i32
  }
  func.func @transform_3(%arg0: i32, %arg1: i32, %arg2: i32) -> (i32, i32) {
    %c0_i32 = arith.constant 0 : i32
    return %arg0, %arg1 : i32, i32
  }
}

module attributes {stable_mosaic.version = 11 : i64} {
  func.func @_linear_kernel(%arg0: i32, %arg1: i32, %arg2: i32, %arg3: memref<16x32xf32, #tpu.memory_space<vmem>>, %arg4: memref<32x96xbf16, #tpu.memory_space<vmem>>, %arg5: memref<1x96xf32, #tpu.memory_space<vmem>>, %arg6: memref<1x32xf32, #tpu.memory_space<vmem>>, %arg7: memref<1x32xf32, #tpu.memory_space<vmem>>, %arg8: memref<16x96xf32, #tpu.memory_space<vmem>>, %arg9: memref<16x96xf32, #tpu.memory_space<vmem>>) attributes {dimension_semantics = [#tpu.dimension_semantics<parallel>, #tpu.dimension_semantics<parallel>, #tpu.dimension_semantics<arbitrary>], iteration_bounds = array<i64: 1, 1, 1>, scalar_prefetch = 0 : i64, scratch_operands = 1 : i64, tpu.core_type = #tpu.core_type<tc>, window_params = [{transform_indices = @transform_0, window_bounds = array<i64: 16, 32>}, {transform_indices = @transform_1, window_bounds = array<i64: 32, 96>}, {transform_indices = @transform_2, window_bounds = array<i64: 1, 96>}, {transform_indices = @transform_3, window_bounds = array<i64: 1, 32>}, {transform_indices = @transform_4, window_bounds = array<i64: 1, 32>}, {transform_indices = @transform_5, window_bounds = array<i64: 16, 96>}]} {
    %c0_i32 = arith.constant 0 : i32
    %0 = arith.cmpi eq, %arg2, %c0_i32 : i32
    %1 = arith.extui %0 : i1 to i32
    %c0_i32_0 = arith.constant 0 : i32
    %2 = arith.cmpi ne, %1, %c0_i32_0 : i32
    scf.if %2 {
      %cst_19 = arith.constant 0.000000e+00 : f32
      %36 = vector.broadcast %cst_19 : f32 to vector<16x96xf32>
      %c0_20 = arith.constant 0 : index
      %c0_21 = arith.constant 0 : index
      %37 = vector.load %arg9[%c0_20, %c0_21] : memref<16x96xf32, #tpu.memory_space<vmem>>, vector<16x96xf32>
      tpu.vector_store %arg9[%c0_20, %c0_21], %36 {strides = array<i32>} : memref<16x96xf32, #tpu.memory_space<vmem>>, vector<16x96xf32>,
    } else {
    }
    %c0 = arith.constant 0 : index
    %c0_1 = arith.constant 0 : index
    %3 = vector.load %arg3[%c0, %c0_1] : memref<16x32xf32, #tpu.memory_space<vmem>>, vector<16x32xf32>
    %cst = arith.constant dense<0.000000e+00> : vector<16xf32>
    %4 = vector.multi_reduction <add>, %3, %cst [1] : vector<16x32xf32> to vector<16xf32>
    %5 = vector.shape_cast %4 : vector<16xf32> to vector<16x1xf32>
    %cst_2 = arith.constant 3.200000e+01 : f32
    %6 = vector.broadcast %cst_2 : f32 to vector<16x1xf32>
    %7 = arith.divf %5, %6 : vector<16x1xf32>
    %8 = vector.broadcast %7 : vector<16x1xf32> to vector<16x32xf32>
    %9 = arith.subf %3, %8 : vector<16x32xf32>
    %10 = arith.mulf %9, %9 : vector<16x32xf32>
    %cst_3 = arith.constant dense<0.000000e+00> : vector<16xf32>
    %11 = vector.multi_reduction <add>, %10, %cst_3 [1] : vector<16x32xf32> to vector<16xf32>
    %12 = vector.shape_cast %11 : vector<16xf32> to vector<16x1xf32>
    %cst_4 = arith.constant 0.0322580636 : f32
    %13 = vector.broadcast %cst_4 : f32 to vector<16x1xf32>
    %14 = arith.mulf %12, %13 : vector<16x1xf32>
    %15 = math.sqrt %14 : vector<16x1xf32>
    %cst_5 = arith.constant 9.99999997E-7 : f32
    %16 = vector.broadcast %cst_5 : f32 to vector<16x1xf32>
    %17 = arith.addf %15, %16 : vector<16x1xf32>
    %18 = tpu.reciprocal %17 {approx = true} : vector<16x1xf32> -> vector<16x1xf32>
    %c0_6 = arith.constant 0 : index
    %c0_7 = arith.constant 0 : index
    %19 = vector.load %arg6[%c0_6, %c0_7] : memref<1x32xf32, #tpu.memory_space<vmem>>, vector<1x32xf32>
    %20 = vector.broadcast %19 : vector<1x32xf32> to vector<16x32xf32>
    %21 = arith.mulf %20, %9 : vector<16x32xf32>
    %22 = vector.broadcast %18 : vector<16x1xf32> to vector<16x32xf32>
    %23 = arith.mulf %21, %22 : vector<16x32xf32>
    %c0_8 = arith.constant 0 : index
    %c0_9 = arith.constant 0 : index
    %24 = vector.load %arg7[%c0_8, %c0_9] : memref<1x32xf32, #tpu.memory_space<vmem>>, vector<1x32xf32>
    %25 = vector.broadcast %24 : vector<1x32xf32> to vector<16x32xf32>
    %26 = arith.addf %23, %25 : vector<16x32xf32>
    %c0_10 = arith.constant 0 : index
    %c0_11 = arith.constant 0 : index
    %27 = vector.load %arg9[%c0_10, %c0_11] : memref<16x96xf32, #tpu.memory_space<vmem>>, vector<16x96xf32>
    %28 = arith.truncf %26 : vector<16x32xf32> to vector<16x32xbf16>
    %c0_12 = arith.constant 0 : index
    %c0_13 = arith.constant 0 : index
    %29 = vector.load %arg4[%c0_12, %c0_13] : memref<32x96xbf16, #tpu.memory_space<vmem>>, vector<32x96xbf16>
    %cst_14 = arith.constant dense<0.000000e+00> : vector<16x96xf32>
    %30 = tpu.matmul %28, %29, %cst_14 {dimension_numbers = #tpu.dot_dimension_numbers<[1], [0], [0], [1], [0, 0, 1, 1], [], []>} : vector<16x32xbf16>, vector<32x96xbf16>, vector<16x96xf32> -> vector<16x96xf32>
    %31 = arith.addf %27, %30 : vector<16x96xf32>
    %c0_15 = arith.constant 0 : index
    %c0_16 = arith.constant 0 : index
    %32 = vector.load %arg9[%c0_15, %c0_16] : memref<16x96xf32, #tpu.memory_space<vmem>>, vector<16x96xf32>
    tpu.vector_store %arg9[%c0_15, %c0_16], %31 {strides = array<i32>} : memref<16x96xf32, #tpu.memory_space<vmem>>, vector<16x96xf32>,
    %c0_i32_17 = arith.constant 0 : i32
    %33 = arith.cmpi eq, %arg2, %c0_i32_17 : i32
    %34 = arith.extui %33 : i1 to i32
    %c0_i32_18 = arith.constant 0 : i32
    %35 = arith.cmpi ne, %34, %c0_i32_18 : i32
    scf.if %35 {
      %c0_19 = arith.constant 0 : index
      %c0_20 = arith.constant 0 : index
      %36 = vector.load %arg9[%c0_19, %c0_20] : memref<16x96xf32, #tpu.memory_space<vmem>>, vector<16x96xf32>
      %c0_21 = arith.constant 0 : index
      %c0_22 = arith.constant 0 : index
      %37 = vector.load %arg5[%c0_21, %c0_22] : memref<1x96xf32, #tpu.memory_space<vmem>>, vector<1x96xf32>
      %38 = vector.broadcast %37 : vector<1x96xf32> to vector<16x96xf32>
      %39 = arith.addf %36, %38 : vector<16x96xf32>
      %c0_23 = arith.constant 0 : index
      %c0_24 = arith.constant 0 : index
      %40 = vector.load %arg8[%c0_23, %c0_24] : memref<16x96xf32, #tpu.memory_space<vmem>>, vector<16x96xf32>
      tpu.vector_store %arg8[%c0_23, %c0_24], %39 {strides = array<i32>} : memref<16x96xf32, #tpu.memory_space<vmem>>, vector<16x96xf32>,
    } else {
    }
    return
  }
  func.func @transform_0(%arg0: i32, %arg1: i32, %arg2: i32) -> (i32, i32) {
    %c0_i32 = arith.constant 0 : i32
    return %arg0, %arg2 : i32, i32
  }
  func.func @transform_1(%arg0: i32, %arg1: i32, %arg2: i32) -> (i32, i32) {
    %c0_i32 = arith.constant 0 : i32
    return %arg2, %arg1 : i32, i32
  }
  func.func @transform_2(%arg0: i32, %arg1: i32, %arg2: i32) -> (i32, i32) {
    %c0_i32 = arith.constant 0 : i32
    %c0_i32_0 = arith.constant 0 : i32
    return %c0_i32, %arg1 : i32, i32
  }
  func.func @transform_3(%arg0: i32, %arg1: i32, %arg2: i32) -> (i32, i32) {
    %c0_i32 = arith.constant 0 : i32
    %c0_i32_0 = arith.constant 0 : i32
    return %c0_i32, %arg2 : i32, i32
  }
  func.func @transform_4(%arg0: i32, %arg1: i32, %arg2: i32) -> (i32, i32) {
    %c0_i32 = arith.constant 0 : i32
    %c0_i32_0 = arith.constant 0 : i32
    return %c0_i32, %arg2 : i32, i32
  }
  func.func @transform_5(%arg0: i32, %arg1: i32, %arg2: i32) -> (i32, i32) {
    %c0_i32 = arith.constant 0 : i32
    return %arg0, %arg1 : i32, i32
  }
}

module attributes {stable_mosaic.version = 11 : i64} {
  func.func @_mha_kernel(%arg0: i32, %arg1: memref<1x8x32xf32, #tpu.memory_space<vmem>>, %arg2: memref<1x8x32xf32, #tpu.memory_space<vmem>>, %arg3: memref<1x8x32xf32, #tpu.memory_space<vmem>>, %arg4: memref<1x8x8xi32, #tpu.memory_space<vmem>>, %arg5: memref<1x8x32xf32, #tpu.memory_space<vmem>>) attributes {dimension_semantics = [#tpu.dimension_semantics<parallel>], iteration_bounds = array<i64: 2>, scalar_prefetch = 0 : i64, scratch_operands = 0 : i64, tpu.core_type = #tpu.core_type<tc>, window_params = [{transform_indices = @transform_0, window_bounds = array<i64: 1, 8, 32>}, {transform_indices = @transform_1, window_bounds = array<i64: 1, 8, 32>}, {transform_indices = @transform_2, window_bounds = array<i64: 1, 8, 32>}, {transform_indices = @transform_3, window_bounds = array<i64: 1, 8, 8>}, {transform_indices = @transform_4, window_bounds = array<i64: 1, 8, 32>}]} {
    %c0 = arith.constant 0 : index
    %c0_0 = arith.constant 0 : index
    %c0_1 = arith.constant 0 : index
    %0 = vector.load %arg1[%c0, %c0_0, %c0_1] : memref<1x8x32xf32, #tpu.memory_space<vmem>>, vector<1x8x32xf32>
    %1 = vector.shape_cast %0 : vector<1x8x32xf32> to vector<8x32xf32>
    %c0_2 = arith.constant 0 : index
    %c0_3 = arith.constant 0 : index
    %c0_4 = arith.constant 0 : index
    %2 = vector.load %arg2[%c0_2, %c0_3, %c0_4] : memref<1x8x32xf32, #tpu.memory_space<vmem>>, vector<1x8x32xf32>
    %3 = vector.shape_cast %2 : vector<1x8x32xf32> to vector<8x32xf32>
    %c0_5 = arith.constant 0 : index
    %c0_6 = arith.constant 0 : index
    %c0_7 = arith.constant 0 : index
    %4 = vector.load %arg3[%c0_5, %c0_6, %c0_7] : memref<1x8x32xf32, #tpu.memory_space<vmem>>, vector<1x8x32xf32>
    %5 = vector.shape_cast %4 : vector<1x8x32xf32> to vector<8x32xf32>
    %c0_8 = arith.constant 0 : index
    %c0_9 = arith.constant 0 : index
    %c0_10 = arith.constant 0 : index
    %6 = vector.load %arg4[%c0_8, %c0_9, %c0_10] : memref<1x8x8xi32, #tpu.memory_space<vmem>>, vector<1x8x8xi32>
    %7 = vector.shape_cast %6 : vector<1x8x8xi32> to vector<8x8xi32>
    %8 = vector.extract_strided_slice %1 {offsets = [0, 0], sizes = [8, 8], strides = [1, 1]} : vector<8x32xf32> to vector<8x8xf32>
    %9 = vector.extract_strided_slice %3 {offsets = [0, 0], sizes = [8, 8], strides = [1, 1]} : vector<8x32xf32> to vector<8x8xf32>
    %10 = vector.extract_strided_slice %5 {offsets = [0, 0], sizes = [8, 8], strides = [1, 1]} : vector<8x32xf32> to vector<8x8xf32>
    %cst = arith.constant dense<0.000000e+00> : vector<8x8xf32>
    %11 = tpu.matmul %8, %9, %cst {dimension_numbers = #tpu.dot_dimension_numbers<[1], [1], [0], [0], [0, 0, 1, 0], [], []>} : vector<8x8xf32>, vector<8x8xf32>, vector<8x8xf32> -> vector<8x8xf32>
    %cst_11 = arith.constant 0.353553385 : f32
    %12 = vector.broadcast %cst_11 : f32 to vector<8x8xf32>
    %13 = arith.mulf %11, %12 : vector<8x8xf32>
    %c0_i32 = arith.constant 0 : i32
    %14 = vector.broadcast %c0_i32 : i32 to vector<8x8xi32>
    %15 = arith.cmpi eq, %7, %14 : vector<8x8xi32>
    %cst_12 = arith.constant -1.000000e+09 : f32
    %16 = vector.broadcast %cst_12 : f32 to vector<8x8xf32>
    %17 = arith.select %15, %16, %13 : vector<8x8xi1>, vector<8x8xf32>
    %cst_13 = arith.constant dense<0xFF800000> : vector<8xf32>
    %18 = vector.multi_reduction <maximumf>, %17, %cst_13 [1] : vector<8x8xf32> to vector<8xf32>
    %19 = vector.shape_cast %18 : vector<8xf32> to vector<8x1xf32>
    %20 = vector.broadcast %19 : vector<8x1xf32> to vector<8x8xf32>
    %21 = arith.subf %17, %20 : vector<8x8xf32>
    %22 = math.exp %21 : vector<8x8xf32>
    %cst_14 = arith.constant dense<0.000000e+00> : vector<8xf32>
    %23 = vector.multi_reduction <add>, %22, %cst_14 [1] : vector<8x8xf32> to vector<8xf32>
    %24 = vector.shape_cast %23 : vector<8xf32> to vector<8x1xf32>
    %25 = tpu.reciprocal %24 {approx = true} : vector<8x1xf32> -> vector<8x1xf32>
    %26 = vector.broadcast %25 : vector<8x1xf32> to vector<8x8xf32>
    %27 = arith.mulf %22, %26 : vector<8x8xf32>
    %cst_15 = arith.constant dense<0.000000e+00> : vector<8x8xf32>
    %28 = tpu.matmul %27, %10, %cst_15 {dimension_numbers = #tpu.dot_dimension_numbers<[1], [0], [0], [1], [0, 0, 1, 1], [], []>} : vector<8x8xf32>, vector<8x8xf32>, vector<8x8xf32> -> vector<8x8xf32>
    %c0_16 = arith.constant 0 : index
    %c0_17 = arith.constant 0 : index
    %c0_18 = arith.constant 0 : index
    %29 = vector.load %arg5[%c0_16, %c0_17, %c0_18] : memref<1x8x32xf32, #tpu.memory_space<vmem>>, vector<1x8x8xf32>
    %30 = vector.shape_cast %29 : vector<1x8x8xf32> to vector<8x8xf32>
    %31 = vector.shape_cast %28 : vector<8x8xf32> to vector<1x8x8xf32>
    tpu.vector_store %arg5[%c0_16, %c0_17, %c0_18], %31 {strides = array<i32>} : memref<1x8x32xf32, #tpu.memory_space<vmem>>, vector<1x8x8xf32>,
    %32 = vector.extract_strided_slice %1 {offsets = [0, 8], sizes = [8, 8], strides = [1, 1]} : vector<8x32xf32> to vector<8x8xf32>
    %33 = vector.extract_strided_slice %3 {offsets = [0, 8], sizes = [8, 8], strides = [1, 1]} : vector<8x32xf32> to vector<8x8xf32>
    %34 = vector.extract_strided_slice %5 {offsets = [0, 8], sizes = [8, 8], strides = [1, 1]} : vector<8x32xf32> to vector<8x8xf32>
    %cst_19 = arith.constant dense<0.000000e+00> : vector<8x8xf32>
    %35 = tpu.matmul %32, %33, %cst_19 {dimension_numbers = #tpu.dot_dimension_numbers<[1], [1], [0], [0], [0, 0, 1, 0], [], []>} : vector<8x8xf32>, vector<8x8xf32>, vector<8x8xf32> -> vector<8x8xf32>
    %cst_20 = arith.constant 0.353553385 : f32
    %36 = vector.broadcast %cst_20 : f32 to vector<8x8xf32>
    %37 = arith.mulf %35, %36 : vector<8x8xf32>
    %c0_i32_21 = arith.constant 0 : i32
    %38 = vector.broadcast %c0_i32_21 : i32 to vector<8x8xi32>
    %39 = arith.cmpi eq, %7, %38 : vector<8x8xi32>
    %cst_22 = arith.constant -1.000000e+09 : f32
    %40 = vector.broadcast %cst_22 : f32 to vector<8x8xf32>
    %41 = arith.select %39, %40, %37 : vector<8x8xi1>, vector<8x8xf32>
    %cst_23 = arith.constant dense<0xFF800000> : vector<8xf32>
    %42 = vector.multi_reduction <maximumf>, %41, %cst_23 [1] : vector<8x8xf32> to vector<8xf32>
    %43 = vector.shape_cast %42 : vector<8xf32> to vector<8x1xf32>
    %44 = vector.broadcast %43 : vector<8x1xf32> to vector<8x8xf32>
    %45 = arith.subf %41, %44 : vector<8x8xf32>
    %46 = math.exp %45 : vector<8x8xf32>
    %cst_24 = arith.constant dense<0.000000e+00> : vector<8xf32>
    %47 = vector.multi_reduction <add>, %46, %cst_24 [1] : vector<8x8xf32> to vector<8xf32>
    %48 = vector.shape_cast %47 : vector<8xf32> to vector<8x1xf32>
    %49 = tpu.reciprocal %48 {approx = true} : vector<8x1xf32> -> vector<8x1xf32>
    %50 = vector.broadcast %49 : vector<8x1xf32> to vector<8x8xf32>
    %51 = arith.mulf %46, %50 : vector<8x8xf32>
    %cst_25 = arith.constant dense<0.000000e+00> : vector<8x8xf32>
    %52 = tpu.matmul %51, %34, %cst_25 {dimension_numbers = #tpu.dot_dimension_numbers<[1], [0], [0], [1], [0, 0, 1, 1], [], []>} : vector<8x8xf32>, vector<8x8xf32>, vector<8x8xf32> -> vector<8x8xf32>
    %c0_26 = arith.constant 0 : index
    %c0_27 = arith.constant 0 : index
    %c8 = arith.constant 8 : index
    %53 = vector.load %arg5[%c0_26, %c0_27, %c8] : memref<1x8x32xf32, #tpu.memory_space<vmem>>, vector<1x8x8xf32>
    %54 = vector.shape_cast %53 : vector<1x8x8xf32> to vector<8x8xf32>
    %55 = vector.shape_cast %52 : vector<8x8xf32> to vector<1x8x8xf32>
    tpu.vector_store %arg5[%c0_26, %c0_27, %c8], %55 {strides = array<i32>} : memref<1x8x32xf32, #tpu.memory_space<vmem>>, vector<1x8x8xf32>,
    %56 = vector.extract_strided_slice %1 {offsets = [0, 16], sizes = [8, 8], strides = [1, 1]} : vector<8x32xf32> to vector<8x8xf32>
    %57 = vector.extract_strided_slice %3 {offsets = [0, 16], sizes = [8, 8], strides = [1, 1]} : vector<8x32xf32> to vector<8x8xf32>
    %58 = vector.extract_strided_slice %5 {offsets = [0, 16], sizes = [8, 8], strides = [1, 1]} : vector<8x32xf32> to vector<8x8xf32>
    %cst_28 = arith.constant dense<0.000000e+00> : vector<8x8xf32>
    %59 = tpu.matmul %56, %57, %cst_28 {dimension_numbers = #tpu.dot_dimension_numbers<[1], [1], [0], [0], [0, 0, 1, 0], [], []>} : vector<8x8xf32>, vector<8x8xf32>, vector<8x8xf32> -> vector<8x8xf32>
    %cst_29 = arith.constant 0.353553385 : f32
    %60 = vector.broadcast %cst_29 : f32 to vector<8x8xf32>
    %61 = arith.mulf %59, %60 : vector<8x8xf32>
    %c0_i32_30 = arith.constant 0 : i32
    %62 = vector.broadcast %c0_i32_30 : i32 to vector<8x8xi32>
    %63 = arith.cmpi eq, %7, %62 : vector<8x8xi32>
    %cst_31 = arith.constant -1.000000e+09 : f32
    %64 = vector.broadcast %cst_31 : f32 to vector<8x8xf32>
    %65 = arith.select %63, %64, %61 : vector<8x8xi1>, vector<8x8xf32>
    %cst_32 = arith.constant dense<0xFF800000> : vector<8xf32>
    %66 = vector.multi_reduction <maximumf>, %65, %cst_32 [1] : vector<8x8xf32> to vector<8xf32>
    %67 = vector.shape_cast %66 : vector<8xf32> to vector<8x1xf32>
    %68 = vector.broadcast %67 : vector<8x1xf32> to vector<8x8xf32>
    %69 = arith.subf %65, %68 : vector<8x8xf32>
    %70 = math.exp %69 : vector<8x8xf32>
    %cst_33 = arith.constant dense<0.000000e+00> : vector<8xf32>
    %71 = vector.multi_reduction <add>, %70, %cst_33 [1] : vector<8x8xf32> to vector<8xf32>
    %72 = vector.shape_cast %71 : vector<8xf32> to vector<8x1xf32>
    %73 = tpu.reciprocal %72 {approx = true} : vector<8x1xf32> -> vector<8x1xf32>
    %74 = vector.broadcast %73 : vector<8x1xf32> to vector<8x8xf32>
    %75 = arith.mulf %70, %74 : vector<8x8xf32>
    %cst_34 = arith.constant dense<0.000000e+00> : vector<8x8xf32>
    %76 = tpu.matmul %75, %58, %cst_34 {dimension_numbers = #tpu.dot_dimension_numbers<[1], [0], [0], [1], [0, 0, 1, 1], [], []>} : vector<8x8xf32>, vector<8x8xf32>, vector<8x8xf32> -> vector<8x8xf32>
    %c0_35 = arith.constant 0 : index
    %c0_36 = arith.constant 0 : index
    %c16 = arith.constant 16 : index
    %77 = vector.load %arg5[%c0_35, %c0_36, %c16] : memref<1x8x32xf32, #tpu.memory_space<vmem>>, vector<1x8x8xf32>
    %78 = vector.shape_cast %77 : vector<1x8x8xf32> to vector<8x8xf32>
    %79 = vector.shape_cast %76 : vector<8x8xf32> to vector<1x8x8xf32>
    tpu.vector_store %arg5[%c0_35, %c0_36, %c16], %79 {strides = array<i32>} : memref<1x8x32xf32, #tpu.memory_space<vmem>>, vector<1x8x8xf32>,
    %80 = vector.extract_strided_slice %1 {offsets = [0, 24], sizes = [8, 8], strides = [1, 1]} : vector<8x32xf32> to vector<8x8xf32>
    %81 = vector.extract_strided_slice %3 {offsets = [0, 24], sizes = [8, 8], strides = [1, 1]} : vector<8x32xf32> to vector<8x8xf32>
    %82 = vector.extract_strided_slice %5 {offsets = [0, 24], sizes = [8, 8], strides = [1, 1]} : vector<8x32xf32> to vector<8x8xf32>
    %cst_37 = arith.constant dense<0.000000e+00> : vector<8x8xf32>
    %83 = tpu.matmul %80, %81, %cst_37 {dimension_numbers = #tpu.dot_dimension_numbers<[1], [1], [0], [0], [0, 0, 1, 0], [], []>} : vector<8x8xf32>, vector<8x8xf32>, vector<8x8xf32> -> vector<8x8xf32>
    %cst_38 = arith.constant 0.353553385 : f32
    %84 = vector.broadcast %cst_38 : f32 to vector<8x8xf32>
    %85 = arith.mulf %83, %84 : vector<8x8xf32>
    %c0_i32_39 = arith.constant 0 : i32
    %86 = vector.broadcast %c0_i32_39 : i32 to vector<8x8xi32>
    %87 = arith.cmpi eq, %7, %86 : vector<8x8xi32>
    %cst_40 = arith.constant -1.000000e+09 : f32
    %88 = vector.broadcast %cst_40 : f32 to vector<8x8xf32>
    %89 = arith.select %87, %88, %85 : vector<8x8xi1>, vector<8x8xf32>
    %cst_41 = arith.constant dense<0xFF800000> : vector<8xf32>
    %90 = vector.multi_reduction <maximumf>, %89, %cst_41 [1] : vector<8x8xf32> to vector<8xf32>
    %91 = vector.shape_cast %90 : vector<8xf32> to vector<8x1xf32>
    %92 = vector.broadcast %91 : vector<8x1xf32> to vector<8x8xf32>
    %93 = arith.subf %89, %92 : vector<8x8xf32>
    %94 = math.exp %93 : vector<8x8xf32>
    %cst_42 = arith.constant dense<0.000000e+00> : vector<8xf32>
    %95 = vector.multi_reduction <add>, %94, %cst_42 [1] : vector<8x8xf32> to vector<8xf32>
    %96 = vector.shape_cast %95 : vector<8xf32> to vector<8x1xf32>
    %97 = tpu.reciprocal %96 {approx = true} : vector<8x1xf32> -> vector<8x1xf32>
    %98 = vector.broadcast %97 : vector<8x1xf32> to vector<8x8xf32>
    %99 = arith.mulf %94, %98 : vector<8x8xf32>
    %cst_43 = arith.constant dense<0.000000e+00> : vector<8x8xf32>
    %100 = tpu.matmul %99, %82, %cst_43 {dimension_numbers = #tpu.dot_dimension_numbers<[1], [0], [0], [1], [0, 0, 1, 1], [], []>} : vector<8x8xf32>, vector<8x8xf32>, vector<8x8xf32> -> vector<8x8xf32>
    %c0_44 = arith.constant 0 : index
    %c0_45 = arith.constant 0 : index
    %c24 = arith.constant 24 : index
    %101 = vector.load %arg5[%c0_44, %c0_45, %c24] : memref<1x8x32xf32, #tpu.memory_space<vmem>>, vector<1x8x8xf32>
    %102 = vector.shape_cast %101 : vector<1x8x8xf32> to vector<8x8xf32>
    %103 = vector.shape_cast %100 : vector<8x8xf32> to vector<1x8x8xf32>
    tpu.vector_store %arg5[%c0_44, %c0_45, %c24], %103 {strides = array<i32>} : memref<1x8x32xf32, #tpu.memory_space<vmem>>, vector<1x8x8xf32>,
    return
  }
  func.func @transform_0(%arg0: i32) -> (i32, i32, i32) {
    %c0_i32 = arith.constant 0 : i32
    %c0_i32_0 = arith.constant 0 : i32
    %c0_i32_1 = arith.constant 0 : i32
    return %arg0, %c0_i32, %c0_i32_0 : i32, i32, i32
  }
  func.func @transform_1(%arg0: i32) -> (i32, i32, i32) {
    %c0_i32 = arith.constant 0 : i32
    %c0_i32_0 = arith.constant 0 : i32
    %c0_i32_1 = arith.constant 0 : i32
    return %arg0, %c0_i32, %c0_i32_0 : i32, i32, i32
  }
  func.func @transform_2(%arg0: i32) -> (i32, i32, i32) {
    %c0_i32 = arith.constant 0 : i32
    %c0_i32_0 = arith.constant 0 : i32
    %c0_i32_1 = arith.constant 0 : i32
    return %arg0, %c0_i32, %c0_i32_0 : i32, i32, i32
  }
  func.func @transform_3(%arg0: i32) -> (i32, i32, i32) {
    %c0_i32 = arith.constant 0 : i32
    %c0_i32_0 = arith.constant 0 : i32
    %c0_i32_1 = arith.constant 0 : i32
    return %arg0, %c0_i32, %c0_i32_0 : i32, i32, i32
  }
  func.func @transform_4(%arg0: i32) -> (i32, i32, i32) {
    %c0_i32 = arith.constant 0 : i32
    %c0_i32_0 = arith.constant 0 : i32
    %c0_i32_1 = arith.constant 0 : i32
    return %arg0, %c0_i32, %c0_i32_0 : i32, i32, i32
  }
}

module attributes {stable_mosaic.version = 11 : i64} {
  func.func @_linear_kernel(%arg0: i32, %arg1: i32, %arg2: i32, %arg3: memref<16x32xf32, #tpu.memory_space<vmem>>, %arg4: memref<32x32xbf16, #tpu.memory_space<vmem>>, %arg5: memref<1x32xf32, #tpu.memory_space<vmem>>, %arg6: memref<1x32xf32, #tpu.memory_space<vmem>>, %arg7: memref<1x32xf32, #tpu.memory_space<vmem>>, %arg8: memref<16x32xf32, #tpu.memory_space<vmem>>, %arg9: memref<16x32xf32, #tpu.memory_space<vmem>>) attributes {dimension_semantics = [#tpu.dimension_semantics<parallel>, #tpu.dimension_semantics<parallel>, #tpu.dimension_semantics<arbitrary>], iteration_bounds = array<i64: 1, 1, 1>, scalar_prefetch = 0 : i64, scratch_operands = 1 : i64, tpu.core_type = #tpu.core_type<tc>, window_params = [{transform_indices = @transform_0, window_bounds = array<i64: 16, 32>}, {transform_indices = @transform_1, window_bounds = array<i64: 32, 32>}, {transform_indices = @transform_2, window_bounds = array<i64: 1, 32>}, {transform_indices = @transform_3, window_bounds = array<i64: 1, 32>}, {transform_indices = @transform_4, window_bounds = array<i64: 1, 32>}, {transform_indices = @transform_5, window_bounds = array<i64: 16, 32>}]} {
    %c0_i32 = arith.constant 0 : i32
    %0 = arith.cmpi eq, %arg2, %c0_i32 : i32
    %1 = arith.extui %0 : i1 to i32
    %c0_i32_0 = arith.constant 0 : i32
    %2 = arith.cmpi ne, %1, %c0_i32_0 : i32
    scf.if %2 {
      %cst_19 = arith.constant 0.000000e+00 : f32
      %36 = vector.broadcast %cst_19 : f32 to vector<16x32xf32>
      %c0_20 = arith.constant 0 : index
      %c0_21 = arith.constant 0 : index
      %37 = vector.load %arg9[%c0_20, %c0_21] : memref<16x32xf32, #tpu.memory_space<vmem>>, vector<16x32xf32>
      tpu.vector_store %arg9[%c0_20, %c0_21], %36 {strides = array<i32>} : memref<16x32xf32, #tpu.memory_space<vmem>>, vector<16x32xf32>,
    } else {
    }
    %c0 = arith.constant 0 : index
    %c0_1 = arith.constant 0 : index
    %3 = vector.load %arg3[%c0, %c0_1] : memref<16x32xf32, #tpu.memory_space<vmem>>, vector<16x32xf32>
    %cst = arith.constant dense<0.000000e+00> : vector<16xf32>
    %4 = vector.multi_reduction <add>, %3, %cst [1] : vector<16x32xf32> to vector<16xf32>
    %5 = vector.shape_cast %4 : vector<16xf32> to vector<16x1xf32>
    %cst_2 = arith.constant 3.200000e+01 : f32
    %6 = vector.broadcast %cst_2 : f32 to vector<16x1xf32>
    %7 = arith.divf %5, %6 : vector<16x1xf32>
    %8 = vector.broadcast %7 : vector<16x1xf32> to vector<16x32xf32>
    %9 = arith.subf %3, %8 : vector<16x32xf32>
    %10 = arith.mulf %9, %9 : vector<16x32xf32>
    %cst_3 = arith.constant dense<0.000000e+00> : vector<16xf32>
    %11 = vector.multi_reduction <add>, %10, %cst_3 [1] : vector<16x32xf32> to vector<16xf32>
    %12 = vector.shape_cast %11 : vector<16xf32> to vector<16x1xf32>
    %cst_4 = arith.constant 0.0322580636 : f32
    %13 = vector.broadcast %cst_4 : f32 to vector<16x1xf32>
    %14 = arith.mulf %12, %13 : vector<16x1xf32>
    %15 = math.sqrt %14 : vector<16x1xf32>
    %cst_5 = arith.constant 9.99999997E-7 : f32
    %16 = vector.broadcast %cst_5 : f32 to vector<16x1xf32>
    %17 = arith.addf %15, %16 : vector<16x1xf32>
    %18 = tpu.reciprocal %17 {approx = true} : vector<16x1xf32> -> vector<16x1xf32>
    %c0_6 = arith.constant 0 : index
    %c0_7 = arith.constant 0 : index
    %19 = vector.load %arg6[%c0_6, %c0_7] : memref<1x32xf32, #tpu.memory_space<vmem>>, vector<1x32xf32>
    %20 = vector.broadcast %19 : vector<1x32xf32> to vector<16x32xf32>
    %21 = arith.mulf %20, %9 : vector<16x32xf32>
    %22 = vector.broadcast %18 : vector<16x1xf32> to vector<16x32xf32>
    %23 = arith.mulf %21, %22 : vector<16x32xf32>
    %c0_8 = arith.constant 0 : index
    %c0_9 = arith.constant 0 : index
    %24 = vector.load %arg7[%c0_8, %c0_9] : memref<1x32xf32, #tpu.memory_space<vmem>>, vector<1x32xf32>
    %25 = vector.broadcast %24 : vector<1x32xf32> to vector<16x32xf32>
    %26 = arith.addf %23, %25 : vector<16x32xf32>
    %c0_10 = arith.constant 0 : index
    %c0_11 = arith.constant 0 : index
    %27 = vector.load %arg9[%c0_10, %c0_11] : memref<16x32xf32, #tpu.memory_space<vmem>>, vector<16x32xf32>
    %28 = arith.truncf %26 : vector<16x32xf32> to vector<16x32xbf16>
    %c0_12 = arith.constant 0 : index
    %c0_13 = arith.constant 0 : index
    %29 = vector.load %arg4[%c0_12, %c0_13] : memref<32x32xbf16, #tpu.memory_space<vmem>>, vector<32x32xbf16>
    %cst_14 = arith.constant dense<0.000000e+00> : vector<16x32xf32>
    %30 = tpu.matmul %28, %29, %cst_14 {dimension_numbers = #tpu.dot_dimension_numbers<[1], [0], [0], [1], [0, 0, 1, 1], [], []>} : vector<16x32xbf16>, vector<32x32xbf16>, vector<16x32xf32> -> vector<16x32xf32>
    %31 = arith.addf %27, %30 : vector<16x32xf32>
    %c0_15 = arith.constant 0 : index
    %c0_16 = arith.constant 0 : index
    %32 = vector.load %arg9[%c0_15, %c0_16] : memref<16x32xf32, #tpu.memory_space<vmem>>, vector<16x32xf32>
    tpu.vector_store %arg9[%c0_15, %c0_16], %31 {strides = array<i32>} : memref<16x32xf32, #tpu.memory_space<vmem>>, vector<16x32xf32>,
    %c0_i32_17 = arith.constant 0 : i32
    %33 = arith.cmpi eq, %arg2, %c0_i32_17 : i32
    %34 = arith.extui %33 : i1 to i32
    %c0_i32_18 = arith.constant 0 : i32
    %35 = arith.cmpi ne, %34, %c0_i32_18 : i32
    scf.if %35 {
      %c0_19 = arith.constant 0 : index
      %c0_20 = arith.constant 0 : index
      %36 = vector.load %arg9[%c0_19, %c0_20] : memref<16x32xf32, #tpu.memory_space<vmem>>, vector<16x32xf32>
      %c0_21 = arith.constant 0 : index
      %c0_22 = arith.constant 0 : index
      %37 = vector.load %arg5[%c0_21, %c0_22] : memref<1x32xf32, #tpu.memory_space<vmem>>, vector<1x32xf32>
      %38 = vector.broadcast %37 : vector<1x32xf32> to vector<16x32xf32>
      %39 = arith.addf %36, %38 : vector<16x32xf32>
      %c0_23 = arith.constant 0 : index
      %c0_24 = arith.constant 0 : index
      %40 = vector.load %arg8[%c0_23, %c0_24] : memref<16x32xf32, #tpu.memory_space<vmem>>, vector<16x32xf32>
      tpu.vector_store %arg8[%c0_23, %c0_24], %39 {strides = array<i32>} : memref<16x32xf32, #tpu.memory_space<vmem>>, vector<16x32xf32>,
    } else {
    }
    return
  }
  func.func @transform_0(%arg0: i32, %arg1: i32, %arg2: i32) -> (i32, i32) {
    %c0_i32 = arith.constant 0 : i32
    return %arg0, %arg2 : i32, i32
  }
  func.func @transform_1(%arg0: i32, %arg1: i32, %arg2: i32) -> (i32, i32) {
    %c0_i32 = arith.constant 0 : i32
    return %arg2, %arg1 : i32, i32
  }
  func.func @transform_2(%arg0: i32, %arg1: i32, %arg2: i32) -> (i32, i32) {
    %c0_i32 = arith.constant 0 : i32
    %c0_i32_0 = arith.constant 0 : i32
    return %c0_i32, %arg1 : i32, i32
  }
  func.func @transform_3(%arg0: i32, %arg1: i32, %arg2: i32) -> (i32, i32) {
    %c0_i32 = arith.constant 0 : i32
    %c0_i32_0 = arith.constant 0 : i32
    return %c0_i32, %arg2 : i32, i32
  }
  func.func @transform_4(%arg0: i32, %arg1: i32, %arg2: i32) -> (i32, i32) {
    %c0_i32 = arith.constant 0 : i32
    %c0_i32_0 = arith.constant 0 : i32
    return %c0_i32, %arg2 : i32, i32
  }
  func.func @transform_5(%arg0: i32, %arg1: i32, %arg2: i32) -> (i32, i32) {
    %c0_i32 = arith.constant 0 : i32
    return %arg0, %arg1 : i32, i32
  }
}

module attributes {stable_mosaic.version = 11 : i64} {
  func.func @_linear_kernel(%arg0: i32, %arg1: i32, %arg2: i32, %arg3: memref<16x32xf32, #tpu.memory_space<vmem>>, %arg4: memref<32x32xbf16, #tpu.memory_space<vmem>>, %arg5: memref<1x32xf32, #tpu.memory_space<vmem>>, %arg6: memref<16x32xf32, #tpu.memory_space<vmem>>, %arg7: memref<16x32xf32, #tpu.memory_space<vmem>>, %arg8: memref<16x32xf32, #tpu.memory_space<vmem>>) attributes {dimension_semantics = [#tpu.dimension_semantics<parallel>, #tpu.dimension_semantics<parallel>, #tpu.dimension_semantics<arbitrary>], iteration_bounds = array<i64: 1, 1, 1>, scalar_prefetch = 0 : i64, scratch_operands = 1 : i64, tpu.core_type = #tpu.core_type<tc>, window_params = [{transform_indices = @transform_0, window_bounds = array<i64: 16, 32>}, {transform_indices = @transform_1, window_bounds = array<i64: 32, 32>}, {transform_indices = @transform_2, window_bounds = array<i64: 1, 32>}, {transform_indices = @transform_3, window_bounds = array<i64: 16, 32>}, {transform_indices = @transform_4, window_bounds = array<i64: 16, 32>}]} {
    %c0_i32 = arith.constant 0 : i32
    %0 = arith.cmpi eq, %arg2, %c0_i32 : i32
    %1 = arith.extui %0 : i1 to i32
    %c0_i32_0 = arith.constant 0 : i32
    %2 = arith.cmpi ne, %1, %c0_i32_0 : i32
    scf.if %2 {
      %cst_10 = arith.constant 0.000000e+00 : f32
      %13 = vector.broadcast %cst_10 : f32 to vector<16x32xf32>
      %c0_11 = arith.constant 0 : index
      %c0_12 = arith.constant 0 : index
      %14 = vector.load %arg8[%c0_11, %c0_12] : memref<16x32xf32, #tpu.memory_space<vmem>>, vector<16x32xf32>
      tpu.vector_store %arg8[%c0_11, %c0_12], %13 {strides = array<i32>} : memref<16x32xf32, #tpu.memory_space<vmem>>, vector<16x32xf32>,
    } else {
    }
    %c0 = arith.constant 0 : index
    %c0_1 = arith.constant 0 : index
    %3 = vector.load %arg3[%c0, %c0_1] : memref<16x32xf32, #tpu.memory_space<vmem>>, vector<16x32xf32>
    %c0_2 = arith.constant 0 : index
    %c0_3 = arith.constant 0 : index
    %4 = vector.load %arg8[%c0_2, %c0_3] : memref<16x32xf32, #tpu.memory_space<vmem>>, vector<16x32xf32>
    %5 = arith.truncf %3 : vector<16x32xf32> to vector<16x32xbf16>
    %c0_4 = arith.constant 0 : index
    %c0_5 = arith.constant 0 : index
    %6 = vector.load %arg4[%c0_4, %c0_5] : memref<32x32xbf16, #tpu.memory_space<vmem>>, vector<32x32xbf16>
    %cst = arith.constant dense<0.000000e+00> : vector<16x32xf32>
    %7 = tpu.matmul %5, %6, %cst {dimension_numbers = #tpu.dot_dimension_numbers<[1], [0], [0], [1], [0, 0, 1, 1], [], []>} : vector<16x32xbf16>, vector<32x32xbf16>, vector<16x32xf32> -> vector<16x32xf32>
    %8 = arith.addf %4, %7 : vector<16x32xf32>
    %c0_6 = arith.constant 0 : index
    %c0_7 = arith.constant 0 : index
    %9 = vector.load %arg8[%c0_6, %c0_7] : memref<16x32xf32, #tpu.memory_space<vmem>>, vector<16x32xf32>
    tpu.vector_store %arg8[%c0_6, %c0_7], %8 {strides = array<i32>} : memref<16x32xf32, #tpu.memory_space<vmem>>, vector<16x32xf32>,
    %c0_i32_8 = arith.constant 0 : i32
    %10 = arith.cmpi eq, %arg2, %c0_i32_8 : i32
    %11 = arith.extui %10 : i1 to i32
    %c0_i32_9 = arith.constant 0 : i32
    %12 = arith.cmpi ne, %11, %c0_i32_9 : i32
    scf.if %12 {
      %c0_10 = arith.constant 0 : index
      %c0_11 = arith.constant 0 : index
      %13 = vector.load %arg8[%c0_10, %c0_11] : memref<16x32xf32, #tpu.memory_space<vmem>>, vector<16x32xf32>
      %c0_12 = arith.constant 0 : index
      %c0_13 = arith.constant 0 : index
      %14 = vector.load %arg5[%c0_12, %c0_13] : memref<1x32xf32, #tpu.memory_space<vmem>>, vector<1x32xf32>
      %15 = vector.broadcast %14 : vector<1x32xf32> to vector<16x32xf32>
      %16 = arith.addf %13, %15 : vector<16x32xf32>
      %c0_14 = arith.constant 0 : index
      %c0_15 = arith.constant 0 : index
      %17 = vector.load %arg6[%c0_14, %c0_15] : memref<16x32xf32, #tpu.memory_space<vmem>>, vector<16x32xf32>
      %18 = arith.addf %16, %17 : vector<16x32xf32>
      %c0_16 = arith.constant 0 : index
      %c0_17 = arith.constant 0 : index
      %19 = vector.load %arg7[%c0_16, %c0_17] : memref<16x32xf32, #tpu.memory_space<vmem>>, vector<16x32xf32>
      tpu.vector_store %arg7[%c0_16, %c0_17], %18 {strides = array<i32>} : memref<16x32xf32, #tpu.memory_space<vmem>>, vector<16x32xf32>,
    } else {
    }
    return
  }
  func.func @transform_0(%arg0: i32, %arg1: i32, %arg2: i32) -> (i32, i32) {
    %c0_i32 = arith.constant 0 : i32
    return %arg0, %arg2 : i32, i32
  }
  func.func @transform_1(%arg0: i32, %arg1: i32, %arg2: i32) -> (i32, i32) {
    %c0_i32 = arith.constant 0 : i32
    return %arg2, %arg1 : i32, i32
  }
  func.func @transform_2(%arg0: i32, %arg1: i32, %arg2: i32) -> (i32, i32) {
    %c0_i32 = arith.constant 0 : i32
    %c0_i32_0 = arith.constant 0 : i32
    return %c0_i32, %arg1 : i32, i32
  }
  func.func @transform_3(%arg0: i32, %arg1: i32, %arg2: i32) -> (i32, i32) {
    %c0_i32 = arith.constant 0 : i32
    return %arg0, %arg1 : i32, i32
  }
  func.func @transform_4(%arg0: i32, %arg1: i32, %arg2: i32) -> (i32, i32) {
    %c0_i32 = arith.constant 0 : i32
    return %arg0, %arg1 : i32, i32
  }
}

module attributes {stable_mosaic.version = 11 : i64} {
  func.func @_mha_kernel(%arg0: i32, %arg1: memref<1x8x32xf32, #tpu.memory_space<vmem>>, %arg2: memref<1x10x32xf32, #tpu.memory_space<vmem>>, %arg3: memref<1x10x32xf32, #tpu.memory_space<vmem>>, %arg4: memref<1x1x10xi32, #tpu.memory_space<vmem>>, %arg5: memref<1x8x32xf32, #tpu.memory_space<vmem>>) attributes {dimension_semantics = [#tpu.dimension_semantics<parallel>], iteration_bounds = array<i64: 2>, scalar_prefetch = 0 : i64, scratch_operands = 0 : i64, tpu.core_type = #tpu.core_type<tc>, window_params = [{transform_indices = @transform_0, window_bounds = array<i64: 1, 8, 32>}, {transform_indices = @transform_1, window_bounds = array<i64: 1, 10, 32>}, {transform_indices = @transform_2, window_bounds = array<i64: 1, 10, 32>}, {transform_indices = @transform_3, window_bounds = array<i64: 1, 1, 10>}, {transform_indices = @transform_4, window_bounds = array<i64: 1, 8, 32>}]} {
    %c0 = arith.constant 0 : index
    %c0_0 = arith.constant 0 : index
    %c0_1 = arith.constant 0 : index
    %0 = vector.load %arg1[%c0, %c0_0, %c0_1] : memref<1x8x32xf32, #tpu.memory_space<vmem>>, vector<1x8x32xf32>
    %1 = vector.shape_cast %0 : vector<1x8x32xf32> to vector<8x32xf32>
    %c0_2 = arith.constant 0 : index
    %c0_3 = arith.constant 0 : index
    %c0_4 = arith.constant 0 : index
    %2 = vector.load %arg2[%c0_2, %c0_3, %c0_4] : memref<1x10x32xf32, #tpu.memory_space<vmem>>, vector<1x10x32xf32>
    %3 = vector.shape_cast %2 : vector<1x10x32xf32> to vector<10x32xf32>
    %c0_5 = arith.constant 0 : index
    %c0_6 = arith.constant 0 : index
    %c0_7 = arith.constant 0 : index
    %4 = vector.load %arg3[%c0_5, %c0_6, %c0_7] : memref<1x10x32xf32, #tpu.memory_space<vmem>>, vector<1x10x32xf32>
    %5 = vector.shape_cast %4 : vector<1x10x32xf32> to vector<10x32xf32>
    %c0_8 = arith.constant 0 : index
    %c0_9 = arith.constant 0 : index
    %c0_10 = arith.constant 0 : index
    %6 = vector.load %arg4[%c0_8, %c0_9, %c0_10] : memref<1x1x10xi32, #tpu.memory_space<vmem>>, vector<1x1x10xi32>
    %7 = vector.shape_cast %6 : vector<1x1x10xi32> to vector<1x10xi32>
    %8 = vector.extract_strided_slice %1 {offsets = [0, 0], sizes = [8, 8], strides = [1, 1]} : vector<8x32xf32> to vector<8x8xf32>
    %9 = vector.extract_strided_slice %3 {offsets = [0, 0], sizes = [10, 8], strides = [1, 1]} : vector<10x32xf32> to vector<10x8xf32>
    %10 = vector.extract_strided_slice %5 {offsets = [0, 0], sizes = [10, 8], strides = [1, 1]} : vector<10x32xf32> to vector<10x8xf32>
    %cst = arith.constant dense<0.000000e+00> : vector<8x10xf32>
    %11 = tpu.matmul %8, %9, %cst {dimension_numbers = #tpu.dot_dimension_numbers<[1], [1], [0], [0], [0, 0, 1, 0], [], []>} : vector<8x8xf32>, vector<10x8xf32>, vector<8x10xf32> -> vector<8x10xf32>
    %cst_11 = arith.constant 0.353553385 : f32
    %12 = vector.broadcast %cst_11 : f32 to vector<8x10xf32>
    %13 = arith.mulf %11, %12 : vector<8x10xf32>
    %c0_i32 = arith.constant 0 : i32
    %14 = vector.broadcast %c0_i32 : i32 to vector<1x10xi32>
    %15 = arith.cmpi eq, %7, %14 : vector<1x10xi32>
    %cst_12 = arith.constant -1.000000e+09 : f32
    %16 = vector.shape_cast %15 : vector<1x10xi1> to vector<1x10xi1>
    %17 = vector.broadcast %16 : vector<1x10xi1> to vector<8x10xi1>
    %18 = vector.broadcast %cst_12 : f32 to vector<8x10xf32>
    %19 = arith.select %17, %18, %13 : vector<8x10xi1>, vector<8x10xf32>
    %cst_13 = arith.constant dense<0xFF800000> : vector<8xf32>
    %20 = vector.multi_reduction <maximumf>, %19, %cst_13 [1] : vector<8x10xf32> to vector<8xf32>
    %21 = vector.shape_cast %20 : vector<8xf32> to vector<8x1xf32>
    %22 = vector.broadcast %21 : vector<8x1xf32> to vector<8x10xf32>
    %23 = arith.subf %19, %22 : vector<8x10xf32>
    %24 = math.exp %23 : vector<8x10xf32>
    %cst_14 = arith.constant dense<0.000000e+00> : vector<8xf32>
    %25 = vector.multi_reduction <add>, %24, %cst_14 [1] : vector<8x10xf32> to vector<8xf32>
    %26 = vector.shape_cast %25 : vector<8xf32> to vector<8x1xf32>
    %27 = tpu.reciprocal %26 {approx = true} : vector<8x1xf32> -> vector<8x1xf32>
    %28 = vector.broadcast %27 : vector<8x1xf32> to vector<8x10xf32>
    %29 = arith.mulf %24, %28 : vector<8x10xf32>
    %cst_15 = arith.constant dense<0.000000e+00> : vector<8x8xf32>
    %30 = tpu.matmul %29, %10, %cst_15 {dimension_numbers = #tpu.dot_dimension_numbers<[1], [0], [0], [1], [0, 0, 1, 1], [], []>} : vector<8x10xf32>, vector<10x8xf32>, vector<8x8xf32> -> vector<8x8xf32>
    %c0_16 = arith.constant 0 : index
    %c0_17 = arith.constant 0 : index
    %c0_18 = arith.constant 0 : index
    %31 = vector.load %arg5[%c0_16, %c0_17, %c0_18] : memref<1x8x32xf32, #tpu.memory_space<vmem>>, vector<1x8x8xf32>
    %32 = vector.shape_cast %31 : vector<1x8x8xf32> to vector<8x8xf32>
    %33 = vector.shape_cast %30 : vector<8x8xf32> to vector<1x8x8xf32>
    tpu.vector_store %arg5[%c0_16, %c0_17, %c0_18], %33 {strides = array<i32>} : memref<1x8x32xf32, #tpu.memory_space<vmem>>, vector<1x8x8xf32>,
    %34 = vector.extract_strided_slice %1 {offsets = [0, 8], sizes = [8, 8], strides = [1, 1]} : vector<8x32xf32> to vector<8x8xf32>
    %35 = vector.extract_strided_slice %3 {offsets = [0, 8], sizes = [10, 8], strides = [1, 1]} : vector<10x32xf32> to vector<10x8xf32>
    %36 = vector.extract_strided_slice %5 {offsets = [0, 8], sizes = [10, 8], strides = [1, 1]} : vector<10x32xf32> to vector<10x8xf32>
    %cst_19 = arith.constant dense<0.000000e+00> : vector<8x10xf32>
    %37 = tpu.matmul %34, %35, %cst_19 {dimension_numbers = #tpu.dot_dimension_numbers<[1], [1], [0], [0], [0, 0, 1, 0], [], []>} : vector<8x8xf32>, vector<10x8xf32>, vector<8x10xf32> -> vector<8x10xf32>
    %cst_20 = arith.constant 0.353553385 : f32
    %38 = vector.broadcast %cst_20 : f32 to vector<8x10xf32>
    %39 = arith.mulf %37, %38 : vector<8x10xf32>
    %c0_i32_21 = arith.constant 0 : i32
    %40 = vector.broadcast %c0_i32_21 : i32 to vector<1x10xi32>
    %41 = arith.cmpi eq, %7, %40 : vector<1x10xi32>
    %cst_22 = arith.constant -1.000000e+09 : f32
    %42 = vector.shape_cast %41 : vector<1x10xi1> to vector<1x10xi1>
    %43 = vector.broadcast %42 : vector<1x10xi1> to vector<8x10xi1>
    %44 = vector.broadcast %cst_22 : f32 to vector<8x10xf32>
    %45 = arith.select %43, %44, %39 : vector<8x10xi1>, vector<8x10xf32>
    %cst_23 = arith.constant dense<0xFF800000> : vector<8xf32>
    %46 = vector.multi_reduction <maximumf>, %45, %cst_23 [1] : vector<8x10xf32> to vector<8xf32>
    %47 = vector.shape_cast %46 : vector<8xf32> to vector<8x1xf32>
    %48 = vector.broadcast %47 : vector<8x1xf32> to vector<8x10xf32>
    %49 = arith.subf %45, %48 : vector<8x10xf32>
    %50 = math.exp %49 : vector<8x10xf32>
    %cst_24 = arith.constant dense<0.000000e+00> : vector<8xf32>
    %51 = vector.multi_reduction <add>, %50, %cst_24 [1] : vector<8x10xf32> to vector<8xf32>
    %52 = vector.shape_cast %51 : vector<8xf32> to vector<8x1xf32>
    %53 = tpu.reciprocal %52 {approx = true} : vector<8x1xf32> -> vector<8x1xf32>
    %54 = vector.broadcast %53 : vector<8x1xf32> to vector<8x10xf32>
    %55 = arith.mulf %50, %54 : vector<8x10xf32>
    %cst_25 = arith.constant dense<0.000000e+00> : vector<8x8xf32>
    %56 = tpu.matmul %55, %36, %cst_25 {dimension_numbers = #tpu.dot_dimension_numbers<[1], [0], [0], [1], [0, 0, 1, 1], [], []>} : vector<8x10xf32>, vector<10x8xf32>, vector<8x8xf32> -> vector<8x8xf32>
    %c0_26 = arith.constant 0 : index
    %c0_27 = arith.constant 0 : index
    %c8 = arith.constant 8 : index
    %57 = vector.load %arg5[%c0_26, %c0_27, %c8] : memref<1x8x32xf32, #tpu.memory_space<vmem>>, vector<1x8x8xf32>
    %58 = vector.shape_cast %57 : vector<1x8x8xf32> to vector<8x8xf32>
    %59 = vector.shape_cast %56 : vector<8x8xf32> to vector<1x8x8xf32>
    tpu.vector_store %arg5[%c0_26, %c0_27, %c8], %59 {strides = array<i32>} : memref<1x8x32xf32, #tpu.memory_space<vmem>>, vector<1x8x8xf32>,
    %60 = vector.extract_strided_slice %1 {offsets = [0, 16], sizes = [8, 8], strides = [1, 1]} : vector<8x32xf32> to vector<8x8xf32>
    %61 = vector.extract_strided_slice %3 {offsets = [0, 16], sizes = [10, 8], strides = [1, 1]} : vector<10x32xf32> to vector<10x8xf32>
    %62 = vector.extract_strided_slice %5 {offsets = [0, 16], sizes = [10, 8], strides = [1, 1]} : vector<10x32xf32> to vector<10x8xf32>
    %cst_28 = arith.constant dense<0.000000e+00> : vector<8x10xf32>
    %63 = tpu.matmul %60, %61, %cst_28 {dimension_numbers = #tpu.dot_dimension_numbers<[1], [1], [0], [0], [0, 0, 1, 0], [], []>} : vector<8x8xf32>, vector<10x8xf32>, vector<8x10xf32> -> vector<8x10xf32>
    %cst_29 = arith.constant 0.353553385 : f32
    %64 = vector.broadcast %cst_29 : f32 to vector<8x10xf32>
    %65 = arith.mulf %63, %64 : vector<8x10xf32>
    %c0_i32_30 = arith.constant 0 : i32
    %66 = vector.broadcast %c0_i32_30 : i32 to vector<1x10xi32>
    %67 = arith.cmpi eq, %7, %66 : vector<1x10xi32>
    %cst_31 = arith.constant -1.000000e+09 : f32
    %68 = vector.shape_cast %67 : vector<1x10xi1> to vector<1x10xi1>
    %69 = vector.broadcast %68 : vector<1x10xi1> to vector<8x10xi1>
    %70 = vector.broadcast %cst_31 : f32 to vector<8x10xf32>
    %71 = arith.select %69, %70, %65 : vector<8x10xi1>, vector<8x10xf32>
    %cst_32 = arith.constant dense<0xFF800000> : vector<8xf32>
    %72 = vector.multi_reduction <maximumf>, %71, %cst_32 [1] : vector<8x10xf32> to vector<8xf32>
    %73 = vector.shape_cast %72 : vector<8xf32> to vector<8x1xf32>
    %74 = vector.broadcast %73 : vector<8x1xf32> to vector<8x10xf32>
    %75 = arith.subf %71, %74 : vector<8x10xf32>
    %76 = math.exp %75 : vector<8x10xf32>
    %cst_33 = arith.constant dense<0.000000e+00> : vector<8xf32>
    %77 = vector.multi_reduction <add>, %76, %cst_33 [1] : vector<8x10xf32> to vector<8xf32>
    %78 = vector.shape_cast %77 : vector<8xf32> to vector<8x1xf32>
    %79 = tpu.reciprocal %78 {approx = true} : vector<8x1xf32> -> vector<8x1xf32>
    %80 = vector.broadcast %79 : vector<8x1xf32> to vector<8x10xf32>
    %81 = arith.mulf %76, %80 : vector<8x10xf32>
    %cst_34 = arith.constant dense<0.000000e+00> : vector<8x8xf32>
    %82 = tpu.matmul %81, %62, %cst_34 {dimension_numbers = #tpu.dot_dimension_numbers<[1], [0], [0], [1], [0, 0, 1, 1], [], []>} : vector<8x10xf32>, vector<10x8xf32>, vector<8x8xf32> -> vector<8x8xf32>
    %c0_35 = arith.constant 0 : index
    %c0_36 = arith.constant 0 : index
    %c16 = arith.constant 16 : index
    %83 = vector.load %arg5[%c0_35, %c0_36, %c16] : memref<1x8x32xf32, #tpu.memory_space<vmem>>, vector<1x8x8xf32>
    %84 = vector.shape_cast %83 : vector<1x8x8xf32> to vector<8x8xf32>
    %85 = vector.shape_cast %82 : vector<8x8xf32> to vector<1x8x8xf32>
    tpu.vector_store %arg5[%c0_35, %c0_36, %c16], %85 {strides = array<i32>} : memref<1x8x32xf32, #tpu.memory_space<vmem>>, vector<1x8x8xf32>,
    %86 = vector.extract_strided_slice %1 {offsets = [0, 24], sizes = [8, 8], strides = [1, 1]} : vector<8x32xf32> to vector<8x8xf32>
    %87 = vector.extract_strided_slice %3 {offsets = [0, 24], sizes = [10, 8], strides = [1, 1]} : vector<10x32xf32> to vector<10x8xf32>
    %88 = vector.extract_strided_slice %5 {offsets = [0, 24], sizes = [10, 8], strides = [1, 1]} : vector<10x32xf32> to vector<10x8xf32>
    %cst_37 = arith.constant dense<0.000000e+00> : vector<8x10xf32>
    %89 = tpu.matmul %86, %87, %cst_37 {dimension_numbers = #tpu.dot_dimension_numbers<[1], [1], [0], [0], [0, 0, 1, 0], [], []>} : vector<8x8xf32>, vector<10x8xf32>, vector<8x10xf32> -> vector<8x10xf32>
    %cst_38 = arith.constant 0.353553385 : f32
    %90 = vector.broadcast %cst_38 : f32 to vector<8x10xf32>
    %91 = arith.mulf %89, %90 : vector<8x10xf32>
    %c0_i32_39 = arith.constant 0 : i32
    %92 = vector.broadcast %c0_i32_39 : i32 to vector<1x10xi32>
    %93 = arith.cmpi eq, %7, %92 : vector<1x10xi32>
    %cst_40 = arith.constant -1.000000e+09 : f32
    %94 = vector.shape_cast %93 : vector<1x10xi1> to vector<1x10xi1>
    %95 = vector.broadcast %94 : vector<1x10xi1> to vector<8x10xi1>
    %96 = vector.broadcast %cst_40 : f32 to vector<8x10xf32>
    %97 = arith.select %95, %96, %91 : vector<8x10xi1>, vector<8x10xf32>
    %cst_41 = arith.constant dense<0xFF800000> : vector<8xf32>
    %98 = vector.multi_reduction <maximumf>, %97, %cst_41 [1] : vector<8x10xf32> to vector<8xf32>
    %99 = vector.shape_cast %98 : vector<8xf32> to vector<8x1xf32>
    %100 = vector.broadcast %99 : vector<8x1xf32> to vector<8x10xf32>
    %101 = arith.subf %97, %100 : vector<8x10xf32>
    %102 = math.exp %101 : vector<8x10xf32>
    %cst_42 = arith.constant dense<0.000000e+00> : vector<8xf32>
    %103 = vector.multi_reduction <add>, %102, %cst_42 [1] : vector<8x10xf32> to vector<8xf32>
    %104 = vector.shape_cast %103 : vector<8xf32> to vector<8x1xf32>
    %105 = tpu.reciprocal %104 {approx = true} : vector<8x1xf32> -> vector<8x1xf32>
    %106 = vector.broadcast %105 : vector<8x1xf32> to vector<8x10xf32>
    %107 = arith.mulf %102, %106 : vector<8x10xf32>
    %cst_43 = arith.constant dense<0.000000e+00> : vector<8x8xf32>
    %108 = tpu.matmul %107, %88, %cst_43 {dimension_numbers = #tpu.dot_dimension_numbers<[1], [0], [0], [1], [0, 0, 1, 1], [], []>} : vector<8x10xf32>, vector<10x8xf32>, vector<8x8xf32> -> vector<8x8xf32>
    %c0_44 = arith.constant 0 : index
    %c0_45 = arith.constant 0 : index
    %c24 = arith.constant 24 : index
    %109 = vector.load %arg5[%c0_44, %c0_45, %c24] : memref<1x8x32xf32, #tpu.memory_space<vmem>>, vector<1x8x8xf32>
    %110 = vector.shape_cast %109 : vector<1x8x8xf32> to vector<8x8xf32>
    %111 = vector.shape_cast %108 : vector<8x8xf32> to vector<1x8x8xf32>
    tpu.vector_store %arg5[%c0_44, %c0_45, %c24], %111 {strides = array<i32>} : memref<1x8x32xf32, #tpu.memory_space<vmem>>, vector<1x8x8xf32>,
    return
  }
  func.func @transform_0(%arg0: i32) -> (i32, i32, i32) {
    %c0_i32 = arith.constant 0 : i32
    %c0_i32_0 = arith.constant 0 : i32
    %c0_i32_1 = arith.constant 0 : i32
    return %arg0, %c0_i32, %c0_i32_0 : i32, i32, i32
  }
  func.func @transform_1(%arg0: i32) -> (i32, i32, i32) {
    %c0_i32 = arith.constant 0 : i32
    %c0_i32_0 = arith.constant 0 : i32
    %c0_i32_1 = arith.constant 0 : i32
    return %arg0, %c0_i32, %c0_i32_0 : i32, i32, i32
  }
  func.func @transform_2(%arg0: i32) -> (i32, i32, i32) {
    %c0_i32 = arith.constant 0 : i32
    %c0_i32_0 = arith.constant 0 : i32
    %c0_i32_1 = arith.constant 0 : i32
    return %arg0, %c0_i32, %c0_i32_0 : i32, i32, i32
  }
  func.func @transform_3(%arg0: i32) -> (i32, i32, i32) {
    %c0_i32 = arith.constant 0 : i32
    %c0_i32_0 = arith.constant 0 : i32
    %c0_i32_1 = arith.constant 0 : i32
    return %arg0, %c0_i32, %c0_i32_0 : i32, i32, i32
  }
  func.func @transform_4(%arg0: i32) -> (i32, i32, i32) {
    %c0_i32 = arith.constant 0 : i32
    %c0_i32_0 = arith.constant 0 : i32
    %c0_i32_1 = arith.constant 0 : i32
    return %arg0, %c0_i32, %c0_i32_0 : i32, i32, i32
  }
}

module attributes {stable_mosaic.version = 11 : i64} {
  func.func @_linear_kernel(%arg0: i32, %arg1: i32, %arg2: i32, %arg3: memref<16x32xf32, #tpu.memory_space<vmem>>, %arg4: memref<32x512xbf16, #tpu.memory_space<vmem>>, %arg5: memref<1x512xf32, #tpu.memory_space<vmem>>, %arg6: memref<1x32xf32, #tpu.memory_space<vmem>>, %arg7: memref<1x32xf32, #tpu.memory_space<vmem>>, %arg8: memref<16x512xf32, #tpu.memory_space<vmem>>, %arg9: memref<16x512xf32, #tpu.memory_space<vmem>>) attributes {dimension_semantics = [#tpu.dimension_semantics<parallel>, #tpu.dimension_semantics<parallel>, #tpu.dimension_semantics<arbitrary>], iteration_bounds = array<i64: 1, 4, 1>, scalar_prefetch = 0 : i64, scratch_operands = 1 : i64, tpu.core_type = #tpu.core_type<tc>, window_params = [{transform_indices = @transform_0, window_bounds = array<i64: 16, 32>}, {transform_indices = @transform_1, window_bounds = array<i64: 32, 512>}, {transform_indices = @transform_2, window_bounds = array<i64: 1, 512>}, {transform_indices = @transform_3, window_bounds = array<i64: 1, 32>}, {transform_indices = @transform_4, window_bounds = array<i64: 1, 32>}, {transform_indices = @transform_5, window_bounds = array<i64: 16, 512>}]} {
    %c0_i32 = arith.constant 0 : i32
    %0 = arith.cmpi eq, %arg2, %c0_i32 : i32
    %1 = arith.extui %0 : i1 to i32
    %c0_i32_0 = arith.constant 0 : i32
    %2 = arith.cmpi ne, %1, %c0_i32_0 : i32
    scf.if %2 {
      %cst_19 = arith.constant 0.000000e+00 : f32
      %36 = vector.broadcast %cst_19 : f32 to vector<16x512xf32>
      %c0_20 = arith.constant 0 : index
      %c0_21 = arith.constant 0 : index
      %37 = vector.load %arg9[%c0_20, %c0_21] : memref<16x512xf32, #tpu.memory_space<vmem>>, vector<16x512xf32>
      tpu.vector_store %arg9[%c0_20, %c0_21], %36 {strides = array<i32>} : memref<16x512xf32, #tpu.memory_space<vmem>>, vector<16x512xf32>,
    } else {
    }
    %c0 = arith.constant 0 : index
    %c0_1 = arith.constant 0 : index
    %3 = vector.load %arg3[%c0, %c0_1] : memref<16x32xf32, #tpu.memory_space<vmem>>, vector<16x32xf32>
    %cst = arith.constant dense<0.000000e+00> : vector<16xf32>
    %4 = vector.multi_reduction <add>, %3, %cst [1] : vector<16x32xf32> to vector<16xf32>
    %5 = vector.shape_cast %4 : vector<16xf32> to vector<16x1xf32>
    %cst_2 = arith.constant 3.200000e+01 : f32
    %6 = vector.broadcast %cst_2 : f32 to vector<16x1xf32>
    %7 = arith.divf %5, %6 : vector<16x1xf32>
    %8 = vector.broadcast %7 : vector<16x1xf32> to vector<16x32xf32>
    %9 = arith.subf %3, %8 : vector<16x32xf32>
    %10 = arith.mulf %9, %9 : vector<16x32xf32>
    %cst_3 = arith.constant dense<0.000000e+00> : vector<16xf32>
    %11 = vector.multi_reduction <add>, %10, %cst_3 [1] : vector<16x32xf32> to vector<16xf32>
    %12 = vector.shape_cast %11 : vector<16xf32> to vector<16x1xf32>
    %cst_4 = arith.constant 0.0322580636 : f32
    %13 = vector.broadcast %cst_4 : f32 to vector<16x1xf32>
    %14 = arith.mulf %12, %13 : vector<16x1xf32>
    %15 = math.sqrt %14 : vector<16x1xf32>
    %cst_5 = arith.constant 9.99999997E-7 : f32
    %16 = vector.broadcast %cst_5 : f32 to vector<16x1xf32>
    %17 = arith.addf %15, %16 : vector<16x1xf32>
    %18 = tpu.reciprocal %17 {approx = true} : vector<16x1xf32> -> vector<16x1xf32>
    %c0_6 = arith.constant 0 : index
    %c0_7 = arith.constant 0 : index
    %19 = vector.load %arg6[%c0_6, %c0_7] : memref<1x32xf32, #tpu.memory_space<vmem>>, vector<1x32xf32>
    %20 = vector.broadcast %19 : vector<1x32xf32> to vector<16x32xf32>
    %21 = arith.mulf %20, %9 : vector<16x32xf32>
    %22 = vector.broadcast %18 : vector<16x1xf32> to vector<16x32xf32>
    %23 = arith.mulf %21, %22 : vector<16x32xf32>
    %c0_8 = arith.constant 0 : index
    %c0_9 = arith.constant 0 : index
    %24 = vector.load %arg7[%c0_8, %c0_9] : memref<1x32xf32, #tpu.memory_space<vmem>>, vector<1x32xf32>
    %25 = vector.broadcast %24 : vector<1x32xf32> to vector<16x32xf32>
    %26 = arith.addf %23, %25 : vector<16x32xf32>
    %c0_10 = arith.constant 0 : index
    %c0_11 = arith.constant 0 : index
    %27 = vector.load %arg9[%c0_10, %c0_11] : memref<16x512xf32, #tpu.memory_space<vmem>>, vector<16x512xf32>
    %28 = arith.truncf %26 : vector<16x32xf32> to vector<16x32xbf16>
    %c0_12 = arith.constant 0 : index
    %c0_13 = arith.constant 0 : index
    %29 = vector.load %arg4[%c0_12, %c0_13] : memref<32x512xbf16, #tpu.memory_space<vmem>>, vector<32x512xbf16>
    %cst_14 = arith.constant dense<0.000000e+00> : vector<16x512xf32>
    %30 = tpu.matmul %28, %29, %cst_14 {dimension_numbers = #tpu.dot_dimension_numbers<[1], [0], [0], [1], [0, 0, 1, 1], [], []>} : vector<16x32xbf16>, vector<32x512xbf16>, vector<16x512xf32> -> vector<16x512xf32>
    %31 = arith.addf %27, %30 : vector<16x512xf32>
    %c0_15 = arith.constant 0 : index
    %c0_16 = arith.constant 0 : index
    %32 = vector.load %arg9[%c0_15, %c0_16] : memref<16x512xf32, #tpu.memory_space<vmem>>, vector<16x512xf32>
    tpu.vector_store %arg9[%c0_15, %c0_16], %31 {strides = array<i32>} : memref<16x512xf32, #tpu.memory_space<vmem>>, vector<16x512xf32>,
    %c0_i32_17 = arith.constant 0 : i32
    %33 = arith.cmpi eq, %arg2, %c0_i32_17 : i32
    %34 = arith.extui %33 : i1 to i32
    %c0_i32_18 = arith.constant 0 : i32
    %35 = arith.cmpi ne, %34, %c0_i32_18 : i32
    scf.if %35 {
      %c0_19 = arith.constant 0 : index
      %c0_20 = arith.constant 0 : index
      %36 = vector.load %arg9[%c0_19, %c0_20] : memref<16x512xf32, #tpu.memory_space<vmem>>, vector<16x512xf32>
      %c0_21 = arith.constant 0 : index
      %c0_22 = arith.constant 0 : index
      %37 = vector.load %arg5[%c0_21, %c0_22] : memref<1x512xf32, #tpu.memory_space<vmem>>, vector<1x512xf32>
      %38 = vector.broadcast %37 : vector<1x512xf32> to vector<16x512xf32>
      %39 = arith.addf %36, %38 : vector<16x512xf32>
      %cst_23 = arith.constant 0.000000e+00 : f32
      %40 = vector.broadcast %cst_23 : f32 to vector<16x512xf32>
      %41 = arith.maximumf %39, %40 : vector<16x512xf32>
      %c0_24 = arith.constant 0 : index
      %c0_25 = arith.constant 0 : index
      %42 = vector.load %arg8[%c0_24, %c0_25] : memref<16x512xf32, #tpu.memory_space<vmem>>, vector<16x512xf32>
      tpu.vector_store %arg8[%c0_24, %c0_25], %41 {strides = array<i32>} : memref<16x512xf32, #tpu.memory_space<vmem>>, vector<16x512xf32>,
    } else {
    }
    return
  }
  func.func @transform_0(%arg0: i32, %arg1: i32, %arg2: i32) -> (i32, i32) {
    %c0_i32 = arith.constant 0 : i32
    return %arg0, %arg2 : i32, i32
  }
  func.func @transform_1(%arg0: i32, %arg1: i32, %arg2: i32) -> (i32, i32) {
    %c0_i32 = arith.constant 0 : i32
    return %arg2, %arg1 : i32, i32
  }
  func.func @transform_2(%arg0: i32, %arg1: i32, %arg2: i32) -> (i32, i32) {
    %c0_i32 = arith.constant 0 : i32
    %c0_i32_0 = arith.constant 0 : i32
    return %c0_i32, %arg1 : i32, i32
  }
  func.func @transform_3(%arg0: i32, %arg1: i32, %arg2: i32) -> (i32, i32) {
    %c0_i32 = arith.constant 0 : i32
    %c0_i32_0 = arith.constant 0 : i32
    return %c0_i32, %arg2 : i32, i32
  }
  func.func @transform_4(%arg0: i32, %arg1: i32, %arg2: i32) -> (i32, i32) {
    %c0_i32 = arith.constant 0 : i32
    %c0_i32_0 = arith.constant 0 : i32
    return %c0_i32, %arg2 : i32, i32
  }
  func.func @transform_5(%arg0: i32, %arg1: i32, %arg2: i32) -> (i32, i32) {
    %c0_i32 = arith.constant 0 : i32
    return %arg0, %arg1 : i32, i32
  }
}

module attributes {stable_mosaic.version = 11 : i64} {
  func.func @_linear_kernel(%arg0: i32, %arg1: i32, %arg2: i32, %arg3: memref<16x512xf32, #tpu.memory_space<vmem>>, %arg4: memref<512x32xbf16, #tpu.memory_space<vmem>>, %arg5: memref<1x32xf32, #tpu.memory_space<vmem>>, %arg6: memref<16x32xf32, #tpu.memory_space<vmem>>, %arg7: memref<16x32xf32, #tpu.memory_space<vmem>>, %arg8: memref<16x32xf32, #tpu.memory_space<vmem>>) attributes {dimension_semantics = [#tpu.dimension_semantics<parallel>, #tpu.dimension_semantics<parallel>, #tpu.dimension_semantics<arbitrary>], iteration_bounds = array<i64: 1, 1, 4>, scalar_prefetch = 0 : i64, scratch_operands = 1 : i64, tpu.core_type = #tpu.core_type<tc>, window_params = [{transform_indices = @transform_0, window_bounds = array<i64: 16, 512>}, {transform_indices = @transform_1, window_bounds = array<i64: 512, 32>}, {transform_indices = @transform_2, window_bounds = array<i64: 1, 32>}, {transform_indices = @transform_3, window_bounds = array<i64: 16, 32>}, {transform_indices = @transform_4, window_bounds = array<i64: 16, 32>}]} {
    %c0_i32 = arith.constant 0 : i32
    %0 = arith.cmpi eq, %arg2, %c0_i32 : i32
    %1 = arith.extui %0 : i1 to i32
    %c0_i32_0 = arith.constant 0 : i32
    %2 = arith.cmpi ne, %1, %c0_i32_0 : i32
    scf.if %2 {
      %cst_9 = arith.constant 0.000000e+00 : f32
      %13 = vector.broadcast %cst_9 : f32 to vector<16x32xf32>
      %c0_10 = arith.constant 0 : index
      %c0_11 = arith.constant 0 : index
      %14 = vector.load %arg8[%c0_10, %c0_11] : memref<16x32xf32, #tpu.memory_space<vmem>>, vector<16x32xf32>
      tpu.vector_store %arg8[%c0_10, %c0_11], %13 {strides = array<i32>} : memref<16x32xf32, #tpu.memory_space<vmem>>, vector<16x32xf32>,
    } else {
    }
    %c0 = arith.constant 0 : index
    %c0_1 = arith.constant 0 : index
    %3 = vector.load %arg3[%c0, %c0_1] : memref<16x512xf32, #tpu.memory_space<vmem>>, vector<16x512xf32>
    %c0_2 = arith.constant 0 : index
    %c0_3 = arith.constant 0 : index
    %4 = vector.load %arg8[%c0_2, %c0_3] : memref<16x32xf32, #tpu.memory_space<vmem>>, vector<16x32xf32>
    %5 = arith.truncf %3 : vector<16x512xf32> to vector<16x512xbf16>
    %c0_4 = arith.constant 0 : index
    %c0_5 = arith.constant 0 : index
    %6 = vector.load %arg4[%c0_4, %c0_5] : memref<512x32xbf16, #tpu.memory_space<vmem>>, vector<512x32xbf16>
    %cst = arith.constant dense<0.000000e+00> : vector<16x32xf32>
    %7 = tpu.matmul %5, %6, %cst {dimension_numbers = #tpu.dot_dimension_numbers<[1], [0], [0], [1], [0, 0, 1, 1], [], []>} : vector<16x512xbf16>, vector<512x32xbf16>, vector<16x32xf32> -> vector<16x32xf32>
    %8 = arith.addf %4, %7 : vector<16x32xf32>
    %c0_6 = arith.constant 0 : index
    %c0_7 = arith.constant 0 : index
    %9 = vector.load %arg8[%c0_6, %c0_7] : memref<16x32xf32, #tpu.memory_space<vmem>>, vector<16x32xf32>
    tpu.vector_store %arg8[%c0_6, %c0_7], %8 {strides = array<i32>} : memref<16x32xf32, #tpu.memory_space<vmem>>, vector<16x32xf32>,
    %c3_i32 = arith.constant 3 : i32
    %10 = arith.cmpi eq, %arg2, %c3_i32 : i32
    %11 = arith.extui %10 : i1 to i32
    %c0_i32_8 = arith.constant 0 : i32
    %12 = arith.cmpi ne, %11, %c0_i32_8 : i32
    scf.if %12 {
      %c0_9 = arith.constant 0 : index
      %c0_10 = arith.constant 0 : index
      %13 = vector.load %arg8[%c0_9, %c0_10] : memref<16x32xf32, #tpu.memory_space<vmem>>, vector<16x32xf32>
      %c0_11 = arith.constant 0 : index
      %c0_12 = arith.constant 0 : index
      %14 = vector.load %arg5[%c0_11, %c0_12] : memref<1x32xf32, #tpu.memory_space<vmem>>, vector<1x32xf32>
      %15 = vector.broadcast %14 : vector<1x32xf32> to vector<16x32xf32>
      %16 = arith.addf %13, %15 : vector<16x32xf32>
      %c0_13 = arith.constant 0 : index
      %c0_14 = arith.constant 0 : index
      %17 = vector.load %arg6[%c0_13, %c0_14] : memref<16x32xf32, #tpu.memory_space<vmem>>, vector<16x32xf32>
      %18 = arith.addf %16, %17 : vector<16x32xf32>
      %c0_15 = arith.constant 0 : index
      %c0_16 = arith.constant 0 : index
      %19 = vector.load %arg7[%c0_15, %c0_16] : memref<16x32xf32, #tpu.memory_space<vmem>>, vector<16x32xf32>
      tpu.vector_store %arg7[%c0_15, %c0_16], %18 {strides = array<i32>} : memref<16x32xf32, #tpu.memory_space<vmem>>, vector<16x32xf32>,
    } else {
    }
    return
  }
  func.func @transform_0(%arg0: i32, %arg1: i32, %arg2: i32) -> (i32, i32) {
    %c0_i32 = arith.constant 0 : i32
    return %arg0, %arg2 : i32, i32
  }
  func.func @transform_1(%arg0: i32, %arg1: i32, %arg2: i32) -> (i32, i32) {
    %c0_i32 = arith.constant 0 : i32
    return %arg2, %arg1 : i32, i32
  }
  func.func @transform_2(%arg0: i32, %arg1: i32, %arg2: i32) -> (i32, i32) {
    %c0_i32 = arith.constant 0 : i32
    %c0_i32_0 = arith.constant 0 : i32
    return %c0_i32, %arg1 : i32, i32
  }
  func.func @transform_3(%arg0: i32, %arg1: i32, %arg2: i32) -> (i32, i32) {
    %c0_i32 = arith.constant 0 : i32
    return %arg0, %arg1 : i32, i32
  }
  func.func @transform_4(%arg0: i32, %arg1: i32, %arg2: i32) -> (i32, i32) {
    %c0_i32 = arith.constant 0 : i32
    return %arg0, %arg1 : i32, i32
  }
}

module attributes {stable_mosaic.version = 11 : i64} {
  func.func @_linear_kernel(%arg0: i32, %arg1: i32, %arg2: i32, %arg3: memref<16x32xf32, #tpu.memory_space<vmem>>, %arg4: memref<32x41xbf16, #tpu.memory_space<vmem>>, %arg5: memref<1x41xf32, #tpu.memory_space<vmem>>, %arg6: memref<1x32xf32, #tpu.memory_space<vmem>>, %arg7: memref<1x32xf32, #tpu.memory_space<vmem>>, %arg8: memref<16x41xf32, #tpu.memory_space<vmem>>, %arg9: memref<16x41xf32, #tpu.memory_space<vmem>>) attributes {dimension_semantics = [#tpu.dimension_semantics<parallel>, #tpu.dimension_semantics<parallel>, #tpu.dimension_semantics<arbitrary>], iteration_bounds = array<i64: 1, 1, 1>, scalar_prefetch = 0 : i64, scratch_operands = 1 : i64, tpu.core_type = #tpu.core_type<tc>, window_params = [{transform_indices = @transform_0, window_bounds = array<i64: 16, 32>}, {transform_indices = @transform_1, window_bounds = array<i64: 32, 41>}, {transform_indices = @transform_2, window_bounds = array<i64: 1, 41>}, {transform_indices = @transform_3, window_bounds = array<i64: 1, 32>}, {transform_indices = @transform_4, window_bounds = array<i64: 1, 32>}, {transform_indices = @transform_5, window_bounds = array<i64: 16, 41>}]} {
    %c0_i32 = arith.constant 0 : i32
    %0 = arith.cmpi eq, %arg2, %c0_i32 : i32
    %1 = arith.extui %0 : i1 to i32
    %c0_i32_0 = arith.constant 0 : i32
    %2 = arith.cmpi ne, %1, %c0_i32_0 : i32
    scf.if %2 {
      %cst_19 = arith.constant 0.000000e+00 : f32
      %36 = vector.broadcast %cst_19 : f32 to vector<16x41xf32>
      %c0_20 = arith.constant 0 : index
      %c0_21 = arith.constant 0 : index
      %37 = vector.load %arg9[%c0_20, %c0_21] : memref<16x41xf32, #tpu.memory_space<vmem>>, vector<16x41xf32>
      tpu.vector_store %arg9[%c0_20, %c0_21], %36 {strides = array<i32>} : memref<16x41xf32, #tpu.memory_space<vmem>>, vector<16x41xf32>,
    } else {
    }
    %c0 = arith.constant 0 : index
    %c0_1 = arith.constant 0 : index
    %3 = vector.load %arg3[%c0, %c0_1] : memref<16x32xf32, #tpu.memory_space<vmem>>, vector<16x32xf32>
    %cst = arith.constant dense<0.000000e+00> : vector<16xf32>
    %4 = vector.multi_reduction <add>, %3, %cst [1] : vector<16x32xf32> to vector<16xf32>
    %5 = vector.shape_cast %4 : vector<16xf32> to vector<16x1xf32>
    %cst_2 = arith.constant 3.200000e+01 : f32
    %6 = vector.broadcast %cst_2 : f32 to vector<16x1xf32>
    %7 = arith.divf %5, %6 : vector<16x1xf32>
    %8 = vector.broadcast %7 : vector<16x1xf32> to vector<16x32xf32>
    %9 = arith.subf %3, %8 : vector<16x32xf32>
    %10 = arith.mulf %9, %9 : vector<16x32xf32>
    %cst_3 = arith.constant dense<0.000000e+00> : vector<16xf32>
    %11 = vector.multi_reduction <add>, %10, %cst_3 [1] : vector<16x32xf32> to vector<16xf32>
    %12 = vector.shape_cast %11 : vector<16xf32> to vector<16x1xf32>
    %cst_4 = arith.constant 0.0322580636 : f32
    %13 = vector.broadcast %cst_4 : f32 to vector<16x1xf32>
    %14 = arith.mulf %12, %13 : vector<16x1xf32>
    %15 = math.sqrt %14 : vector<16x1xf32>
    %cst_5 = arith.constant 9.99999997E-7 : f32
    %16 = vector.broadcast %cst_5 : f32 to vector<16x1xf32>
    %17 = arith.addf %15, %16 : vector<16x1xf32>
    %18 = tpu.reciprocal %17 {approx = true} : vector<16x1xf32> -> vector<16x1xf32>
    %c0_6 = arith.constant 0 : index
    %c0_7 = arith.constant 0 : index
    %19 = vector.load %arg6[%c0_6, %c0_7] : memref<1x32xf32, #tpu.memory_space<vmem>>, vector<1x32xf32>
    %20 = vector.broadcast %19 : vector<1x32xf32> to vector<16x32xf32>
    %21 = arith.mulf %20, %9 : vector<16x32xf32>
    %22 = vector.broadcast %18 : vector<16x1xf32> to vector<16x32xf32>
    %23 = arith.mulf %21, %22 : vector<16x32xf32>
    %c0_8 = arith.constant 0 : index
    %c0_9 = arith.constant 0 : index
    %24 = vector.load %arg7[%c0_8, %c0_9] : memref<1x32xf32, #tpu.memory_space<vmem>>, vector<1x32xf32>
    %25 = vector.broadcast %24 : vector<1x32xf32> to vector<16x32xf32>
    %26 = arith.addf %23, %25 : vector<16x32xf32>
    %c0_10 = arith.constant 0 : index
    %c0_11 = arith.constant 0 : index
    %27 = vector.load %arg9[%c0_10, %c0_11] : memref<16x41xf32, #tpu.memory_space<vmem>>, vector<16x41xf32>
    %28 = arith.truncf %26 : vector<16x32xf32> to vector<16x32xbf16>
    %c0_12 = arith.constant 0 : index
    %c0_13 = arith.constant 0 : index
    %29 = vector.load %arg4[%c0_12, %c0_13] : memref<32x41xbf16, #tpu.memory_space<vmem>>, vector<32x41xbf16>
    %cst_14 = arith.constant dense<0.000000e+00> : vector<16x41xf32>
    %30 = tpu.matmul %28, %29, %cst_14 {dimension_numbers = #tpu.dot_dimension_numbers<[1], [0], [0], [1], [0, 0, 1, 1], [], []>} : vector<16x32xbf16>, vector<32x41xbf16>, vector<16x41xf32> -> vector<16x41xf32>
    %31 = arith.addf %27, %30 : vector<16x41xf32>
    %c0_15 = arith.constant 0 : index
    %c0_16 = arith.constant 0 : index
    %32 = vector.load %arg9[%c0_15, %c0_16] : memref<16x41xf32, #tpu.memory_space<vmem>>, vector<16x41xf32>
    tpu.vector_store %arg9[%c0_15, %c0_16], %31 {strides = array<i32>} : memref<16x41xf32, #tpu.memory_space<vmem>>, vector<16x41xf32>,
    %c0_i32_17 = arith.constant 0 : i32
    %33 = arith.cmpi eq, %arg2, %c0_i32_17 : i32
    %34 = arith.extui %33 : i1 to i32
    %c0_i32_18 = arith.constant 0 : i32
    %35 = arith.cmpi ne, %34, %c0_i32_18 : i32
    scf.if %35 {
      %c0_19 = arith.constant 0 : index
      %c0_20 = arith.constant 0 : index
      %36 = vector.load %arg9[%c0_19, %c0_20] : memref<16x41xf32, #tpu.memory_space<vmem>>, vector<16x41xf32>
      %c0_21 = arith.constant 0 : index
      %c0_22 = arith.constant 0 : index
      %37 = vector.load %arg5[%c0_21, %c0_22] : memref<1x41xf32, #tpu.memory_space<vmem>>, vector<1x41xf32>
      %38 = vector.broadcast %37 : vector<1x41xf32> to vector<16x41xf32>
      %39 = arith.addf %36, %38 : vector<16x41xf32>
      %c0_23 = arith.constant 0 : index
      %c0_24 = arith.constant 0 : index
      %40 = vector.load %arg8[%c0_23, %c0_24] : memref<16x41xf32, #tpu.memory_space<vmem>>, vector<16x41xf32>
      tpu.vector_store %arg8[%c0_23, %c0_24], %39 {strides = array<i32>} : memref<16x41xf32, #tpu.memory_space<vmem>>, vector<16x41xf32>,
    } else {
    }
    return
  }
  func.func @transform_0(%arg0: i32, %arg1: i32, %arg2: i32) -> (i32, i32) {
    %c0_i32 = arith.constant 0 : i32
    return %arg0, %arg2 : i32, i32
  }
  func.func @transform_1(%arg0: i32, %arg1: i32, %arg2: i32) -> (i32, i32) {
    %c0_i32 = arith.constant 0 : i32
    return %arg2, %arg1 : i32, i32
  }
  func.func @transform_2(%arg0: i32, %arg1: i32, %arg2: i32) -> (i32, i32) {
    %c0_i32 = arith.constant 0 : i32
    %c0_i32_0 = arith.constant 0 : i32
    return %c0_i32, %arg1 : i32, i32
  }
  func.func @transform_3(%arg0: i32, %arg1: i32, %arg2: i32) -> (i32, i32) {
    %c0_i32 = arith.constant 0 : i32
    %c0_i32_0 = arith.constant 0 : i32
    return %c0_i32, %arg2 : i32, i32
  }
  func.func @transform_4(%arg0: i32, %arg1: i32, %arg2: i32) -> (i32, i32) {
    %c0_i32 = arith.constant 0 : i32
    %c0_i32_0 = arith.constant 0 : i32
    return %c0_i32, %arg2 : i32, i32
  }
  func.func @transform_5(%arg0: i32, %arg1: i32, %arg2: i32) -> (i32, i32) {
    %c0_i32 = arith.constant 0 : i32
    return %arg0, %arg1 : i32, i32
  }
}

</mosaic_0001>

<llo_original>
// kernel: transformer_forward.32
$region0: #{transformer_forward.32}
  #allocation0 [shape = 'u32[]', space=smem, size = 0x4, offset = 0x4, fixed_abs, tag = 'smem constant byte address 0x4 - core index']
  #allocation1 [shape = 'u32[72,128]{1,0:T(1,128)}', space=vmem, size = 0x9000, scoped, tag = 'internal scratch']
  #allocation2 [shape = 'f32[20,32]{1,0:T(8,128)}', space=vmem, size = 0x3000, scoped, tag = 'scratch operand']
  %s0 = inlined_call_operand.vmem [shape: f32[20,32], index: 0, kind: input, shape index: {}]
  %s1 = inlined_call_operand.vmem [shape: bf16[32,32], index: 1, kind: input, shape index: {}]
  %s2 = inlined_call_operand.vmem [shape: f32[1,32], index: 2, kind: input, shape index: {}]
  %s3 = inlined_call_operand.vmem [shape: f32[20,32], index: 3, kind: input, shape index: {}]
  %s4 = inlined_call_operand.vmem [shape: f32[20,32], index: 4, kind: output, shape index: {}]
  %s5 = sld [smem:[#allocation0]]
  $region34: #{transformer_forward.32} parent=0
    _
  %s7 = ssub.s32 1, %s5
  %s8 = scalar_select 0, %s7, %s5
  // Predicated region
  $region2: #{transformer_forward.32} parent=0 // pred_check
    _
  $region3: #{transformer_forward.32} parent=0 // pred_check_branch
    %10 = sbr.rel (0) target = $region5
  $region4: #{transformer_forward.32} parent=0 // pred_region
    _
  $region5: #{transformer_forward.32} parent=0 // pred_fallthru
    _
  // Predicated region
  $region6: #{transformer_forward.32} parent=0 // pred_check
    _
  $region7: #{transformer_forward.32} parent=0 // pred_check_branch
    %12 = sbr.rel (0) target = $region9
  $region8: #{transformer_forward.32} parent=0 // pred_region
    _
  $region9: #{transformer_forward.32} parent=0 // pred_fallthru
    _
  // Predicated region
  $region10: #{transformer_forward.32} parent=0 // pred_check
    _
  $region11: #{transformer_forward.32} parent=0 // pred_check_branch
    %14 = sbr.rel (0) target = $region13
  $region12: #{transformer_forward.32} parent=0 // pred_region
    _
  $region13: #{transformer_forward.32} parent=0 // pred_fallthru
    _
  // Predicated region
  $region14: #{transformer_forward.32} parent=0 // pred_check
    _
  $region15: #{transformer_forward.32} parent=0 // pred_check_branch
    %16 = sbr.rel (0) target = $region17
  $region16: #{transformer_forward.32} parent=0 // pred_region
    _
  $region17: #{transformer_forward.32} parent=0 // pred_fallthru
    _
  %p18 = scmp.eq.s32.totalorder 0, 0
  // Predicated region
  $region18: #{transformer_forward.32} parent=0 // pred_check
    %p19 = pneg %p18
  $region19: #{transformer_forward.32} parent=0 // pred_check_branch
    %21 = sbr.rel (%p19) target = $region21
  $region20: #{transformer_forward.32} parent=0 // pred_region
    %vm22 = vcmask 261120
    %23 = vst.msk [vmem:[#allocation2] sm:$0xff] %vm22, 0.0
    %24 = vst.msk [vmem:[#allocation2 + $0x8] sm:$0xff] %vm22, 0.0
    %vm25 = vcmask 257024
    %26 = vst.msk [vmem:[#allocation2 + $0x10] sm:$0xf] %vm25, 0.0
  $region21: #{transformer_forward.32} parent=0 // pred_fallthru
    _
  %v27 = vld [vmem:[%s0] sm:$0xff]
  %v28 = vld [vmem:[%s0 + $0x8] sm:$0xff]
  %v29 = vld [vmem:[%s0 + $0x10] sm:$0xf]
  %v30 = vld [vmem:[#allocation2] sm:$0xff]
  %v31 = vld [vmem:[#allocation2 + $0x8] sm:$0xff]
  %v32 = vld [vmem:[#allocation2 + $0x10] sm:$0xf]
  %v33 = vpack.c.bf16 %v28, %v27
  %v34 = vpack.c.bf16 %v29, %v29
  %v35 = vld [vmem:[%s1] sm:$0xf]
  %v36 = vld [vmem:[%s1 + $0x4] sm:$0xf]
  %v37 = vld [vmem:[%s1 + $0x8] sm:$0xf]
  %v38 = vld [vmem:[%s1 + $0xc] sm:$0xf]
  %v43 = vunpack.c.l.b16 %v35
  %v44 = vunpack.c.l.b16 %v36
  %v45 = vunpack.c.l.b16 %v37
  %v46 = vunpack.c.l.b16 %v38
  %v47 = vpack.c.b16 %v44, %v43
  %v48 = vpack.c.b16 %v46, %v45
  %vm51 = vcmask 261120
  %v53 = vsel %vm51, %v33, 0
  %v56 = vsel %vm51, %v34, 0
  %58 = vmatpush.bf16.msra.mxu0 0
  %59 = vmatpush.bf16.msra.mxu0 0
  %60 = vmatpush.bf16.msra.mxu0 0
  %61 = vmatpush.bf16.msra.mxu0 0
  %62 = vmatpush.bf16.msra.mxu0 0
  %63 = vmatpush.bf16.msra.mxu0 0
  %64 = vmatpush.bf16.msra.mxu0 %v48
  %65 = vmatpush.bf16.msra.mxu0 %v47
  %66 = vmatmul.bf16.gmra.mxu0 %v53
  %v67 = vpop.f32.mrf.mxu0
  %v68 = vadd.f32 0.0, %v67
  %v69 = vpop.f32.mrf.mxu0
  %v70 = vadd.f32 0.0, %v69
  %71 = vmatmul.bf16.gmra.mxu0 %v56
  %v72 = vpop.f32.mrf.mxu0
  %v73 = vadd.f32 0.0, %v72
  %v74 = vpop.f32.mrf.mxu0
  %75 = vdwg.mxu0
  %v76 = vadd.f32 %v30, %v68
  %v77 = vadd.f32 %v31, %v70
  %v78 = vadd.f32 %v32, %v73
  %79 = vst.msk [vmem:[#allocation2] sm:$0xff] %vm51, %v76
  %80 = vst.msk [vmem:[#allocation2 + $0x8] sm:$0xff] %vm51, %v77
  %vm81 = vcmask 257024
  %82 = vst.msk [vmem:[#allocation2 + $0x10] sm:$0xf] %vm81, %v78
  // Predicated region
  $region22: #{transformer_forward.32} parent=0 // pred_check
    %p83 = pneg %p18
  $region23: #{transformer_forward.32} parent=0 // pred_check_branch
    %85 = sbr.rel (%p83) target = $region25
  $region24: #{transformer_forward.32} parent=0 // pred_region
    %v86 = vld [vmem:[#allocation2] sm:$0xff]
    %v87 = vld [vmem:[#allocation2 + $0x8] sm:$0xff]
    %v88 = vld [vmem:[#allocation2 + $0x10] sm:$0xf]
    %v89 = vld [vmem:[%s2] sm:$0x1]
    %v91 = vperm.slane %v89, 0
    %v93 = vadd.f32 %v86, %v91
    %v94 = vadd.f32 %v87, %v91
    %v95 = vadd.f32 %v88, %v91
    %v96 = vld [vmem:[%s3] sm:$0xff]
    %v97 = vld [vmem:[%s3 + $0x8] sm:$0xff]
    %v98 = vld [vmem:[%s3 + $0x10] sm:$0xf]
    %v99 = vadd.f32 %v93, %v96
    %v100 = vadd.f32 %v94, %v97
    %v101 = vadd.f32 %v95, %v98
    %102 = vst.msk [vmem:[%s4] sm:$0xff] %vm51, %v99
    %103 = vst.msk [vmem:[%s4 + $0x8] sm:$0xff] %vm51, %v100
    %104 = vst.msk [vmem:[%s4 + $0x10] sm:$0xf] %vm81, %v101
  $region25: #{transformer_forward.32} parent=0 // pred_fallthru
    _
  // Predicated region
  $region26: #{transformer_forward.32} parent=0 // pred_check
    _
  $region27: #{transformer_forward.32} parent=0 // pred_check_branch
    %106 = sbr.rel (0) target = $region29
  $region28: #{transformer_forward.32} parent=0 // pred_region
    _
  $region29: #{transformer_forward.32} parent=0 // pred_fallthru
    _
  // Predicated region
  $region30: #{transformer_forward.32} parent=0 // pred_check
    _
  $region31: #{transformer_forward.32} parent=0 // pred_check_branch
    %108 = sbr.rel (0) target = $region33
  $region32: #{transformer_forward.32} parent=0 // pred_region
    _
  $region33: #{transformer_forward.32} parent=0 // pred_fallthru
    _

// kernel: transformer_forward.30
$region0: #{transformer_forward.30}
  #allocation0 [shape = 'u32[]', space=smem, size = 0x4, offset = 0x4, fixed_abs, tag = 'smem constant byte address 0x4 - core index']
  #allocation1 [shape = 'u32[72,128]{1,0:T(1,128)}', space=vmem, size = 0x9000, scoped, tag = 'internal scratch']
  #allocation2 [shape = 'f32[20,96]{1,0:T(8,128)}', space=vmem, size = 0x3000, scoped, tag = 'scratch operand']
  %s0 = inlined_call_operand.vmem [shape: f32[20,32], index: 0, kind: input, shape index: {}]
  %s1 = inlined_call_operand.vmem [shape: bf16[32,96], index: 1, kind: input, shape index: {}]
  %s2 = inlined_call_operand.vmem [shape: f32[1,96], index: 2, kind: input, shape index: {}]
  %s3 = inlined_call_operand.vmem [shape: f32[1,32], index: 3, kind: input, shape index: {}]
  %s4 = inlined_call_operand.vmem [shape: f32[1,32], index: 4, kind: input, shape index: {}]
  %s5 = inlined_call_operand.vmem [shape: f32[20,96], index: 5, kind: output, shape index: {}]
  %s6 = sld [smem:[#allocation0]]
  $region38: #{transformer_forward.30} parent=0
    _
  %s8 = ssub.s32 1, %s6
  %s9 = scalar_select 0, %s8, %s6
  // Predicated region
  $region2: #{transformer_forward.30} parent=0 // pred_check
    _
  $region3: #{transformer_forward.30} parent=0 // pred_check_branch
    %11 = sbr.rel (0) target = $region5
  $region4: #{transformer_forward.30} parent=0 // pred_region
    _
  $region5: #{transformer_forward.30} parent=0 // pred_fallthru
    _
  // Predicated region
  $region6: #{transformer_forward.30} parent=0 // pred_check
    _
  $region7: #{transformer_forward.30} parent=0 // pred_check_branch
    %13 = sbr.rel (0) target = $region9
  $region8: #{transformer_forward.30} parent=0 // pred_region
    _
  $region9: #{transformer_forward.30} parent=0 // pred_fallthru
    _
  // Predicated region
  $region10: #{transformer_forward.30} parent=0 // pred_check
    _
  $region11: #{transformer_forward.30} parent=0 // pred_check_branch
    %15 = sbr.rel (0) target = $region13
  $region12: #{transformer_forward.30} parent=0 // pred_region
    _
  $region13: #{transformer_forward.30} parent=0 // pred_fallthru
    _
  // Predicated region
  $region14: #{transformer_forward.30} parent=0 // pred_check
    _
  $region15: #{transformer_forward.30} parent=0 // pred_check_branch
    %17 = sbr.rel (0) target = $region17
  $region16: #{transformer_forward.30} parent=0 // pred_region
    _
  $region17: #{transformer_forward.30} parent=0 // pred_fallthru
    _
  // Predicated region
  $region18: #{transformer_forward.30} parent=0 // pred_check
    _
  $region19: #{transformer_forward.30} parent=0 // pred_check_branch
    %19 = sbr.rel (0) target = $region21
  $region20: #{transformer_forward.30} parent=0 // pred_region
    _
  $region21: #{transformer_forward.30} parent=0 // pred_fallthru
    _
  %p21 = scmp.eq.s32.totalorder 0, 0
  // Predicated region
  $region22: #{transformer_forward.30} parent=0 // pred_check
    %p22 = pneg %p21
  $region23: #{transformer_forward.30} parent=0 // pred_check_branch
    %24 = sbr.rel (%p22) target = $region25
  $region24: #{transformer_forward.30} parent=0 // pred_region
    %vm25 = vcmask 785408
    %26 = vst.msk [vmem:[#allocation2] sm:$0xff] %vm25, 0.0
    %27 = vst.msk [vmem:[#allocation2 + $0x8] sm:$0xff] %vm25, 0.0
    %vm28 = vcmask 781312
    %29 = vst.msk [vmem:[#allocation2 + $0x10] sm:$0xf] %vm28, 0.0
  $region25: #{transformer_forward.30} parent=0 // pred_fallthru
    _
  %v30 = vld [vmem:[%s0] sm:$0xff]
  %v31 = vld [vmem:[%s0 + $0x8] sm:$0xff]
  %v32 = vld [vmem:[%s0 + $0x10] sm:$0xf]
  %vm33 = vcmask 261120
  %v34 = vsel %vm33, %v30, 0.0
  %35 = vadd.xlane.f32.xlu0 %v34
  %v36 = vpop.xlane.xlu0 %35
  %v37 = vsel %vm33, %v31, 0.0
  %38 = vadd.xlane.f32.xlu0 %v37
  %v39 = vpop.xlane.xlu0 %38
  %vm40 = vcmask 257024
  %v41 = vsel %vm40, %v32, 0.0
  %42 = vadd.xlane.f32.xlu0 %v41
  %v43 = vpop.xlane.xlu0 %42
  %v44 = vrcp.pop 32.0
  %v45 = vmul.f32 32.0, %v44
  %v46 = vsub.f32 1.0, %v45
  %v47 = vmul.f32 %v44, %v46
  %v48 = vadd.f32 %v44, %v47
  %vm49 = vweird.f32 %v44
  %v50 = vsel %vm49, %v44, %v48
  %v51 = vmul.f32 %v36, %v50
  %v52 = vmul.f32 %v39, %v50
  %v53 = vmul.f32 %v43, %v50
  %v54 = vsub.f32 %v30, %v51
  %v55 = vsub.f32 %v31, %v52
  %v56 = vsub.f32 %v32, %v53
  %v57 = vmul.f32 %v54, %v54
  %v58 = vmul.f32 %v55, %v55
  %v59 = vmul.f32 %v56, %v56
  %v60 = vsel %vm33, %v57, 0.0
  %61 = vadd.xlane.f32.xlu0 %v60
  %v62 = vpop.xlane.xlu0 %61
  %v63 = vsel %vm33, %v58, 0.0
  %64 = vadd.xlane.f32.xlu0 %v63
  %v65 = vpop.xlane.xlu0 %64
  %v66 = vsel %vm40, %v59, 0.0
  %67 = vadd.xlane.f32.xlu0 %v66
  %v68 = vpop.xlane.xlu0 %67
  %v69 = vmul.f32 %v62, 0.032258064
  %v70 = vmul.f32 %v65, 0.032258064
  %v71 = vmul.f32 %v68, 0.032258064
  %v72 = vrsqrt.pop %v69
  %v73 = vmul.f32 %v72, %v69
  %v74 = vmul.f32 %v73, %v72
  %v75 = vmul.f32 0.5, %v74
  %v76 = vsub.f32 1.5, %v75
  %v77 = vmul.f32 %v72, %v76
  %v78 = vmul.f32 %v69, %v77
  %vm79 = vcmp.eq.f32.partialorder %v69, inf
  %v80 = vsel %vm79, %v69, %v78
  %vm81 = vcmp.eq.f32.partialorder %v69, 0.0
  %v82 = vand.u32 %v69, 2147483648
  %v83 = vsel %vm81, %v82, %v80
  %v84 = vrsqrt.pop %v70
  %v85 = vmul.f32 %v84, %v70
  %v86 = vmul.f32 %v85, %v84
  %v87 = vmul.f32 0.5, %v86
  %v88 = vsub.f32 1.5, %v87
  %v89 = vmul.f32 %v84, %v88
  %v90 = vmul.f32 %v70, %v89
  %vm91 = vcmp.eq.f32.partialorder %v70, inf
  %v92 = vsel %vm91, %v70, %v90
  %vm93 = vcmp.eq.f32.partialorder %v70, 0.0
  %v94 = vand.u32 %v70, 2147483648
  %v95 = vsel %vm93, %v94, %v92
  %v96 = vrsqrt.pop %v71
  %v97 = vmul.f32 %v96, %v71
  %v98 = vmul.f32 %v97, %v96
  %v99 = vmul.f32 0.5, %v98
  %v100 = vsub.f32 1.5, %v99
  %v101 = vmul.f32 %v96, %v100
  %v102 = vmul.f32 %v71, %v101
  %vm103 = vcmp.eq.f32.partialorder %v71, inf
  %v104 = vsel %vm103, %v71, %v102
  %vm105 = vcmp.eq.f32.partialorder %v71, 0.0
  %v106 = vand.u32 %v71, 2147483648
  %v107 = vsel %vm105, %v106, %v104
  %v108 = vadd.f32 %v83, 1e-06
  %v109 = vadd.f32 %v95, 1e-06
  %v110 = vadd.f32 %v107, 1e-06
  %v111 = vrcp.pop %v108
  %v112 = vrcp.pop %v109
  %v113 = vrcp.pop %v110
  %v114 = vld [vmem:[%s3] sm:$0x1]
  %v116 = vperm.slane %v114, 0
  %v118 = vmul.f32 %v116, %v54
  %v119 = vmul.f32 %v116, %v55
  %v120 = vmul.f32 %v116, %v56
  %v121 = vmul.f32 %v118, %v111
  %v122 = vmul.f32 %v119, %v112
  %v123 = vmul.f32 %v120, %v113
  %v124 = vld [vmem:[%s4] sm:$0x1]
  %v126 = vperm.slane %v124, 0
  %v128 = vadd.f32 %v121, %v126
  %v129 = vadd.f32 %v122, %v126
  %v130 = vadd.f32 %v123, %v126
  %v131 = vld [vmem:[#allocation2] sm:$0xff]
  %v132 = vld [vmem:[#allocation2 + $0x8] sm:$0xff]
  %v133 = vld [vmem:[#allocation2 + $0x10] sm:$0xf]
  %v134 = vpack.c.bf16 %v129, %v128
  %v135 = vpack.c.bf16 %v130, %v130
  %v136 = vld [vmem:[%s1] sm:$0xf]
  %v137 = vld [vmem:[%s1 + $0x4] sm:$0xf]
  %v138 = vld [vmem:[%s1 + $0x8] sm:$0xf]
  %v139 = vld [vmem:[%s1 + $0xc] sm:$0xf]
  %v144 = vunpack.c.l.b16 %v136
  %v145 = vunpack.c.l.b16 %v137
  %v146 = vunpack.c.l.b16 %v138
  %v147 = vunpack.c.l.b16 %v139
  %v148 = vpack.c.b16 %v145, %v144
  %v149 = vpack.c.b16 %v147, %v146
  %v153 = vsel %vm33, %v134, 0
  %v156 = vsel %vm33, %v135, 0
  %158 = vmatpush.bf16.msra.mxu0 0
  %159 = vmatpush.bf16.msra.mxu0 0
  %160 = vmatpush.bf16.msra.mxu0 0
  %161 = vmatpush.bf16.msra.mxu0 0
  %162 = vmatpush.bf16.msra.mxu0 0
  %163 = vmatpush.bf16.msra.mxu0 0
  %164 = vmatpush.bf16.msra.mxu0 %v149
  %165 = vmatpush.bf16.msra.mxu0 %v148
  %166 = vmatmul.bf16.gmra.mxu0 %v153
  %v167 = vpop.f32.mrf.mxu0
  %v168 = vadd.f32 0.0, %v167
  %v169 = vpop.f32.mrf.mxu0
  %v170 = vadd.f32 0.0, %v169
  %171 = vmatmul.bf16.gmra.mxu0 %v156
  %v172 = vpop.f32.mrf.mxu0
  %v173 = vadd.f32 0.0, %v172
  %v174 = vpop.f32.mrf.mxu0
  %175 = vdwg.mxu0
  %v176 = vadd.f32 %v131, %v168
  %v177 = vadd.f32 %v132, %v170
  %v178 = vadd.f32 %v133, %v173
  %vm179 = vcmask 785408
  %180 = vst.msk [vmem:[#allocation2] sm:$0xff] %vm179, %v176
  %181 = vst.msk [vmem:[#allocation2 + $0x8] sm:$0xff] %vm179, %v177
  %vm182 = vcmask 781312
  %183 = vst.msk [vmem:[#allocation2 + $0x10] sm:$0xf] %vm182, %v178
  // Predicated region
  $region26: #{transformer_forward.30} parent=0 // pred_check
    %p184 = pneg %p21
  $region27: #{transformer_forward.30} parent=0 // pred_check_branch
    %186 = sbr.rel (%p184) target = $region29
  $region28: #{transformer_forward.30} parent=0 // pred_region
    %v187 = vld [vmem:[#allocation2] sm:$0xff]
    %v188 = vld [vmem:[#allocation2 + $0x8] sm:$0xff]
    %v189 = vld [vmem:[#allocation2 + $0x10] sm:$0xf]
    %v190 = vld [vmem:[%s2] sm:$0x1]
    %v192 = vperm.slane %v190, 0
    %v194 = vadd.f32 %v187, %v192
    %v195 = vadd.f32 %v188, %v192
    %v196 = vadd.f32 %v189, %v192
    %197 = vst.msk [vmem:[%s5] sm:$0xff] %vm179, %v194
    %198 = vst.msk [vmem:[%s5 + $0x8] sm:$0xff] %vm179, %v195
    %199 = vst.msk [vmem:[%s5 + $0x10] sm:$0xf] %vm182, %v196
  $region29: #{transformer_forward.30} parent=0 // pred_fallthru
    _
  // Predicated region
  $region30: #{transformer_forward.30} parent=0 // pred_check
    _
  $region31: #{transformer_forward.30} parent=0 // pred_check_branch
    %201 = sbr.rel (0) target = $region33
  $region32: #{transformer_forward.30} parent=0 // pred_region
    _
  $region33: #{transformer_forward.30} parent=0 // pred_fallthru
    _
  // Predicated region
  $region34: #{transformer_forward.30} parent=0 // pred_check
    _
  $region35: #{transformer_forward.30} parent=0 // pred_check_branch
    %203 = sbr.rel (0) target = $region37
  $region36: #{transformer_forward.30} parent=0 // pred_region
    _
  $region37: #{transformer_forward.30} parent=0 // pred_fallthru
    _

// kernel: transformer_forward.33
$region0: #{transformer_forward.33}
  #allocation0 [shape = 'u32[]', space=smem, size = 0x4, offset = 0x4, fixed_abs, tag = 'smem constant byte address 0x4 - core index']
  #allocation1 [shape = 'u32[72,128]{1,0:T(1,128)}', space=vmem, size = 0x9000, scoped, tag = 'internal scratch']
  #allocation2 [shape = 'f32[20,512]{1,0:T(8,128)}', space=vmem, size = 0xc000, scoped, tag = 'scratch operand']
  %s0 = inlined_call_operand.vmem [shape: f32[20,32], index: 0, kind: input, shape index: {}]
  %s1 = inlined_call_operand.vmem [shape: bf16[32,2048], index: 1, kind: input, shape index: {}]
  %s2 = inlined_call_operand.vmem [shape: f32[1,2048], index: 2, kind: input, shape index: {}]
  %s3 = inlined_call_operand.vmem [shape: f32[1,32], index: 3, kind: input, shape index: {}]
  %s4 = inlined_call_operand.vmem [shape: f32[1,32], index: 4, kind: input, shape index: {}]
  %s5 = inlined_call_operand.vmem [shape: f32[20,2048], index: 5, kind: output, shape index: {}]
  %s6 = sld [smem:[#allocation0]]
  $region103: #{transformer_forward.33} parent=0
    _
  %s8 = ssub.s32 1, %s6
  %s9 = scalar_select 0, %s8, %s6
  $region1: #{transformer_forward.33} parent=0
    #allocation3 [shape = 'u8[65536]{0}', space=vmem, size = 0x10000, scoped, tag = 'input window, operand 1']
    #allocation4 [shape = 'u8[98304]{0}', space=vmem, size = 0x18000, scoped, tag = 'output window, operand 0']
    loop: start=0, step=1, limit=6
    $region2: #{transformer_forward.33} parent=1 // loop_pre_header
      _
    $region3: #{transformer_forward.33} parent=1 // loop_header
      %s11 = sphi 0, %s15
      %p12 = scmp.ge.s32.totalorder %s11, 6
      %s18 = sphi 0, %s37
      %s19 = sphi 0, %s33
      %s20 = sphi 0, %s29
      %s21 = sphi 0, %s18
      %s22 = sphi 0, %s19
      %s23 = sphi 0, %s20
      %s24 = sphi 0, %s21
      %s25 = sphi 0, %s22
      %s26 = sphi 0, %s23
      %s42 = sphi 0, %s44
      %s45 = sphi 0, %s42
      %s46 = sphi 0, %s45
      %s62 = sphi 0, %s46
      %s70 = sphi 0, %s72
      %s73 = sphi 0, %s70
      %s74 = sphi 0, %s73
      %s90 = sphi 0, %s74
      %s96 = sphi 0, %s98
      %s99 = sphi 0, %s96
      %s100 = sphi 0, %s99
      %s116 = sphi 0, %s100
      %s122 = sphi 0, %s124
      %s125 = sphi 0, %s122
      %s126 = sphi 0, %s125
      %s142 = sphi 0, %s126
      %s148 = sphi 0, %s150
      %s151 = sphi 0, %s148
      %s152 = sphi 0, %s151
      %s168 = sphi 0, %s152
      %s176 = sphi 0, %s178
      %s179 = sphi 0, %s176
      %s180 = sphi 0, %s179
      %s196 = sphi 0, %s180
    $region4: #{transformer_forward.33} parent=1 // loop_header_branch
      %14 = sbr.rel (%p12) target = $region8
    $region5: #{transformer_forward.33} parent=1 // loop_body
      %s16 = ssub.s32 %s11, 1
      %s17 = ssub.s32 %s11, 2
      %s27 = sadd.s32 1, %s20
      %p28 = scmp.ge.s32.totalorder %s27, 1
      %s29 = scalar_select %p28, 0, %s27
      %s30 = sadd.s32 1, %s19
      %s31 = scalar_select %p28, %s30, %s19
      %p32 = scmp.ge.s32.totalorder %s31, 4
      %s33 = scalar_select %p32, 0, %s31
      %s34 = sadd.s32 1, %s18
      %s35 = scalar_select %p32, %s34, %s18
      %p36 = scmp.ge.s32.totalorder %s35, 1
      %s37 = scalar_select %p36, 0, %s35
      %s38 = ssub.s32 %s18, %s37
      %s39 = ssub.s32 %s20, %s29
      %s40 = sor.u32 %s38, %s39
      %p41 = scmp.eq.s32.totalorder %s40, 0
      %s43 = sadd.s32 %s42, 1
      %s44 = scalar_select %p41, %s42, %s43
      %p47 = pneg %p41
      %p48 = scmp.eq.s32.totalorder %s11, 3
      %p49 = por %p47, %p48
      %p50 = scmp.ne.s32.totalorder %s42, %s45
      %p51 = scmp.eq.s32.totalorder %s11, 0
      %p52 = por %p50, %p51
      %p53 = scmp.ne.s32.totalorder %s42, %s45
      %p54 = scmp.eq.s32.totalorder %s16, 3
      %p55 = por %p53, %p54
      %p56 = scmp.ne.s32.totalorder %s45, %s46
      %p57 = scmp.eq.s32.totalorder %s16, 0
      %p58 = por %p56, %p57
      %p59 = scmp.ne.s32.totalorder %s45, %s46
      %p60 = scmp.eq.s32.totalorder %s17, 3
      %p61 = por %p59, %p60
      %p63 = scmp.ne.s32.totalorder %s46, %s62
      %p64 = scmp.eq.s32.totalorder %s17, 0
      %p65 = por %p63, %p64
      %s66 = ssub.s32 %s20, %s29
      %s67 = ssub.s32 %s19, %s33
      %s68 = sor.u32 %s66, %s67
      %p69 = scmp.eq.s32.totalorder %s68, 0
      %s71 = sadd.s32 %s70, 1
      %s72 = scalar_select %p69, %s70, %s71
      %p75 = pneg %p69
      %p76 = scmp.eq.s32.totalorder %s11, 3
      %p77 = por %p75, %p76
      %p78 = scmp.ne.s32.totalorder %s70, %s73
      %p79 = scmp.eq.s32.totalorder %s11, 0
      %p80 = por %p78, %p79
      %p81 = scmp.ne.s32.totalorder %s70, %s73
      %p82 = scmp.eq.s32.totalorder %s16, 3
      %p83 = por %p81, %p82
      %p84 = scmp.ne.s32.totalorder %s73, %s74
      %p85 = scmp.eq.s32.totalorder %s16, 0
      %p86 = por %p84, %p85
      %p87 = scmp.ne.s32.totalorder %s73, %s74
      %p88 = scmp.eq.s32.totalorder %s17, 3
      %p89 = por %p87, %p88
      %p91 = scmp.ne.s32.totalorder %s74, %s90
      %p92 = scmp.eq.s32.totalorder %s17, 0
      %p93 = por %p91, %p92
      %s94 = ssub.s32 %s19, %s33
      %p95 = scmp.eq.s32.totalorder %s94, 0
      %s97 = sadd.s32 %s96, 1
      %s98 = scalar_select %p95, %s96, %s97
      %p101 = pneg %p95
      %p102 = scmp.eq.s32.totalorder %s11, 3
      %p103 = por %p101, %p102
      %p104 = scmp.ne.s32.totalorder %s96, %s99
      %p105 = scmp.eq.s32.totalorder %s11, 0
      %p106 = por %p104, %p105
      %p107 = scmp.ne.s32.totalorder %s96, %s99
      %p108 = scmp.eq.s32.totalorder %s16, 3
      %p109 = por %p107, %p108
      %p110 = scmp.ne.s32.totalorder %s99, %s100
      %p111 = scmp.eq.s32.totalorder %s16, 0
      %p112 = por %p110, %p111
      %p113 = scmp.ne.s32.totalorder %s99, %s100
      %p114 = scmp.eq.s32.totalorder %s17, 3
      %p115 = por %p113, %p114
      %p117 = scmp.ne.s32.totalorder %s100, %s116
      %p118 = scmp.eq.s32.totalorder %s17, 0
      %p119 = por %p117, %p118
      %s120 = ssub.s32 %s20, %s29
      %p121 = scmp.eq.s32.totalorder %s120, 0
      %s123 = sadd.s32 %s122, 1
      %s124 = scalar_select %p121, %s122, %s123
      %p127 = pneg %p121
      %p128 = scmp.eq.s32.totalorder %s11, 3
      %p129 = por %p127, %p128
      %p130 = scmp.ne.s32.totalorder %s122, %s125
      %p131 = scmp.eq.s32.totalorder %s11, 0
      %p132 = por %p130, %p131
      %p133 = scmp.ne.s32.totalorder %s122, %s125
      %p134 = scmp.eq.s32.totalorder %s16, 3
      %p135 = por %p133, %p134
      %p136 = scmp.ne.s32.totalorder %s125, %s126
      %p137 = scmp.eq.s32.totalorder %s16, 0
      %p138 = por %p136, %p137
      %p139 = scmp.ne.s32.totalorder %s125, %s126
      %p140 = scmp.eq.s32.totalorder %s17, 3
      %p141 = por %p139, %p140
      %p143 = scmp.ne.s32.totalorder %s126, %s142
      %p144 = scmp.eq.s32.totalorder %s17, 0
      %p145 = por %p143, %p144
      %s146 = ssub.s32 %s20, %s29
      %p147 = scmp.eq.s32.totalorder %s146, 0
      %s149 = sadd.s32 %s148, 1
      %s150 = scalar_select %p147, %s148, %s149
      %p153 = pneg %p147
      %p154 = scmp.eq.s32.totalorder %s11, 3
      %p155 = por %p153, %p154
      %p156 = scmp.ne.s32.totalorder %s148, %s151
      %p157 = scmp.eq.s32.totalorder %s11, 0
      %p158 = por %p156, %p157
      %p159 = scmp.ne.s32.totalorder %s148, %s151
      %p160 = scmp.eq.s32.totalorder %s16, 3
      %p161 = por %p159, %p160
      %p162 = scmp.ne.s32.totalorder %s151, %s152
      %p163 = scmp.eq.s32.totalorder %s16, 0
      %p164 = por %p162, %p163
      %p165 = scmp.ne.s32.totalorder %s151, %s152
      %p166 = scmp.eq.s32.totalorder %s17, 3
      %p167 = por %p165, %p166
      %p169 = scmp.ne.s32.totalorder %s152, %s168
      %p170 = scmp.eq.s32.totalorder %s17, 0
      %p171 = por %p169, %p170
      %s172 = ssub.s32 %s18, %s37
      %s173 = ssub.s32 %s19, %s33
      %s174 = sor.u32 %s172, %s173
      %p175 = scmp.eq.s32.totalorder %s174, 0
      %s177 = sadd.s32 %s176, 1
      %s178 = scalar_select %p175, %s176, %s177
      %p181 = pneg %p175
      %p182 = scmp.eq.s32.totalorder %s11, 3
      %p183 = por %p181, %p182
      %p184 = scmp.ne.s32.totalorder %s176, %s179
      %p185 = scmp.eq.s32.totalorder %s11, 0
      %p186 = por %p184, %p185
      %p187 = scmp.ne.s32.totalorder %s176, %s179
      %p188 = scmp.eq.s32.totalorder %s16, 3
      %p189 = por %p187, %p188
      %p190 = scmp.ne.s32.totalorder %s179, %s180
      %p191 = scmp.eq.s32.totalorder %s16, 0
      %p192 = por %p190, %p191
      %p193 = scmp.ne.s32.totalorder %s179, %s180
      %p194 = scmp.eq.s32.totalorder %s17, 3
      %p195 = por %p193, %p194
      %p197 = scmp.ne.s32.totalorder %s180, %s196
      %p198 = scmp.eq.s32.totalorder %s17, 0
      %p199 = por %p197, %p198
      %p200 = scmp.le.s32.totalorder 1, %s11
      %p201 = scmp.lt.s32.totalorder %s11, 5
      %p202 = pnand %p200, %p201
      %p203 = pneg %p202
      // Predicated region
      $region9: #{transformer_forward.33} parent=5 // pred_check
        _
      $region10: #{transformer_forward.33} parent=5 // pred_check_branch
        %205 = sbr.rel (%p202) target = $region12
      $region11: #{transformer_forward.33} parent=5 // pred_region
        %s206 = ssub.s32 %s11, 1
        // Predicated region
        $region13: #{transformer_forward.33} parent=11 // pred_check
          %p207 = pneg %p58
        $region14: #{transformer_forward.33} parent=11 // pred_check_branch
          %209 = sbr.rel (%p207) target = $region16
        $region15: #{transformer_forward.33} parent=11 // pred_region
          %s210 = smul.u32 3, %s21
          %p211 = scmp.lt.s32.totalorder %s210, 2
          %s212 = scalar_select %p211, %s210, 2
          %p213 = scmp.lt.s32.totalorder %s23, 0
          %s214 = scalar_select %p213, %s23, 0
          %s215 = sadd.s32 %s214, %s212
          %s216 = smul.addr %s215, 8
          %s217 = scalar_lea.vmem %s0, %s216
          %s218 = smul.u32 3, %s21
        $region16: #{transformer_forward.33} parent=11 // pred_fallthru
          _
        // Predicated region
        $region17: #{transformer_forward.33} parent=11 // pred_check
          %p219 = pneg %p138
        $region18: #{transformer_forward.33} parent=11 // pred_check_branch
          %221 = sbr.rel (%p219) target = $region20
        $region19: #{transformer_forward.33} parent=11 // pred_region
          %p222 = scmp.lt.s32.totalorder %s23, 0
          %s223 = scalar_select %p222, %s23, 0
          %s224 = scalar_lea.vmem %s3, %s223
        $region20: #{transformer_forward.33} parent=11 // pred_fallthru
          _
        // Predicated region
        $region21: #{transformer_forward.33} parent=11 // pred_check
          %p225 = pneg %p164
        $region22: #{transformer_forward.33} parent=11 // pred_check_branch
          %227 = sbr.rel (%p225) target = $region24
        $region23: #{transformer_forward.33} parent=11 // pred_region
          %p228 = scmp.lt.s32.totalorder %s23, 0
          %s229 = scalar_select %p228, %s23, 0
          %s230 = scalar_lea.vmem %s4, %s229
        $region24: #{transformer_forward.33} parent=11 // pred_fallthru
          _
      $region12: #{transformer_forward.33} parent=5 // pred_fallthru
        _
      %p231 = scmp.lt.s32.totalorder %s11, 4
      // Predicated region
      $region25: #{transformer_forward.33} parent=5 // pred_check
        %p232 = pneg %p231
      $region26: #{transformer_forward.33} parent=5 // pred_check_branch
        %234 = sbr.rel (%p232) target = $region28
      $region27: #{transformer_forward.33} parent=5 // pred_region
        // Predicated region
        $region29: #{transformer_forward.33} parent=27 // pred_check
          %p235 = pneg %p80
        $region30: #{transformer_forward.33} parent=27 // pred_check_branch
          %237 = sbr.rel (%p235) target = $region32
        $region31: #{transformer_forward.33} parent=27 // pred_region
          %s238 = sand.u32 %s70, 1
          %s239 = sand.u32 %s70, 1
          %s240 = smul.addr %s239, 64
          %s241 = scalar_lea.vmem [#allocation3], %s240
          %s242 = smul.u32 4, %s20
          %s243 = smul.u32 4, %s19
          %s244 = smul.addr %s242, 16
          %s245 = sadd.s32 %s243, %s244
          %s246 = smul.addr %s245, 4
          %s247 = scalar_lea.vmem %s1, %s246
          // Predicated region
          $region33: #{transformer_forward.33} parent=31 // pred_check
            _
          $region34: #{transformer_forward.33} parent=31 // pred_check_branch
            %249 = sbr.rel (0) target = $region36
          $region35: #{transformer_forward.33} parent=31 // pred_region
            // Predicated region
            $region37: #{transformer_forward.33} parent=35 // pred_check
              _
            $region38: #{transformer_forward.33} parent=35 // pred_check_branch
              %251 = sbr.rel (0) target = $region40
            $region39: #{transformer_forward.33} parent=35 // pred_region
              loop: start=0, step=1, limit=1
              $region41: #{transformer_forward.33} parent=39 // loop_pre_header
                _
              $region42: #{transformer_forward.33} parent=39 // loop_header
                %s253 = sphi 0, %s257
                %p254 = scmp.ge.s32.totalorder %s253, 1
                %s258 = sphi %s247, %s247
                %s259 = sphi %s241, %s241
              $region43: #{transformer_forward.33} parent=39 // loop_header_branch
                %256 = sbr.rel (%p254) target = $region47
              $region44: #{transformer_forward.33} parent=39 // loop_body
                %v260 = vld [vmem:[%s258] sm:$0xff]
                %261 = vst [vmem:[%s259] sm:$0xff] %v260
                %v262 = vld [vmem:[%s258 + $0x8] sm:$0xff]
                %263 = vst [vmem:[%s259 + $0x8] sm:$0xff] %v262
                %v264 = vld [vmem:[%s258 + $0x40] sm:$0xff]
                %265 = vst [vmem:[%s259 + $0x10] sm:$0xff] %v264
                %v266 = vld [vmem:[%s258 + $0x48] sm:$0xff]
                %267 = vst [vmem:[%s259 + $0x18] sm:$0xff] %v266
                %v268 = vld [vmem:[%s258 + $0x80] sm:$0xff]
                %269 = vst [vmem:[%s259 + $0x20] sm:$0xff] %v268
                %v270 = vld [vmem:[%s258 + $0x88] sm:$0xff]
                %271 = vst [vmem:[%s259 + $0x28] sm:$0xff] %v270
                %v272 = vld [vmem:[%s258 + $0xc0] sm:$0xff]
                %273 = vst [vmem:[%s259 + $0x30] sm:$0xff] %v272
                %v274 = vld [vmem:[%s258 + $0xc8] sm:$0xff]
                %275 = vst [vmem:[%s259 + $0x38] sm:$0xff] %v274
              $region45: #{transformer_forward.33} parent=39 // loop_footer
                %s257 = sadd.s32 1, %s253
              $region46: #{transformer_forward.33} parent=39 // loop_footer_branch
                %252 = sbr.rel target = $region42
              $region47: #{transformer_forward.33} parent=39 // loop_exit
                _
            $region40: #{transformer_forward.33} parent=35 // pred_fallthru
              _
            // Predicated region
            $region48: #{transformer_forward.33} parent=35 // pred_check
              _
            $region49: #{transformer_forward.33} parent=35 // pred_check_branch
              %277 = sbr.rel target = $region51
            $region50: #{transformer_forward.33} parent=35 // pred_region
              _
            $region51: #{transformer_forward.33} parent=35 // pred_fallthru
              _
          $region36: #{transformer_forward.33} parent=31 // pred_fallthru
            _
          %278 = vnop
        $region32: #{transformer_forward.33} parent=27 // pred_fallthru
          _
        // Predicated region
        $region52: #{transformer_forward.33} parent=27 // pred_check
          %p279 = pneg %p106
        $region53: #{transformer_forward.33} parent=27 // pred_check_branch
          %281 = sbr.rel (%p279) target = $region55
        $region54: #{transformer_forward.33} parent=27 // pred_region
          %s282 = smul.u32 4, %s19
          %p283 = scmp.lt.s32.totalorder %s282, 15
          %s284 = scalar_select %p283, %s282, 15
          %s285 = scalar_lea.vmem %s2, %s284
          %s286 = smul.u32 4, %s19
        $region55: #{transformer_forward.33} parent=27 // pred_fallthru
          _
      $region28: #{transformer_forward.33} parent=5 // pred_fallthru
        _
      %p287 = scmp.le.s32.totalorder 1, %s11
      %p288 = scmp.lt.s32.totalorder %s11, 5
      %p289 = pnand %p287, %p288
      %p290 = pneg %p289
      // Predicated region
      $region56: #{transformer_forward.33} parent=5 // pred_check
        _
      $region57: #{transformer_forward.33} parent=5 // pred_check_branch
        %292 = sbr.rel (%p289) target = $region59
      $region58: #{transformer_forward.33} parent=5 // pred_region
        %s293 = ssub.s32 %s11, 1
        %s294 = sand.u32 %s73, 1
        %s295 = sand.u32 %s73, 1
        %s296 = smul.addr %s295, 64
        %s297 = scalar_lea.vmem [#allocation3], %s296
        // Predicated region
        $region60: #{transformer_forward.33} parent=58 // pred_check
          %p298 = pneg %p86
        $region61: #{transformer_forward.33} parent=58 // pred_check_branch
          %300 = sbr.rel (%p298) target = $region63
        $region62: #{transformer_forward.33} parent=58 // pred_region
          _
        $region63: #{transformer_forward.33} parent=58 // pred_fallthru
          _
        %s301 = smul.u32 3, %s21
        %p302 = scmp.lt.s32.totalorder %s301, 2
        %s303 = scalar_select %p302, %s301, 2
        %p304 = scmp.lt.s32.totalorder %s23, 0
        %s305 = scalar_select %p304, %s23, 0
        %s306 = sadd.s32 %s305, %s303
        %s307 = smul.addr %s306, 8
        %s308 = scalar_lea.vmem %s0, %s307
        %p309 = pneg %p58
        %p310 = pneg %p55
        %s311 = sand.u32 %s73, 1
        %s312 = sand.u32 %s73, 1
        %s313 = smul.addr %s312, 64
        %s314 = scalar_lea.vmem [#allocation3], %s313
        %p315 = pneg %p86
        %p316 = pneg %p83
        %s317 = smul.u32 4, %s22
        %p318 = scmp.lt.s32.totalorder %s317, 15
        %s319 = scalar_select %p318, %s317, 15
        %s320 = scalar_lea.vmem %s2, %s319
        %p321 = pneg %p112
        %p322 = pneg %p109
        %p323 = scmp.lt.s32.totalorder %s23, 0
        %s324 = scalar_select %p323, %s23, 0
        %s325 = scalar_lea.vmem %s3, %s324
        %p326 = pneg %p138
        %p327 = pneg %p135
        %p328 = scmp.lt.s32.totalorder %s23, 0
        %s329 = scalar_select %p328, %s23, 0
        %s330 = scalar_lea.vmem %s4, %s329
        %p331 = pneg %p164
        %p332 = pneg %p161
        %p333 = pneg %p192
        %p334 = pneg %p189
        %s335 = sand.u32 %s179, 1
        %s336 = sand.u32 %s179, 1
        %s337 = smul.addr %s336, 96
        %s338 = scalar_lea.vmem [#allocation4], %s337
        %s339 = smul.u32 3, %s21
        %p340 = scmp.lt.s32.totalorder %s339, 2
        %s341 = scalar_select %p340, %s339, 2
        %p342 = scmp.lt.s32.totalorder %s23, 0
        %s343 = scalar_select %p342, %s23, 0
        %s344 = sadd.s32 %s343, %s341
        %s345 = smul.addr %s344, 8
        %s346 = scalar_lea.vmem %s0, %s345
        %s347 = smul.u32 3, %s21
        %s348 = smul.u32 4, %s23
        %s349 = smul.u32 4, %s22
        %s350 = smul.u32 4, %s22
        %p351 = scmp.lt.s32.totalorder %s350, 15
        %s352 = scalar_select %p351, %s350, 15
        %s353 = scalar_lea.vmem %s2, %s352
        %s354 = smul.u32 4, %s22
        %p355 = scmp.lt.s32.totalorder %s23, 0
        %s356 = scalar_select %p355, %s23, 0
        %s357 = scalar_lea.vmem %s3, %s356
        %p358 = scmp.lt.s32.totalorder %s23, 0
        %s359 = scalar_select %p358, %s23, 0
        %s360 = scalar_lea.vmem %s4, %s359
        %s361 = smul.u32 3, %s21
        %s362 = smul.u32 4, %s22
        %p364 = scmp.eq.s32.totalorder %s23, 0
        // Predicated region
        $region64: #{transformer_forward.33} parent=58 // pred_check
          %p365 = pneg %p364
        $region65: #{transformer_forward.33} parent=58 // pred_check_branch
          %367 = sbr.rel (%p365) target = $region67
        $region66: #{transformer_forward.33} parent=58 // pred_region
          %368 = vst [vmem:[#allocation2] sm:$0xff] 0.0
          %369 = vst [vmem:[#allocation2 + $0x8] sm:$0xff] 0.0
          %370 = vst [vmem:[#allocation2 + $0x10] sm:$0xff] 0.0
          %371 = vst [vmem:[#allocation2 + $0x18] sm:$0xff] 0.0
          %372 = vst [vmem:[#allocation2 + $0x20] sm:$0xff] 0.0
          %373 = vst [vmem:[#allocation2 + $0x28] sm:$0xff] 0.0
          %374 = vst [vmem:[#allocation2 + $0x30] sm:$0xff] 0.0
          %375 = vst [vmem:[#allocation2 + $0x38] sm:$0xff] 0.0
          %376 = vst [vmem:[#allocation2 + $0x40] sm:$0xf] 0.0
          %377 = vst [vmem:[#allocation2 + $0x48] sm:$0xf] 0.0
          %378 = vst [vmem:[#allocation2 + $0x50] sm:$0xf] 0.0
          %379 = vst [vmem:[#allocation2 + $0x58] sm:$0xf] 0.0
        $region67: #{transformer_forward.33} parent=58 // pred_fallthru
          _
        %v380 = vld [vmem:[%s346] sm:$0xff]
        %v381 = vld [vmem:[%s346 + $0x8] sm:$0xff]
        %v382 = vld [vmem:[%s346 + $0x10] sm:$0xf]
        %vm383 = vcmask 261120
        %v384 = vsel %vm383, %v380, 0.0
        %385 = vadd.xlane.f32.xlu0 %v384
        %v386 = vpop.xlane.xlu0 %385
        %v387 = vsel %vm383, %v381, 0.0
        %388 = vadd.xlane.f32.xlu0 %v387
        %v389 = vpop.xlane.xlu0 %388
        %vm390 = vcmask 257024
        %v391 = vsel %vm390, %v382, 0.0
        %392 = vadd.xlane.f32.xlu0 %v391
        %v393 = vpop.xlane.xlu0 %392
        %v394 = vrcp.pop 32.0
        %v395 = vmul.f32 32.0, %v394
        %v396 = vsub.f32 1.0, %v395
        %v397 = vmul.f32 %v394, %v396
        %v398 = vadd.f32 %v394, %v397
        %vm399 = vweird.f32 %v394
        %v400 = vsel %vm399, %v394, %v398
        %v401 = vmul.f32 %v386, %v400
        %v402 = vmul.f32 %v389, %v400
        %v403 = vmul.f32 %v393, %v400
        %v404 = vsub.f32 %v380, %v401
        %v405 = vsub.f32 %v381, %v402
        %v406 = vsub.f32 %v382, %v403
        %v407 = vmul.f32 %v404, %v404
        %v408 = vmul.f32 %v405, %v405
        %v409 = vmul.f32 %v406, %v406
        %v410 = vsel %vm383, %v407, 0.0
        %411 = vadd.xlane.f32.xlu0 %v410
        %v412 = vpop.xlane.xlu0 %411
        %v413 = vsel %vm383, %v408, 0.0
        %414 = vadd.xlane.f32.xlu0 %v413
        %v415 = vpop.xlane.xlu0 %414
        %v416 = vsel %vm390, %v409, 0.0
        %417 = vadd.xlane.f32.xlu0 %v416
        %v418 = vpop.xlane.xlu0 %417
        %v419 = vmul.f32 %v412, 0.032258064
        %v420 = vmul.f32 %v415, 0.032258064
        %v421 = vmul.f32 %v418, 0.032258064
        %v422 = vrsqrt.pop %v419
        %v423 = vmul.f32 %v422, %v419
        %v424 = vmul.f32 %v423, %v422
        %v425 = vmul.f32 0.5, %v424
        %v426 = vsub.f32 1.5, %v425
        %v427 = vmul.f32 %v422, %v426
        %v428 = vmul.f32 %v419, %v427
        %vm429 = vcmp.eq.f32.partialorder %v419, inf
        %v430 = vsel %vm429, %v419, %v428
        %vm431 = vcmp.eq.f32.partialorder %v419, 0.0
        %v432 = vand.u32 %v419, 2147483648
        %v433 = vsel %vm431, %v432, %v430
        %v434 = vrsqrt.pop %v420
        %v435 = vmul.f32 %v434, %v420
        %v436 = vmul.f32 %v435, %v434
        %v437 = vmul.f32 0.5, %v436
        %v438 = vsub.f32 1.5, %v437
        %v439 = vmul.f32 %v434, %v438
        %v440 = vmul.f32 %v420, %v439
        %vm441 = vcmp.eq.f32.partialorder %v420, inf
        %v442 = vsel %vm441, %v420, %v440
        %vm443 = vcmp.eq.f32.partialorder %v420, 0.0
        %v444 = vand.u32 %v420, 2147483648
        %v445 = vsel %vm443, %v444, %v442
        %v446 = vrsqrt.pop %v421
        %v447 = vmul.f32 %v446, %v421
        %v448 = vmul.f32 %v447, %v446
        %v449 = vmul.f32 0.5, %v448
        %v450 = vsub.f32 1.5, %v449
        %v451 = vmul.f32 %v446, %v450
        %v452 = vmul.f32 %v421, %v451
        %vm453 = vcmp.eq.f32.partialorder %v421, inf
        %v454 = vsel %vm453, %v421, %v452
        %vm455 = vcmp.eq.f32.partialorder %v421, 0.0
        %v456 = vand.u32 %v421, 2147483648
        %v457 = vsel %vm455, %v456, %v454
        %v458 = vadd.f32 %v433, 1e-06
        %v459 = vadd.f32 %v445, 1e-06
        %v460 = vadd.f32 %v457, 1e-06
        %v461 = vrcp.pop %v458
        %v462 = vrcp.pop %v459
        %v463 = vrcp.pop %v460
        %v464 = vld [vmem:[%s357] sm:$0x1]
        %v466 = vperm.slane %v464, 0
        %v468 = vmul.f32 %v466, %v404
        %v469 = vmul.f32 %v466, %v405
        %v470 = vmul.f32 %v466, %v406
        %v471 = vmul.f32 %v468, %v461
        %v472 = vmul.f32 %v469, %v462
        %v473 = vmul.f32 %v470, %v463
        %v474 = vld [vmem:[%s360] sm:$0x1]
        %v476 = vperm.slane %v474, 0
        %v478 = vadd.f32 %v471, %v476
        %v479 = vadd.f32 %v472, %v476
        %v480 = vadd.f32 %v473, %v476
        %v481 = vld [vmem:[#allocation2] sm:$0xff]
        %v482 = vld [vmem:[#allocation2 + $0x8] sm:$0xff]
        %v483 = vld [vmem:[#allocation2 + $0x10] sm:$0xff]
        %v484 = vld [vmem:[#allocation2 + $0x18] sm:$0xff]
        %v485 = vld [vmem:[#allocation2 + $0x20] sm:$0xff]
        %v486 = vld [vmem:[#allocation2 + $0x28] sm:$0xff]
        %v487 = vld [vmem:[#allocation2 + $0x30] sm:$0xff]
        %v488 = vld [vmem:[#allocation2 + $0x38] sm:$0xff]
        %v489 = vld [vmem:[#allocation2 + $0x40] sm:$0xf]
        %v490 = vld [vmem:[#allocation2 + $0x48] sm:$0xf]
        %v491 = vld [vmem:[#allocation2 + $0x50] sm:$0xf]
        %v492 = vld [vmem:[#allocation2 + $0x58] sm:$0xf]
        %v493 = vpack.c.bf16 %v479, %v478
        %v494 = vpack.c.bf16 %v480, %v480
        %v495 = vld [vmem:[%s297] sm:$0xff]
        %v496 = vld [vmem:[%s297 + $0x8] sm:$0xff]
        %v497 = vld [vmem:[%s297 + $0x10] sm:$0xff]
        %v498 = vld [vmem:[%s297 + $0x18] sm:$0xff]
        %v499 = vld [vmem:[%s297 + $0x20] sm:$0xff]
        %v500 = vld [vmem:[%s297 + $0x28] sm:$0xff]
        %v501 = vld [vmem:[%s297 + $0x30] sm:$0xff]
        %v502 = vld [vmem:[%s297 + $0x38] sm:$0xff]
        %v511 = vunpack.c.l.b16 %v495
        %v512 = vunpack.c.h.b16 %v495
        %v513 = vunpack.c.l.b16 %v496
        %v514 = vunpack.c.h.b16 %v496
        %v515 = vunpack.c.l.b16 %v497
        %v516 = vunpack.c.h.b16 %v497
        %v517 = vunpack.c.l.b16 %v498
        %v518 = vunpack.c.h.b16 %v498
        %v519 = vunpack.c.l.b16 %v499
        %v520 = vunpack.c.h.b16 %v499
        %v521 = vunpack.c.l.b16 %v500
        %v522 = vunpack.c.h.b16 %v500
        %v523 = vunpack.c.l.b16 %v501
        %v524 = vunpack.c.h.b16 %v501
        %v525 = vunpack.c.l.b16 %v502
        %v526 = vunpack.c.h.b16 %v502
        %v527 = vpack.c.b16 %v515, %v511
        %v528 = vpack.c.b16 %v516, %v512
        %v529 = vpack.c.b16 %v517, %v513
        %v530 = vpack.c.b16 %v518, %v514
        %v531 = vpack.c.b16 %v523, %v519
        %v532 = vpack.c.b16 %v524, %v520
        %v533 = vpack.c.b16 %v525, %v521
        %v534 = vpack.c.b16 %v526, %v522
        %v544 = vsel %vm383, %v493, 0
        %v547 = vsel %vm383, %v494, 0
        %549 = vmatpush.bf16.msra.mxu0 0
        %550 = vmatpush.bf16.msra.mxu0 0
        %551 = vmatpush.bf16.msra.mxu0 0
        %552 = vmatpush.bf16.msra.mxu0 0
        %553 = vmatpush.bf16.msra.mxu0 0
        %554 = vmatpush.bf16.msra.mxu0 0
        %555 = vmatpush.bf16.msra.mxu0 %v531
        %556 = vmatpush.bf16.msra.mxu0 %v527
        %557 = vmatmul.bf16.gmra.mxu0 %v544
        %v558 = vpop.f32.mrf.mxu0
        %v559 = vadd.f32 0.0, %v558
        %v560 = vpop.f32.mrf.mxu0
        %v561 = vadd.f32 0.0, %v560
        %562 = vmatmul.bf16.gmra.mxu0 %v547
        %v563 = vpop.f32.mrf.mxu0
        %v564 = vadd.f32 0.0, %v563
        %v565 = vpop.f32.mrf.mxu0
        %566 = vdwg.mxu0
        %567 = vmatpush.bf16.msra.mxu0 0
        %568 = vmatpush.bf16.msra.mxu0 0
        %569 = vmatpush.bf16.msra.mxu0 0
        %570 = vmatpush.bf16.msra.mxu0 0
        %571 = vmatpush.bf16.msra.mxu0 0
        %572 = vmatpush.bf16.msra.mxu0 0
        %573 = vmatpush.bf16.msra.mxu0 %v532
        %574 = vmatpush.bf16.msra.mxu0 %v528
        %575 = vmatmul.bf16.gmra.mxu0 %v544
        %v576 = vpop.f32.mrf.mxu0
        %v577 = vadd.f32 0.0, %v576
        %v578 = vpop.f32.mrf.mxu0
        %v579 = vadd.f32 0.0, %v578
        %580 = vmatmul.bf16.gmra.mxu0 %v547
        %v581 = vpop.f32.mrf.mxu0
        %v582 = vadd.f32 0.0, %v581
        %v583 = vpop.f32.mrf.mxu0
        %584 = vdwg.mxu0
        %585 = vmatpush.bf16.msra.mxu0 0
        %586 = vmatpush.bf16.msra.mxu0 0
        %587 = vmatpush.bf16.msra.mxu0 0
        %588 = vmatpush.bf16.msra.mxu0 0
        %589 = vmatpush.bf16.msra.mxu0 0
        %590 = vmatpush.bf16.msra.mxu0 0
        %591 = vmatpush.bf16.msra.mxu0 %v533
        %592 = vmatpush.bf16.msra.mxu0 %v529
        %593 = vmatmul.bf16.gmra.mxu0 %v544
        %v594 = vpop.f32.mrf.mxu0
        %v595 = vadd.f32 0.0, %v594
        %v596 = vpop.f32.mrf.mxu0
        %v597 = vadd.f32 0.0, %v596
        %598 = vmatmul.bf16.gmra.mxu0 %v547
        %v599 = vpop.f32.mrf.mxu0
        %v600 = vadd.f32 0.0, %v599
        %v601 = vpop.f32.mrf.mxu0
        %602 = vdwg.mxu0
        %603 = vmatpush.bf16.msra.mxu0 0
        %604 = vmatpush.bf16.msra.mxu0 0
        %605 = vmatpush.bf16.msra.mxu0 0
        %606 = vmatpush.bf16.msra.mxu0 0
        %607 = vmatpush.bf16.msra.mxu0 0
        %608 = vmatpush.bf16.msra.mxu0 0
        %609 = vmatpush.bf16.msra.mxu0 %v534
        %610 = vmatpush.bf16.msra.mxu0 %v530
        %611 = vmatmul.bf16.gmra.mxu0 %v544
        %v612 = vpop.f32.mrf.mxu0
        %v613 = vadd.f32 0.0, %v612
        %v614 = vpop.f32.mrf.mxu0
        %v615 = vadd.f32 0.0, %v614
        %616 = vmatmul.bf16.gmra.mxu0 %v547
        %v617 = vpop.f32.mrf.mxu0
        %v618 = vadd.f32 0.0, %v617
        %v619 = vpop.f32.mrf.mxu0
        %620 = vdwg.mxu0
        %v621 = vadd.f32 %v481, %v559
        %v622 = vadd.f32 %v482, %v577
        %v623 = vadd.f32 %v483, %v595
        %v624 = vadd.f32 %v484, %v613
        %v625 = vadd.f32 %v485, %v561
        %v626 = vadd.f32 %v486, %v579
        %v627 = vadd.f32 %v487, %v597
        %v628 = vadd.f32 %v488, %v615
        %v629 = vadd.f32 %v489, %v564
        %v630 = vadd.f32 %v490, %v582
        %v631 = vadd.f32 %v491, %v600
        %v632 = vadd.f32 %v492, %v618
        %633 = vst [vmem:[#allocation2] sm:$0xff] %v621
        %634 = vst [vmem:[#allocation2 + $0x8] sm:$0xff] %v622
        %635 = vst [vmem:[#allocation2 + $0x10] sm:$0xff] %v623
        %636 = vst [vmem:[#allocation2 + $0x18] sm:$0xff] %v624
        %637 = vst [vmem:[#allocation2 + $0x20] sm:$0xff] %v625
        %638 = vst [vmem:[#allocation2 + $0x28] sm:$0xff] %v626
        %639 = vst [vmem:[#allocation2 + $0x30] sm:$0xff] %v627
        %640 = vst [vmem:[#allocation2 + $0x38] sm:$0xff] %v628
        %641 = vst [vmem:[#allocation2 + $0x40] sm:$0xf] %v629
        %642 = vst [vmem:[#allocation2 + $0x48] sm:$0xf] %v630
        %643 = vst [vmem:[#allocation2 + $0x50] sm:$0xf] %v631
        %644 = vst [vmem:[#allocation2 + $0x58] sm:$0xf] %v632
        // Predicated region
        $region68: #{transformer_forward.33} parent=58 // pred_check
          %p645 = pneg %p364
        $region69: #{transformer_forward.33} parent=58 // pred_check_branch
          %647 = sbr.rel (%p645) target = $region71
        $region70: #{transformer_forward.33} parent=58 // pred_region
          %v648 = vld [vmem:[#allocation2] sm:$0xff]
          %v649 = vld [vmem:[#allocation2 + $0x8] sm:$0xff]
          %v650 = vld [vmem:[#allocation2 + $0x10] sm:$0xff]
          %v651 = vld [vmem:[#allocation2 + $0x18] sm:$0xff]
          %v652 = vld [vmem:[#allocation2 + $0x20] sm:$0xff]
          %v653 = vld [vmem:[#allocation2 + $0x28] sm:$0xff]
          %v654 = vld [vmem:[#allocation2 + $0x30] sm:$0xff]
          %v655 = vld [vmem:[#allocation2 + $0x38] sm:$0xff]
          %v656 = vld [vmem:[#allocation2 + $0x40] sm:$0xf]
          %v657 = vld [vmem:[#allocation2 + $0x48] sm:$0xf]
          %v658 = vld [vmem:[#allocation2 + $0x50] sm:$0xf]
          %v659 = vld [vmem:[#allocation2 + $0x58] sm:$0xf]
          %v660 = vld [vmem:[%s353] sm:$0xf]
          %v662 = vperm.slane %v660, 0
          %v663 = vperm.slane %v660, 1
          %v664 = vperm.slane %v660, 2
          %v665 = vperm.slane %v660, 3
          %v670 = vadd.f32 %v648, %v662
          %v671 = vadd.f32 %v649, %v663
          %v672 = vadd.f32 %v650, %v664
          %v673 = vadd.f32 %v651, %v665
          %v674 = vadd.f32 %v652, %v662
          %v675 = vadd.f32 %v653, %v663
          %v676 = vadd.f32 %v654, %v664
          %v677 = vadd.f32 %v655, %v665
          %v678 = vadd.f32 %v656, %v662
          %v679 = vadd.f32 %v657, %v663
          %v680 = vadd.f32 %v658, %v664
          %v681 = vadd.f32 %v659, %v665
          %v682 = vmax.f32 %v670, 0.0
          %v683 = vmax.f32 %v671, 0.0
          %v684 = vmax.f32 %v672, 0.0
          %v685 = vmax.f32 %v673, 0.0
          %v686 = vmax.f32 %v674, 0.0
          %v687 = vmax.f32 %v675, 0.0
          %v688 = vmax.f32 %v676, 0.0
          %v689 = vmax.f32 %v677, 0.0
          %v690 = vmax.f32 %v678, 0.0
          %v691 = vmax.f32 %v679, 0.0
          %v692 = vmax.f32 %v680, 0.0
          %v693 = vmax.f32 %v681, 0.0
          %694 = vst [vmem:[%s338] sm:$0xff] %v682
          %695 = vst [vmem:[%s338 + $0x8] sm:$0xff] %v683
          %696 = vst [vmem:[%s338 + $0x10] sm:$0xff] %v684
          %697 = vst [vmem:[%s338 + $0x18] sm:$0xff] %v685
          %698 = vst [vmem:[%s338 + $0x20] sm:$0xff] %v686
          %699 = vst [vmem:[%s338 + $0x28] sm:$0xff] %v687
          %700 = vst [vmem:[%s338 + $0x30] sm:$0xff] %v688
          %701 = vst [vmem:[%s338 + $0x38] sm:$0xff] %v689
          %702 = vst [vmem:[%s338 + $0x40] sm:$0xf] %v690
          %703 = vst [vmem:[%s338 + $0x48] sm:$0xf] %v691
          %704 = vst [vmem:[%s338 + $0x50] sm:$0xf] %v692
          %705 = vst [vmem:[%s338 + $0x58] sm:$0xf] %v693
        $region71: #{transformer_forward.33} parent=58 // pred_fallthru
          _
        %s706 = sand.u32 %s179, 1
        %s707 = sand.u32 %s179, 1
        %s708 = smul.addr %s707, 96
        %s709 = scalar_lea.vmem [#allocation4], %s708
        // Predicated region
        $region72: #{transformer_forward.33} parent=58 // pred_check
          %p710 = pneg %p189
        $region73: #{transformer_forward.33} parent=58 // pred_check_branch
          %712 = sbr.rel (%p710) target = $region75
        $region74: #{transformer_forward.33} parent=58 // pred_region
          %s713 = smul.u32 3, %s21
          %s714 = smul.u32 4, %s22
          %s715 = smul.addr %s713, 16
          %s716 = sadd.s32 %s714, %s715
          %s717 = smul.addr %s716, 8
          %s718 = scalar_lea.vmem %s5, %s717
          // Predicated region
          $region76: #{transformer_forward.33} parent=74 // pred_check
            _
          $region77: #{transformer_forward.33} parent=74 // pred_check_branch
            %720 = sbr.rel (0) target = $region79
          $region78: #{transformer_forward.33} parent=74 // pred_region
            // Predicated region
            $region80: #{transformer_forward.33} parent=78 // pred_check
              _
            $region81: #{transformer_forward.33} parent=78 // pred_check_branch
              %722 = sbr.rel (0) target = $region83
            $region82: #{transformer_forward.33} parent=78 // pred_region
              loop: start=0, step=1, limit=1
              $region84: #{transformer_forward.33} parent=82 // loop_pre_header
                _
              $region85: #{transformer_forward.33} parent=82 // loop_header
                %s724 = sphi 0, %s728
                %p725 = scmp.ge.s32.totalorder %s724, 1
                %s729 = sphi %s709, %s709
                %s730 = sphi %s718, %s718
              $region86: #{transformer_forward.33} parent=82 // loop_header_branch
                %727 = sbr.rel (%p725) target = $region90
              $region87: #{transformer_forward.33} parent=82 // loop_body
                %v731 = vld [vmem:[%s729] sm:$0xff]
                %732 = vst [vmem:[%s730] sm:$0xff] %v731
                %v733 = vld [vmem:[%s729 + $0x8] sm:$0xff]
                %734 = vst [vmem:[%s730 + $0x8] sm:$0xff] %v733
                %v735 = vld [vmem:[%s729 + $0x10] sm:$0xff]
                %736 = vst [vmem:[%s730 + $0x10] sm:$0xff] %v735
                %v737 = vld [vmem:[%s729 + $0x18] sm:$0xff]
                %738 = vst [vmem:[%s730 + $0x18] sm:$0xff] %v737
                %v739 = vld [vmem:[%s729 + $0x20] sm:$0xff]
                %740 = vst [vmem:[%s730 + $0x80] sm:$0xff] %v739
                %v741 = vld [vmem:[%s729 + $0x28] sm:$0xff]
                %742 = vst [vmem:[%s730 + $0x88] sm:$0xff] %v741
                %v743 = vld [vmem:[%s729 + $0x30] sm:$0xff]
                %744 = vst [vmem:[%s730 + $0x90] sm:$0xff] %v743
                %v745 = vld [vmem:[%s729 + $0x38] sm:$0xff]
                %746 = vst [vmem:[%s730 + $0x98] sm:$0xff] %v745
                %v747 = vld [vmem:[%s729 + $0x40] sm:$0xff]
                %748 = vst [vmem:[%s730 + $0x100] sm:$0xff] %v747
                %v749 = vld [vmem:[%s729 + $0x48] sm:$0xff]
                %750 = vst [vmem:[%s730 + $0x108] sm:$0xff] %v749
                %v751 = vld [vmem:[%s729 + $0x50] sm:$0xff]
                %752 = vst [vmem:[%s730 + $0x110] sm:$0xff] %v751
                %v753 = vld [vmem:[%s729 + $0x58] sm:$0xff]
                %754 = vst [vmem:[%s730 + $0x118] sm:$0xff] %v753
              $region88: #{transformer_forward.33} parent=82 // loop_footer
                %s728 = sadd.s32 1, %s724
              $region89: #{transformer_forward.33} parent=82 // loop_footer_branch
                %723 = sbr.rel target = $region85
              $region90: #{transformer_forward.33} parent=82 // loop_exit
                _
            $region83: #{transformer_forward.33} parent=78 // pred_fallthru
              _
            // Predicated region
            $region91: #{transformer_forward.33} parent=78 // pred_check
              _
            $region92: #{transformer_forward.33} parent=78 // pred_check_branch
              %756 = sbr.rel target = $region94
            $region93: #{transformer_forward.33} parent=78 // pred_region
              _
            $region94: #{transformer_forward.33} parent=78 // pred_fallthru
              _
          $region79: #{transformer_forward.33} parent=74 // pred_fallthru
            _
          %757 = vnop
        $region75: #{transformer_forward.33} parent=58 // pred_fallthru
          _
      $region59: #{transformer_forward.33} parent=5 // pred_fallthru
        _
      %p758 = scmp.le.s32.totalorder 2, %s11
      // Predicated region
      $region95: #{transformer_forward.33} parent=5 // pred_check
        %p759 = pneg %p758
      $region96: #{transformer_forward.33} parent=5 // pred_check_branch
        %761 = sbr.rel (%p759) target = $region98
      $region97: #{transformer_forward.33} parent=5 // pred_region
        %s762 = ssub.s32 %s11, 2
        // Predicated region
        $region99: #{transformer_forward.33} parent=97 // pred_check
          %p763 = pneg %p195
        $region100: #{transformer_forward.33} parent=97 // pred_check_branch
          %765 = sbr.rel (%p763) target = $region102
        $region101: #{transformer_forward.33} parent=97 // pred_region
          %s766 = sand.u32 %s180, 1
          %s767 = sand.u32 %s180, 1
          %s768 = smul.addr %s767, 96
          %s769 = scalar_lea.vmem [#allocation4], %s768
        $region102: #{transformer_forward.33} parent=97 // pred_fallthru
          _
      $region98: #{transformer_forward.33} parent=5 // pred_fallthru
        _
    $region6: #{transformer_forward.33} parent=1 // loop_footer
      %s15 = sadd.s32 1, %s11
    $region7: #{transformer_forward.33} parent=1 // loop_footer_branch
      %10 = sbr.rel target = $region3
    $region8: #{transformer_forward.33} parent=1 // loop_exit
      _

// kernel: transformer_forward.31
$region0: #{transformer_forward.31}
  #allocation0 [shape = 'u32[]', space=smem, size = 0x4, offset = 0x4, fixed_abs, tag = 'smem constant byte address 0x4 - core index']
  #allocation1 [shape = 'u32[72,128]{1,0:T(1,128)}', space=vmem, size = 0x9000, scoped, tag = 'internal scratch']
  %s0 = inlined_call_operand.vmem [shape: f32[2,10,32], index: 0, kind: input, shape index: {}]
  %s1 = inlined_call_operand.vmem [shape: f32[2,10,32], index: 1, kind: input, shape index: {}]
  %s2 = inlined_call_operand.vmem [shape: f32[2,10,32], index: 2, kind: input, shape index: {}]
  %s3 = inlined_call_operand.vmem [shape: s32[2,1,10], index: 3, kind: input, shape index: {}]
  %s4 = inlined_call_operand.vmem [shape: f32[2,10,32], index: 4, kind: output, shape index: {}]
  %s5 = sld [smem:[#allocation0]]
  $region49: #{transformer_forward.31} parent=0
    _
  %s7 = ssub.s32 1, %s5
  %s8 = scalar_select 0, %s7, %s5
  loop: start=0, step=1, limit=4
  $region2: #{transformer_forward.31} parent=0 // loop_pre_header
    _
  $region3: #{transformer_forward.31} parent=0 // loop_header
    %s10 = sphi 0, %s14
    %p11 = scmp.ge.s32.totalorder %s10, 4
    %s20 = sphi 0, %s22
    %s23 = sphi 0, %s20
    %s24 = sphi 0, %s23
    %s40 = sphi 0, %s24
    %s46 = sphi 0, %s48
    %s49 = sphi 0, %s46
    %s50 = sphi 0, %s49
    %s66 = sphi 0, %s50
    %s72 = sphi 0, %s74
    %s75 = sphi 0, %s72
    %s76 = sphi 0, %s75
    %s92 = sphi 0, %s76
    %s98 = sphi 0, %s100
    %s101 = sphi 0, %s98
    %s102 = sphi 0, %s101
    %s118 = sphi 0, %s102
    %s124 = sphi 0, %s126
    %s127 = sphi 0, %s124
    %s128 = sphi 0, %s127
    %s144 = sphi 0, %s128
  $region4: #{transformer_forward.31} parent=0 // loop_header_branch
    %13 = sbr.rel (%p11) target = $region8
  $region5: #{transformer_forward.31} parent=0 // loop_body
    %s15 = ssub.s32 %s10, 1
    %s16 = ssub.s32 %s10, 2
    %s17 = sadd.s32 %s10, 1
    %s18 = ssub.s32 %s10, %s17
    %p19 = scmp.eq.s32.totalorder %s18, 0
    %s21 = sadd.s32 %s20, 1
    %s22 = scalar_select %p19, %s20, %s21
    %p25 = pneg %p19
    %p26 = scmp.eq.s32.totalorder %s10, 1
    %p27 = por %p25, %p26
    %p28 = scmp.ne.s32.totalorder %s20, %s23
    %p29 = scmp.eq.s32.totalorder %s10, 0
    %p30 = por %p28, %p29
    %p31 = scmp.ne.s32.totalorder %s20, %s23
    %p32 = scmp.eq.s32.totalorder %s15, 1
    %p33 = por %p31, %p32
    %p34 = scmp.ne.s32.totalorder %s23, %s24
    %p35 = scmp.eq.s32.totalorder %s15, 0
    %p36 = por %p34, %p35
    %p37 = scmp.ne.s32.totalorder %s23, %s24
    %p38 = scmp.eq.s32.totalorder %s16, 1
    %p39 = por %p37, %p38
    %p41 = scmp.ne.s32.totalorder %s24, %s40
    %p42 = scmp.eq.s32.totalorder %s16, 0
    %p43 = por %p41, %p42
    %s44 = ssub.s32 %s10, %s17
    %p45 = scmp.eq.s32.totalorder %s44, 0
    %s47 = sadd.s32 %s46, 1
    %s48 = scalar_select %p45, %s46, %s47
    %p51 = pneg %p45
    %p52 = scmp.eq.s32.totalorder %s10, 1
    %p53 = por %p51, %p52
    %p54 = scmp.ne.s32.totalorder %s46, %s49
    %p55 = scmp.eq.s32.totalorder %s10, 0
    %p56 = por %p54, %p55
    %p57 = scmp.ne.s32.totalorder %s46, %s49
    %p58 = scmp.eq.s32.totalorder %s15, 1
    %p59 = por %p57, %p58
    %p60 = scmp.ne.s32.totalorder %s49, %s50
    %p61 = scmp.eq.s32.totalorder %s15, 0
    %p62 = por %p60, %p61
    %p63 = scmp.ne.s32.totalorder %s49, %s50
    %p64 = scmp.eq.s32.totalorder %s16, 1
    %p65 = por %p63, %p64
    %p67 = scmp.ne.s32.totalorder %s50, %s66
    %p68 = scmp.eq.s32.totalorder %s16, 0
    %p69 = por %p67, %p68
    %s70 = ssub.s32 %s10, %s17
    %p71 = scmp.eq.s32.totalorder %s70, 0
    %s73 = sadd.s32 %s72, 1
    %s74 = scalar_select %p71, %s72, %s73
    %p77 = pneg %p71
    %p78 = scmp.eq.s32.totalorder %s10, 1
    %p79 = por %p77, %p78
    %p80 = scmp.ne.s32.totalorder %s72, %s75
    %p81 = scmp.eq.s32.totalorder %s10, 0
    %p82 = por %p80, %p81
    %p83 = scmp.ne.s32.totalorder %s72, %s75
    %p84 = scmp.eq.s32.totalorder %s15, 1
    %p85 = por %p83, %p84
    %p86 = scmp.ne.s32.totalorder %s75, %s76
    %p87 = scmp.eq.s32.totalorder %s15, 0
    %p88 = por %p86, %p87
    %p89 = scmp.ne.s32.totalorder %s75, %s76
    %p90 = scmp.eq.s32.totalorder %s16, 1
    %p91 = por %p89, %p90
    %p93 = scmp.ne.s32.totalorder %s76, %s92
    %p94 = scmp.eq.s32.totalorder %s16, 0
    %p95 = por %p93, %p94
    %s96 = ssub.s32 %s10, %s17
    %p97 = scmp.eq.s32.totalorder %s96, 0
    %s99 = sadd.s32 %s98, 1
    %s100 = scalar_select %p97, %s98, %s99
    %p103 = pneg %p97
    %p104 = scmp.eq.s32.totalorder %s10, 1
    %p105 = por %p103, %p104
    %p106 = scmp.ne.s32.totalorder %s98, %s101
    %p107 = scmp.eq.s32.totalorder %s10, 0
    %p108 = por %p106, %p107
    %p109 = scmp.ne.s32.totalorder %s98, %s101
    %p110 = scmp.eq.s32.totalorder %s15, 1
    %p111 = por %p109, %p110
    %p112 = scmp.ne.s32.totalorder %s101, %s102
    %p113 = scmp.eq.s32.totalorder %s15, 0
    %p114 = por %p112, %p113
    %p115 = scmp.ne.s32.totalorder %s101, %s102
    %p116 = scmp.eq.s32.totalorder %s16, 1
    %p117 = por %p115, %p116
    %p119 = scmp.ne.s32.totalorder %s102, %s118
    %p120 = scmp.eq.s32.totalorder %s16, 0
    %p121 = por %p119, %p120
    %s122 = ssub.s32 %s10, %s17
    %p123 = scmp.eq.s32.totalorder %s122, 0
    %s125 = sadd.s32 %s124, 1
    %s126 = scalar_select %p123, %s124, %s125
    %p129 = pneg %p123
    %p130 = scmp.eq.s32.totalorder %s10, 1
    %p131 = por %p129, %p130
    %p132 = scmp.ne.s32.totalorder %s124, %s127
    %p133 = scmp.eq.s32.totalorder %s10, 0
    %p134 = por %p132, %p133
    %p135 = scmp.ne.s32.totalorder %s124, %s127
    %p136 = scmp.eq.s32.totalorder %s15, 1
    %p137 = por %p135, %p136
    %p138 = scmp.ne.s32.totalorder %s127, %s128
    %p139 = scmp.eq.s32.totalorder %s15, 0
    %p140 = por %p138, %p139
    %p141 = scmp.ne.s32.totalorder %s127, %s128
    %p142 = scmp.eq.s32.totalorder %s16, 1
    %p143 = por %p141, %p142
    %p145 = scmp.ne.s32.totalorder %s128, %s144
    %p146 = scmp.eq.s32.totalorder %s16, 0
    %p147 = por %p145, %p146
    %p148 = scmp.le.s32.totalorder 1, %s10
    %p149 = scmp.lt.s32.totalorder %s10, 3
    %p150 = pnand %p148, %p149
    %p151 = pneg %p150
    // Predicated region
    $region9: #{transformer_forward.31} parent=5 // pred_check
      _
    $region10: #{transformer_forward.31} parent=5 // pred_check_branch
      %153 = sbr.rel (%p150) target = $region12
    $region11: #{transformer_forward.31} parent=5 // pred_region
      %s154 = ssub.s32 %s10, 1
    $region12: #{transformer_forward.31} parent=5 // pred_fallthru
      _
    %p155 = scmp.lt.s32.totalorder %s10, 2
    // Predicated region
    $region13: #{transformer_forward.31} parent=5 // pred_check
      %p156 = pneg %p155
    $region14: #{transformer_forward.31} parent=5 // pred_check_branch
      %158 = sbr.rel (%p156) target = $region16
    $region15: #{transformer_forward.31} parent=5 // pred_region
      // Predicated region
      $region17: #{transformer_forward.31} parent=15 // pred_check
        %p159 = pneg %p30
      $region18: #{transformer_forward.31} parent=15 // pred_check_branch
        %161 = sbr.rel (%p159) target = $region20
      $region19: #{transformer_forward.31} parent=15 // pred_region
        %p162 = scmp.lt.s32.totalorder %s10, 1
        %s163 = scalar_select %p162, %s10, 1
        %s164 = smul.addr %s163, 2
        %s165 = smul.addr %s164, 8
        %s166 = scalar_lea.vmem %s0, %s165
      $region20: #{transformer_forward.31} parent=15 // pred_fallthru
        _
      // Predicated region
      $region21: #{transformer_forward.31} parent=15 // pred_check
        %p167 = pneg %p56
      $region22: #{transformer_forward.31} parent=15 // pred_check_branch
        %169 = sbr.rel (%p167) target = $region24
      $region23: #{transformer_forward.31} parent=15 // pred_region
        %p170 = scmp.lt.s32.totalorder %s10, 1
        %s171 = scalar_select %p170, %s10, 1
        %s172 = smul.addr %s171, 2
        %s173 = smul.addr %s172, 8
        %s174 = scalar_lea.vmem %s1, %s173
      $region24: #{transformer_forward.31} parent=15 // pred_fallthru
        _
      // Predicated region
      $region25: #{transformer_forward.31} parent=15 // pred_check
        %p175 = pneg %p82
      $region26: #{transformer_forward.31} parent=15 // pred_check_branch
        %177 = sbr.rel (%p175) target = $region28
      $region27: #{transformer_forward.31} parent=15 // pred_region
        %p178 = scmp.lt.s32.totalorder %s10, 1
        %s179 = scalar_select %p178, %s10, 1
        %s180 = smul.addr %s179, 2
        %s181 = smul.addr %s180, 8
        %s182 = scalar_lea.vmem %s2, %s181
      $region28: #{transformer_forward.31} parent=15 // pred_fallthru
        _
      // Predicated region
      $region29: #{transformer_forward.31} parent=15 // pred_check
        %p183 = pneg %p108
      $region30: #{transformer_forward.31} parent=15 // pred_check_branch
        %185 = sbr.rel (%p183) target = $region32
      $region31: #{transformer_forward.31} parent=15 // pred_region
        %p186 = scmp.lt.s32.totalorder %s10, 1
        %s187 = scalar_select %p186, %s10, 1
        %s188 = scalar_lea.vmem %s3, %s187
      $region32: #{transformer_forward.31} parent=15 // pred_fallthru
        _
    $region16: #{transformer_forward.31} parent=5 // pred_fallthru
      _
    %p189 = scmp.le.s32.totalorder 1, %s10
    %p190 = scmp.lt.s32.totalorder %s10, 3
    %p191 = pnand %p189, %p190
    %p192 = pneg %p191
    // Predicated region
    $region33: #{transformer_forward.31} parent=5 // pred_check
      _
    $region34: #{transformer_forward.31} parent=5 // pred_check_branch
      %194 = sbr.rel (%p191) target = $region36
    $region35: #{transformer_forward.31} parent=5 // pred_region
      %s195 = ssub.s32 %s10, 1
      %p196 = scmp.lt.s32.totalorder %s15, 1
      %s197 = scalar_select %p196, %s15, 1
      %s198 = smul.addr %s197, 2
      %s199 = smul.addr %s198, 8
      %s200 = scalar_lea.vmem %s0, %s199
      %p201 = pneg %p36
      %p202 = pneg %p33
      %p203 = scmp.lt.s32.totalorder %s15, 1
      %s204 = scalar_select %p203, %s15, 1
      %s205 = smul.addr %s204, 2
      %s206 = smul.addr %s205, 8
      %s207 = scalar_lea.vmem %s1, %s206
      %p208 = pneg %p62
      %p209 = pneg %p59
      %p210 = scmp.lt.s32.totalorder %s15, 1
      %s211 = scalar_select %p210, %s15, 1
      %s212 = smul.addr %s211, 2
      %s213 = smul.addr %s212, 8
      %s214 = scalar_lea.vmem %s2, %s213
      %p215 = pneg %p88
      %p216 = pneg %p85
      %p217 = scmp.lt.s32.totalorder %s15, 1
      %s218 = scalar_select %p217, %s15, 1
      %s219 = scalar_lea.vmem %s3, %s218
      %p220 = pneg %p114
      %p221 = pneg %p111
      %p222 = pneg %p140
      %p223 = pneg %p137
      %p224 = scmp.lt.s32.totalorder %s15, 1
      %s225 = scalar_select %p224, %s15, 1
      %s226 = smul.addr %s225, 2
      %s227 = smul.addr %s226, 8
      %s228 = scalar_lea.vmem %s4, %s227
      %p229 = scmp.lt.s32.totalorder %s15, 1
      %s230 = scalar_select %p229, %s15, 1
      %s231 = smul.addr %s230, 2
      %s232 = smul.addr %s231, 8
      %s233 = scalar_lea.vmem %s0, %s232
      %p234 = scmp.lt.s32.totalorder %s15, 1
      %s235 = scalar_select %p234, %s15, 1
      %s236 = smul.addr %s235, 2
      %s237 = smul.addr %s236, 8
      %s238 = scalar_lea.vmem %s1, %s237
      %p239 = scmp.lt.s32.totalorder %s15, 1
      %s240 = scalar_select %p239, %s15, 1
      %s241 = smul.addr %s240, 2
      %s242 = smul.addr %s241, 8
      %s243 = scalar_lea.vmem %s2, %s242
      %p244 = scmp.lt.s32.totalorder %s15, 1
      %s245 = scalar_select %p244, %s15, 1
      %s246 = scalar_lea.vmem %s3, %s245
      %p247 = scmp.lt.s32.totalorder %s15, 1
      %s248 = scalar_select %p247, %s15, 1
      %s249 = smul.addr %s248, 2
      %s250 = smul.addr %s249, 8
      %s251 = scalar_lea.vmem %s4, %s250
      %v252 = vld [vmem:[%s233] sm:$0xff]
      %v253 = vld [vmem:[%s233 + $0x8] sm:$0x3]
      %v254 = vld [vmem:[%s238] sm:$0xff]
      %v255 = vld [vmem:[%s238 + $0x8] sm:$0x3]
      %v256 = vld [vmem:[%s243] sm:$0xff]
      %v257 = vld [vmem:[%s243 + $0x8] sm:$0x3]
      %v258 = vld [vmem:[%s246] sm:$0x1]
      %vm259 = vcmask 64512
      %v261 = vsel %vm259, %v252, 0
      %v264 = vsel %vm259, %v253, 0
      %v267 = vsel %vm259, %v254, 0
      %v270 = vsel %vm259, %v255, 0
      %272 = vmatpush.xpose.msra.mxu0 0.0
      %273 = vmatpush.xpose.msra.mxu0 0.0
      %274 = vmatpush.xpose.msra.mxu0 0.0
      %275 = vmatpush.xpose.msra.mxu0 0.0
      %276 = vmatpush.xpose.msra.mxu0 0.0
      %277 = vmatpush.xpose.msra.mxu0 0.0
      %278 = vmatpush.xpose.msra.mxu0 0.0
      %279 = vmatpush.xpose.msra.mxu0 0.0
      %280 = vmatpush.xpose.msra.mxu0 0.0
      %281 = vmatpush.xpose.msra.mxu0 0.0
      %282 = vmatpush.xpose.msra.mxu0 0.0
      %283 = vmatpush.xpose.msra.mxu0 0.0
      %284 = vmatpush.xpose.msra.mxu0 0.0
      %285 = vmatpush.xpose.msra.mxu0 0.0
      %286 = vmatpush.xpose.msra.mxu0 %v270
      %287 = vmatpush.xpose.msra.mxu0 %v267
      %288 = vmatmul.f32.gmra.mxu0 %v261
      %v289 = vpop.f32.mrf.mxu0
      %v290 = vadd.f32 0.0, %v289
      %291 = vmatmul.f32.gmra.mxu0 %v264
      %v292 = vpop.f32.mrf.mxu0
      %v293 = vadd.f32 0.0, %v292
      %294 = vdwg.mxu0
      %v295 = vmul.f32 %v290, 0.35355338
      %v296 = vmul.f32 %v293, 0.35355338
      %vm297 = vcmp.eq.s32.totalorder %v258, 0
      %v298 = vsel %vm297, 1, 0
      %v299 = vperm.slane %v298, 0
      %vm300 = vcmp.eq.s32.totalorder %v299, 1
      %v301 = vsel %vm300, -1e+09, %v295
      %v302 = vsel %vm300, -1e+09, %v296
      %vm303 = vcmask 80896
      %v304 = vsel %vm303, %v301, -inf
      %305 = vmax.xlane.f32.xlu0 %v304
      %v306 = vpop.xlane.xlu0 %305
      %vm307 = vcmask 74752
      %v308 = vsel %vm307, %v302, -inf
      %309 = vmax.xlane.f32.xlu0 %v308
      %v310 = vpop.xlane.xlu0 %309
      %v311 = vsub.f32 %v301, %v306
      %v312 = vsub.f32 %v302, %v310
      %v313 = vmul.f32 %v311, 1.442695
      %v314 = vpow.pop %v313
      %v315 = vmul.f32 %v312, 1.442695
      %v316 = vpow.pop %v315
      %v317 = vsel %vm303, %v314, 0.0
      %318 = vadd.xlane.f32.xlu0 %v317
      %v319 = vpop.xlane.xlu0 %318
      %v320 = vsel %vm307, %v316, 0.0
      %321 = vadd.xlane.f32.xlu0 %v320
      %v322 = vpop.xlane.xlu0 %321
      %v323 = vrcp.pop %v319
      %v324 = vrcp.pop %v322
      %v325 = vmul.f32 %v314, %v323
      %v326 = vmul.f32 %v316, %v324
      %v328 = vsel %vm303, %v325, 0
      %v331 = vsel %vm303, %v326, 0
      %vm333 = vcmask 1041408
      %v335 = vsel %vm333, %v257, 0
      %337 = vmatpush.msra.mxu0 0.0
      %338 = vmatpush.msra.mxu0 0.0
      %339 = vmatpush.msra.mxu0 0.0
      %340 = vmatpush.msra.mxu0 0.0
      %341 = vmatpush.msra.mxu0 0.0
      %342 = vmatpush.msra.mxu0 0.0
      %343 = vmatpush.msra.mxu0 0.0
      %344 = vmatpush.msra.mxu0 0.0
      %345 = vmatpush.msra.mxu0 0.0
      %346 = vmatpush.msra.mxu0 0.0
      %347 = vmatpush.msra.mxu0 0.0
      %348 = vmatpush.msra.mxu0 0.0
      %349 = vmatpush.msra.mxu0 0.0
      %350 = vmatpush.msra.mxu0 0.0
      %351 = vmatpush.msra.mxu0 %v335
      %352 = vmatpush.msra.mxu0 %v256
      %353 = vmatmul.f32.gmra.mxu0 %v328
      %v354 = vpop.f32.mrf.mxu0
      %v355 = vadd.f32 0.0, %v354
      %356 = vmatmul.f32.gmra.mxu0 %v331
      %v357 = vpop.f32.mrf.mxu0
      %v358 = vadd.f32 0.0, %v357
      %359 = vdwg.mxu0
      %360 = vst.msk [vmem:[%s251] sm:$0xff] %vm259, %v355
      %vm361 = vcmask 58368
      %362 = vst.msk [vmem:[%s251 + $0x8] sm:$0x3] %vm361, %v358
      %363 = vrot.lane.b32.xlu0 %v252, 120
      %v364 = vpop.permute.xlu0 %363
      %365 = vrot.lane.b32.xlu0 %v253, 120
      %v366 = vpop.permute.xlu0 %365
      %367 = vrot.lane.b32.xlu0 %v254, 120
      %v368 = vpop.permute.xlu0 %367
      %369 = vrot.lane.b32.xlu0 %v255, 120
      %v370 = vpop.permute.xlu0 %369
      %v371 = vsel %vm259, %v364, 0
      %v373 = vsel %vm259, %v366, 0
      %v375 = vsel %vm259, %v368, 0
      %v377 = vsel %vm259, %v370, 0
      %379 = vmatpush.xpose.msra.mxu0 0.0
      %380 = vmatpush.xpose.msra.mxu0 0.0
      %381 = vmatpush.xpose.msra.mxu0 0.0
      %382 = vmatpush.xpose.msra.mxu0 0.0
      %383 = vmatpush.xpose.msra.mxu0 0.0
      %384 = vmatpush.xpose.msra.mxu0 0.0
      %385 = vmatpush.xpose.msra.mxu0 0.0
      %386 = vmatpush.xpose.msra.mxu0 0.0
      %387 = vmatpush.xpose.msra.mxu0 0.0
      %388 = vmatpush.xpose.msra.mxu0 0.0
      %389 = vmatpush.xpose.msra.mxu0 0.0
      %390 = vmatpush.xpose.msra.mxu0 0.0
      %391 = vmatpush.xpose.msra.mxu0 0.0
      %392 = vmatpush.xpose.msra.mxu0 0.0
      %393 = vmatpush.xpose.msra.mxu0 %v377
      %394 = vmatpush.xpose.msra.mxu0 %v375
      %395 = vmatmul.f32.gmra.mxu0 %v371
      %v396 = vpop.f32.mrf.mxu0
      %v397 = vadd.f32 0.0, %v396
      %398 = vmatmul.f32.gmra.mxu0 %v373
      %v399 = vpop.f32.mrf.mxu0
      %v400 = vadd.f32 0.0, %v399
      %401 = vdwg.mxu0
      %v402 = vmul.f32 %v397, 0.35355338
      %v403 = vmul.f32 %v400, 0.35355338
      %v404 = vsel %vm300, -1e+09, %v402
      %v405 = vsel %vm300, -1e+09, %v403
      %v406 = vsel %vm303, %v404, -inf
      %407 = vmax.xlane.f32.xlu0 %v406
      %v408 = vpop.xlane.xlu0 %407
      %v409 = vsel %vm307, %v405, -inf
      %410 = vmax.xlane.f32.xlu0 %v409
      %v411 = vpop.xlane.xlu0 %410
      %v412 = vsub.f32 %v404, %v408
      %v413 = vsub.f32 %v405, %v411
      %v414 = vmul.f32 %v412, 1.442695
      %v415 = vpow.pop %v414
      %v416 = vmul.f32 %v413, 1.442695
      %v417 = vpow.pop %v416
      %v418 = vsel %vm303, %v415, 0.0
      %419 = vadd.xlane.f32.xlu0 %v418
      %v420 = vpop.xlane.xlu0 %419
      %v421 = vsel %vm307, %v417, 0.0
      %422 = vadd.xlane.f32.xlu0 %v421
      %v423 = vpop.xlane.xlu0 %422
      %v424 = vrcp.pop %v420
      %v425 = vrcp.pop %v423
      %v426 = vmul.f32 %v415, %v424
      %v427 = vmul.f32 %v417, %v425
      %429 = vrot.lane.b32.xlu0 %v256, 120
      %v430 = vpop.permute.xlu0 %429
      %431 = vrot.lane.b32.xlu0 %v257, 120
      %v432 = vpop.permute.xlu0 %431
      %v435 = vsel %vm303, %v426, 0
      %v438 = vsel %vm303, %v427, 0
      %v440 = vsel %vm333, %v432, 0
      %442 = vmatpush.msra.mxu0 0.0
      %443 = vmatpush.msra.mxu0 0.0
      %444 = vmatpush.msra.mxu0 0.0
      %445 = vmatpush.msra.mxu0 0.0
      %446 = vmatpush.msra.mxu0 0.0
      %447 = vmatpush.msra.mxu0 0.0
      %448 = vmatpush.msra.mxu0 0.0
      %449 = vmatpush.msra.mxu0 0.0
      %450 = vmatpush.msra.mxu0 0.0
      %451 = vmatpush.msra.mxu0 0.0
      %452 = vmatpush.msra.mxu0 0.0
      %453 = vmatpush.msra.mxu0 0.0
      %454 = vmatpush.msra.mxu0 0.0
      %455 = vmatpush.msra.mxu0 0.0
      %456 = vmatpush.msra.mxu0 %v440
      %457 = vmatpush.msra.mxu0 %v430
      %458 = vmatmul.f32.gmra.mxu0 %v435
      %v459 = vpop.f32.mrf.mxu0
      %v460 = vadd.f32 0.0, %v459
      %461 = vmatmul.f32.gmra.mxu0 %v438
      %v462 = vpop.f32.mrf.mxu0
      %v463 = vadd.f32 0.0, %v462
      %464 = vdwg.mxu0
      %467 = vrot.lane.b32.xlu0 %v460, 8
      %v468 = vpop.permute.xlu0 %467
      %469 = vrot.lane.b32.xlu0 %v463, 8
      %v470 = vpop.permute.xlu0 %469
      %vm473 = vcmask 130112
      %474 = vst.msk [vmem:[%s251] sm:$0xff] %vm473, %v468
      %vm475 = vcmask 123968
      %476 = vst.msk [vmem:[%s251 + $0x8] sm:$0x3] %vm475, %v470
      %477 = vrot.lane.b32.xlu0 %v252, 112
      %v478 = vpop.permute.xlu0 %477
      %479 = vrot.lane.b32.xlu0 %v253, 112
      %v480 = vpop.permute.xlu0 %479
      %481 = vrot.lane.b32.xlu0 %v254, 112
      %v482 = vpop.permute.xlu0 %481
      %483 = vrot.lane.b32.xlu0 %v255, 112
      %v484 = vpop.permute.xlu0 %483
      %v485 = vsel %vm259, %v478, 0
      %v487 = vsel %vm259, %v480, 0
      %v489 = vsel %vm259, %v482, 0
      %v491 = vsel %vm259, %v484, 0
      %493 = vmatpush.xpose.msra.mxu0 0.0
      %494 = vmatpush.xpose.msra.mxu0 0.0
      %495 = vmatpush.xpose.msra.mxu0 0.0
      %496 = vmatpush.xpose.msra.mxu0 0.0
      %497 = vmatpush.xpose.msra.mxu0 0.0
      %498 = vmatpush.xpose.msra.mxu0 0.0
      %499 = vmatpush.xpose.msra.mxu0 0.0
      %500 = vmatpush.xpose.msra.mxu0 0.0
      %501 = vmatpush.xpose.msra.mxu0 0.0
      %502 = vmatpush.xpose.msra.mxu0 0.0
      %503 = vmatpush.xpose.msra.mxu0 0.0
      %504 = vmatpush.xpose.msra.mxu0 0.0
      %505 = vmatpush.xpose.msra.mxu0 0.0
      %506 = vmatpush.xpose.msra.mxu0 0.0
      %507 = vmatpush.xpose.msra.mxu0 %v491
      %508 = vmatpush.xpose.msra.mxu0 %v489
      %509 = vmatmul.f32.gmra.mxu0 %v485
      %v510 = vpop.f32.mrf.mxu0
      %v511 = vadd.f32 0.0, %v510
      %512 = vmatmul.f32.gmra.mxu0 %v487
      %v513 = vpop.f32.mrf.mxu0
      %v514 = vadd.f32 0.0, %v513
      %515 = vdwg.mxu0
      %v516 = vmul.f32 %v511, 0.35355338
      %v517 = vmul.f32 %v514, 0.35355338
      %v518 = vsel %vm300, -1e+09, %v516
      %v519 = vsel %vm300, -1e+09, %v517
      %v520 = vsel %vm303, %v518, -inf
      %521 = vmax.xlane.f32.xlu0 %v520
      %v522 = vpop.xlane.xlu0 %521
      %v523 = vsel %vm307, %v519, -inf
      %524 = vmax.xlane.f32.xlu0 %v523
      %v525 = vpop.xlane.xlu0 %524
      %v526 = vsub.f32 %v518, %v522
      %v527 = vsub.f32 %v519, %v525
      %v528 = vmul.f32 %v526, 1.442695
      %v529 = vpow.pop %v528
      %v530 = vmul.f32 %v527, 1.442695
      %v531 = vpow.pop %v530
      %v532 = vsel %vm303, %v529, 0.0
      %533 = vadd.xlane.f32.xlu0 %v532
      %v534 = vpop.xlane.xlu0 %533
      %v535 = vsel %vm307, %v531, 0.0
      %536 = vadd.xlane.f32.xlu0 %v535
      %v537 = vpop.xlane.xlu0 %536
      %v538 = vrcp.pop %v534
      %v539 = vrcp.pop %v537
      %v540 = vmul.f32 %v529, %v538
      %v541 = vmul.f32 %v531, %v539
      %542 = vrot.lane.b32.xlu0 %v256, 112
      %v543 = vpop.permute.xlu0 %542
      %544 = vrot.lane.b32.xlu0 %v257, 112
      %v545 = vpop.permute.xlu0 %544
      %v548 = vsel %vm303, %v540, 0
      %v551 = vsel %vm303, %v541, 0
      %v553 = vsel %vm333, %v545, 0
      %555 = vmatpush.msra.mxu0 0.0
      %556 = vmatpush.msra.mxu0 0.0
      %557 = vmatpush.msra.mxu0 0.0
      %558 = vmatpush.msra.mxu0 0.0
      %559 = vmatpush.msra.mxu0 0.0
      %560 = vmatpush.msra.mxu0 0.0
      %561 = vmatpush.msra.mxu0 0.0
      %562 = vmatpush.msra.mxu0 0.0
      %563 = vmatpush.msra.mxu0 0.0
      %564 = vmatpush.msra.mxu0 0.0
      %565 = vmatpush.msra.mxu0 0.0
      %566 = vmatpush.msra.mxu0 0.0
      %567 = vmatpush.msra.mxu0 0.0
      %568 = vmatpush.msra.mxu0 0.0
      %569 = vmatpush.msra.mxu0 %v553
      %570 = vmatpush.msra.mxu0 %v543
      %571 = vmatmul.f32.gmra.mxu0 %v548
      %v572 = vpop.f32.mrf.mxu0
      %v573 = vadd.f32 0.0, %v572
      %574 = vmatmul.f32.gmra.mxu0 %v551
      %v575 = vpop.f32.mrf.mxu0
      %v576 = vadd.f32 0.0, %v575
      %577 = vdwg.mxu0
      %580 = vrot.lane.b32.xlu0 %v573, 16
      %v581 = vpop.permute.xlu0 %580
      %582 = vrot.lane.b32.xlu0 %v576, 16
      %v583 = vpop.permute.xlu0 %582
      %vm586 = vcmask 195712
      %587 = vst.msk [vmem:[%s251] sm:$0xff] %vm586, %v581
      %vm588 = vcmask 189568
      %589 = vst.msk [vmem:[%s251 + $0x8] sm:$0x3] %vm588, %v583
      %590 = vrot.lane.b32.xlu0 %v252, 104
      %v591 = vpop.permute.xlu0 %590
      %592 = vrot.lane.b32.xlu0 %v253, 104
      %v593 = vpop.permute.xlu0 %592
      %594 = vrot.lane.b32.xlu0 %v254, 104
      %v595 = vpop.permute.xlu0 %594
      %596 = vrot.lane.b32.xlu0 %v255, 104
      %v597 = vpop.permute.xlu0 %596
      %v598 = vsel %vm259, %v591, 0
      %v600 = vsel %vm259, %v593, 0
      %v602 = vsel %vm259, %v595, 0
      %v604 = vsel %vm259, %v597, 0
      %606 = vmatpush.xpose.msra.mxu0 0.0
      %607 = vmatpush.xpose.msra.mxu0 0.0
      %608 = vmatpush.xpose.msra.mxu0 0.0
      %609 = vmatpush.xpose.msra.mxu0 0.0
      %610 = vmatpush.xpose.msra.mxu0 0.0
      %611 = vmatpush.xpose.msra.mxu0 0.0
      %612 = vmatpush.xpose.msra.mxu0 0.0
      %613 = vmatpush.xpose.msra.mxu0 0.0
      %614 = vmatpush.xpose.msra.mxu0 0.0
      %615 = vmatpush.xpose.msra.mxu0 0.0
      %616 = vmatpush.xpose.msra.mxu0 0.0
      %617 = vmatpush.xpose.msra.mxu0 0.0
      %618 = vmatpush.xpose.msra.mxu0 0.0
      %619 = vmatpush.xpose.msra.mxu0 0.0
      %620 = vmatpush.xpose.msra.mxu0 %v604
      %621 = vmatpush.xpose.msra.mxu0 %v602
      %622 = vmatmul.f32.gmra.mxu0 %v598
      %v623 = vpop.f32.mrf.mxu0
      %v624 = vadd.f32 0.0, %v623
      %625 = vmatmul.f32.gmra.mxu0 %v600
      %v626 = vpop.f32.mrf.mxu0
      %v627 = vadd.f32 0.0, %v626
      %628 = vdwg.mxu0
      %v629 = vmul.f32 %v624, 0.35355338
      %v630 = vmul.f32 %v627, 0.35355338
      %v631 = vsel %vm300, -1e+09, %v629
      %v632 = vsel %vm300, -1e+09, %v630
      %v633 = vsel %vm303, %v631, -inf
      %634 = vmax.xlane.f32.xlu0 %v633
      %v635 = vpop.xlane.xlu0 %634
      %v636 = vsel %vm307, %v632, -inf
      %637 = vmax.xlane.f32.xlu0 %v636
      %v638 = vpop.xlane.xlu0 %637
      %v639 = vsub.f32 %v631, %v635
      %v640 = vsub.f32 %v632, %v638
      %v641 = vmul.f32 %v639, 1.442695
      %v642 = vpow.pop %v641
      %v643 = vmul.f32 %v640, 1.442695
      %v644 = vpow.pop %v643
      %v645 = vsel %vm303, %v642, 0.0
      %646 = vadd.xlane.f32.xlu0 %v645
      %v647 = vpop.xlane.xlu0 %646
      %v648 = vsel %vm307, %v644, 0.0
      %649 = vadd.xlane.f32.xlu0 %v648
      %v650 = vpop.xlane.xlu0 %649
      %v651 = vrcp.pop %v647
      %v652 = vrcp.pop %v650
      %v653 = vmul.f32 %v642, %v651
      %v654 = vmul.f32 %v644, %v652
      %655 = vrot.lane.b32.xlu0 %v256, 104
      %v656 = vpop.permute.xlu0 %655
      %657 = vrot.lane.b32.xlu0 %v257, 104
      %v658 = vpop.permute.xlu0 %657
      %v661 = vsel %vm303, %v653, 0
      %v664 = vsel %vm303, %v654, 0
      %v666 = vsel %vm333, %v658, 0
      %668 = vmatpush.msra.mxu0 0.0
      %669 = vmatpush.msra.mxu0 0.0
      %670 = vmatpush.msra.mxu0 0.0
      %671 = vmatpush.msra.mxu0 0.0
      %672 = vmatpush.msra.mxu0 0.0
      %673 = vmatpush.msra.mxu0 0.0
      %674 = vmatpush.msra.mxu0 0.0
      %675 = vmatpush.msra.mxu0 0.0
      %676 = vmatpush.msra.mxu0 0.0
      %677 = vmatpush.msra.mxu0 0.0
      %678 = vmatpush.msra.mxu0 0.0
      %679 = vmatpush.msra.mxu0 0.0
      %680 = vmatpush.msra.mxu0 0.0
      %681 = vmatpush.msra.mxu0 0.0
      %682 = vmatpush.msra.mxu0 %v666
      %683 = vmatpush.msra.mxu0 %v656
      %684 = vmatmul.f32.gmra.mxu0 %v661
      %v685 = vpop.f32.mrf.mxu0
      %v686 = vadd.f32 0.0, %v685
      %687 = vmatmul.f32.gmra.mxu0 %v664
      %v688 = vpop.f32.mrf.mxu0
      %v689 = vadd.f32 0.0, %v688
      %690 = vdwg.mxu0
      %693 = vrot.lane.b32.xlu0 %v686, 24
      %v694 = vpop.permute.xlu0 %693
      %695 = vrot.lane.b32.xlu0 %v689, 24
      %v696 = vpop.permute.xlu0 %695
      %vm699 = vcmask 261312
      %700 = vst.msk [vmem:[%s251] sm:$0xff] %vm699, %v694
      %vm701 = vcmask 255168
      %702 = vst.msk [vmem:[%s251 + $0x8] sm:$0x3] %vm701, %v696
      %p703 = scmp.lt.s32.totalorder %s15, 1
      %s704 = scalar_select %p703, %s15, 1
      %s705 = smul.addr %s704, 2
      %s706 = smul.addr %s705, 8
      %s707 = scalar_lea.vmem %s4, %s706
      // Predicated region
      $region37: #{transformer_forward.31} parent=35 // pred_check
        %p708 = pneg %p137
      $region38: #{transformer_forward.31} parent=35 // pred_check_branch
        %710 = sbr.rel (%p708) target = $region40
      $region39: #{transformer_forward.31} parent=35 // pred_region
        _
      $region40: #{transformer_forward.31} parent=35 // pred_fallthru
        _
    $region36: #{transformer_forward.31} parent=5 // pred_fallthru
      _
    %p711 = scmp.le.s32.totalorder 2, %s10
    // Predicated region
    $region41: #{transformer_forward.31} parent=5 // pred_check
      %p712 = pneg %p711
    $region42: #{transformer_forward.31} parent=5 // pred_check_branch
      %714 = sbr.rel (%p712) target = $region44
    $region43: #{transformer_forward.31} parent=5 // pred_region
      %s715 = ssub.s32 %s10, 2
      // Predicated region
      $region45: #{transformer_forward.31} parent=43 // pred_check
        %p716 = pneg %p143
      $region46: #{transformer_forward.31} parent=43 // pred_check_branch
        %718 = sbr.rel (%p716) target = $region48
      $region47: #{transformer_forward.31} parent=43 // pred_region
        %p719 = scmp.lt.s32.totalorder %s16, 1
        %s720 = scalar_select %p719, %s16, 1
        %s721 = smul.addr %s720, 2
        %s722 = smul.addr %s721, 8
        %s723 = scalar_lea.vmem %s4, %s722
      $region48: #{transformer_forward.31} parent=43 // pred_fallthru
        _
    $region44: #{transformer_forward.31} parent=5 // pred_fallthru
      _
  $region6: #{transformer_forward.31} parent=0 // loop_footer
    %s14 = sadd.s32 1, %s10
  $region7: #{transformer_forward.31} parent=0 // loop_footer_branch
    %9 = sbr.rel target = $region3
  $region8: #{transformer_forward.31} parent=0 // loop_exit
    _

// kernel: transformer_forward.45
$region0: #{transformer_forward.45}
  #allocation0 [shape = 'u32[]', space=smem, size = 0x4, offset = 0x4, fixed_abs, tag = 'smem constant byte address 0x4 - core index']
  #allocation1 [shape = 'u32[72,128]{1,0:T(1,128)}', space=vmem, size = 0x9000, scoped, tag = 'internal scratch']
  #allocation2 [shape = 'f32[20,64]{1,0:T(8,128)}', space=vmem, size = 0x3000, scoped, tag = 'scratch operand']
  %s0 = inlined_call_operand.vmem [shape: f32[20,32], index: 0, kind: input, shape index: {}]
  %s1 = inlined_call_operand.vmem [shape: bf16[32,64], index: 1, kind: input, shape index: {}]
  %s2 = inlined_call_operand.vmem [shape: f32[1,64], index: 2, kind: input, shape index: {}]
  %s3 = inlined_call_operand.vmem [shape: f32[20,64], index: 3, kind: output, shape index: {}]
  %s4 = sld [smem:[#allocation0]]
  $region30: #{transformer_forward.45} parent=0
    _
  %s6 = ssub.s32 1, %s4
  %s7 = scalar_select 0, %s6, %s4
  // Predicated region
  $region2: #{transformer_forward.45} parent=0 // pred_check
    _
  $region3: #{transformer_forward.45} parent=0 // pred_check_branch
    %9 = sbr.rel (0) target = $region5
  $region4: #{transformer_forward.45} parent=0 // pred_region
    _
  $region5: #{transformer_forward.45} parent=0 // pred_fallthru
    _
  // Predicated region
  $region6: #{transformer_forward.45} parent=0 // pred_check
    _
  $region7: #{transformer_forward.45} parent=0 // pred_check_branch
    %11 = sbr.rel (0) target = $region9
  $region8: #{transformer_forward.45} parent=0 // pred_region
    _
  $region9: #{transformer_forward.45} parent=0 // pred_fallthru
    _
  // Predicated region
  $region10: #{transformer_forward.45} parent=0 // pred_check
    _
  $region11: #{transformer_forward.45} parent=0 // pred_check_branch
    %13 = sbr.rel (0) target = $region13
  $region12: #{transformer_forward.45} parent=0 // pred_region
    _
  $region13: #{transformer_forward.45} parent=0 // pred_fallthru
    _
  %p15 = scmp.eq.s32.totalorder 0, 0
  // Predicated region
  $region14: #{transformer_forward.45} parent=0 // pred_check
    %p16 = pneg %p15
  $region15: #{transformer_forward.45} parent=0 // pred_check_branch
    %18 = sbr.rel (%p16) target = $region17
  $region16: #{transformer_forward.45} parent=0 // pred_region
    %vm19 = vcmask 523264
    %20 = vst.msk [vmem:[#allocation2] sm:$0xff] %vm19, 0.0
    %21 = vst.msk [vmem:[#allocation2 + $0x8] sm:$0xff] %vm19, 0.0
    %vm22 = vcmask 519168
    %23 = vst.msk [vmem:[#allocation2 + $0x10] sm:$0xf] %vm22, 0.0
  $region17: #{transformer_forward.45} parent=0 // pred_fallthru
    _
  %v24 = vld [vmem:[%s0] sm:$0xff]
  %v25 = vld [vmem:[%s0 + $0x8] sm:$0xff]
  %v26 = vld [vmem:[%s0 + $0x10] sm:$0xf]
  %v27 = vld [vmem:[#allocation2] sm:$0xff]
  %v28 = vld [vmem:[#allocation2 + $0x8] sm:$0xff]
  %v29 = vld [vmem:[#allocation2 + $0x10] sm:$0xf]
  %v30 = vpack.c.bf16 %v25, %v24
  %v31 = vpack.c.bf16 %v26, %v26
  %v32 = vld [vmem:[%s1] sm:$0xf]
  %v33 = vld [vmem:[%s1 + $0x4] sm:$0xf]
  %v34 = vld [vmem:[%s1 + $0x8] sm:$0xf]
  %v35 = vld [vmem:[%s1 + $0xc] sm:$0xf]
  %v40 = vunpack.c.l.b16 %v32
  %v41 = vunpack.c.l.b16 %v33
  %v42 = vunpack.c.l.b16 %v34
  %v43 = vunpack.c.l.b16 %v35
  %v44 = vpack.c.b16 %v41, %v40
  %v45 = vpack.c.b16 %v43, %v42
  %vm48 = vcmask 261120
  %v50 = vsel %vm48, %v30, 0
  %v53 = vsel %vm48, %v31, 0
  %55 = vmatpush.bf16.msra.mxu0 0
  %56 = vmatpush.bf16.msra.mxu0 0
  %57 = vmatpush.bf16.msra.mxu0 0
  %58 = vmatpush.bf16.msra.mxu0 0
  %59 = vmatpush.bf16.msra.mxu0 0
  %60 = vmatpush.bf16.msra.mxu0 0
  %61 = vmatpush.bf16.msra.mxu0 %v45
  %62 = vmatpush.bf16.msra.mxu0 %v44
  %63 = vmatmul.bf16.gmra.mxu0 %v50
  %v64 = vpop.f32.mrf.mxu0
  %v65 = vadd.f32 0.0, %v64
  %v66 = vpop.f32.mrf.mxu0
  %v67 = vadd.f32 0.0, %v66
  %68 = vmatmul.bf16.gmra.mxu0 %v53
  %v69 = vpop.f32.mrf.mxu0
  %v70 = vadd.f32 0.0, %v69
  %v71 = vpop.f32.mrf.mxu0
  %72 = vdwg.mxu0
  %v73 = vadd.f32 %v27, %v65
  %v74 = vadd.f32 %v28, %v67
  %v75 = vadd.f32 %v29, %v70
  %vm76 = vcmask 523264
  %77 = vst.msk [vmem:[#allocation2] sm:$0xff] %vm76, %v73
  %78 = vst.msk [vmem:[#allocation2 + $0x8] sm:$0xff] %vm76, %v74
  %vm79 = vcmask 519168
  %80 = vst.msk [vmem:[#allocation2 + $0x10] sm:$0xf] %vm79, %v75
  // Predicated region
  $region18: #{transformer_forward.45} parent=0 // pred_check
    %p81 = pneg %p15
  $region19: #{transformer_forward.45} parent=0 // pred_check_branch
    %83 = sbr.rel (%p81) target = $region21
  $region20: #{transformer_forward.45} parent=0 // pred_region
    %v84 = vld [vmem:[#allocation2] sm:$0xff]
    %v85 = vld [vmem:[#allocation2 + $0x8] sm:$0xff]
    %v86 = vld [vmem:[#allocation2 + $0x10] sm:$0xf]
    %v87 = vld [vmem:[%s2] sm:$0x1]
    %v89 = vperm.slane %v87, 0
    %v91 = vadd.f32 %v84, %v89
    %v92 = vadd.f32 %v85, %v89
    %v93 = vadd.f32 %v86, %v89
    %94 = vst.msk [vmem:[%s3] sm:$0xff] %vm76, %v91
    %95 = vst.msk [vmem:[%s3 + $0x8] sm:$0xff] %vm76, %v92
    %96 = vst.msk [vmem:[%s3 + $0x10] sm:$0xf] %vm79, %v93
  $region21: #{transformer_forward.45} parent=0 // pred_fallthru
    _
  // Predicated region
  $region22: #{transformer_forward.45} parent=0 // pred_check
    _
  $region23: #{transformer_forward.45} parent=0 // pred_check_branch
    %98 = sbr.rel (0) target = $region25
  $region24: #{transformer_forward.45} parent=0 // pred_region
    _
  $region25: #{transformer_forward.45} parent=0 // pred_fallthru
    _
  // Predicated region
  $region26: #{transformer_forward.45} parent=0 // pred_check
    _
  $region27: #{transformer_forward.45} parent=0 // pred_check_branch
    %100 = sbr.rel (0) target = $region29
  $region28: #{transformer_forward.45} parent=0 // pred_region
    _
  $region29: #{transformer_forward.45} parent=0 // pred_fallthru
    _

// kernel: transformer_forward.40
$region0: #{transformer_forward.40}
  #allocation0 [shape = 'u32[]', space=smem, size = 0x4, offset = 0x4, fixed_abs, tag = 'smem constant byte address 0x4 - core index']
  #allocation1 [shape = 'u32[72,128]{1,0:T(1,128)}', space=vmem, size = 0x9000, scoped, tag = 'internal scratch']
  %s0 = inlined_call_operand.vmem [shape: f32[20,32], index: 0, kind: input, shape index: {}]
  %s1 = inlined_call_operand.vmem [shape: f32[1,32], index: 1, kind: input, shape index: {}]
  %s2 = inlined_call_operand.vmem [shape: f32[1,32], index: 2, kind: input, shape index: {}]
  %s3 = inlined_call_operand.vmem [shape: f32[20,32], index: 3, kind: output, shape index: {}]
  %s4 = sld [smem:[#allocation0]]
  $region22: #{transformer_forward.40} parent=0
    _
  %s6 = ssub.s32 1, %s4
  %s7 = scalar_select 0, %s6, %s4
  // Predicated region
  $region2: #{transformer_forward.40} parent=0 // pred_check
    _
  $region3: #{transformer_forward.40} parent=0 // pred_check_branch
    %9 = sbr.rel (0) target = $region5
  $region4: #{transformer_forward.40} parent=0 // pred_region
    _
  $region5: #{transformer_forward.40} parent=0 // pred_fallthru
    _
  // Predicated region
  $region6: #{transformer_forward.40} parent=0 // pred_check
    _
  $region7: #{transformer_forward.40} parent=0 // pred_check_branch
    %11 = sbr.rel (0) target = $region9
  $region8: #{transformer_forward.40} parent=0 // pred_region
    _
  $region9: #{transformer_forward.40} parent=0 // pred_fallthru
    _
  // Predicated region
  $region10: #{transformer_forward.40} parent=0 // pred_check
    _
  $region11: #{transformer_forward.40} parent=0 // pred_check_branch
    %13 = sbr.rel (0) target = $region13
  $region12: #{transformer_forward.40} parent=0 // pred_region
    _
  $region13: #{transformer_forward.40} parent=0 // pred_fallthru
    _
  %v14 = vld [vmem:[%s0] sm:$0xff]
  %v15 = vld [vmem:[%s0 + $0x8] sm:$0xff]
  %v16 = vld [vmem:[%s0 + $0x10] sm:$0xf]
  %vm17 = vcmask 261120
  %v18 = vsel %vm17, %v14, 0.0
  %19 = vadd.xlane.f32.xlu0 %v18
  %v20 = vpop.xlane.xlu0 %19
  %v21 = vsel %vm17, %v15, 0.0
  %22 = vadd.xlane.f32.xlu0 %v21
  %v23 = vpop.xlane.xlu0 %22
  %vm24 = vcmask 257024
  %v25 = vsel %vm24, %v16, 0.0
  %26 = vadd.xlane.f32.xlu0 %v25
  %v27 = vpop.xlane.xlu0 %26
  %v28 = vrcp.pop 32.0
  %v29 = vmul.f32 32.0, %v28
  %v30 = vsub.f32 1.0, %v29
  %v31 = vmul.f32 %v28, %v30
  %v32 = vadd.f32 %v28, %v31
  %vm33 = vweird.f32 %v28
  %v34 = vsel %vm33, %v28, %v32
  %v35 = vmul.f32 %v20, %v34
  %v36 = vmul.f32 %v23, %v34
  %v37 = vmul.f32 %v27, %v34
  %v38 = vsub.f32 %v14, %v35
  %v39 = vsub.f32 %v15, %v36
  %v40 = vsub.f32 %v16, %v37
  %v41 = vmul.f32 %v38, %v38
  %v42 = vmul.f32 %v39, %v39
  %v43 = vmul.f32 %v40, %v40
  %v44 = vsel %vm17, %v41, 0.0
  %45 = vadd.xlane.f32.xlu0 %v44
  %v46 = vpop.xlane.xlu0 %45
  %v47 = vsel %vm17, %v42, 0.0
  %48 = vadd.xlane.f32.xlu0 %v47
  %v49 = vpop.xlane.xlu0 %48
  %v50 = vsel %vm24, %v43, 0.0
  %51 = vadd.xlane.f32.xlu0 %v50
  %v52 = vpop.xlane.xlu0 %51
  %v53 = vmul.f32 %v46, 0.032258064
  %v54 = vmul.f32 %v49, 0.032258064
  %v55 = vmul.f32 %v52, 0.032258064
  %v56 = vrsqrt.pop %v53
  %v57 = vmul.f32 %v56, %v53
  %v58 = vmul.f32 %v57, %v56
  %v59 = vmul.f32 0.5, %v58
  %v60 = vsub.f32 1.5, %v59
  %v61 = vmul.f32 %v56, %v60
  %v62 = vmul.f32 %v53, %v61
  %vm63 = vcmp.eq.f32.partialorder %v53, inf
  %v64 = vsel %vm63, %v53, %v62
  %vm65 = vcmp.eq.f32.partialorder %v53, 0.0
  %v66 = vand.u32 %v53, 2147483648
  %v67 = vsel %vm65, %v66, %v64
  %v68 = vrsqrt.pop %v54
  %v69 = vmul.f32 %v68, %v54
  %v70 = vmul.f32 %v69, %v68
  %v71 = vmul.f32 0.5, %v70
  %v72 = vsub.f32 1.5, %v71
  %v73 = vmul.f32 %v68, %v72
  %v74 = vmul.f32 %v54, %v73
  %vm75 = vcmp.eq.f32.partialorder %v54, inf
  %v76 = vsel %vm75, %v54, %v74
  %vm77 = vcmp.eq.f32.partialorder %v54, 0.0
  %v78 = vand.u32 %v54, 2147483648
  %v79 = vsel %vm77, %v78, %v76
  %v80 = vrsqrt.pop %v55
  %v81 = vmul.f32 %v80, %v55
  %v82 = vmul.f32 %v81, %v80
  %v83 = vmul.f32 0.5, %v82
  %v84 = vsub.f32 1.5, %v83
  %v85 = vmul.f32 %v80, %v84
  %v86 = vmul.f32 %v55, %v85
  %vm87 = vcmp.eq.f32.partialorder %v55, inf
  %v88 = vsel %vm87, %v55, %v86
  %vm89 = vcmp.eq.f32.partialorder %v55, 0.0
  %v90 = vand.u32 %v55, 2147483648
  %v91 = vsel %vm89, %v90, %v88
  %v92 = vadd.f32 %v67, 1e-06
  %v93 = vadd.f32 %v79, 1e-06
  %v94 = vadd.f32 %v91, 1e-06
  %v95 = vrcp.pop %v92
  %v96 = vrcp.pop %v93
  %v97 = vrcp.pop %v94
  %v98 = vld [vmem:[%s1] sm:$0x1]
  %v100 = vperm.slane %v98, 0
  %v102 = vmul.f32 %v100, %v38
  %v103 = vmul.f32 %v100, %v39
  %v104 = vmul.f32 %v100, %v40
  %v105 = vmul.f32 %v102, %v95
  %v106 = vmul.f32 %v103, %v96
  %v107 = vmul.f32 %v104, %v97
  %v108 = vld [vmem:[%s2] sm:$0x1]
  %v110 = vperm.slane %v108, 0
  %v112 = vadd.f32 %v105, %v110
  %v113 = vadd.f32 %v106, %v110
  %v114 = vadd.f32 %v107, %v110
  %115 = vst.msk [vmem:[%s3] sm:$0xff] %vm17, %v112
  %116 = vst.msk [vmem:[%s3 + $0x8] sm:$0xff] %vm17, %v113
  %117 = vst.msk [vmem:[%s3 + $0x10] sm:$0xf] %vm24, %v114
  // Predicated region
  $region14: #{transformer_forward.40} parent=0 // pred_check
    _
  $region15: #{transformer_forward.40} parent=0 // pred_check_branch
    %119 = sbr.rel (0) target = $region17
  $region16: #{transformer_forward.40} parent=0 // pred_region
    _
  $region17: #{transformer_forward.40} parent=0 // pred_fallthru
    _
  // Predicated region
  $region18: #{transformer_forward.40} parent=0 // pred_check
    _
  $region19: #{transformer_forward.40} parent=0 // pred_check_branch
    %121 = sbr.rel (0) target = $region21
  $region20: #{transformer_forward.40} parent=0 // pred_region
    _
  $region21: #{transformer_forward.40} parent=0 // pred_fallthru
    _

// kernel: transformer_forward.34
$region0: #{transformer_forward.34}
  #allocation0 [shape = 'u32[]', space=smem, size = 0x4, offset = 0x4, fixed_abs, tag = 'smem constant byte address 0x4 - core index']
  #allocation1 [shape = 'u32[72,128]{1,0:T(1,128)}', space=vmem, size = 0x9000, scoped, tag = 'internal scratch']
  #allocation2 [shape = 'f32[20,32]{1,0:T(8,128)}', space=vmem, size = 0x3000, scoped, tag = 'scratch operand']
  %s0 = inlined_call_operand.vmem [shape: f32[20,2048], index: 0, kind: input, shape index: {}]
  %s1 = inlined_call_operand.vmem [shape: bf16[2048,32], index: 1, kind: input, shape index: {}]
  %s2 = inlined_call_operand.vmem [shape: f32[1,32], index: 2, kind: input, shape index: {}]
  %s3 = inlined_call_operand.vmem [shape: f32[20,32], index: 3, kind: input, shape index: {}]
  %s4 = inlined_call_operand.vmem [shape: f32[20,32], index: 4, kind: output, shape index: {}]
  %s5 = sld [smem:[#allocation0]]
  $region80: #{transformer_forward.34} parent=0
    _
  %s7 = ssub.s32 1, %s5
  %s8 = scalar_select 0, %s7, %s5
  $region1: #{transformer_forward.34} parent=0
    #allocation3 [shape = 'u8[98304]{0}', space=vmem, size = 0x18000, scoped, tag = 'input window, operand 0']
    loop: start=0, step=1, limit=6
    $region2: #{transformer_forward.34} parent=1 // loop_pre_header
      _
    $region3: #{transformer_forward.34} parent=1 // loop_header
      %s10 = sphi 0, %s14
      %p11 = scmp.ge.s32.totalorder %s10, 6
      %s17 = sphi 0, %s36
      %s18 = sphi 0, %s32
      %s19 = sphi 0, %s28
      %s20 = sphi 0, %s17
      %s21 = sphi 0, %s18
      %s22 = sphi 0, %s19
      %s23 = sphi 0, %s20
      %s24 = sphi 0, %s21
      %s25 = sphi 0, %s22
      %s41 = sphi 0, %s43
      %s44 = sphi 0, %s41
      %s45 = sphi 0, %s44
      %s61 = sphi 0, %s45
      %s69 = sphi 0, %s71
      %s72 = sphi 0, %s69
      %s73 = sphi 0, %s72
      %s89 = sphi 0, %s73
      %s95 = sphi 0, %s97
      %s98 = sphi 0, %s95
      %s99 = sphi 0, %s98
      %s115 = sphi 0, %s99
      %s123 = sphi 0, %s125
      %s126 = sphi 0, %s123
      %s127 = sphi 0, %s126
      %s143 = sphi 0, %s127
      %s151 = sphi 0, %s153
      %s154 = sphi 0, %s151
      %s155 = sphi 0, %s154
      %s171 = sphi 0, %s155
    $region4: #{transformer_forward.34} parent=1 // loop_header_branch
      %13 = sbr.rel (%p11) target = $region8
    $region5: #{transformer_forward.34} parent=1 // loop_body
      %s15 = ssub.s32 %s10, 1
      %s16 = ssub.s32 %s10, 2
      %s26 = sadd.s32 1, %s19
      %p27 = scmp.ge.s32.totalorder %s26, 4
      %s28 = scalar_select %p27, 0, %s26
      %s29 = sadd.s32 1, %s18
      %s30 = scalar_select %p27, %s29, %s18
      %p31 = scmp.ge.s32.totalorder %s30, 1
      %s32 = scalar_select %p31, 0, %s30
      %s33 = sadd.s32 1, %s17
      %s34 = scalar_select %p31, %s33, %s17
      %p35 = scmp.ge.s32.totalorder %s34, 1
      %s36 = scalar_select %p35, 0, %s34
      %s37 = ssub.s32 %s17, %s36
      %s38 = ssub.s32 %s19, %s28
      %s39 = sor.u32 %s37, %s38
      %p40 = scmp.eq.s32.totalorder %s39, 0
      %s42 = sadd.s32 %s41, 1
      %s43 = scalar_select %p40, %s41, %s42
      %p46 = pneg %p40
      %p47 = scmp.eq.s32.totalorder %s10, 3
      %p48 = por %p46, %p47
      %p49 = scmp.ne.s32.totalorder %s41, %s44
      %p50 = scmp.eq.s32.totalorder %s10, 0
      %p51 = por %p49, %p50
      %p52 = scmp.ne.s32.totalorder %s41, %s44
      %p53 = scmp.eq.s32.totalorder %s15, 3
      %p54 = por %p52, %p53
      %p55 = scmp.ne.s32.totalorder %s44, %s45
      %p56 = scmp.eq.s32.totalorder %s15, 0
      %p57 = por %p55, %p56
      %p58 = scmp.ne.s32.totalorder %s44, %s45
      %p59 = scmp.eq.s32.totalorder %s16, 3
      %p60 = por %p58, %p59
      %p62 = scmp.ne.s32.totalorder %s45, %s61
      %p63 = scmp.eq.s32.totalorder %s16, 0
      %p64 = por %p62, %p63
      %s65 = ssub.s32 %s19, %s28
      %s66 = ssub.s32 %s18, %s32
      %s67 = sor.u32 %s65, %s66
      %p68 = scmp.eq.s32.totalorder %s67, 0
      %s70 = sadd.s32 %s69, 1
      %s71 = scalar_select %p68, %s69, %s70
      %p74 = pneg %p68
      %p75 = scmp.eq.s32.totalorder %s10, 3
      %p76 = por %p74, %p75
      %p77 = scmp.ne.s32.totalorder %s69, %s72
      %p78 = scmp.eq.s32.totalorder %s10, 0
      %p79 = por %p77, %p78
      %p80 = scmp.ne.s32.totalorder %s69, %s72
      %p81 = scmp.eq.s32.totalorder %s15, 3
      %p82 = por %p80, %p81
      %p83 = scmp.ne.s32.totalorder %s72, %s73
      %p84 = scmp.eq.s32.totalorder %s15, 0
      %p85 = por %p83, %p84
      %p86 = scmp.ne.s32.totalorder %s72, %s73
      %p87 = scmp.eq.s32.totalorder %s16, 3
      %p88 = por %p86, %p87
      %p90 = scmp.ne.s32.totalorder %s73, %s89
      %p91 = scmp.eq.s32.totalorder %s16, 0
      %p92 = por %p90, %p91
      %s93 = ssub.s32 %s18, %s32
      %p94 = scmp.eq.s32.totalorder %s93, 0
      %s96 = sadd.s32 %s95, 1
      %s97 = scalar_select %p94, %s95, %s96
      %p100 = pneg %p94
      %p101 = scmp.eq.s32.totalorder %s10, 3
      %p102 = por %p100, %p101
      %p103 = scmp.ne.s32.totalorder %s95, %s98
      %p104 = scmp.eq.s32.totalorder %s10, 0
      %p105 = por %p103, %p104
      %p106 = scmp.ne.s32.totalorder %s95, %s98
      %p107 = scmp.eq.s32.totalorder %s15, 3
      %p108 = por %p106, %p107
      %p109 = scmp.ne.s32.totalorder %s98, %s99
      %p110 = scmp.eq.s32.totalorder %s15, 0
      %p111 = por %p109, %p110
      %p112 = scmp.ne.s32.totalorder %s98, %s99
      %p113 = scmp.eq.s32.totalorder %s16, 3
      %p114 = por %p112, %p113
      %p116 = scmp.ne.s32.totalorder %s99, %s115
      %p117 = scmp.eq.s32.totalorder %s16, 0
      %p118 = por %p116, %p117
      %s119 = ssub.s32 %s17, %s36
      %s120 = ssub.s32 %s18, %s32
      %s121 = sor.u32 %s119, %s120
      %p122 = scmp.eq.s32.totalorder %s121, 0
      %s124 = sadd.s32 %s123, 1
      %s125 = scalar_select %p122, %s123, %s124
      %p128 = pneg %p122
      %p129 = scmp.eq.s32.totalorder %s10, 3
      %p130 = por %p128, %p129
      %p131 = scmp.ne.s32.totalorder %s123, %s126
      %p132 = scmp.eq.s32.totalorder %s10, 0
      %p133 = por %p131, %p132
      %p134 = scmp.ne.s32.totalorder %s123, %s126
      %p135 = scmp.eq.s32.totalorder %s15, 3
      %p136 = por %p134, %p135
      %p137 = scmp.ne.s32.totalorder %s126, %s127
      %p138 = scmp.eq.s32.totalorder %s15, 0
      %p139 = por %p137, %p138
      %p140 = scmp.ne.s32.totalorder %s126, %s127
      %p141 = scmp.eq.s32.totalorder %s16, 3
      %p142 = por %p140, %p141
      %p144 = scmp.ne.s32.totalorder %s127, %s143
      %p145 = scmp.eq.s32.totalorder %s16, 0
      %p146 = por %p144, %p145
      %s147 = ssub.s32 %s17, %s36
      %s148 = ssub.s32 %s18, %s32
      %s149 = sor.u32 %s147, %s148
      %p150 = scmp.eq.s32.totalorder %s149, 0
      %s152 = sadd.s32 %s151, 1
      %s153 = scalar_select %p150, %s151, %s152
      %p156 = pneg %p150
      %p157 = scmp.eq.s32.totalorder %s10, 3
      %p158 = por %p156, %p157
      %p159 = scmp.ne.s32.totalorder %s151, %s154
      %p160 = scmp.eq.s32.totalorder %s10, 0
      %p161 = por %p159, %p160
      %p162 = scmp.ne.s32.totalorder %s151, %s154
      %p163 = scmp.eq.s32.totalorder %s15, 3
      %p164 = por %p162, %p163
      %p165 = scmp.ne.s32.totalorder %s154, %s155
      %p166 = scmp.eq.s32.totalorder %s15, 0
      %p167 = por %p165, %p166
      %p168 = scmp.ne.s32.totalorder %s154, %s155
      %p169 = scmp.eq.s32.totalorder %s16, 3
      %p170 = por %p168, %p169
      %p172 = scmp.ne.s32.totalorder %s155, %s171
      %p173 = scmp.eq.s32.totalorder %s16, 0
      %p174 = por %p172, %p173
      %p175 = scmp.le.s32.totalorder 1, %s10
      %p176 = scmp.lt.s32.totalorder %s10, 5
      %p177 = pnand %p175, %p176
      %p178 = pneg %p177
      // Predicated region
      $region9: #{transformer_forward.34} parent=5 // pred_check
        _
      $region10: #{transformer_forward.34} parent=5 // pred_check_branch
        %180 = sbr.rel (%p177) target = $region12
      $region11: #{transformer_forward.34} parent=5 // pred_region
        %s181 = ssub.s32 %s10, 1
        // Predicated region
        $region13: #{transformer_forward.34} parent=11 // pred_check
          %p182 = pneg %p111
        $region14: #{transformer_forward.34} parent=11 // pred_check_branch
          %184 = sbr.rel (%p182) target = $region16
        $region15: #{transformer_forward.34} parent=11 // pred_region
          %p185 = scmp.lt.s32.totalorder %s21, 0
          %s186 = scalar_select %p185, %s21, 0
          %s187 = scalar_lea.vmem %s2, %s186
        $region16: #{transformer_forward.34} parent=11 // pred_fallthru
          _
        // Predicated region
        $region17: #{transformer_forward.34} parent=11 // pred_check
          %p188 = pneg %p139
        $region18: #{transformer_forward.34} parent=11 // pred_check_branch
          %190 = sbr.rel (%p188) target = $region20
        $region19: #{transformer_forward.34} parent=11 // pred_region
          %s191 = smul.u32 3, %s20
          %p192 = scmp.lt.s32.totalorder %s191, 2
          %s193 = scalar_select %p192, %s191, 2
          %p194 = scmp.lt.s32.totalorder %s21, 0
          %s195 = scalar_select %p194, %s21, 0
          %s196 = sadd.s32 %s195, %s193
          %s197 = smul.addr %s196, 8
          %s198 = scalar_lea.vmem %s3, %s197
          %s199 = smul.u32 3, %s20
        $region20: #{transformer_forward.34} parent=11 // pred_fallthru
          _
      $region12: #{transformer_forward.34} parent=5 // pred_fallthru
        _
      %p200 = scmp.lt.s32.totalorder %s10, 4
      // Predicated region
      $region21: #{transformer_forward.34} parent=5 // pred_check
        %p201 = pneg %p200
      $region22: #{transformer_forward.34} parent=5 // pred_check_branch
        %203 = sbr.rel (%p201) target = $region24
      $region23: #{transformer_forward.34} parent=5 // pred_region
        // Predicated region
        $region25: #{transformer_forward.34} parent=23 // pred_check
          %p204 = pneg %p51
        $region26: #{transformer_forward.34} parent=23 // pred_check_branch
          %206 = sbr.rel (%p204) target = $region28
        $region27: #{transformer_forward.34} parent=23 // pred_region
          %s207 = sand.u32 %s41, 1
          %s208 = sand.u32 %s41, 1
          %s209 = smul.addr %s208, 96
          %s210 = scalar_lea.vmem [#allocation3], %s209
          %s211 = smul.u32 3, %s17
          %s212 = smul.u32 4, %s19
          %s213 = smul.addr %s211, 16
          %s214 = sadd.s32 %s212, %s213
          %s215 = smul.addr %s214, 8
          %s216 = scalar_lea.vmem %s0, %s215
          // Predicated region
          $region29: #{transformer_forward.34} parent=27 // pred_check
            _
          $region30: #{transformer_forward.34} parent=27 // pred_check_branch
            %218 = sbr.rel (0) target = $region32
          $region31: #{transformer_forward.34} parent=27 // pred_region
            // Predicated region
            $region33: #{transformer_forward.34} parent=31 // pred_check
              _
            $region34: #{transformer_forward.34} parent=31 // pred_check_branch
              %220 = sbr.rel (0) target = $region36
            $region35: #{transformer_forward.34} parent=31 // pred_region
              loop: start=0, step=1, limit=1
              $region37: #{transformer_forward.34} parent=35 // loop_pre_header
                _
              $region38: #{transformer_forward.34} parent=35 // loop_header
                %s222 = sphi 0, %s226
                %p223 = scmp.ge.s32.totalorder %s222, 1
                %s227 = sphi %s216, %s216
                %s228 = sphi %s210, %s210
              $region39: #{transformer_forward.34} parent=35 // loop_header_branch
                %225 = sbr.rel (%p223) target = $region43
              $region40: #{transformer_forward.34} parent=35 // loop_body
                %v229 = vld [vmem:[%s227] sm:$0xff]
                %230 = vst [vmem:[%s228] sm:$0xff] %v229
                %v231 = vld [vmem:[%s227 + $0x8] sm:$0xff]
                %232 = vst [vmem:[%s228 + $0x8] sm:$0xff] %v231
                %v233 = vld [vmem:[%s227 + $0x10] sm:$0xff]
                %234 = vst [vmem:[%s228 + $0x10] sm:$0xff] %v233
                %v235 = vld [vmem:[%s227 + $0x18] sm:$0xff]
                %236 = vst [vmem:[%s228 + $0x18] sm:$0xff] %v235
                %v237 = vld [vmem:[%s227 + $0x80] sm:$0xff]
                %238 = vst [vmem:[%s228 + $0x20] sm:$0xff] %v237
                %v239 = vld [vmem:[%s227 + $0x88] sm:$0xff]
                %240 = vst [vmem:[%s228 + $0x28] sm:$0xff] %v239
                %v241 = vld [vmem:[%s227 + $0x90] sm:$0xff]
                %242 = vst [vmem:[%s228 + $0x30] sm:$0xff] %v241
                %v243 = vld [vmem:[%s227 + $0x98] sm:$0xff]
                %244 = vst [vmem:[%s228 + $0x38] sm:$0xff] %v243
                %v245 = vld [vmem:[%s227 + $0x100] sm:$0xff]
                %246 = vst [vmem:[%s228 + $0x40] sm:$0xff] %v245
                %v247 = vld [vmem:[%s227 + $0x108] sm:$0xff]
                %248 = vst [vmem:[%s228 + $0x48] sm:$0xff] %v247
                %v249 = vld [vmem:[%s227 + $0x110] sm:$0xff]
                %250 = vst [vmem:[%s228 + $0x50] sm:$0xff] %v249
                %v251 = vld [vmem:[%s227 + $0x118] sm:$0xff]
                %252 = vst [vmem:[%s228 + $0x58] sm:$0xff] %v251
              $region41: #{transformer_forward.34} parent=35 // loop_footer
                %s226 = sadd.s32 1, %s222
              $region42: #{transformer_forward.34} parent=35 // loop_footer_branch
                %221 = sbr.rel target = $region38
              $region43: #{transformer_forward.34} parent=35 // loop_exit
                _
            $region36: #{transformer_forward.34} parent=31 // pred_fallthru
              _
            // Predicated region
            $region44: #{transformer_forward.34} parent=31 // pred_check
              _
            $region45: #{transformer_forward.34} parent=31 // pred_check_branch
              %254 = sbr.rel target = $region47
            $region46: #{transformer_forward.34} parent=31 // pred_region
              _
            $region47: #{transformer_forward.34} parent=31 // pred_fallthru
              _
          $region32: #{transformer_forward.34} parent=27 // pred_fallthru
            _
          %255 = vnop
        $region28: #{transformer_forward.34} parent=23 // pred_fallthru
          _
        // Predicated region
        $region48: #{transformer_forward.34} parent=23 // pred_check
          %p256 = pneg %p79
        $region49: #{transformer_forward.34} parent=23 // pred_check_branch
          %258 = sbr.rel (%p256) target = $region51
        $region50: #{transformer_forward.34} parent=23 // pred_region
          %s259 = smul.u32 64, %s19
          %p260 = scmp.lt.s32.totalorder %s259, 255
          %s261 = scalar_select %p260, %s259, 255
          %p262 = scmp.lt.s32.totalorder %s18, 0
          %s263 = scalar_select %p262, %s18, 0
          %s264 = sadd.s32 %s263, %s261
          %s265 = smul.addr %s264, 4
          %s266 = scalar_lea.vmem %s1, %s265
          %s267 = smul.u32 64, %s19
        $region51: #{transformer_forward.34} parent=23 // pred_fallthru
          _
      $region24: #{transformer_forward.34} parent=5 // pred_fallthru
        _
      %p268 = scmp.le.s32.totalorder 1, %s10
      %p269 = scmp.lt.s32.totalorder %s10, 5
      %p270 = pnand %p268, %p269
      %p271 = pneg %p270
      // Predicated region
      $region52: #{transformer_forward.34} parent=5 // pred_check
        _
      $region53: #{transformer_forward.34} parent=5 // pred_check_branch
        %273 = sbr.rel (%p270) target = $region55
      $region54: #{transformer_forward.34} parent=5 // pred_region
        %s274 = ssub.s32 %s10, 1
        %s275 = sand.u32 %s44, 1
        %s276 = sand.u32 %s44, 1
        %s277 = smul.addr %s276, 96
        %s278 = scalar_lea.vmem [#allocation3], %s277
        // Predicated region
        $region56: #{transformer_forward.34} parent=54 // pred_check
          %p279 = pneg %p57
        $region57: #{transformer_forward.34} parent=54 // pred_check_branch
          %281 = sbr.rel (%p279) target = $region59
        $region58: #{transformer_forward.34} parent=54 // pred_region
          _
        $region59: #{transformer_forward.34} parent=54 // pred_fallthru
          _
        %s282 = sand.u32 %s44, 1
        %s283 = sand.u32 %s44, 1
        %s284 = smul.addr %s283, 96
        %s285 = scalar_lea.vmem [#allocation3], %s284
        %p286 = pneg %p57
        %p287 = pneg %p54
        %s288 = smul.u32 64, %s22
        %p289 = scmp.lt.s32.totalorder %s288, 255
        %s290 = scalar_select %p289, %s288, 255
        %p291 = scmp.lt.s32.totalorder %s21, 0
        %s292 = scalar_select %p291, %s21, 0
        %s293 = sadd.s32 %s292, %s290
        %s294 = smul.addr %s293, 4
        %s295 = scalar_lea.vmem %s1, %s294
        %p296 = pneg %p85
        %p297 = pneg %p82
        %p298 = scmp.lt.s32.totalorder %s21, 0
        %s299 = scalar_select %p298, %s21, 0
        %s300 = scalar_lea.vmem %s2, %s299
        %p301 = pneg %p111
        %p302 = pneg %p108
        %s303 = smul.u32 3, %s20
        %p304 = scmp.lt.s32.totalorder %s303, 2
        %s305 = scalar_select %p304, %s303, 2
        %p306 = scmp.lt.s32.totalorder %s21, 0
        %s307 = scalar_select %p306, %s21, 0
        %s308 = sadd.s32 %s307, %s305
        %s309 = smul.addr %s308, 8
        %s310 = scalar_lea.vmem %s3, %s309
        %p311 = pneg %p139
        %p312 = pneg %p136
        %p313 = pneg %p167
        %p314 = pneg %p164
        %s315 = smul.u32 3, %s20
        %p316 = scmp.lt.s32.totalorder %s315, 2
        %s317 = scalar_select %p316, %s315, 2
        %p318 = scmp.lt.s32.totalorder %s21, 0
        %s319 = scalar_select %p318, %s21, 0
        %s320 = sadd.s32 %s319, %s317
        %s321 = smul.addr %s320, 8
        %s322 = scalar_lea.vmem %s4, %s321
        %s323 = smul.u32 3, %s20
        %s324 = smul.u32 4, %s22
        %s325 = smul.u32 64, %s22
        %p326 = scmp.lt.s32.totalorder %s325, 255
        %s327 = scalar_select %p326, %s325, 255
        %p328 = scmp.lt.s32.totalorder %s21, 0
        %s329 = scalar_select %p328, %s21, 0
        %s330 = sadd.s32 %s329, %s327
        %s331 = smul.addr %s330, 4
        %s332 = scalar_lea.vmem %s1, %s331
        %s333 = smul.u32 64, %s22
        %p334 = scmp.lt.s32.totalorder %s21, 0
        %s335 = scalar_select %p334, %s21, 0
        %s336 = scalar_lea.vmem %s2, %s335
        %s337 = smul.u32 3, %s20
        %p338 = scmp.lt.s32.totalorder %s337, 2
        %s339 = scalar_select %p338, %s337, 2
        %p340 = scmp.lt.s32.totalorder %s21, 0
        %s341 = scalar_select %p340, %s21, 0
        %s342 = sadd.s32 %s341, %s339
        %s343 = smul.addr %s342, 8
        %s344 = scalar_lea.vmem %s3, %s343
        %s345 = smul.u32 3, %s20
        %s346 = smul.u32 3, %s20
        %p347 = scmp.lt.s32.totalorder %s346, 2
        %s348 = scalar_select %p347, %s346, 2
        %p349 = scmp.lt.s32.totalorder %s21, 0
        %s350 = scalar_select %p349, %s21, 0
        %s351 = sadd.s32 %s350, %s348
        %s352 = smul.addr %s351, 8
        %s353 = scalar_lea.vmem %s4, %s352
        %s354 = smul.u32 3, %s20
        %p355 = scmp.eq.s32.totalorder %s22, 0
        // Predicated region
        $region60: #{transformer_forward.34} parent=54 // pred_check
          %p356 = pneg %p355
        $region61: #{transformer_forward.34} parent=54 // pred_check_branch
          %358 = sbr.rel (%p356) target = $region63
        $region62: #{transformer_forward.34} parent=54 // pred_region
          %vm359 = vcmask 261120
          %360 = vst.msk [vmem:[#allocation2] sm:$0xff] %vm359, 0.0
          %361 = vst.msk [vmem:[#allocation2 + $0x8] sm:$0xff] %vm359, 0.0
          %vm362 = vcmask 257024
          %363 = vst.msk [vmem:[#allocation2 + $0x10] sm:$0xf] %vm362, 0.0
        $region63: #{transformer_forward.34} parent=54 // pred_fallthru
          _
        %v364 = vld [vmem:[%s278] sm:$0xff]
        %v365 = vld [vmem:[%s278 + $0x8] sm:$0xff]
        %v366 = vld [vmem:[%s278 + $0x10] sm:$0xff]
        %v367 = vld [vmem:[%s278 + $0x18] sm:$0xff]
        %v368 = vld [vmem:[%s278 + $0x20] sm:$0xff]
        %v369 = vld [vmem:[%s278 + $0x28] sm:$0xff]
        %v370 = vld [vmem:[%s278 + $0x30] sm:$0xff]
        %v371 = vld [vmem:[%s278 + $0x38] sm:$0xff]
        %v372 = vld [vmem:[%s278 + $0x40] sm:$0xf]
        %v373 = vld [vmem:[%s278 + $0x48] sm:$0xf]
        %v374 = vld [vmem:[%s278 + $0x50] sm:$0xf]
        %v375 = vld [vmem:[%s278 + $0x58] sm:$0xf]
        %v376 = vld [vmem:[#allocation2] sm:$0xff]
        %v377 = vld [vmem:[#allocation2 + $0x8] sm:$0xff]
        %v378 = vld [vmem:[#allocation2 + $0x10] sm:$0xf]
        %v379 = vpack.c.bf16 %v368, %v364
        %v380 = vpack.c.bf16 %v369, %v365
        %v381 = vpack.c.bf16 %v370, %v366
        %v382 = vpack.c.bf16 %v371, %v367
        %v383 = vpack.c.bf16 %v372, %v372
        %v384 = vpack.c.bf16 %v373, %v373
        %v385 = vpack.c.bf16 %v374, %v374
        %v386 = vpack.c.bf16 %v375, %v375
        %v387 = vld [vmem:[%s332] sm:$0xf]
        %v388 = vld [vmem:[%s332 + $0x4] sm:$0xf]
        %v389 = vld [vmem:[%s332 + $0x8] sm:$0xf]
        %v390 = vld [vmem:[%s332 + $0xc] sm:$0xf]
        %v391 = vld [vmem:[%s332 + $0x10] sm:$0xf]
        %v392 = vld [vmem:[%s332 + $0x14] sm:$0xf]
        %v393 = vld [vmem:[%s332 + $0x18] sm:$0xf]
        %v394 = vld [vmem:[%s332 + $0x1c] sm:$0xf]
        %v395 = vld [vmem:[%s332 + $0x20] sm:$0xf]
        %v396 = vld [vmem:[%s332 + $0x24] sm:$0xf]
        %v397 = vld [vmem:[%s332 + $0x28] sm:$0xf]
        %v398 = vld [vmem:[%s332 + $0x2c] sm:$0xf]
        %v399 = vld [vmem:[%s332 + $0x30] sm:$0xf]
        %v400 = vld [vmem:[%s332 + $0x34] sm:$0xf]
        %v401 = vld [vmem:[%s332 + $0x38] sm:$0xf]
        %v402 = vld [vmem:[%s332 + $0x3c] sm:$0xf]
        %v403 = vld [vmem:[%s332 + $0x40] sm:$0xf]
        %v404 = vld [vmem:[%s332 + $0x44] sm:$0xf]
        %v405 = vld [vmem:[%s332 + $0x48] sm:$0xf]
        %v406 = vld [vmem:[%s332 + $0x4c] sm:$0xf]
        %v407 = vld [vmem:[%s332 + $0x50] sm:$0xf]
        %v408 = vld [vmem:[%s332 + $0x54] sm:$0xf]
        %v409 = vld [vmem:[%s332 + $0x58] sm:$0xf]
        %v410 = vld [vmem:[%s332 + $0x5c] sm:$0xf]
        %v411 = vld [vmem:[%s332 + $0x60] sm:$0xf]
        %v412 = vld [vmem:[%s332 + $0x64] sm:$0xf]
        %v413 = vld [vmem:[%s332 + $0x68] sm:$0xf]
        %v414 = vld [vmem:[%s332 + $0x6c] sm:$0xf]
        %v415 = vld [vmem:[%s332 + $0x70] sm:$0xf]
        %v416 = vld [vmem:[%s332 + $0x74] sm:$0xf]
        %v417 = vld [vmem:[%s332 + $0x78] sm:$0xf]
        %v418 = vld [vmem:[%s332 + $0x7c] sm:$0xf]
        %v419 = vld [vmem:[%s332 + $0x80] sm:$0xf]
        %v420 = vld [vmem:[%s332 + $0x84] sm:$0xf]
        %v421 = vld [vmem:[%s332 + $0x88] sm:$0xf]
        %v422 = vld [vmem:[%s332 + $0x8c] sm:$0xf]
        %v423 = vld [vmem:[%s332 + $0x90] sm:$0xf]
        %v424 = vld [vmem:[%s332 + $0x94] sm:$0xf]
        %v425 = vld [vmem:[%s332 + $0x98] sm:$0xf]
        %v426 = vld [vmem:[%s332 + $0x9c] sm:$0xf]
        %v427 = vld [vmem:[%s332 + $0xa0] sm:$0xf]
        %v428 = vld [vmem:[%s332 + $0xa4] sm:$0xf]
        %v429 = vld [vmem:[%s332 + $0xa8] sm:$0xf]
        %v430 = vld [vmem:[%s332 + $0xac] sm:$0xf]
        %v431 = vld [vmem:[%s332 + $0xb0] sm:$0xf]
        %v432 = vld [vmem:[%s332 + $0xb4] sm:$0xf]
        %v433 = vld [vmem:[%s332 + $0xb8] sm:$0xf]
        %v434 = vld [vmem:[%s332 + $0xbc] sm:$0xf]
        %v435 = vld [vmem:[%s332 + $0xc0] sm:$0xf]
        %v436 = vld [vmem:[%s332 + $0xc4] sm:$0xf]
        %v437 = vld [vmem:[%s332 + $0xc8] sm:$0xf]
        %v438 = vld [vmem:[%s332 + $0xcc] sm:$0xf]
        %v439 = vld [vmem:[%s332 + $0xd0] sm:$0xf]
        %v440 = vld [vmem:[%s332 + $0xd4] sm:$0xf]
        %v441 = vld [vmem:[%s332 + $0xd8] sm:$0xf]
        %v442 = vld [vmem:[%s332 + $0xdc] sm:$0xf]
        %v443 = vld [vmem:[%s332 + $0xe0] sm:$0xf]
        %v444 = vld [vmem:[%s332 + $0xe4] sm:$0xf]
        %v445 = vld [vmem:[%s332 + $0xe8] sm:$0xf]
        %v446 = vld [vmem:[%s332 + $0xec] sm:$0xf]
        %v447 = vld [vmem:[%s332 + $0xf0] sm:$0xf]
        %v448 = vld [vmem:[%s332 + $0xf4] sm:$0xf]
        %v449 = vld [vmem:[%s332 + $0xf8] sm:$0xf]
        %v450 = vld [vmem:[%s332 + $0xfc] sm:$0xf]
        %v515 = vunpack.c.l.b16 %v387
        %v516 = vunpack.c.l.b16 %v388
        %v517 = vunpack.c.l.b16 %v389
        %v518 = vunpack.c.l.b16 %v390
        %v519 = vunpack.c.l.b16 %v391
        %v520 = vunpack.c.l.b16 %v392
        %v521 = vunpack.c.l.b16 %v393
        %v522 = vunpack.c.l.b16 %v394
        %v523 = vunpack.c.l.b16 %v395
        %v524 = vunpack.c.l.b16 %v396
        %v525 = vunpack.c.l.b16 %v397
        %v526 = vunpack.c.l.b16 %v398
        %v527 = vunpack.c.l.b16 %v399
        %v528 = vunpack.c.l.b16 %v400
        %v529 = vunpack.c.l.b16 %v401
        %v530 = vunpack.c.l.b16 %v402
        %v531 = vunpack.c.l.b16 %v403
        %v532 = vunpack.c.l.b16 %v404
        %v533 = vunpack.c.l.b16 %v405
        %v534 = vunpack.c.l.b16 %v406
        %v535 = vunpack.c.l.b16 %v407
        %v536 = vunpack.c.l.b16 %v408
        %v537 = vunpack.c.l.b16 %v409
        %v538 = vunpack.c.l.b16 %v410
        %v539 = vunpack.c.l.b16 %v411
        %v540 = vunpack.c.l.b16 %v412
        %v541 = vunpack.c.l.b16 %v413
        %v542 = vunpack.c.l.b16 %v414
        %v543 = vunpack.c.l.b16 %v415
        %v544 = vunpack.c.l.b16 %v416
        %v545 = vunpack.c.l.b16 %v417
        %v546 = vunpack.c.l.b16 %v418
        %v547 = vunpack.c.l.b16 %v419
        %v548 = vunpack.c.l.b16 %v420
        %v549 = vunpack.c.l.b16 %v421
        %v550 = vunpack.c.l.b16 %v422
        %v551 = vunpack.c.l.b16 %v423
        %v552 = vunpack.c.l.b16 %v424
        %v553 = vunpack.c.l.b16 %v425
        %v554 = vunpack.c.l.b16 %v426
        %v555 = vunpack.c.l.b16 %v427
        %v556 = vunpack.c.l.b16 %v428
        %v557 = vunpack.c.l.b16 %v429
        %v558 = vunpack.c.l.b16 %v430
        %v559 = vunpack.c.l.b16 %v431
        %v560 = vunpack.c.l.b16 %v432
        %v561 = vunpack.c.l.b16 %v433
        %v562 = vunpack.c.l.b16 %v434
        %v563 = vunpack.c.l.b16 %v435
        %v564 = vunpack.c.l.b16 %v436
        %v565 = vunpack.c.l.b16 %v437
        %v566 = vunpack.c.l.b16 %v438
        %v567 = vunpack.c.l.b16 %v439
        %v568 = vunpack.c.l.b16 %v440
        %v569 = vunpack.c.l.b16 %v441
        %v570 = vunpack.c.l.b16 %v442
        %v571 = vunpack.c.l.b16 %v443
        %v572 = vunpack.c.l.b16 %v444
        %v573 = vunpack.c.l.b16 %v445
        %v574 = vunpack.c.l.b16 %v446
        %v575 = vunpack.c.l.b16 %v447
        %v576 = vunpack.c.l.b16 %v448
        %v577 = vunpack.c.l.b16 %v449
        %v578 = vunpack.c.l.b16 %v450
        %v579 = vpack.c.b16 %v516, %v515
        %v580 = vpack.c.b16 %v518, %v517
        %v581 = vpack.c.b16 %v520, %v519
        %v582 = vpack.c.b16 %v522, %v521
        %v583 = vpack.c.b16 %v524, %v523
        %v584 = vpack.c.b16 %v526, %v525
        %v585 = vpack.c.b16 %v528, %v527
        %v586 = vpack.c.b16 %v530, %v529
        %v587 = vpack.c.b16 %v532, %v531
        %v588 = vpack.c.b16 %v534, %v533
        %v589 = vpack.c.b16 %v536, %v535
        %v590 = vpack.c.b16 %v538, %v537
        %v591 = vpack.c.b16 %v540, %v539
        %v592 = vpack.c.b16 %v542, %v541
        %v593 = vpack.c.b16 %v544, %v543
        %v594 = vpack.c.b16 %v546, %v545
        %v595 = vpack.c.b16 %v548, %v547
        %v596 = vpack.c.b16 %v550, %v549
        %v597 = vpack.c.b16 %v552, %v551
        %v598 = vpack.c.b16 %v554, %v553
        %v599 = vpack.c.b16 %v556, %v555
        %v600 = vpack.c.b16 %v558, %v557
        %v601 = vpack.c.b16 %v560, %v559
        %v602 = vpack.c.b16 %v562, %v561
        %v603 = vpack.c.b16 %v564, %v563
        %v604 = vpack.c.b16 %v566, %v565
        %v605 = vpack.c.b16 %v568, %v567
        %v606 = vpack.c.b16 %v570, %v569
        %v607 = vpack.c.b16 %v572, %v571
        %v608 = vpack.c.b16 %v574, %v573
        %v609 = vpack.c.b16 %v576, %v575
        %v610 = vpack.c.b16 %v578, %v577
        %643 = vmatpush.bf16.msra.mxu0 %v586
        %644 = vmatpush.bf16.msra.mxu0 %v585
        %645 = vmatpush.bf16.msra.mxu0 %v584
        %646 = vmatpush.bf16.msra.mxu0 %v583
        %647 = vmatpush.bf16.msra.mxu0 %v582
        %648 = vmatpush.bf16.msra.mxu0 %v581
        %649 = vmatpush.bf16.msra.mxu0 %v580
        %650 = vmatpush.bf16.msra.mxu0 %v579
        %651 = vmatmul.bf16.gmra.mxu0 %v379
        %v652 = vpop.f32.mrf.mxu0
        %v653 = vadd.f32 0.0, %v652
        %v654 = vpop.f32.mrf.mxu0
        %v655 = vadd.f32 0.0, %v654
        %656 = vmatmul.bf16.gmra.mxu0 %v383
        %v657 = vpop.f32.mrf.mxu0
        %v658 = vadd.f32 0.0, %v657
        %v659 = vpop.f32.mrf.mxu0
        %660 = vdwg.mxu0
        %661 = vmatpush.bf16.msra.mxu0 %v594
        %662 = vmatpush.bf16.msra.mxu0 %v593
        %663 = vmatpush.bf16.msra.mxu0 %v592
        %664 = vmatpush.bf16.msra.mxu0 %v591
        %665 = vmatpush.bf16.msra.mxu0 %v590
        %666 = vmatpush.bf16.msra.mxu0 %v589
        %667 = vmatpush.bf16.msra.mxu0 %v588
        %668 = vmatpush.bf16.msra.mxu0 %v587
        %669 = vmatmul.bf16.gmra.mxu0 %v380
        %v670 = vpop.f32.mrf.mxu0
        %v671 = vadd.f32 %v653, %v670
        %v672 = vpop.f32.mrf.mxu0
        %v673 = vadd.f32 %v655, %v672
        %674 = vmatmul.bf16.gmra.mxu0 %v384
        %v675 = vpop.f32.mrf.mxu0
        %v676 = vadd.f32 %v658, %v675
        %v677 = vpop.f32.mrf.mxu0
        %678 = vdwg.mxu0
        %679 = vmatpush.bf16.msra.mxu0 %v602
        %680 = vmatpush.bf16.msra.mxu0 %v601
        %681 = vmatpush.bf16.msra.mxu0 %v600
        %682 = vmatpush.bf16.msra.mxu0 %v599
        %683 = vmatpush.bf16.msra.mxu0 %v598
        %684 = vmatpush.bf16.msra.mxu0 %v597
        %685 = vmatpush.bf16.msra.mxu0 %v596
        %686 = vmatpush.bf16.msra.mxu0 %v595
        %687 = vmatmul.bf16.gmra.mxu0 %v381
        %v688 = vpop.f32.mrf.mxu0
        %v689 = vadd.f32 %v671, %v688
        %v690 = vpop.f32.mrf.mxu0
        %v691 = vadd.f32 %v673, %v690
        %692 = vmatmul.bf16.gmra.mxu0 %v385
        %v693 = vpop.f32.mrf.mxu0
        %v694 = vadd.f32 %v676, %v693
        %v695 = vpop.f32.mrf.mxu0
        %696 = vdwg.mxu0
        %697 = vmatpush.bf16.msra.mxu0 %v610
        %698 = vmatpush.bf16.msra.mxu0 %v609
        %699 = vmatpush.bf16.msra.mxu0 %v608
        %700 = vmatpush.bf16.msra.mxu0 %v607
        %701 = vmatpush.bf16.msra.mxu0 %v606
        %702 = vmatpush.bf16.msra.mxu0 %v605
        %703 = vmatpush.bf16.msra.mxu0 %v604
        %704 = vmatpush.bf16.msra.mxu0 %v603
        %705 = vmatmul.bf16.gmra.mxu0 %v382
        %v706 = vpop.f32.mrf.mxu0
        %v707 = vadd.f32 %v689, %v706
        %v708 = vpop.f32.mrf.mxu0
        %v709 = vadd.f32 %v691, %v708
        %710 = vmatmul.bf16.gmra.mxu0 %v386
        %v711 = vpop.f32.mrf.mxu0
        %v712 = vadd.f32 %v694, %v711
        %v713 = vpop.f32.mrf.mxu0
        %714 = vdwg.mxu0
        %v715 = vadd.f32 %v376, %v707
        %v716 = vadd.f32 %v377, %v709
        %v717 = vadd.f32 %v378, %v712
        %vm718 = vcmask 261120
        %719 = vst.msk [vmem:[#allocation2] sm:$0xff] %vm718, %v715
        %720 = vst.msk [vmem:[#allocation2 + $0x8] sm:$0xff] %vm718, %v716
        %vm721 = vcmask 257024
        %722 = vst.msk [vmem:[#allocation2 + $0x10] sm:$0xf] %vm721, %v717
        %p723 = scmp.eq.s32.totalorder %s22, 3
        // Predicated region
        $region64: #{transformer_forward.34} parent=54 // pred_check
          %p724 = pneg %p723
        $region65: #{transformer_forward.34} parent=54 // pred_check_branch
          %726 = sbr.rel (%p724) target = $region67
        $region66: #{transformer_forward.34} parent=54 // pred_region
          %v727 = vld [vmem:[#allocation2] sm:$0xff]
          %v728 = vld [vmem:[#allocation2 + $0x8] sm:$0xff]
          %v729 = vld [vmem:[#allocation2 + $0x10] sm:$0xf]
          %v730 = vld [vmem:[%s336] sm:$0x1]
          %v732 = vperm.slane %v730, 0
          %v734 = vadd.f32 %v727, %v732
          %v735 = vadd.f32 %v728, %v732
          %v736 = vadd.f32 %v729, %v732
          %v737 = vld [vmem:[%s344] sm:$0xff]
          %v738 = vld [vmem:[%s344 + $0x8] sm:$0xff]
          %v739 = vld [vmem:[%s344 + $0x10] sm:$0xf]
          %v740 = vadd.f32 %v734, %v737
          %v741 = vadd.f32 %v735, %v738
          %v742 = vadd.f32 %v736, %v739
          %743 = vst.msk [vmem:[%s353] sm:$0xff] %vm718, %v740
          %744 = vst.msk [vmem:[%s353 + $0x8] sm:$0xff] %vm718, %v741
          %745 = vst.msk [vmem:[%s353 + $0x10] sm:$0xf] %vm721, %v742
        $region67: #{transformer_forward.34} parent=54 // pred_fallthru
          _
        %s746 = smul.u32 3, %s20
        %p747 = scmp.lt.s32.totalorder %s746, 2
        %s748 = scalar_select %p747, %s746, 2
        %p749 = scmp.lt.s32.totalorder %s21, 0
        %s750 = scalar_select %p749, %s21, 0
        %s751 = sadd.s32 %s750, %s748
        %s752 = smul.addr %s751, 8
        %s753 = scalar_lea.vmem %s4, %s752
        // Predicated region
        $region68: #{transformer_forward.34} parent=54 // pred_check
          %p754 = pneg %p164
        $region69: #{transformer_forward.34} parent=54 // pred_check_branch
          %756 = sbr.rel (%p754) target = $region71
        $region70: #{transformer_forward.34} parent=54 // pred_region
          %s757 = smul.u32 3, %s20
        $region71: #{transformer_forward.34} parent=54 // pred_fallthru
          _
        // Predicated region
        $region72: #{transformer_forward.34} parent=54 // pred_check
          %p758 = pneg %p164
        $region73: #{transformer_forward.34} parent=54 // pred_check_branch
          %760 = sbr.rel (%p758) target = $region75
        $region74: #{transformer_forward.34} parent=54 // pred_region
          %s761 = smul.u32 3, %s20
          %p762 = scmp.lt.s32.totalorder %s761, 2
          %s763 = scalar_select %p762, %s761, 2
          %p764 = scmp.lt.s32.totalorder %s21, 0
          %s765 = scalar_select %p764, %s21, 0
          %s766 = sadd.s32 %s765, %s763
          %s767 = smul.addr %s766, 8
          %s768 = scalar_lea.vmem %s4, %s767
        $region75: #{transformer_forward.34} parent=54 // pred_fallthru
          _
      $region55: #{transformer_forward.34} parent=5 // pred_fallthru
        _
      %p769 = scmp.le.s32.totalorder 2, %s10
      // Predicated region
      $region76: #{transformer_forward.34} parent=5 // pred_check
        %p770 = pneg %p769
      $region77: #{transformer_forward.34} parent=5 // pred_check_branch
        %772 = sbr.rel (%p770) target = $region79
      $region78: #{transformer_forward.34} parent=5 // pred_region
        %s773 = ssub.s32 %s10, 2
      $region79: #{transformer_forward.34} parent=5 // pred_fallthru
        _
    $region6: #{transformer_forward.34} parent=1 // loop_footer
      %s14 = sadd.s32 1, %s10
    $region7: #{transformer_forward.34} parent=1 // loop_footer_branch
      %9 = sbr.rel target = $region3
    $region8: #{transformer_forward.34} parent=1 // loop_exit
      _

// kernel: transformer_forward.41
$region0: #{transformer_forward.41}
  #allocation0 [shape = 'u32[]', space=smem, size = 0x4, offset = 0x4, fixed_abs, tag = 'smem constant byte address 0x4 - core index']
  #allocation1 [shape = 'u32[72,128]{1,0:T(1,128)}', space=vmem, size = 0x9000, scoped, tag = 'internal scratch']
  #allocation2 [shape = 'f32[16,96]{1,0:T(8,128)}', space=vmem, size = 0x2000, scoped, tag = 'scratch operand']
  %s0 = inlined_call_operand.vmem [shape: f32[16,32], index: 0, kind: input, shape index: {}]
  %s1 = inlined_call_operand.vmem [shape: bf16[32,96], index: 1, kind: input, shape index: {}]
  %s2 = inlined_call_operand.vmem [shape: f32[1,96], index: 2, kind: input, shape index: {}]
  %s3 = inlined_call_operand.vmem [shape: f32[1,32], index: 3, kind: input, shape index: {}]
  %s4 = inlined_call_operand.vmem [shape: f32[1,32], index: 4, kind: input, shape index: {}]
  %s5 = inlined_call_operand.vmem [shape: f32[16,96], index: 5, kind: output, shape index: {}]
  %s6 = sld [smem:[#allocation0]]
  $region38: #{transformer_forward.41} parent=0
    _
  %s8 = ssub.s32 1, %s6
  %s9 = scalar_select 0, %s8, %s6
  // Predicated region
  $region2: #{transformer_forward.41} parent=0 // pred_check
    _
  $region3: #{transformer_forward.41} parent=0 // pred_check_branch
    %11 = sbr.rel (0) target = $region5
  $region4: #{transformer_forward.41} parent=0 // pred_region
    _
  $region5: #{transformer_forward.41} parent=0 // pred_fallthru
    _
  // Predicated region
  $region6: #{transformer_forward.41} parent=0 // pred_check
    _
  $region7: #{transformer_forward.41} parent=0 // pred_check_branch
    %13 = sbr.rel (0) target = $region9
  $region8: #{transformer_forward.41} parent=0 // pred_region
    _
  $region9: #{transformer_forward.41} parent=0 // pred_fallthru
    _
  // Predicated region
  $region10: #{transformer_forward.41} parent=0 // pred_check
    _
  $region11: #{transformer_forward.41} parent=0 // pred_check_branch
    %15 = sbr.rel (0) target = $region13
  $region12: #{transformer_forward.41} parent=0 // pred_region
    _
  $region13: #{transformer_forward.41} parent=0 // pred_fallthru
    _
  // Predicated region
  $region14: #{transformer_forward.41} parent=0 // pred_check
    _
  $region15: #{transformer_forward.41} parent=0 // pred_check_branch
    %17 = sbr.rel (0) target = $region17
  $region16: #{transformer_forward.41} parent=0 // pred_region
    _
  $region17: #{transformer_forward.41} parent=0 // pred_fallthru
    _
  // Predicated region
  $region18: #{transformer_forward.41} parent=0 // pred_check
    _
  $region19: #{transformer_forward.41} parent=0 // pred_check_branch
    %19 = sbr.rel (0) target = $region21
  $region20: #{transformer_forward.41} parent=0 // pred_region
    _
  $region21: #{transformer_forward.41} parent=0 // pred_fallthru
    _
  %p21 = scmp.eq.s32.totalorder 0, 0
  // Predicated region
  $region22: #{transformer_forward.41} parent=0 // pred_check
    %p22 = pneg %p21
  $region23: #{transformer_forward.41} parent=0 // pred_check_branch
    %24 = sbr.rel (%p22) target = $region25
  $region24: #{transformer_forward.41} parent=0 // pred_region
    %vm25 = vcmask 785408
    %26 = vst.msk [vmem:[#allocation2] sm:$0xff] %vm25, 0.0
    %27 = vst.msk [vmem:[#allocation2 + $0x8] sm:$0xff] %vm25, 0.0
  $region25: #{transformer_forward.41} parent=0 // pred_fallthru
    _
  %v28 = vld [vmem:[%s0] sm:$0xff]
  %v29 = vld [vmem:[%s0 + $0x8] sm:$0xff]
  %vm30 = vcmask 261120
  %v31 = vsel %vm30, %v28, 0.0
  %32 = vadd.xlane.f32.xlu0 %v31
  %v33 = vpop.xlane.xlu0 %32
  %v34 = vsel %vm30, %v29, 0.0
  %35 = vadd.xlane.f32.xlu0 %v34
  %v36 = vpop.xlane.xlu0 %35
  %v37 = vrcp.pop 32.0
  %v38 = vmul.f32 32.0, %v37
  %v39 = vsub.f32 1.0, %v38
  %v40 = vmul.f32 %v37, %v39
  %v41 = vadd.f32 %v37, %v40
  %vm42 = vweird.f32 %v37
  %v43 = vsel %vm42, %v37, %v41
  %v44 = vmul.f32 %v33, %v43
  %v45 = vmul.f32 %v36, %v43
  %v46 = vsub.f32 %v28, %v44
  %v47 = vsub.f32 %v29, %v45
  %v48 = vmul.f32 %v46, %v46
  %v49 = vmul.f32 %v47, %v47
  %v50 = vsel %vm30, %v48, 0.0
  %51 = vadd.xlane.f32.xlu0 %v50
  %v52 = vpop.xlane.xlu0 %51
  %v53 = vsel %vm30, %v49, 0.0
  %54 = vadd.xlane.f32.xlu0 %v53
  %v55 = vpop.xlane.xlu0 %54
  %v56 = vmul.f32 %v52, 0.032258064
  %v57 = vmul.f32 %v55, 0.032258064
  %v58 = vrsqrt.pop %v56
  %v59 = vmul.f32 %v58, %v56
  %v60 = vmul.f32 %v59, %v58
  %v61 = vmul.f32 0.5, %v60
  %v62 = vsub.f32 1.5, %v61
  %v63 = vmul.f32 %v58, %v62
  %v64 = vmul.f32 %v56, %v63
  %vm65 = vcmp.eq.f32.partialorder %v56, inf
  %v66 = vsel %vm65, %v56, %v64
  %vm67 = vcmp.eq.f32.partialorder %v56, 0.0
  %v68 = vand.u32 %v56, 2147483648
  %v69 = vsel %vm67, %v68, %v66
  %v70 = vrsqrt.pop %v57
  %v71 = vmul.f32 %v70, %v57
  %v72 = vmul.f32 %v71, %v70
  %v73 = vmul.f32 0.5, %v72
  %v74 = vsub.f32 1.5, %v73
  %v75 = vmul.f32 %v70, %v74
  %v76 = vmul.f32 %v57, %v75
  %vm77 = vcmp.eq.f32.partialorder %v57, inf
  %v78 = vsel %vm77, %v57, %v76
  %vm79 = vcmp.eq.f32.partialorder %v57, 0.0
  %v80 = vand.u32 %v57, 2147483648
  %v81 = vsel %vm79, %v80, %v78
  %v82 = vadd.f32 %v69, 1e-06
  %v83 = vadd.f32 %v81, 1e-06
  %v84 = vrcp.pop %v82
  %v85 = vrcp.pop %v83
  %v86 = vld [vmem:[%s3] sm:$0x1]
  %v88 = vperm.slane %v86, 0
  %v90 = vmul.f32 %v88, %v46
  %v91 = vmul.f32 %v88, %v47
  %v92 = vmul.f32 %v90, %v84
  %v93 = vmul.f32 %v91, %v85
  %v94 = vld [vmem:[%s4] sm:$0x1]
  %v96 = vperm.slane %v94, 0
  %v98 = vadd.f32 %v92, %v96
  %v99 = vadd.f32 %v93, %v96
  %v100 = vld [vmem:[#allocation2] sm:$0xff]
  %v101 = vld [vmem:[#allocation2 + $0x8] sm:$0xff]
  %v102 = vpack.c.bf16 %v99, %v98
  %v103 = vld [vmem:[%s1] sm:$0xf]
  %v104 = vld [vmem:[%s1 + $0x4] sm:$0xf]
  %v105 = vld [vmem:[%s1 + $0x8] sm:$0xf]
  %v106 = vld [vmem:[%s1 + $0xc] sm:$0xf]
  %v111 = vunpack.c.l.b16 %v103
  %v112 = vunpack.c.l.b16 %v104
  %v113 = vunpack.c.l.b16 %v105
  %v114 = vunpack.c.l.b16 %v106
  %v115 = vpack.c.b16 %v112, %v111
  %v116 = vpack.c.b16 %v114, %v113
  %v120 = vsel %vm30, %v102, 0
  %122 = vmatpush.bf16.msra.mxu0 0
  %123 = vmatpush.bf16.msra.mxu0 0
  %124 = vmatpush.bf16.msra.mxu0 0
  %125 = vmatpush.bf16.msra.mxu0 0
  %126 = vmatpush.bf16.msra.mxu0 0
  %127 = vmatpush.bf16.msra.mxu0 0
  %128 = vmatpush.bf16.msra.mxu0 %v116
  %129 = vmatpush.bf16.msra.mxu0 %v115
  %130 = vmatmul.bf16.gmra.mxu0 %v120
  %v131 = vpop.f32.mrf.mxu0
  %v132 = vadd.f32 0.0, %v131
  %v133 = vpop.f32.mrf.mxu0
  %v134 = vadd.f32 0.0, %v133
  %135 = vdwg.mxu0
  %v136 = vadd.f32 %v100, %v132
  %v137 = vadd.f32 %v101, %v134
  %vm138 = vcmask 785408
  %139 = vst.msk [vmem:[#allocation2] sm:$0xff] %vm138, %v136
  %140 = vst.msk [vmem:[#allocation2 + $0x8] sm:$0xff] %vm138, %v137
  // Predicated region
  $region26: #{transformer_forward.41} parent=0 // pred_check
    %p141 = pneg %p21
  $region27: #{transformer_forward.41} parent=0 // pred_check_branch
    %143 = sbr.rel (%p141) target = $region29
  $region28: #{transformer_forward.41} parent=0 // pred_region
    %v144 = vld [vmem:[#allocation2] sm:$0xff]
    %v145 = vld [vmem:[#allocation2 + $0x8] sm:$0xff]
    %v146 = vld [vmem:[%s2] sm:$0x1]
    %v148 = vperm.slane %v146, 0
    %v150 = vadd.f32 %v144, %v148
    %v151 = vadd.f32 %v145, %v148
    %152 = vst.msk [vmem:[%s5] sm:$0xff] %vm138, %v150
    %153 = vst.msk [vmem:[%s5 + $0x8] sm:$0xff] %vm138, %v151
  $region29: #{transformer_forward.41} parent=0 // pred_fallthru
    _
  // Predicated region
  $region30: #{transformer_forward.41} parent=0 // pred_check
    _
  $region31: #{transformer_forward.41} parent=0 // pred_check_branch
    %155 = sbr.rel (0) target = $region33
  $region32: #{transformer_forward.41} parent=0 // pred_region
    _
  $region33: #{transformer_forward.41} parent=0 // pred_fallthru
    _
  // Predicated region
  $region34: #{transformer_forward.41} parent=0 // pred_check
    _
  $region35: #{transformer_forward.41} parent=0 // pred_check_branch
    %157 = sbr.rel (0) target = $region37
  $region36: #{transformer_forward.41} parent=0 // pred_region
    _
  $region37: #{transformer_forward.41} parent=0 // pred_fallthru
    _

// kernel: transformer_forward.44
$region0: #{transformer_forward.44}
  #allocation0 [shape = 'u32[]', space=smem, size = 0x4, offset = 0x4, fixed_abs, tag = 'smem constant byte address 0x4 - core index']
  #allocation1 [shape = 'u32[72,128]{1,0:T(1,128)}', space=vmem, size = 0x9000, scoped, tag = 'internal scratch']
  #allocation2 [shape = 'f32[16,32]{1,0:T(8,128)}', space=vmem, size = 0x2000, scoped, tag = 'scratch operand']
  %s0 = inlined_call_operand.vmem [shape: f32[16,32], index: 0, kind: input, shape index: {}]
  %s1 = inlined_call_operand.vmem [shape: bf16[32,32], index: 1, kind: input, shape index: {}]
  %s2 = inlined_call_operand.vmem [shape: f32[1,32], index: 2, kind: input, shape index: {}]
  %s3 = inlined_call_operand.vmem [shape: f32[1,32], index: 3, kind: input, shape index: {}]
  %s4 = inlined_call_operand.vmem [shape: f32[1,32], index: 4, kind: input, shape index: {}]
  %s5 = inlined_call_operand.vmem [shape: f32[16,32], index: 5, kind: output, shape index: {}]
  %s6 = sld [smem:[#allocation0]]
  $region38: #{transformer_forward.44} parent=0
    _
  %s8 = ssub.s32 1, %s6
  %s9 = scalar_select 0, %s8, %s6
  // Predicated region
  $region2: #{transformer_forward.44} parent=0 // pred_check
    _
  $region3: #{transformer_forward.44} parent=0 // pred_check_branch
    %11 = sbr.rel (0) target = $region5
  $region4: #{transformer_forward.44} parent=0 // pred_region
    _
  $region5: #{transformer_forward.44} parent=0 // pred_fallthru
    _
  // Predicated region
  $region6: #{transformer_forward.44} parent=0 // pred_check
    _
  $region7: #{transformer_forward.44} parent=0 // pred_check_branch
    %13 = sbr.rel (0) target = $region9
  $region8: #{transformer_forward.44} parent=0 // pred_region
    _
  $region9: #{transformer_forward.44} parent=0 // pred_fallthru
    _
  // Predicated region
  $region10: #{transformer_forward.44} parent=0 // pred_check
    _
  $region11: #{transformer_forward.44} parent=0 // pred_check_branch
    %15 = sbr.rel (0) target = $region13
  $region12: #{transformer_forward.44} parent=0 // pred_region
    _
  $region13: #{transformer_forward.44} parent=0 // pred_fallthru
    _
  // Predicated region
  $region14: #{transformer_forward.44} parent=0 // pred_check
    _
  $region15: #{transformer_forward.44} parent=0 // pred_check_branch
    %17 = sbr.rel (0) target = $region17
  $region16: #{transformer_forward.44} parent=0 // pred_region
    _
  $region17: #{transformer_forward.44} parent=0 // pred_fallthru
    _
  // Predicated region
  $region18: #{transformer_forward.44} parent=0 // pred_check
    _
  $region19: #{transformer_forward.44} parent=0 // pred_check_branch
    %19 = sbr.rel (0) target = $region21
  $region20: #{transformer_forward.44} parent=0 // pred_region
    _
  $region21: #{transformer_forward.44} parent=0 // pred_fallthru
    _
  %p21 = scmp.eq.s32.totalorder 0, 0
  // Predicated region
  $region22: #{transformer_forward.44} parent=0 // pred_check
    %p22 = pneg %p21
  $region23: #{transformer_forward.44} parent=0 // pred_check_branch
    %24 = sbr.rel (%p22) target = $region25
  $region24: #{transformer_forward.44} parent=0 // pred_region
    %vm25 = vcmask 261120
    %26 = vst.msk [vmem:[#allocation2] sm:$0xff] %vm25, 0.0
    %27 = vst.msk [vmem:[#allocation2 + $0x8] sm:$0xff] %vm25, 0.0
  $region25: #{transformer_forward.44} parent=0 // pred_fallthru
    _
  %v28 = vld [vmem:[%s0] sm:$0xff]
  %v29 = vld [vmem:[%s0 + $0x8] sm:$0xff]
  %vm30 = vcmask 261120
  %v31 = vsel %vm30, %v28, 0.0
  %32 = vadd.xlane.f32.xlu0 %v31
  %v33 = vpop.xlane.xlu0 %32
  %v34 = vsel %vm30, %v29, 0.0
  %35 = vadd.xlane.f32.xlu0 %v34
  %v36 = vpop.xlane.xlu0 %35
  %v37 = vrcp.pop 32.0
  %v38 = vmul.f32 32.0, %v37
  %v39 = vsub.f32 1.0, %v38
  %v40 = vmul.f32 %v37, %v39
  %v41 = vadd.f32 %v37, %v40
  %vm42 = vweird.f32 %v37
  %v43 = vsel %vm42, %v37, %v41
  %v44 = vmul.f32 %v33, %v43
  %v45 = vmul.f32 %v36, %v43
  %v46 = vsub.f32 %v28, %v44
  %v47 = vsub.f32 %v29, %v45
  %v48 = vmul.f32 %v46, %v46
  %v49 = vmul.f32 %v47, %v47
  %v50 = vsel %vm30, %v48, 0.0
  %51 = vadd.xlane.f32.xlu0 %v50
  %v52 = vpop.xlane.xlu0 %51
  %v53 = vsel %vm30, %v49, 0.0
  %54 = vadd.xlane.f32.xlu0 %v53
  %v55 = vpop.xlane.xlu0 %54
  %v56 = vmul.f32 %v52, 0.032258064
  %v57 = vmul.f32 %v55, 0.032258064
  %v58 = vrsqrt.pop %v56
  %v59 = vmul.f32 %v58, %v56
  %v60 = vmul.f32 %v59, %v58
  %v61 = vmul.f32 0.5, %v60
  %v62 = vsub.f32 1.5, %v61
  %v63 = vmul.f32 %v58, %v62
  %v64 = vmul.f32 %v56, %v63
  %vm65 = vcmp.eq.f32.partialorder %v56, inf
  %v66 = vsel %vm65, %v56, %v64
  %vm67 = vcmp.eq.f32.partialorder %v56, 0.0
  %v68 = vand.u32 %v56, 2147483648
  %v69 = vsel %vm67, %v68, %v66
  %v70 = vrsqrt.pop %v57
  %v71 = vmul.f32 %v70, %v57
  %v72 = vmul.f32 %v71, %v70
  %v73 = vmul.f32 0.5, %v72
  %v74 = vsub.f32 1.5, %v73
  %v75 = vmul.f32 %v70, %v74
  %v76 = vmul.f32 %v57, %v75
  %vm77 = vcmp.eq.f32.partialorder %v57, inf
  %v78 = vsel %vm77, %v57, %v76
  %vm79 = vcmp.eq.f32.partialorder %v57, 0.0
  %v80 = vand.u32 %v57, 2147483648
  %v81 = vsel %vm79, %v80, %v78
  %v82 = vadd.f32 %v69, 1e-06
  %v83 = vadd.f32 %v81, 1e-06
  %v84 = vrcp.pop %v82
  %v85 = vrcp.pop %v83
  %v86 = vld [vmem:[%s3] sm:$0x1]
  %v88 = vperm.slane %v86, 0
  %v90 = vmul.f32 %v88, %v46
  %v91 = vmul.f32 %v88, %v47
  %v92 = vmul.f32 %v90, %v84
  %v93 = vmul.f32 %v91, %v85
  %v94 = vld [vmem:[%s4] sm:$0x1]
  %v96 = vperm.slane %v94, 0
  %v98 = vadd.f32 %v92, %v96
  %v99 = vadd.f32 %v93, %v96
  %v100 = vld [vmem:[#allocation2] sm:$0xff]
  %v101 = vld [vmem:[#allocation2 + $0x8] sm:$0xff]
  %v102 = vpack.c.bf16 %v99, %v98
  %v103 = vld [vmem:[%s1] sm:$0xf]
  %v104 = vld [vmem:[%s1 + $0x4] sm:$0xf]
  %v105 = vld [vmem:[%s1 + $0x8] sm:$0xf]
  %v106 = vld [vmem:[%s1 + $0xc] sm:$0xf]
  %v111 = vunpack.c.l.b16 %v103
  %v112 = vunpack.c.l.b16 %v104
  %v113 = vunpack.c.l.b16 %v105
  %v114 = vunpack.c.l.b16 %v106
  %v115 = vpack.c.b16 %v112, %v111
  %v116 = vpack.c.b16 %v114, %v113
  %v120 = vsel %vm30, %v102, 0
  %122 = vmatpush.bf16.msra.mxu0 0
  %123 = vmatpush.bf16.msra.mxu0 0
  %124 = vmatpush.bf16.msra.mxu0 0
  %125 = vmatpush.bf16.msra.mxu0 0
  %126 = vmatpush.bf16.msra.mxu0 0
  %127 = vmatpush.bf16.msra.mxu0 0
  %128 = vmatpush.bf16.msra.mxu0 %v116
  %129 = vmatpush.bf16.msra.mxu0 %v115
  %130 = vmatmul.bf16.gmra.mxu0 %v120
  %v131 = vpop.f32.mrf.mxu0
  %v132 = vadd.f32 0.0, %v131
  %v133 = vpop.f32.mrf.mxu0
  %v134 = vadd.f32 0.0, %v133
  %135 = vdwg.mxu0
  %v136 = vadd.f32 %v100, %v132
  %v137 = vadd.f32 %v101, %v134
  %138 = vst.msk [vmem:[#allocation2] sm:$0xff] %vm30, %v136
  %139 = vst.msk [vmem:[#allocation2 + $0x8] sm:$0xff] %vm30, %v137
  // Predicated region
  $region26: #{transformer_forward.44} parent=0 // pred_check
    %p140 = pneg %p21
  $region27: #{transformer_forward.44} parent=0 // pred_check_branch
    %142 = sbr.rel (%p140) target = $region29
  $region28: #{transformer_forward.44} parent=0 // pred_region
    %v143 = vld [vmem:[#allocation2] sm:$0xff]
    %v144 = vld [vmem:[#allocation2 + $0x8] sm:$0xff]
    %v145 = vld [vmem:[%s2] sm:$0x1]
    %v147 = vperm.slane %v145, 0
    %v149 = vadd.f32 %v143, %v147
    %v150 = vadd.f32 %v144, %v147
    %151 = vst.msk [vmem:[%s5] sm:$0xff] %vm30, %v149
    %152 = vst.msk [vmem:[%s5 + $0x8] sm:$0xff] %vm30, %v150
  $region29: #{transformer_forward.44} parent=0 // pred_fallthru
    _
  // Predicated region
  $region30: #{transformer_forward.44} parent=0 // pred_check
    _
  $region31: #{transformer_forward.44} parent=0 // pred_check_branch
    %154 = sbr.rel (0) target = $region33
  $region32: #{transformer_forward.44} parent=0 // pred_region
    _
  $region33: #{transformer_forward.44} parent=0 // pred_fallthru
    _
  // Predicated region
  $region34: #{transformer_forward.44} parent=0 // pred_check
    _
  $region35: #{transformer_forward.44} parent=0 // pred_check_branch
    %156 = sbr.rel (0) target = $region37
  $region36: #{transformer_forward.44} parent=0 // pred_region
    _
  $region37: #{transformer_forward.44} parent=0 // pred_fallthru
    _

// kernel: transformer_forward.42
$region0: #{transformer_forward.42}
  #allocation0 [shape = 'u32[]', space=smem, size = 0x4, offset = 0x4, fixed_abs, tag = 'smem constant byte address 0x4 - core index']
  #allocation1 [shape = 'u32[72,128]{1,0:T(1,128)}', space=vmem, size = 0x9000, scoped, tag = 'internal scratch']
  %s0 = inlined_call_operand.vmem [shape: f32[2,8,32], index: 0, kind: input, shape index: {}]
  %s1 = inlined_call_operand.vmem [shape: f32[2,8,32], index: 1, kind: input, shape index: {}]
  %s2 = inlined_call_operand.vmem [shape: f32[2,8,32], index: 2, kind: input, shape index: {}]
  %s3 = inlined_call_operand.vmem [shape: s32[2,8,8], index: 3, kind: input, shape index: {}]
  %s4 = inlined_call_operand.vmem [shape: f32[2,8,32], index: 4, kind: output, shape index: {}]
  %s5 = sld [smem:[#allocation0]]
  $region49: #{transformer_forward.42} parent=0
    _
  %s7 = ssub.s32 1, %s5
  %s8 = scalar_select 0, %s7, %s5
  loop: start=0, step=1, limit=4
  $region2: #{transformer_forward.42} parent=0 // loop_pre_header
    _
  $region3: #{transformer_forward.42} parent=0 // loop_header
    %s10 = sphi 0, %s14
    %p11 = scmp.ge.s32.totalorder %s10, 4
    %s20 = sphi 0, %s22
    %s23 = sphi 0, %s20
    %s24 = sphi 0, %s23
    %s40 = sphi 0, %s24
    %s46 = sphi 0, %s48
    %s49 = sphi 0, %s46
    %s50 = sphi 0, %s49
    %s66 = sphi 0, %s50
    %s72 = sphi 0, %s74
    %s75 = sphi 0, %s72
    %s76 = sphi 0, %s75
    %s92 = sphi 0, %s76
    %s98 = sphi 0, %s100
    %s101 = sphi 0, %s98
    %s102 = sphi 0, %s101
    %s118 = sphi 0, %s102
    %s124 = sphi 0, %s126
    %s127 = sphi 0, %s124
    %s128 = sphi 0, %s127
    %s144 = sphi 0, %s128
  $region4: #{transformer_forward.42} parent=0 // loop_header_branch
    %13 = sbr.rel (%p11) target = $region8
  $region5: #{transformer_forward.42} parent=0 // loop_body
    %s15 = ssub.s32 %s10, 1
    %s16 = ssub.s32 %s10, 2
    %s17 = sadd.s32 %s10, 1
    %s18 = ssub.s32 %s10, %s17
    %p19 = scmp.eq.s32.totalorder %s18, 0
    %s21 = sadd.s32 %s20, 1
    %s22 = scalar_select %p19, %s20, %s21
    %p25 = pneg %p19
    %p26 = scmp.eq.s32.totalorder %s10, 1
    %p27 = por %p25, %p26
    %p28 = scmp.ne.s32.totalorder %s20, %s23
    %p29 = scmp.eq.s32.totalorder %s10, 0
    %p30 = por %p28, %p29
    %p31 = scmp.ne.s32.totalorder %s20, %s23
    %p32 = scmp.eq.s32.totalorder %s15, 1
    %p33 = por %p31, %p32
    %p34 = scmp.ne.s32.totalorder %s23, %s24
    %p35 = scmp.eq.s32.totalorder %s15, 0
    %p36 = por %p34, %p35
    %p37 = scmp.ne.s32.totalorder %s23, %s24
    %p38 = scmp.eq.s32.totalorder %s16, 1
    %p39 = por %p37, %p38
    %p41 = scmp.ne.s32.totalorder %s24, %s40
    %p42 = scmp.eq.s32.totalorder %s16, 0
    %p43 = por %p41, %p42
    %s44 = ssub.s32 %s10, %s17
    %p45 = scmp.eq.s32.totalorder %s44, 0
    %s47 = sadd.s32 %s46, 1
    %s48 = scalar_select %p45, %s46, %s47
    %p51 = pneg %p45
    %p52 = scmp.eq.s32.totalorder %s10, 1
    %p53 = por %p51, %p52
    %p54 = scmp.ne.s32.totalorder %s46, %s49
    %p55 = scmp.eq.s32.totalorder %s10, 0
    %p56 = por %p54, %p55
    %p57 = scmp.ne.s32.totalorder %s46, %s49
    %p58 = scmp.eq.s32.totalorder %s15, 1
    %p59 = por %p57, %p58
    %p60 = scmp.ne.s32.totalorder %s49, %s50
    %p61 = scmp.eq.s32.totalorder %s15, 0
    %p62 = por %p60, %p61
    %p63 = scmp.ne.s32.totalorder %s49, %s50
    %p64 = scmp.eq.s32.totalorder %s16, 1
    %p65 = por %p63, %p64
    %p67 = scmp.ne.s32.totalorder %s50, %s66
    %p68 = scmp.eq.s32.totalorder %s16, 0
    %p69 = por %p67, %p68
    %s70 = ssub.s32 %s10, %s17
    %p71 = scmp.eq.s32.totalorder %s70, 0
    %s73 = sadd.s32 %s72, 1
    %s74 = scalar_select %p71, %s72, %s73
    %p77 = pneg %p71
    %p78 = scmp.eq.s32.totalorder %s10, 1
    %p79 = por %p77, %p78
    %p80 = scmp.ne.s32.totalorder %s72, %s75
    %p81 = scmp.eq.s32.totalorder %s10, 0
    %p82 = por %p80, %p81
    %p83 = scmp.ne.s32.totalorder %s72, %s75
    %p84 = scmp.eq.s32.totalorder %s15, 1
    %p85 = por %p83, %p84
    %p86 = scmp.ne.s32.totalorder %s75, %s76
    %p87 = scmp.eq.s32.totalorder %s15, 0
    %p88 = por %p86, %p87
    %p89 = scmp.ne.s32.totalorder %s75, %s76
    %p90 = scmp.eq.s32.totalorder %s16, 1
    %p91 = por %p89, %p90
    %p93 = scmp.ne.s32.totalorder %s76, %s92
    %p94 = scmp.eq.s32.totalorder %s16, 0
    %p95 = por %p93, %p94
    %s96 = ssub.s32 %s10, %s17
    %p97 = scmp.eq.s32.totalorder %s96, 0
    %s99 = sadd.s32 %s98, 1
    %s100 = scalar_select %p97, %s98, %s99
    %p103 = pneg %p97
    %p104 = scmp.eq.s32.totalorder %s10, 1
    %p105 = por %p103, %p104
    %p106 = scmp.ne.s32.totalorder %s98, %s101
    %p107 = scmp.eq.s32.totalorder %s10, 0
    %p108 = por %p106, %p107
    %p109 = scmp.ne.s32.totalorder %s98, %s101
    %p110 = scmp.eq.s32.totalorder %s15, 1
    %p111 = por %p109, %p110
    %p112 = scmp.ne.s32.totalorder %s101, %s102
    %p113 = scmp.eq.s32.totalorder %s15, 0
    %p114 = por %p112, %p113
    %p115 = scmp.ne.s32.totalorder %s101, %s102
    %p116 = scmp.eq.s32.totalorder %s16, 1
    %p117 = por %p115, %p116
    %p119 = scmp.ne.s32.totalorder %s102, %s118
    %p120 = scmp.eq.s32.totalorder %s16, 0
    %p121 = por %p119, %p120
    %s122 = ssub.s32 %s10, %s17
    %p123 = scmp.eq.s32.totalorder %s122, 0
    %s125 = sadd.s32 %s124, 1
    %s126 = scalar_select %p123, %s124, %s125
    %p129 = pneg %p123
    %p130 = scmp.eq.s32.totalorder %s10, 1
    %p131 = por %p129, %p130
    %p132 = scmp.ne.s32.totalorder %s124, %s127
    %p133 = scmp.eq.s32.totalorder %s10, 0
    %p134 = por %p132, %p133
    %p135 = scmp.ne.s32.totalorder %s124, %s127
    %p136 = scmp.eq.s32.totalorder %s15, 1
    %p137 = por %p135, %p136
    %p138 = scmp.ne.s32.totalorder %s127, %s128
    %p139 = scmp.eq.s32.totalorder %s15, 0
    %p140 = por %p138, %p139
    %p141 = scmp.ne.s32.totalorder %s127, %s128
    %p142 = scmp.eq.s32.totalorder %s16, 1
    %p143 = por %p141, %p142
    %p145 = scmp.ne.s32.totalorder %s128, %s144
    %p146 = scmp.eq.s32.totalorder %s16, 0
    %p147 = por %p145, %p146
    %p148 = scmp.le.s32.totalorder 1, %s10
    %p149 = scmp.lt.s32.totalorder %s10, 3
    %p150 = pnand %p148, %p149
    %p151 = pneg %p150
    // Predicated region
    $region9: #{transformer_forward.42} parent=5 // pred_check
      _
    $region10: #{transformer_forward.42} parent=5 // pred_check_branch
      %153 = sbr.rel (%p150) target = $region12
    $region11: #{transformer_forward.42} parent=5 // pred_region
      %s154 = ssub.s32 %s10, 1
    $region12: #{transformer_forward.42} parent=5 // pred_fallthru
      _
    %p155 = scmp.lt.s32.totalorder %s10, 2
    // Predicated region
    $region13: #{transformer_forward.42} parent=5 // pred_check
      %p156 = pneg %p155
    $region14: #{transformer_forward.42} parent=5 // pred_check_branch
      %158 = sbr.rel (%p156) target = $region16
    $region15: #{transformer_forward.42} parent=5 // pred_region
      // Predicated region
      $region17: #{transformer_forward.42} parent=15 // pred_check
        %p159 = pneg %p30
      $region18: #{transformer_forward.42} parent=15 // pred_check_branch
        %161 = sbr.rel (%p159) target = $region20
      $region19: #{transformer_forward.42} parent=15 // pred_region
        %p162 = scmp.lt.s32.totalorder %s10, 1
        %s163 = scalar_select %p162, %s10, 1
        %s164 = smul.addr %s163, 8
        %s165 = scalar_lea.vmem %s0, %s164
      $region20: #{transformer_forward.42} parent=15 // pred_fallthru
        _
      // Predicated region
      $region21: #{transformer_forward.42} parent=15 // pred_check
        %p166 = pneg %p56
      $region22: #{transformer_forward.42} parent=15 // pred_check_branch
        %168 = sbr.rel (%p166) target = $region24
      $region23: #{transformer_forward.42} parent=15 // pred_region
        %p169 = scmp.lt.s32.totalorder %s10, 1
        %s170 = scalar_select %p169, %s10, 1
        %s171 = smul.addr %s170, 8
        %s172 = scalar_lea.vmem %s1, %s171
      $region24: #{transformer_forward.42} parent=15 // pred_fallthru
        _
      // Predicated region
      $region25: #{transformer_forward.42} parent=15 // pred_check
        %p173 = pneg %p82
      $region26: #{transformer_forward.42} parent=15 // pred_check_branch
        %175 = sbr.rel (%p173) target = $region28
      $region27: #{transformer_forward.42} parent=15 // pred_region
        %p176 = scmp.lt.s32.totalorder %s10, 1
        %s177 = scalar_select %p176, %s10, 1
        %s178 = smul.addr %s177, 8
        %s179 = scalar_lea.vmem %s2, %s178
      $region28: #{transformer_forward.42} parent=15 // pred_fallthru
        _
      // Predicated region
      $region29: #{transformer_forward.42} parent=15 // pred_check
        %p180 = pneg %p108
      $region30: #{transformer_forward.42} parent=15 // pred_check_branch
        %182 = sbr.rel (%p180) target = $region32
      $region31: #{transformer_forward.42} parent=15 // pred_region
        %p183 = scmp.lt.s32.totalorder %s10, 1
        %s184 = scalar_select %p183, %s10, 1
        %s185 = smul.addr %s184, 8
        %s186 = scalar_lea.vmem %s3, %s185
      $region32: #{transformer_forward.42} parent=15 // pred_fallthru
        _
    $region16: #{transformer_forward.42} parent=5 // pred_fallthru
      _
    %p187 = scmp.le.s32.totalorder 1, %s10
    %p188 = scmp.lt.s32.totalorder %s10, 3
    %p189 = pnand %p187, %p188
    %p190 = pneg %p189
    // Predicated region
    $region33: #{transformer_forward.42} parent=5 // pred_check
      _
    $region34: #{transformer_forward.42} parent=5 // pred_check_branch
      %192 = sbr.rel (%p189) target = $region36
    $region35: #{transformer_forward.42} parent=5 // pred_region
      %s193 = ssub.s32 %s10, 1
      %p194 = scmp.lt.s32.totalorder %s15, 1
      %s195 = scalar_select %p194, %s15, 1
      %s196 = smul.addr %s195, 8
      %s197 = scalar_lea.vmem %s0, %s196
      %p198 = pneg %p36
      %p199 = pneg %p33
      %p200 = scmp.lt.s32.totalorder %s15, 1
      %s201 = scalar_select %p200, %s15, 1
      %s202 = smul.addr %s201, 8
      %s203 = scalar_lea.vmem %s1, %s202
      %p204 = pneg %p62
      %p205 = pneg %p59
      %p206 = scmp.lt.s32.totalorder %s15, 1
      %s207 = scalar_select %p206, %s15, 1
      %s208 = smul.addr %s207, 8
      %s209 = scalar_lea.vmem %s2, %s208
      %p210 = pneg %p88
      %p211 = pneg %p85
      %p212 = scmp.lt.s32.totalorder %s15, 1
      %s213 = scalar_select %p212, %s15, 1
      %s214 = smul.addr %s213, 8
      %s215 = scalar_lea.vmem %s3, %s214
      %p216 = pneg %p114
      %p217 = pneg %p111
      %p218 = pneg %p140
      %p219 = pneg %p137
      %p220 = scmp.lt.s32.totalorder %s15, 1
      %s221 = scalar_select %p220, %s15, 1
      %s222 = smul.addr %s221, 8
      %s223 = scalar_lea.vmem %s4, %s222
      %p224 = scmp.lt.s32.totalorder %s15, 1
      %s225 = scalar_select %p224, %s15, 1
      %s226 = smul.addr %s225, 8
      %s227 = scalar_lea.vmem %s0, %s226
      %p228 = scmp.lt.s32.totalorder %s15, 1
      %s229 = scalar_select %p228, %s15, 1
      %s230 = smul.addr %s229, 8
      %s231 = scalar_lea.vmem %s1, %s230
      %p232 = scmp.lt.s32.totalorder %s15, 1
      %s233 = scalar_select %p232, %s15, 1
      %s234 = smul.addr %s233, 8
      %s235 = scalar_lea.vmem %s2, %s234
      %p236 = scmp.lt.s32.totalorder %s15, 1
      %s237 = scalar_select %p236, %s15, 1
      %s238 = smul.addr %s237, 8
      %s239 = scalar_lea.vmem %s3, %s238
      %p240 = scmp.lt.s32.totalorder %s15, 1
      %s241 = scalar_select %p240, %s15, 1
      %s242 = smul.addr %s241, 8
      %s243 = scalar_lea.vmem %s4, %s242
      %v244 = vld [vmem:[%s227] sm:$0xff]
      %v245 = vld [vmem:[%s231] sm:$0xff]
      %v246 = vld [vmem:[%s235] sm:$0xff]
      %v247 = vld [vmem:[%s239] sm:$0xff]
      %vm248 = vcmask 64512
      %v250 = vsel %vm248, %v244, 0
      %v253 = vsel %vm248, %v245, 0
      %255 = vmatpush.xpose.msra.mxu0 0.0
      %256 = vmatpush.xpose.msra.mxu0 0.0
      %257 = vmatpush.xpose.msra.mxu0 0.0
      %258 = vmatpush.xpose.msra.mxu0 0.0
      %259 = vmatpush.xpose.msra.mxu0 0.0
      %260 = vmatpush.xpose.msra.mxu0 0.0
      %261 = vmatpush.xpose.msra.mxu0 0.0
      %262 = vmatpush.xpose.msra.mxu0 0.0
      %263 = vmatpush.xpose.msra.mxu0 0.0
      %264 = vmatpush.xpose.msra.mxu0 0.0
      %265 = vmatpush.xpose.msra.mxu0 0.0
      %266 = vmatpush.xpose.msra.mxu0 0.0
      %267 = vmatpush.xpose.msra.mxu0 0.0
      %268 = vmatpush.xpose.msra.mxu0 0.0
      %269 = vmatpush.xpose.msra.mxu0 0.0
      %270 = vmatpush.xpose.msra.mxu0 %v253
      %271 = vmatmul.f32.gmra.mxu0 %v250
      %v272 = vpop.f32.mrf.mxu0
      %v273 = vadd.f32 0.0, %v272
      %274 = vdwg.mxu0
      %v275 = vmul.f32 %v273, 0.35355338
      %vm276 = vcmp.eq.s32.totalorder %v247, 0
      %v277 = vsel %vm276, -1e+09, %v275
      %v278 = vsel %vm248, %v277, -inf
      %279 = vmax.xlane.f32.xlu0 %v278
      %v280 = vpop.xlane.xlu0 %279
      %v281 = vsub.f32 %v277, %v280
      %v282 = vmul.f32 %v281, 1.442695
      %v283 = vpow.pop %v282
      %v284 = vsel %vm248, %v283, 0.0
      %285 = vadd.xlane.f32.xlu0 %v284
      %v286 = vpop.xlane.xlu0 %285
      %v287 = vrcp.pop %v286
      %v288 = vmul.f32 %v283, %v287
      %v290 = vsel %vm248, %v288, 0
      %292 = vmatpush.msra.mxu0 0.0
      %293 = vmatpush.msra.mxu0 0.0
      %294 = vmatpush.msra.mxu0 0.0
      %295 = vmatpush.msra.mxu0 0.0
      %296 = vmatpush.msra.mxu0 0.0
      %297 = vmatpush.msra.mxu0 0.0
      %298 = vmatpush.msra.mxu0 0.0
      %299 = vmatpush.msra.mxu0 0.0
      %300 = vmatpush.msra.mxu0 0.0
      %301 = vmatpush.msra.mxu0 0.0
      %302 = vmatpush.msra.mxu0 0.0
      %303 = vmatpush.msra.mxu0 0.0
      %304 = vmatpush.msra.mxu0 0.0
      %305 = vmatpush.msra.mxu0 0.0
      %306 = vmatpush.msra.mxu0 0.0
      %307 = vmatpush.msra.mxu0 %v246
      %308 = vmatmul.f32.gmra.mxu0 %v290
      %v309 = vpop.f32.mrf.mxu0
      %v310 = vadd.f32 0.0, %v309
      %311 = vdwg.mxu0
      %312 = vst.msk [vmem:[%s243] sm:$0xff] %vm248, %v310
      %313 = vrot.lane.b32.xlu0 %v244, 120
      %v314 = vpop.permute.xlu0 %313
      %315 = vrot.lane.b32.xlu0 %v245, 120
      %v316 = vpop.permute.xlu0 %315
      %v317 = vsel %vm248, %v314, 0
      %v319 = vsel %vm248, %v316, 0
      %321 = vmatpush.xpose.msra.mxu0 0.0
      %322 = vmatpush.xpose.msra.mxu0 0.0
      %323 = vmatpush.xpose.msra.mxu0 0.0
      %324 = vmatpush.xpose.msra.mxu0 0.0
      %325 = vmatpush.xpose.msra.mxu0 0.0
      %326 = vmatpush.xpose.msra.mxu0 0.0
      %327 = vmatpush.xpose.msra.mxu0 0.0
      %328 = vmatpush.xpose.msra.mxu0 0.0
      %329 = vmatpush.xpose.msra.mxu0 0.0
      %330 = vmatpush.xpose.msra.mxu0 0.0
      %331 = vmatpush.xpose.msra.mxu0 0.0
      %332 = vmatpush.xpose.msra.mxu0 0.0
      %333 = vmatpush.xpose.msra.mxu0 0.0
      %334 = vmatpush.xpose.msra.mxu0 0.0
      %335 = vmatpush.xpose.msra.mxu0 0.0
      %336 = vmatpush.xpose.msra.mxu0 %v319
      %337 = vmatmul.f32.gmra.mxu0 %v317
      %v338 = vpop.f32.mrf.mxu0
      %v339 = vadd.f32 0.0, %v338
      %340 = vdwg.mxu0
      %v341 = vmul.f32 %v339, 0.35355338
      %v342 = vsel %vm276, -1e+09, %v341
      %v343 = vsel %vm248, %v342, -inf
      %344 = vmax.xlane.f32.xlu0 %v343
      %v345 = vpop.xlane.xlu0 %344
      %v346 = vsub.f32 %v342, %v345
      %v347 = vmul.f32 %v346, 1.442695
      %v348 = vpow.pop %v347
      %v349 = vsel %vm248, %v348, 0.0
      %350 = vadd.xlane.f32.xlu0 %v349
      %v351 = vpop.xlane.xlu0 %350
      %v352 = vrcp.pop %v351
      %v353 = vmul.f32 %v348, %v352
      %355 = vrot.lane.b32.xlu0 %v246, 120
      %v356 = vpop.permute.xlu0 %355
      %v359 = vsel %vm248, %v353, 0
      %361 = vmatpush.msra.mxu0 0.0
      %362 = vmatpush.msra.mxu0 0.0
      %363 = vmatpush.msra.mxu0 0.0
      %364 = vmatpush.msra.mxu0 0.0
      %365 = vmatpush.msra.mxu0 0.0
      %366 = vmatpush.msra.mxu0 0.0
      %367 = vmatpush.msra.mxu0 0.0
      %368 = vmatpush.msra.mxu0 0.0
      %369 = vmatpush.msra.mxu0 0.0
      %370 = vmatpush.msra.mxu0 0.0
      %371 = vmatpush.msra.mxu0 0.0
      %372 = vmatpush.msra.mxu0 0.0
      %373 = vmatpush.msra.mxu0 0.0
      %374 = vmatpush.msra.mxu0 0.0
      %375 = vmatpush.msra.mxu0 0.0
      %376 = vmatpush.msra.mxu0 %v356
      %377 = vmatmul.f32.gmra.mxu0 %v359
      %v378 = vpop.f32.mrf.mxu0
      %v379 = vadd.f32 0.0, %v378
      %380 = vdwg.mxu0
      %382 = vrot.lane.b32.xlu0 %v379, 8
      %v383 = vpop.permute.xlu0 %382
      %vm385 = vcmask 130112
      %386 = vst.msk [vmem:[%s243] sm:$0xff] %vm385, %v383
      %387 = vrot.lane.b32.xlu0 %v244, 112
      %v388 = vpop.permute.xlu0 %387
      %389 = vrot.lane.b32.xlu0 %v245, 112
      %v390 = vpop.permute.xlu0 %389
      %v391 = vsel %vm248, %v388, 0
      %v393 = vsel %vm248, %v390, 0
      %395 = vmatpush.xpose.msra.mxu0 0.0
      %396 = vmatpush.xpose.msra.mxu0 0.0
      %397 = vmatpush.xpose.msra.mxu0 0.0
      %398 = vmatpush.xpose.msra.mxu0 0.0
      %399 = vmatpush.xpose.msra.mxu0 0.0
      %400 = vmatpush.xpose.msra.mxu0 0.0
      %401 = vmatpush.xpose.msra.mxu0 0.0
      %402 = vmatpush.xpose.msra.mxu0 0.0
      %403 = vmatpush.xpose.msra.mxu0 0.0
      %404 = vmatpush.xpose.msra.mxu0 0.0
      %405 = vmatpush.xpose.msra.mxu0 0.0
      %406 = vmatpush.xpose.msra.mxu0 0.0
      %407 = vmatpush.xpose.msra.mxu0 0.0
      %408 = vmatpush.xpose.msra.mxu0 0.0
      %409 = vmatpush.xpose.msra.mxu0 0.0
      %410 = vmatpush.xpose.msra.mxu0 %v393
      %411 = vmatmul.f32.gmra.mxu0 %v391
      %v412 = vpop.f32.mrf.mxu0
      %v413 = vadd.f32 0.0, %v412
      %414 = vdwg.mxu0
      %v415 = vmul.f32 %v413, 0.35355338
      %v416 = vsel %vm276, -1e+09, %v415
      %v417 = vsel %vm248, %v416, -inf
      %418 = vmax.xlane.f32.xlu0 %v417
      %v419 = vpop.xlane.xlu0 %418
      %v420 = vsub.f32 %v416, %v419
      %v421 = vmul.f32 %v420, 1.442695
      %v422 = vpow.pop %v421
      %v423 = vsel %vm248, %v422, 0.0
      %424 = vadd.xlane.f32.xlu0 %v423
      %v425 = vpop.xlane.xlu0 %424
      %v426 = vrcp.pop %v425
      %v427 = vmul.f32 %v422, %v426
      %428 = vrot.lane.b32.xlu0 %v246, 112
      %v429 = vpop.permute.xlu0 %428
      %v432 = vsel %vm248, %v427, 0
      %434 = vmatpush.msra.mxu0 0.0
      %435 = vmatpush.msra.mxu0 0.0
      %436 = vmatpush.msra.mxu0 0.0
      %437 = vmatpush.msra.mxu0 0.0
      %438 = vmatpush.msra.mxu0 0.0
      %439 = vmatpush.msra.mxu0 0.0
      %440 = vmatpush.msra.mxu0 0.0
      %441 = vmatpush.msra.mxu0 0.0
      %442 = vmatpush.msra.mxu0 0.0
      %443 = vmatpush.msra.mxu0 0.0
      %444 = vmatpush.msra.mxu0 0.0
      %445 = vmatpush.msra.mxu0 0.0
      %446 = vmatpush.msra.mxu0 0.0
      %447 = vmatpush.msra.mxu0 0.0
      %448 = vmatpush.msra.mxu0 0.0
      %449 = vmatpush.msra.mxu0 %v429
      %450 = vmatmul.f32.gmra.mxu0 %v432
      %v451 = vpop.f32.mrf.mxu0
      %v452 = vadd.f32 0.0, %v451
      %453 = vdwg.mxu0
      %455 = vrot.lane.b32.xlu0 %v452, 16
      %v456 = vpop.permute.xlu0 %455
      %vm458 = vcmask 195712
      %459 = vst.msk [vmem:[%s243] sm:$0xff] %vm458, %v456
      %460 = vrot.lane.b32.xlu0 %v244, 104
      %v461 = vpop.permute.xlu0 %460
      %462 = vrot.lane.b32.xlu0 %v245, 104
      %v463 = vpop.permute.xlu0 %462
      %v464 = vsel %vm248, %v461, 0
      %v466 = vsel %vm248, %v463, 0
      %468 = vmatpush.xpose.msra.mxu0 0.0
      %469 = vmatpush.xpose.msra.mxu0 0.0
      %470 = vmatpush.xpose.msra.mxu0 0.0
      %471 = vmatpush.xpose.msra.mxu0 0.0
      %472 = vmatpush.xpose.msra.mxu0 0.0
      %473 = vmatpush.xpose.msra.mxu0 0.0
      %474 = vmatpush.xpose.msra.mxu0 0.0
      %475 = vmatpush.xpose.msra.mxu0 0.0
      %476 = vmatpush.xpose.msra.mxu0 0.0
      %477 = vmatpush.xpose.msra.mxu0 0.0
      %478 = vmatpush.xpose.msra.mxu0 0.0
      %479 = vmatpush.xpose.msra.mxu0 0.0
      %480 = vmatpush.xpose.msra.mxu0 0.0
      %481 = vmatpush.xpose.msra.mxu0 0.0
      %482 = vmatpush.xpose.msra.mxu0 0.0
      %483 = vmatpush.xpose.msra.mxu0 %v466
      %484 = vmatmul.f32.gmra.mxu0 %v464
      %v485 = vpop.f32.mrf.mxu0
      %v486 = vadd.f32 0.0, %v485
      %487 = vdwg.mxu0
      %v488 = vmul.f32 %v486, 0.35355338
      %v489 = vsel %vm276, -1e+09, %v488
      %v490 = vsel %vm248, %v489, -inf
      %491 = vmax.xlane.f32.xlu0 %v490
      %v492 = vpop.xlane.xlu0 %491
      %v493 = vsub.f32 %v489, %v492
      %v494 = vmul.f32 %v493, 1.442695
      %v495 = vpow.pop %v494
      %v496 = vsel %vm248, %v495, 0.0
      %497 = vadd.xlane.f32.xlu0 %v496
      %v498 = vpop.xlane.xlu0 %497
      %v499 = vrcp.pop %v498
      %v500 = vmul.f32 %v495, %v499
      %501 = vrot.lane.b32.xlu0 %v246, 104
      %v502 = vpop.permute.xlu0 %501
      %v505 = vsel %vm248, %v500, 0
      %507 = vmatpush.msra.mxu0 0.0
      %508 = vmatpush.msra.mxu0 0.0
      %509 = vmatpush.msra.mxu0 0.0
      %510 = vmatpush.msra.mxu0 0.0
      %511 = vmatpush.msra.mxu0 0.0
      %512 = vmatpush.msra.mxu0 0.0
      %513 = vmatpush.msra.mxu0 0.0
      %514 = vmatpush.msra.mxu0 0.0
      %515 = vmatpush.msra.mxu0 0.0
      %516 = vmatpush.msra.mxu0 0.0
      %517 = vmatpush.msra.mxu0 0.0
      %518 = vmatpush.msra.mxu0 0.0
      %519 = vmatpush.msra.mxu0 0.0
      %520 = vmatpush.msra.mxu0 0.0
      %521 = vmatpush.msra.mxu0 0.0
      %522 = vmatpush.msra.mxu0 %v502
      %523 = vmatmul.f32.gmra.mxu0 %v505
      %v524 = vpop.f32.mrf.mxu0
      %v525 = vadd.f32 0.0, %v524
      %526 = vdwg.mxu0
      %528 = vrot.lane.b32.xlu0 %v525, 24
      %v529 = vpop.permute.xlu0 %528
      %vm531 = vcmask 261312
      %532 = vst.msk [vmem:[%s243] sm:$0xff] %vm531, %v529
      %p533 = scmp.lt.s32.totalorder %s15, 1
      %s534 = scalar_select %p533, %s15, 1
      %s535 = smul.addr %s534, 8
      %s536 = scalar_lea.vmem %s4, %s535
      // Predicated region
      $region37: #{transformer_forward.42} parent=35 // pred_check
        %p537 = pneg %p137
      $region38: #{transformer_forward.42} parent=35 // pred_check_branch
        %539 = sbr.rel (%p537) target = $region40
      $region39: #{transformer_forward.42} parent=35 // pred_region
        _
      $region40: #{transformer_forward.42} parent=35 // pred_fallthru
        _
    $region36: #{transformer_forward.42} parent=5 // pred_fallthru
      _
    %p540 = scmp.le.s32.totalorder 2, %s10
    // Predicated region
    $region41: #{transformer_forward.42} parent=5 // pred_check
      %p541 = pneg %p540
    $region42: #{transformer_forward.42} parent=5 // pred_check_branch
      %543 = sbr.rel (%p541) target = $region44
    $region43: #{transformer_forward.42} parent=5 // pred_region
      %s544 = ssub.s32 %s10, 2
      // Predicated region
      $region45: #{transformer_forward.42} parent=43 // pred_check
        %p545 = pneg %p143
      $region46: #{transformer_forward.42} parent=43 // pred_check_branch
        %547 = sbr.rel (%p545) target = $region48
      $region47: #{transformer_forward.42} parent=43 // pred_region
        %p548 = scmp.lt.s32.totalorder %s16, 1
        %s549 = scalar_select %p548, %s16, 1
        %s550 = smul.addr %s549, 8
        %s551 = scalar_lea.vmem %s4, %s550
      $region48: #{transformer_forward.42} parent=43 // pred_fallthru
        _
    $region44: #{transformer_forward.42} parent=5 // pred_fallthru
      _
  $region6: #{transformer_forward.42} parent=0 // loop_footer
    %s14 = sadd.s32 1, %s10
  $region7: #{transformer_forward.42} parent=0 // loop_footer_branch
    %9 = sbr.rel target = $region3
  $region8: #{transformer_forward.42} parent=0 // loop_exit
    _

// kernel: transformer_forward.43
$region0: #{transformer_forward.43}
  #allocation0 [shape = 'u32[]', space=smem, size = 0x4, offset = 0x4, fixed_abs, tag = 'smem constant byte address 0x4 - core index']
  #allocation1 [shape = 'u32[72,128]{1,0:T(1,128)}', space=vmem, size = 0x9000, scoped, tag = 'internal scratch']
  #allocation2 [shape = 'f32[16,32]{1,0:T(8,128)}', space=vmem, size = 0x2000, scoped, tag = 'scratch operand']
  %s0 = inlined_call_operand.vmem [shape: f32[16,32], index: 0, kind: input, shape index: {}]
  %s1 = inlined_call_operand.vmem [shape: bf16[32,32], index: 1, kind: input, shape index: {}]
  %s2 = inlined_call_operand.vmem [shape: f32[1,32], index: 2, kind: input, shape index: {}]
  %s3 = inlined_call_operand.vmem [shape: f32[16,32], index: 3, kind: input, shape index: {}]
  %s4 = inlined_call_operand.vmem [shape: f32[16,32], index: 4, kind: output, shape index: {}]
  %s5 = sld [smem:[#allocation0]]
  $region34: #{transformer_forward.43} parent=0
    _
  %s7 = ssub.s32 1, %s5
  %s8 = scalar_select 0, %s7, %s5
  // Predicated region
  $region2: #{transformer_forward.43} parent=0 // pred_check
    _
  $region3: #{transformer_forward.43} parent=0 // pred_check_branch
    %10 = sbr.rel (0) target = $region5
  $region4: #{transformer_forward.43} parent=0 // pred_region
    _
  $region5: #{transformer_forward.43} parent=0 // pred_fallthru
    _
  // Predicated region
  $region6: #{transformer_forward.43} parent=0 // pred_check
    _
  $region7: #{transformer_forward.43} parent=0 // pred_check_branch
    %12 = sbr.rel (0) target = $region9
  $region8: #{transformer_forward.43} parent=0 // pred_region
    _
  $region9: #{transformer_forward.43} parent=0 // pred_fallthru
    _
  // Predicated region
  $region10: #{transformer_forward.43} parent=0 // pred_check
    _
  $region11: #{transformer_forward.43} parent=0 // pred_check_branch
    %14 = sbr.rel (0) target = $region13
  $region12: #{transformer_forward.43} parent=0 // pred_region
    _
  $region13: #{transformer_forward.43} parent=0 // pred_fallthru
    _
  // Predicated region
  $region14: #{transformer_forward.43} parent=0 // pred_check
    _
  $region15: #{transformer_forward.43} parent=0 // pred_check_branch
    %16 = sbr.rel (0) target = $region17
  $region16: #{transformer_forward.43} parent=0 // pred_region
    _
  $region17: #{transformer_forward.43} parent=0 // pred_fallthru
    _
  %p18 = scmp.eq.s32.totalorder 0, 0
  // Predicated region
  $region18: #{transformer_forward.43} parent=0 // pred_check
    %p19 = pneg %p18
  $region19: #{transformer_forward.43} parent=0 // pred_check_branch
    %21 = sbr.rel (%p19) target = $region21
  $region20: #{transformer_forward.43} parent=0 // pred_region
    %vm22 = vcmask 261120
    %23 = vst.msk [vmem:[#allocation2] sm:$0xff] %vm22, 0.0
    %24 = vst.msk [vmem:[#allocation2 + $0x8] sm:$0xff] %vm22, 0.0
  $region21: #{transformer_forward.43} parent=0 // pred_fallthru
    _
  %v25 = vld [vmem:[%s0] sm:$0xff]
  %v26 = vld [vmem:[%s0 + $0x8] sm:$0xff]
  %v27 = vld [vmem:[#allocation2] sm:$0xff]
  %v28 = vld [vmem:[#allocation2 + $0x8] sm:$0xff]
  %v29 = vpack.c.bf16 %v26, %v25
  %v30 = vld [vmem:[%s1] sm:$0xf]
  %v31 = vld [vmem:[%s1 + $0x4] sm:$0xf]
  %v32 = vld [vmem:[%s1 + $0x8] sm:$0xf]
  %v33 = vld [vmem:[%s1 + $0xc] sm:$0xf]
  %v38 = vunpack.c.l.b16 %v30
  %v39 = vunpack.c.l.b16 %v31
  %v40 = vunpack.c.l.b16 %v32
  %v41 = vunpack.c.l.b16 %v33
  %v42 = vpack.c.b16 %v39, %v38
  %v43 = vpack.c.b16 %v41, %v40
  %vm46 = vcmask 261120
  %v48 = vsel %vm46, %v29, 0
  %50 = vmatpush.bf16.msra.mxu0 0
  %51 = vmatpush.bf16.msra.mxu0 0
  %52 = vmatpush.bf16.msra.mxu0 0
  %53 = vmatpush.bf16.msra.mxu0 0
  %54 = vmatpush.bf16.msra.mxu0 0
  %55 = vmatpush.bf16.msra.mxu0 0
  %56 = vmatpush.bf16.msra.mxu0 %v43
  %57 = vmatpush.bf16.msra.mxu0 %v42
  %58 = vmatmul.bf16.gmra.mxu0 %v48
  %v59 = vpop.f32.mrf.mxu0
  %v60 = vadd.f32 0.0, %v59
  %v61 = vpop.f32.mrf.mxu0
  %v62 = vadd.f32 0.0, %v61
  %63 = vdwg.mxu0
  %v64 = vadd.f32 %v27, %v60
  %v65 = vadd.f32 %v28, %v62
  %66 = vst.msk [vmem:[#allocation2] sm:$0xff] %vm46, %v64
  %67 = vst.msk [vmem:[#allocation2 + $0x8] sm:$0xff] %vm46, %v65
  // Predicated region
  $region22: #{transformer_forward.43} parent=0 // pred_check
    %p68 = pneg %p18
  $region23: #{transformer_forward.43} parent=0 // pred_check_branch
    %70 = sbr.rel (%p68) target = $region25
  $region24: #{transformer_forward.43} parent=0 // pred_region
    %v71 = vld [vmem:[#allocation2] sm:$0xff]
    %v72 = vld [vmem:[#allocation2 + $0x8] sm:$0xff]
    %v73 = vld [vmem:[%s2] sm:$0x1]
    %v75 = vperm.slane %v73, 0
    %v77 = vadd.f32 %v71, %v75
    %v78 = vadd.f32 %v72, %v75
    %v79 = vld [vmem:[%s3] sm:$0xff]
    %v80 = vld [vmem:[%s3 + $0x8] sm:$0xff]
    %v81 = vadd.f32 %v77, %v79
    %v82 = vadd.f32 %v78, %v80
    %83 = vst.msk [vmem:[%s4] sm:$0xff] %vm46, %v81
    %84 = vst.msk [vmem:[%s4 + $0x8] sm:$0xff] %vm46, %v82
  $region25: #{transformer_forward.43} parent=0 // pred_fallthru
    _
  // Predicated region
  $region26: #{transformer_forward.43} parent=0 // pred_check
    _
  $region27: #{transformer_forward.43} parent=0 // pred_check_branch
    %86 = sbr.rel (0) target = $region29
  $region28: #{transformer_forward.43} parent=0 // pred_region
    _
  $region29: #{transformer_forward.43} parent=0 // pred_fallthru
    _
  // Predicated region
  $region30: #{transformer_forward.43} parent=0 // pred_check
    _
  $region31: #{transformer_forward.43} parent=0 // pred_check_branch
    %88 = sbr.rel (0) target = $region33
  $region32: #{transformer_forward.43} parent=0 // pred_region
    _
  $region33: #{transformer_forward.43} parent=0 // pred_fallthru
    _

// kernel: transformer_forward.46
$region0: #{transformer_forward.46}
  #allocation0 [shape = 'u32[]', space=smem, size = 0x4, offset = 0x4, fixed_abs, tag = 'smem constant byte address 0x4 - core index']
  #allocation1 [shape = 'u32[72,128]{1,0:T(1,128)}', space=vmem, size = 0x9000, scoped, tag = 'internal scratch']
  %s0 = inlined_call_operand.vmem [shape: f32[2,8,32], index: 0, kind: input, shape index: {}]
  %s1 = inlined_call_operand.vmem [shape: f32[2,10,32], index: 1, kind: input, shape index: {}]
  %s2 = inlined_call_operand.vmem [shape: f32[2,10,32], index: 2, kind: input, shape index: {}]
  %s3 = inlined_call_operand.vmem [shape: s32[2,1,10], index: 3, kind: input, shape index: {}]
  %s4 = inlined_call_operand.vmem [shape: f32[2,8,32], index: 4, kind: output, shape index: {}]
  %s5 = sld [smem:[#allocation0]]
  $region49: #{transformer_forward.46} parent=0
    _
  %s7 = ssub.s32 1, %s5
  %s8 = scalar_select 0, %s7, %s5
  loop: start=0, step=1, limit=4
  $region2: #{transformer_forward.46} parent=0 // loop_pre_header
    _
  $region3: #{transformer_forward.46} parent=0 // loop_header
    %s10 = sphi 0, %s14
    %p11 = scmp.ge.s32.totalorder %s10, 4
    %s20 = sphi 0, %s22
    %s23 = sphi 0, %s20
    %s24 = sphi 0, %s23
    %s40 = sphi 0, %s24
    %s46 = sphi 0, %s48
    %s49 = sphi 0, %s46
    %s50 = sphi 0, %s49
    %s66 = sphi 0, %s50
    %s72 = sphi 0, %s74
    %s75 = sphi 0, %s72
    %s76 = sphi 0, %s75
    %s92 = sphi 0, %s76
    %s98 = sphi 0, %s100
    %s101 = sphi 0, %s98
    %s102 = sphi 0, %s101
    %s118 = sphi 0, %s102
    %s124 = sphi 0, %s126
    %s127 = sphi 0, %s124
    %s128 = sphi 0, %s127
    %s144 = sphi 0, %s128
  $region4: #{transformer_forward.46} parent=0 // loop_header_branch
    %13 = sbr.rel (%p11) target = $region8
  $region5: #{transformer_forward.46} parent=0 // loop_body
    %s15 = ssub.s32 %s10, 1
    %s16 = ssub.s32 %s10, 2
    %s17 = sadd.s32 %s10, 1
    %s18 = ssub.s32 %s10, %s17
    %p19 = scmp.eq.s32.totalorder %s18, 0
    %s21 = sadd.s32 %s20, 1
    %s22 = scalar_select %p19, %s20, %s21
    %p25 = pneg %p19
    %p26 = scmp.eq.s32.totalorder %s10, 1
    %p27 = por %p25, %p26
    %p28 = scmp.ne.s32.totalorder %s20, %s23
    %p29 = scmp.eq.s32.totalorder %s10, 0
    %p30 = por %p28, %p29
    %p31 = scmp.ne.s32.totalorder %s20, %s23
    %p32 = scmp.eq.s32.totalorder %s15, 1
    %p33 = por %p31, %p32
    %p34 = scmp.ne.s32.totalorder %s23, %s24
    %p35 = scmp.eq.s32.totalorder %s15, 0
    %p36 = por %p34, %p35
    %p37 = scmp.ne.s32.totalorder %s23, %s24
    %p38 = scmp.eq.s32.totalorder %s16, 1
    %p39 = por %p37, %p38
    %p41 = scmp.ne.s32.totalorder %s24, %s40
    %p42 = scmp.eq.s32.totalorder %s16, 0
    %p43 = por %p41, %p42
    %s44 = ssub.s32 %s10, %s17
    %p45 = scmp.eq.s32.totalorder %s44, 0
    %s47 = sadd.s32 %s46, 1
    %s48 = scalar_select %p45, %s46, %s47
    %p51 = pneg %p45
    %p52 = scmp.eq.s32.totalorder %s10, 1
    %p53 = por %p51, %p52
    %p54 = scmp.ne.s32.totalorder %s46, %s49
    %p55 = scmp.eq.s32.totalorder %s10, 0
    %p56 = por %p54, %p55
    %p57 = scmp.ne.s32.totalorder %s46, %s49
    %p58 = scmp.eq.s32.totalorder %s15, 1
    %p59 = por %p57, %p58
    %p60 = scmp.ne.s32.totalorder %s49, %s50
    %p61 = scmp.eq.s32.totalorder %s15, 0
    %p62 = por %p60, %p61
    %p63 = scmp.ne.s32.totalorder %s49, %s50
    %p64 = scmp.eq.s32.totalorder %s16, 1
    %p65 = por %p63, %p64
    %p67 = scmp.ne.s32.totalorder %s50, %s66
    %p68 = scmp.eq.s32.totalorder %s16, 0
    %p69 = por %p67, %p68
    %s70 = ssub.s32 %s10, %s17
    %p71 = scmp.eq.s32.totalorder %s70, 0
    %s73 = sadd.s32 %s72, 1
    %s74 = scalar_select %p71, %s72, %s73
    %p77 = pneg %p71
    %p78 = scmp.eq.s32.totalorder %s10, 1
    %p79 = por %p77, %p78
    %p80 = scmp.ne.s32.totalorder %s72, %s75
    %p81 = scmp.eq.s32.totalorder %s10, 0
    %p82 = por %p80, %p81
    %p83 = scmp.ne.s32.totalorder %s72, %s75
    %p84 = scmp.eq.s32.totalorder %s15, 1
    %p85 = por %p83, %p84
    %p86 = scmp.ne.s32.totalorder %s75, %s76
    %p87 = scmp.eq.s32.totalorder %s15, 0
    %p88 = por %p86, %p87
    %p89 = scmp.ne.s32.totalorder %s75, %s76
    %p90 = scmp.eq.s32.totalorder %s16, 1
    %p91 = por %p89, %p90
    %p93 = scmp.ne.s32.totalorder %s76, %s92
    %p94 = scmp.eq.s32.totalorder %s16, 0
    %p95 = por %p93, %p94
    %s96 = ssub.s32 %s10, %s17
    %p97 = scmp.eq.s32.totalorder %s96, 0
    %s99 = sadd.s32 %s98, 1
    %s100 = scalar_select %p97, %s98, %s99
    %p103 = pneg %p97
    %p104 = scmp.eq.s32.totalorder %s10, 1
    %p105 = por %p103, %p104
    %p106 = scmp.ne.s32.totalorder %s98, %s101
    %p107 = scmp.eq.s32.totalorder %s10, 0
    %p108 = por %p106, %p107
    %p109 = scmp.ne.s32.totalorder %s98, %s101
    %p110 = scmp.eq.s32.totalorder %s15, 1
    %p111 = por %p109, %p110
    %p112 = scmp.ne.s32.totalorder %s101, %s102
    %p113 = scmp.eq.s32.totalorder %s15, 0
    %p114 = por %p112, %p113
    %p115 = scmp.ne.s32.totalorder %s101, %s102
    %p116 = scmp.eq.s32.totalorder %s16, 1
    %p117 = por %p115, %p116
    %p119 = scmp.ne.s32.totalorder %s102, %s118
    %p120 = scmp.eq.s32.totalorder %s16, 0
    %p121 = por %p119, %p120
    %s122 = ssub.s32 %s10, %s17
    %p123 = scmp.eq.s32.totalorder %s122, 0
    %s125 = sadd.s32 %s124, 1
    %s126 = scalar_select %p123, %s124, %s125
    %p129 = pneg %p123
    %p130 = scmp.eq.s32.totalorder %s10, 1
    %p131 = por %p129, %p130
    %p132 = scmp.ne.s32.totalorder %s124, %s127
    %p133 = scmp.eq.s32.totalorder %s10, 0
    %p134 = por %p132, %p133
    %p135 = scmp.ne.s32.totalorder %s124, %s127
    %p136 = scmp.eq.s32.totalorder %s15, 1
    %p137 = por %p135, %p136
    %p138 = scmp.ne.s32.totalorder %s127, %s128
    %p139 = scmp.eq.s32.totalorder %s15, 0
    %p140 = por %p138, %p139
    %p141 = scmp.ne.s32.totalorder %s127, %s128
    %p142 = scmp.eq.s32.totalorder %s16, 1
    %p143 = por %p141, %p142
    %p145 = scmp.ne.s32.totalorder %s128, %s144
    %p146 = scmp.eq.s32.totalorder %s16, 0
    %p147 = por %p145, %p146
    %p148 = scmp.le.s32.totalorder 1, %s10
    %p149 = scmp.lt.s32.totalorder %s10, 3
    %p150 = pnand %p148, %p149
    %p151 = pneg %p150
    // Predicated region
    $region9: #{transformer_forward.46} parent=5 // pred_check
      _
    $region10: #{transformer_forward.46} parent=5 // pred_check_branch
      %153 = sbr.rel (%p150) target = $region12
    $region11: #{transformer_forward.46} parent=5 // pred_region
      %s154 = ssub.s32 %s10, 1
    $region12: #{transformer_forward.46} parent=5 // pred_fallthru
      _
    %p155 = scmp.lt.s32.totalorder %s10, 2
    // Predicated region
    $region13: #{transformer_forward.46} parent=5 // pred_check
      %p156 = pneg %p155
    $region14: #{transformer_forward.46} parent=5 // pred_check_branch
      %158 = sbr.rel (%p156) target = $region16
    $region15: #{transformer_forward.46} parent=5 // pred_region
      // Predicated region
      $region17: #{transformer_forward.46} parent=15 // pred_check
        %p159 = pneg %p30
      $region18: #{transformer_forward.46} parent=15 // pred_check_branch
        %161 = sbr.rel (%p159) target = $region20
      $region19: #{transformer_forward.46} parent=15 // pred_region
        %p162 = scmp.lt.s32.totalorder %s10, 1
        %s163 = scalar_select %p162, %s10, 1
        %s164 = smul.addr %s163, 8
        %s165 = scalar_lea.vmem %s0, %s164
      $region20: #{transformer_forward.46} parent=15 // pred_fallthru
        _
      // Predicated region
      $region21: #{transformer_forward.46} parent=15 // pred_check
        %p166 = pneg %p56
      $region22: #{transformer_forward.46} parent=15 // pred_check_branch
        %168 = sbr.rel (%p166) target = $region24
      $region23: #{transformer_forward.46} parent=15 // pred_region
        %p169 = scmp.lt.s32.totalorder %s10, 1
        %s170 = scalar_select %p169, %s10, 1
        %s171 = smul.addr %s170, 2
        %s172 = smul.addr %s171, 8
        %s173 = scalar_lea.vmem %s1, %s172
      $region24: #{transformer_forward.46} parent=15 // pred_fallthru
        _
      // Predicated region
      $region25: #{transformer_forward.46} parent=15 // pred_check
        %p174 = pneg %p82
      $region26: #{transformer_forward.46} parent=15 // pred_check_branch
        %176 = sbr.rel (%p174) target = $region28
      $region27: #{transformer_forward.46} parent=15 // pred_region
        %p177 = scmp.lt.s32.totalorder %s10, 1
        %s178 = scalar_select %p177, %s10, 1
        %s179 = smul.addr %s178, 2
        %s180 = smul.addr %s179, 8
        %s181 = scalar_lea.vmem %s2, %s180
      $region28: #{transformer_forward.46} parent=15 // pred_fallthru
        _
      // Predicated region
      $region29: #{transformer_forward.46} parent=15 // pred_check
        %p182 = pneg %p108
      $region30: #{transformer_forward.46} parent=15 // pred_check_branch
        %184 = sbr.rel (%p182) target = $region32
      $region31: #{transformer_forward.46} parent=15 // pred_region
        %p185 = scmp.lt.s32.totalorder %s10, 1
        %s186 = scalar_select %p185, %s10, 1
        %s187 = scalar_lea.vmem %s3, %s186
      $region32: #{transformer_forward.46} parent=15 // pred_fallthru
        _
    $region16: #{transformer_forward.46} parent=5 // pred_fallthru
      _
    %p188 = scmp.le.s32.totalorder 1, %s10
    %p189 = scmp.lt.s32.totalorder %s10, 3
    %p190 = pnand %p188, %p189
    %p191 = pneg %p190
    // Predicated region
    $region33: #{transformer_forward.46} parent=5 // pred_check
      _
    $region34: #{transformer_forward.46} parent=5 // pred_check_branch
      %193 = sbr.rel (%p190) target = $region36
    $region35: #{transformer_forward.46} parent=5 // pred_region
      %s194 = ssub.s32 %s10, 1
      %p195 = scmp.lt.s32.totalorder %s15, 1
      %s196 = scalar_select %p195, %s15, 1
      %s197 = smul.addr %s196, 8
      %s198 = scalar_lea.vmem %s0, %s197
      %p199 = pneg %p36
      %p200 = pneg %p33
      %p201 = scmp.lt.s32.totalorder %s15, 1
      %s202 = scalar_select %p201, %s15, 1
      %s203 = smul.addr %s202, 2
      %s204 = smul.addr %s203, 8
      %s205 = scalar_lea.vmem %s1, %s204
      %p206 = pneg %p62
      %p207 = pneg %p59
      %p208 = scmp.lt.s32.totalorder %s15, 1
      %s209 = scalar_select %p208, %s15, 1
      %s210 = smul.addr %s209, 2
      %s211 = smul.addr %s210, 8
      %s212 = scalar_lea.vmem %s2, %s211
      %p213 = pneg %p88
      %p214 = pneg %p85
      %p215 = scmp.lt.s32.totalorder %s15, 1
      %s216 = scalar_select %p215, %s15, 1
      %s217 = scalar_lea.vmem %s3, %s216
      %p218 = pneg %p114
      %p219 = pneg %p111
      %p220 = pneg %p140
      %p221 = pneg %p137
      %p222 = scmp.lt.s32.totalorder %s15, 1
      %s223 = scalar_select %p222, %s15, 1
      %s224 = smul.addr %s223, 8
      %s225 = scalar_lea.vmem %s4, %s224
      %p226 = scmp.lt.s32.totalorder %s15, 1
      %s227 = scalar_select %p226, %s15, 1
      %s228 = smul.addr %s227, 8
      %s229 = scalar_lea.vmem %s0, %s228
      %p230 = scmp.lt.s32.totalorder %s15, 1
      %s231 = scalar_select %p230, %s15, 1
      %s232 = smul.addr %s231, 2
      %s233 = smul.addr %s232, 8
      %s234 = scalar_lea.vmem %s1, %s233
      %p235 = scmp.lt.s32.totalorder %s15, 1
      %s236 = scalar_select %p235, %s15, 1
      %s237 = smul.addr %s236, 2
      %s238 = smul.addr %s237, 8
      %s239 = scalar_lea.vmem %s2, %s238
      %p240 = scmp.lt.s32.totalorder %s15, 1
      %s241 = scalar_select %p240, %s15, 1
      %s242 = scalar_lea.vmem %s3, %s241
      %p243 = scmp.lt.s32.totalorder %s15, 1
      %s244 = scalar_select %p243, %s15, 1
      %s245 = smul.addr %s244, 8
      %s246 = scalar_lea.vmem %s4, %s245
      %v247 = vld [vmem:[%s229] sm:$0xff]
      %v248 = vld [vmem:[%s234] sm:$0xff]
      %v249 = vld [vmem:[%s234 + $0x8] sm:$0x3]
      %v250 = vld [vmem:[%s239] sm:$0xff]
      %v251 = vld [vmem:[%s239 + $0x8] sm:$0x3]
      %v252 = vld [vmem:[%s242] sm:$0x1]
      %vm253 = vcmask 64512
      %v255 = vsel %vm253, %v247, 0
      %v258 = vsel %vm253, %v248, 0
      %v261 = vsel %vm253, %v249, 0
      %263 = vmatpush.xpose.msra.mxu0 0.0
      %264 = vmatpush.xpose.msra.mxu0 0.0
      %265 = vmatpush.xpose.msra.mxu0 0.0
      %266 = vmatpush.xpose.msra.mxu0 0.0
      %267 = vmatpush.xpose.msra.mxu0 0.0
      %268 = vmatpush.xpose.msra.mxu0 0.0
      %269 = vmatpush.xpose.msra.mxu0 0.0
      %270 = vmatpush.xpose.msra.mxu0 0.0
      %271 = vmatpush.xpose.msra.mxu0 0.0
      %272 = vmatpush.xpose.msra.mxu0 0.0
      %273 = vmatpush.xpose.msra.mxu0 0.0
      %274 = vmatpush.xpose.msra.mxu0 0.0
      %275 = vmatpush.xpose.msra.mxu0 0.0
      %276 = vmatpush.xpose.msra.mxu0 0.0
      %277 = vmatpush.xpose.msra.mxu0 %v261
      %278 = vmatpush.xpose.msra.mxu0 %v258
      %279 = vmatmul.f32.gmra.mxu0 %v255
      %v280 = vpop.f32.mrf.mxu0
      %v281 = vadd.f32 0.0, %v280
      %282 = vdwg.mxu0
      %v283 = vmul.f32 %v281, 0.35355338
      %vm284 = vcmp.eq.s32.totalorder %v252, 0
      %v285 = vsel %vm284, 1, 0
      %v286 = vperm.slane %v285, 0
      %vm287 = vcmp.eq.s32.totalorder %v286, 1
      %v288 = vsel %vm287, -1e+09, %v283
      %vm289 = vcmask 80896
      %v290 = vsel %vm289, %v288, -inf
      %291 = vmax.xlane.f32.xlu0 %v290
      %v292 = vpop.xlane.xlu0 %291
      %v293 = vsub.f32 %v288, %v292
      %v294 = vmul.f32 %v293, 1.442695
      %v295 = vpow.pop %v294
      %v296 = vsel %vm289, %v295, 0.0
      %297 = vadd.xlane.f32.xlu0 %v296
      %v298 = vpop.xlane.xlu0 %297
      %v299 = vrcp.pop %v298
      %v300 = vmul.f32 %v295, %v299
      %v302 = vsel %vm289, %v300, 0
      %vm304 = vcmask 1041408
      %v306 = vsel %vm304, %v251, 0
      %308 = vmatpush.msra.mxu0 0.0
      %309 = vmatpush.msra.mxu0 0.0
      %310 = vmatpush.msra.mxu0 0.0
      %311 = vmatpush.msra.mxu0 0.0
      %312 = vmatpush.msra.mxu0 0.0
      %313 = vmatpush.msra.mxu0 0.0
      %314 = vmatpush.msra.mxu0 0.0
      %315 = vmatpush.msra.mxu0 0.0
      %316 = vmatpush.msra.mxu0 0.0
      %317 = vmatpush.msra.mxu0 0.0
      %318 = vmatpush.msra.mxu0 0.0
      %319 = vmatpush.msra.mxu0 0.0
      %320 = vmatpush.msra.mxu0 0.0
      %321 = vmatpush.msra.mxu0 0.0
      %322 = vmatpush.msra.mxu0 %v306
      %323 = vmatpush.msra.mxu0 %v250
      %324 = vmatmul.f32.gmra.mxu0 %v302
      %v325 = vpop.f32.mrf.mxu0
      %v326 = vadd.f32 0.0, %v325
      %327 = vdwg.mxu0
      %328 = vst.msk [vmem:[%s246] sm:$0xff] %vm253, %v326
      %329 = vrot.lane.b32.xlu0 %v247, 120
      %v330 = vpop.permute.xlu0 %329
      %331 = vrot.lane.b32.xlu0 %v248, 120
      %v332 = vpop.permute.xlu0 %331
      %333 = vrot.lane.b32.xlu0 %v249, 120
      %v334 = vpop.permute.xlu0 %333
      %v335 = vsel %vm253, %v330, 0
      %v337 = vsel %vm253, %v332, 0
      %v339 = vsel %vm253, %v334, 0
      %341 = vmatpush.xpose.msra.mxu0 0.0
      %342 = vmatpush.xpose.msra.mxu0 0.0
      %343 = vmatpush.xpose.msra.mxu0 0.0
      %344 = vmatpush.xpose.msra.mxu0 0.0
      %345 = vmatpush.xpose.msra.mxu0 0.0
      %346 = vmatpush.xpose.msra.mxu0 0.0
      %347 = vmatpush.xpose.msra.mxu0 0.0
      %348 = vmatpush.xpose.msra.mxu0 0.0
      %349 = vmatpush.xpose.msra.mxu0 0.0
      %350 = vmatpush.xpose.msra.mxu0 0.0
      %351 = vmatpush.xpose.msra.mxu0 0.0
      %352 = vmatpush.xpose.msra.mxu0 0.0
      %353 = vmatpush.xpose.msra.mxu0 0.0
      %354 = vmatpush.xpose.msra.mxu0 0.0
      %355 = vmatpush.xpose.msra.mxu0 %v339
      %356 = vmatpush.xpose.msra.mxu0 %v337
      %357 = vmatmul.f32.gmra.mxu0 %v335
      %v358 = vpop.f32.mrf.mxu0
      %v359 = vadd.f32 0.0, %v358
      %360 = vdwg.mxu0
      %v361 = vmul.f32 %v359, 0.35355338
      %v362 = vsel %vm287, -1e+09, %v361
      %v363 = vsel %vm289, %v362, -inf
      %364 = vmax.xlane.f32.xlu0 %v363
      %v365 = vpop.xlane.xlu0 %364
      %v366 = vsub.f32 %v362, %v365
      %v367 = vmul.f32 %v366, 1.442695
      %v368 = vpow.pop %v367
      %v369 = vsel %vm289, %v368, 0.0
      %370 = vadd.xlane.f32.xlu0 %v369
      %v371 = vpop.xlane.xlu0 %370
      %v372 = vrcp.pop %v371
      %v373 = vmul.f32 %v368, %v372
      %375 = vrot.lane.b32.xlu0 %v250, 120
      %v376 = vpop.permute.xlu0 %375
      %377 = vrot.lane.b32.xlu0 %v251, 120
      %v378 = vpop.permute.xlu0 %377
      %v381 = vsel %vm289, %v373, 0
      %v383 = vsel %vm304, %v378, 0
      %385 = vmatpush.msra.mxu0 0.0
      %386 = vmatpush.msra.mxu0 0.0
      %387 = vmatpush.msra.mxu0 0.0
      %388 = vmatpush.msra.mxu0 0.0
      %389 = vmatpush.msra.mxu0 0.0
      %390 = vmatpush.msra.mxu0 0.0
      %391 = vmatpush.msra.mxu0 0.0
      %392 = vmatpush.msra.mxu0 0.0
      %393 = vmatpush.msra.mxu0 0.0
      %394 = vmatpush.msra.mxu0 0.0
      %395 = vmatpush.msra.mxu0 0.0
      %396 = vmatpush.msra.mxu0 0.0
      %397 = vmatpush.msra.mxu0 0.0
      %398 = vmatpush.msra.mxu0 0.0
      %399 = vmatpush.msra.mxu0 %v383
      %400 = vmatpush.msra.mxu0 %v376
      %401 = vmatmul.f32.gmra.mxu0 %v381
      %v402 = vpop.f32.mrf.mxu0
      %v403 = vadd.f32 0.0, %v402
      %404 = vdwg.mxu0
      %406 = vrot.lane.b32.xlu0 %v403, 8
      %v407 = vpop.permute.xlu0 %406
      %vm409 = vcmask 130112
      %410 = vst.msk [vmem:[%s246] sm:$0xff] %vm409, %v407
      %411 = vrot.lane.b32.xlu0 %v247, 112
      %v412 = vpop.permute.xlu0 %411
      %413 = vrot.lane.b32.xlu0 %v248, 112
      %v414 = vpop.permute.xlu0 %413
      %415 = vrot.lane.b32.xlu0 %v249, 112
      %v416 = vpop.permute.xlu0 %415
      %v417 = vsel %vm253, %v412, 0
      %v419 = vsel %vm253, %v414, 0
      %v421 = vsel %vm253, %v416, 0
      %423 = vmatpush.xpose.msra.mxu0 0.0
      %424 = vmatpush.xpose.msra.mxu0 0.0
      %425 = vmatpush.xpose.msra.mxu0 0.0
      %426 = vmatpush.xpose.msra.mxu0 0.0
      %427 = vmatpush.xpose.msra.mxu0 0.0
      %428 = vmatpush.xpose.msra.mxu0 0.0
      %429 = vmatpush.xpose.msra.mxu0 0.0
      %430 = vmatpush.xpose.msra.mxu0 0.0
      %431 = vmatpush.xpose.msra.mxu0 0.0
      %432 = vmatpush.xpose.msra.mxu0 0.0
      %433 = vmatpush.xpose.msra.mxu0 0.0
      %434 = vmatpush.xpose.msra.mxu0 0.0
      %435 = vmatpush.xpose.msra.mxu0 0.0
      %436 = vmatpush.xpose.msra.mxu0 0.0
      %437 = vmatpush.xpose.msra.mxu0 %v421
      %438 = vmatpush.xpose.msra.mxu0 %v419
      %439 = vmatmul.f32.gmra.mxu0 %v417
      %v440 = vpop.f32.mrf.mxu0
      %v441 = vadd.f32 0.0, %v440
      %442 = vdwg.mxu0
      %v443 = vmul.f32 %v441, 0.35355338
      %v444 = vsel %vm287, -1e+09, %v443
      %v445 = vsel %vm289, %v444, -inf
      %446 = vmax.xlane.f32.xlu0 %v445
      %v447 = vpop.xlane.xlu0 %446
      %v448 = vsub.f32 %v444, %v447
      %v449 = vmul.f32 %v448, 1.442695
      %v450 = vpow.pop %v449
      %v451 = vsel %vm289, %v450, 0.0
      %452 = vadd.xlane.f32.xlu0 %v451
      %v453 = vpop.xlane.xlu0 %452
      %v454 = vrcp.pop %v453
      %v455 = vmul.f32 %v450, %v454
      %456 = vrot.lane.b32.xlu0 %v250, 112
      %v457 = vpop.permute.xlu0 %456
      %458 = vrot.lane.b32.xlu0 %v251, 112
      %v459 = vpop.permute.xlu0 %458
      %v462 = vsel %vm289, %v455, 0
      %v464 = vsel %vm304, %v459, 0
      %466 = vmatpush.msra.mxu0 0.0
      %467 = vmatpush.msra.mxu0 0.0
      %468 = vmatpush.msra.mxu0 0.0
      %469 = vmatpush.msra.mxu0 0.0
      %470 = vmatpush.msra.mxu0 0.0
      %471 = vmatpush.msra.mxu0 0.0
      %472 = vmatpush.msra.mxu0 0.0
      %473 = vmatpush.msra.mxu0 0.0
      %474 = vmatpush.msra.mxu0 0.0
      %475 = vmatpush.msra.mxu0 0.0
      %476 = vmatpush.msra.mxu0 0.0
      %477 = vmatpush.msra.mxu0 0.0
      %478 = vmatpush.msra.mxu0 0.0
      %479 = vmatpush.msra.mxu0 0.0
      %480 = vmatpush.msra.mxu0 %v464
      %481 = vmatpush.msra.mxu0 %v457
      %482 = vmatmul.f32.gmra.mxu0 %v462
      %v483 = vpop.f32.mrf.mxu0
      %v484 = vadd.f32 0.0, %v483
      %485 = vdwg.mxu0
      %487 = vrot.lane.b32.xlu0 %v484, 16
      %v488 = vpop.permute.xlu0 %487
      %vm490 = vcmask 195712
      %491 = vst.msk [vmem:[%s246] sm:$0xff] %vm490, %v488
      %492 = vrot.lane.b32.xlu0 %v247, 104
      %v493 = vpop.permute.xlu0 %492
      %494 = vrot.lane.b32.xlu0 %v248, 104
      %v495 = vpop.permute.xlu0 %494
      %496 = vrot.lane.b32.xlu0 %v249, 104
      %v497 = vpop.permute.xlu0 %496
      %v498 = vsel %vm253, %v493, 0
      %v500 = vsel %vm253, %v495, 0
      %v502 = vsel %vm253, %v497, 0
      %504 = vmatpush.xpose.msra.mxu0 0.0
      %505 = vmatpush.xpose.msra.mxu0 0.0
      %506 = vmatpush.xpose.msra.mxu0 0.0
      %507 = vmatpush.xpose.msra.mxu0 0.0
      %508 = vmatpush.xpose.msra.mxu0 0.0
      %509 = vmatpush.xpose.msra.mxu0 0.0
      %510 = vmatpush.xpose.msra.mxu0 0.0
      %511 = vmatpush.xpose.msra.mxu0 0.0
      %512 = vmatpush.xpose.msra.mxu0 0.0
      %513 = vmatpush.xpose.msra.mxu0 0.0
      %514 = vmatpush.xpose.msra.mxu0 0.0
      %515 = vmatpush.xpose.msra.mxu0 0.0
      %516 = vmatpush.xpose.msra.mxu0 0.0
      %517 = vmatpush.xpose.msra.mxu0 0.0
      %518 = vmatpush.xpose.msra.mxu0 %v502
      %519 = vmatpush.xpose.msra.mxu0 %v500
      %520 = vmatmul.f32.gmra.mxu0 %v498
      %v521 = vpop.f32.mrf.mxu0
      %v522 = vadd.f32 0.0, %v521
      %523 = vdwg.mxu0
      %v524 = vmul.f32 %v522, 0.35355338
      %v525 = vsel %vm287, -1e+09, %v524
      %v526 = vsel %vm289, %v525, -inf
      %527 = vmax.xlane.f32.xlu0 %v526
      %v528 = vpop.xlane.xlu0 %527
      %v529 = vsub.f32 %v525, %v528
      %v530 = vmul.f32 %v529, 1.442695
      %v531 = vpow.pop %v530
      %v532 = vsel %vm289, %v531, 0.0
      %533 = vadd.xlane.f32.xlu0 %v532
      %v534 = vpop.xlane.xlu0 %533
      %v535 = vrcp.pop %v534
      %v536 = vmul.f32 %v531, %v535
      %537 = vrot.lane.b32.xlu0 %v250, 104
      %v538 = vpop.permute.xlu0 %537
      %539 = vrot.lane.b32.xlu0 %v251, 104
      %v540 = vpop.permute.xlu0 %539
      %v543 = vsel %vm289, %v536, 0
      %v545 = vsel %vm304, %v540, 0
      %547 = vmatpush.msra.mxu0 0.0
      %548 = vmatpush.msra.mxu0 0.0
      %549 = vmatpush.msra.mxu0 0.0
      %550 = vmatpush.msra.mxu0 0.0
      %551 = vmatpush.msra.mxu0 0.0
      %552 = vmatpush.msra.mxu0 0.0
      %553 = vmatpush.msra.mxu0 0.0
      %554 = vmatpush.msra.mxu0 0.0
      %555 = vmatpush.msra.mxu0 0.0
      %556 = vmatpush.msra.mxu0 0.0
      %557 = vmatpush.msra.mxu0 0.0
      %558 = vmatpush.msra.mxu0 0.0
      %559 = vmatpush.msra.mxu0 0.0
      %560 = vmatpush.msra.mxu0 0.0
      %561 = vmatpush.msra.mxu0 %v545
      %562 = vmatpush.msra.mxu0 %v538
      %563 = vmatmul.f32.gmra.mxu0 %v543
      %v564 = vpop.f32.mrf.mxu0
      %v565 = vadd.f32 0.0, %v564
      %566 = vdwg.mxu0
      %568 = vrot.lane.b32.xlu0 %v565, 24
      %v569 = vpop.permute.xlu0 %568
      %vm571 = vcmask 261312
      %572 = vst.msk [vmem:[%s246] sm:$0xff] %vm571, %v569
      %p573 = scmp.lt.s32.totalorder %s15, 1
      %s574 = scalar_select %p573, %s15, 1
      %s575 = smul.addr %s574, 8
      %s576 = scalar_lea.vmem %s4, %s575
      // Predicated region
      $region37: #{transformer_forward.46} parent=35 // pred_check
        %p577 = pneg %p137
      $region38: #{transformer_forward.46} parent=35 // pred_check_branch
        %579 = sbr.rel (%p577) target = $region40
      $region39: #{transformer_forward.46} parent=35 // pred_region
        _
      $region40: #{transformer_forward.46} parent=35 // pred_fallthru
        _
    $region36: #{transformer_forward.46} parent=5 // pred_fallthru
      _
    %p580 = scmp.le.s32.totalorder 2, %s10
    // Predicated region
    $region41: #{transformer_forward.46} parent=5 // pred_check
      %p581 = pneg %p580
    $region42: #{transformer_forward.46} parent=5 // pred_check_branch
      %583 = sbr.rel (%p581) target = $region44
    $region43: #{transformer_forward.46} parent=5 // pred_region
      %s584 = ssub.s32 %s10, 2
      // Predicated region
      $region45: #{transformer_forward.46} parent=43 // pred_check
        %p585 = pneg %p143
      $region46: #{transformer_forward.46} parent=43 // pred_check_branch
        %587 = sbr.rel (%p585) target = $region48
      $region47: #{transformer_forward.46} parent=43 // pred_region
        %p588 = scmp.lt.s32.totalorder %s16, 1
        %s589 = scalar_select %p588, %s16, 1
        %s590 = smul.addr %s589, 8
        %s591 = scalar_lea.vmem %s4, %s590
      $region48: #{transformer_forward.46} parent=43 // pred_fallthru
        _
    $region44: #{transformer_forward.46} parent=5 // pred_fallthru
      _
  $region6: #{transformer_forward.46} parent=0 // loop_footer
    %s14 = sadd.s32 1, %s10
  $region7: #{transformer_forward.46} parent=0 // loop_footer_branch
    %9 = sbr.rel target = $region3
  $region8: #{transformer_forward.46} parent=0 // loop_exit
    _

// kernel: transformer_forward.48
$region0: #{transformer_forward.48}
  #allocation0 [shape = 'u32[]', space=smem, size = 0x4, offset = 0x4, fixed_abs, tag = 'smem constant byte address 0x4 - core index']
  #allocation1 [shape = 'u32[72,128]{1,0:T(1,128)}', space=vmem, size = 0x9000, scoped, tag = 'internal scratch']
  #allocation2 [shape = 'f32[16,512]{1,0:T(8,128)}', space=vmem, size = 0x8000, scoped, tag = 'scratch operand']
  %s0 = inlined_call_operand.vmem [shape: f32[16,32], index: 0, kind: input, shape index: {}]
  %s1 = inlined_call_operand.vmem [shape: bf16[32,2048], index: 1, kind: input, shape index: {}]
  %s2 = inlined_call_operand.vmem [shape: f32[1,2048], index: 2, kind: input, shape index: {}]
  %s3 = inlined_call_operand.vmem [shape: f32[1,32], index: 3, kind: input, shape index: {}]
  %s4 = inlined_call_operand.vmem [shape: f32[1,32], index: 4, kind: input, shape index: {}]
  %s5 = inlined_call_operand.vmem [shape: f32[16,2048], index: 5, kind: output, shape index: {}]
  %s6 = sld [smem:[#allocation0]]
  $region103: #{transformer_forward.48} parent=0
    _
  %s8 = ssub.s32 1, %s6
  %s9 = scalar_select 0, %s8, %s6
  $region1: #{transformer_forward.48} parent=0
    #allocation3 [shape = 'u8[65536]{0}', space=vmem, size = 0x10000, scoped, tag = 'input window, operand 1']
    #allocation4 [shape = 'u8[65536]{0}', space=vmem, size = 0x10000, scoped, tag = 'output window, operand 0']
    loop: start=0, step=1, limit=6
    $region2: #{transformer_forward.48} parent=1 // loop_pre_header
      _
    $region3: #{transformer_forward.48} parent=1 // loop_header
      %s11 = sphi 0, %s15
      %p12 = scmp.ge.s32.totalorder %s11, 6
      %s18 = sphi 0, %s37
      %s19 = sphi 0, %s33
      %s20 = sphi 0, %s29
      %s21 = sphi 0, %s18
      %s22 = sphi 0, %s19
      %s23 = sphi 0, %s20
      %s24 = sphi 0, %s21
      %s25 = sphi 0, %s22
      %s26 = sphi 0, %s23
      %s42 = sphi 0, %s44
      %s45 = sphi 0, %s42
      %s46 = sphi 0, %s45
      %s62 = sphi 0, %s46
      %s70 = sphi 0, %s72
      %s73 = sphi 0, %s70
      %s74 = sphi 0, %s73
      %s90 = sphi 0, %s74
      %s96 = sphi 0, %s98
      %s99 = sphi 0, %s96
      %s100 = sphi 0, %s99
      %s116 = sphi 0, %s100
      %s122 = sphi 0, %s124
      %s125 = sphi 0, %s122
      %s126 = sphi 0, %s125
      %s142 = sphi 0, %s126
      %s148 = sphi 0, %s150
      %s151 = sphi 0, %s148
      %s152 = sphi 0, %s151
      %s168 = sphi 0, %s152
      %s176 = sphi 0, %s178
      %s179 = sphi 0, %s176
      %s180 = sphi 0, %s179
      %s196 = sphi 0, %s180
    $region4: #{transformer_forward.48} parent=1 // loop_header_branch
      %14 = sbr.rel (%p12) target = $region8
    $region5: #{transformer_forward.48} parent=1 // loop_body
      %s16 = ssub.s32 %s11, 1
      %s17 = ssub.s32 %s11, 2
      %s27 = sadd.s32 1, %s20
      %p28 = scmp.ge.s32.totalorder %s27, 1
      %s29 = scalar_select %p28, 0, %s27
      %s30 = sadd.s32 1, %s19
      %s31 = scalar_select %p28, %s30, %s19
      %p32 = scmp.ge.s32.totalorder %s31, 4
      %s33 = scalar_select %p32, 0, %s31
      %s34 = sadd.s32 1, %s18
      %s35 = scalar_select %p32, %s34, %s18
      %p36 = scmp.ge.s32.totalorder %s35, 1
      %s37 = scalar_select %p36, 0, %s35
      %s38 = ssub.s32 %s18, %s37
      %s39 = ssub.s32 %s20, %s29
      %s40 = sor.u32 %s38, %s39
      %p41 = scmp.eq.s32.totalorder %s40, 0
      %s43 = sadd.s32 %s42, 1
      %s44 = scalar_select %p41, %s42, %s43
      %p47 = pneg %p41
      %p48 = scmp.eq.s32.totalorder %s11, 3
      %p49 = por %p47, %p48
      %p50 = scmp.ne.s32.totalorder %s42, %s45
      %p51 = scmp.eq.s32.totalorder %s11, 0
      %p52 = por %p50, %p51
      %p53 = scmp.ne.s32.totalorder %s42, %s45
      %p54 = scmp.eq.s32.totalorder %s16, 3
      %p55 = por %p53, %p54
      %p56 = scmp.ne.s32.totalorder %s45, %s46
      %p57 = scmp.eq.s32.totalorder %s16, 0
      %p58 = por %p56, %p57
      %p59 = scmp.ne.s32.totalorder %s45, %s46
      %p60 = scmp.eq.s32.totalorder %s17, 3
      %p61 = por %p59, %p60
      %p63 = scmp.ne.s32.totalorder %s46, %s62
      %p64 = scmp.eq.s32.totalorder %s17, 0
      %p65 = por %p63, %p64
      %s66 = ssub.s32 %s20, %s29
      %s67 = ssub.s32 %s19, %s33
      %s68 = sor.u32 %s66, %s67
      %p69 = scmp.eq.s32.totalorder %s68, 0
      %s71 = sadd.s32 %s70, 1
      %s72 = scalar_select %p69, %s70, %s71
      %p75 = pneg %p69
      %p76 = scmp.eq.s32.totalorder %s11, 3
      %p77 = por %p75, %p76
      %p78 = scmp.ne.s32.totalorder %s70, %s73
      %p79 = scmp.eq.s32.totalorder %s11, 0
      %p80 = por %p78, %p79
      %p81 = scmp.ne.s32.totalorder %s70, %s73
      %p82 = scmp.eq.s32.totalorder %s16, 3
      %p83 = por %p81, %p82
      %p84 = scmp.ne.s32.totalorder %s73, %s74
      %p85 = scmp.eq.s32.totalorder %s16, 0
      %p86 = por %p84, %p85
      %p87 = scmp.ne.s32.totalorder %s73, %s74
      %p88 = scmp.eq.s32.totalorder %s17, 3
      %p89 = por %p87, %p88
      %p91 = scmp.ne.s32.totalorder %s74, %s90
      %p92 = scmp.eq.s32.totalorder %s17, 0
      %p93 = por %p91, %p92
      %s94 = ssub.s32 %s19, %s33
      %p95 = scmp.eq.s32.totalorder %s94, 0
      %s97 = sadd.s32 %s96, 1
      %s98 = scalar_select %p95, %s96, %s97
      %p101 = pneg %p95
      %p102 = scmp.eq.s32.totalorder %s11, 3
      %p103 = por %p101, %p102
      %p104 = scmp.ne.s32.totalorder %s96, %s99
      %p105 = scmp.eq.s32.totalorder %s11, 0
      %p106 = por %p104, %p105
      %p107 = scmp.ne.s32.totalorder %s96, %s99
      %p108 = scmp.eq.s32.totalorder %s16, 3
      %p109 = por %p107, %p108
      %p110 = scmp.ne.s32.totalorder %s99, %s100
      %p111 = scmp.eq.s32.totalorder %s16, 0
      %p112 = por %p110, %p111
      %p113 = scmp.ne.s32.totalorder %s99, %s100
      %p114 = scmp.eq.s32.totalorder %s17, 3
      %p115 = por %p113, %p114
      %p117 = scmp.ne.s32.totalorder %s100, %s116
      %p118 = scmp.eq.s32.totalorder %s17, 0
      %p119 = por %p117, %p118
      %s120 = ssub.s32 %s20, %s29
      %p121 = scmp.eq.s32.totalorder %s120, 0
      %s123 = sadd.s32 %s122, 1
      %s124 = scalar_select %p121, %s122, %s123
      %p127 = pneg %p121
      %p128 = scmp.eq.s32.totalorder %s11, 3
      %p129 = por %p127, %p128
      %p130 = scmp.ne.s32.totalorder %s122, %s125
      %p131 = scmp.eq.s32.totalorder %s11, 0
      %p132 = por %p130, %p131
      %p133 = scmp.ne.s32.totalorder %s122, %s125
      %p134 = scmp.eq.s32.totalorder %s16, 3
      %p135 = por %p133, %p134
      %p136 = scmp.ne.s32.totalorder %s125, %s126
      %p137 = scmp.eq.s32.totalorder %s16, 0
      %p138 = por %p136, %p137
      %p139 = scmp.ne.s32.totalorder %s125, %s126
      %p140 = scmp.eq.s32.totalorder %s17, 3
      %p141 = por %p139, %p140
      %p143 = scmp.ne.s32.totalorder %s126, %s142
      %p144 = scmp.eq.s32.totalorder %s17, 0
      %p145 = por %p143, %p144
      %s146 = ssub.s32 %s20, %s29
      %p147 = scmp.eq.s32.totalorder %s146, 0
      %s149 = sadd.s32 %s148, 1
      %s150 = scalar_select %p147, %s148, %s149
      %p153 = pneg %p147
      %p154 = scmp.eq.s32.totalorder %s11, 3
      %p155 = por %p153, %p154
      %p156 = scmp.ne.s32.totalorder %s148, %s151
      %p157 = scmp.eq.s32.totalorder %s11, 0
      %p158 = por %p156, %p157
      %p159 = scmp.ne.s32.totalorder %s148, %s151
      %p160 = scmp.eq.s32.totalorder %s16, 3
      %p161 = por %p159, %p160
      %p162 = scmp.ne.s32.totalorder %s151, %s152
      %p163 = scmp.eq.s32.totalorder %s16, 0
      %p164 = por %p162, %p163
      %p165 = scmp.ne.s32.totalorder %s151, %s152
      %p166 = scmp.eq.s32.totalorder %s17, 3
      %p167 = por %p165, %p166
      %p169 = scmp.ne.s32.totalorder %s152, %s168
      %p170 = scmp.eq.s32.totalorder %s17, 0
      %p171 = por %p169, %p170
      %s172 = ssub.s32 %s18, %s37
      %s173 = ssub.s32 %s19, %s33
      %s174 = sor.u32 %s172, %s173
      %p175 = scmp.eq.s32.totalorder %s174, 0
      %s177 = sadd.s32 %s176, 1
      %s178 = scalar_select %p175, %s176, %s177
      %p181 = pneg %p175
      %p182 = scmp.eq.s32.totalorder %s11, 3
      %p183 = por %p181, %p182
      %p184 = scmp.ne.s32.totalorder %s176, %s179
      %p185 = scmp.eq.s32.totalorder %s11, 0
      %p186 = por %p184, %p185
      %p187 = scmp.ne.s32.totalorder %s176, %s179
      %p188 = scmp.eq.s32.totalorder %s16, 3
      %p189 = por %p187, %p188
      %p190 = scmp.ne.s32.totalorder %s179, %s180
      %p191 = scmp.eq.s32.totalorder %s16, 0
      %p192 = por %p190, %p191
      %p193 = scmp.ne.s32.totalorder %s179, %s180
      %p194 = scmp.eq.s32.totalorder %s17, 3
      %p195 = por %p193, %p194
      %p197 = scmp.ne.s32.totalorder %s180, %s196
      %p198 = scmp.eq.s32.totalorder %s17, 0
      %p199 = por %p197, %p198
      %p200 = scmp.le.s32.totalorder 1, %s11
      %p201 = scmp.lt.s32.totalorder %s11, 5
      %p202 = pnand %p200, %p201
      %p203 = pneg %p202
      // Predicated region
      $region9: #{transformer_forward.48} parent=5 // pred_check
        _
      $region10: #{transformer_forward.48} parent=5 // pred_check_branch
        %205 = sbr.rel (%p202) target = $region12
      $region11: #{transformer_forward.48} parent=5 // pred_region
        %s206 = ssub.s32 %s11, 1
        // Predicated region
        $region13: #{transformer_forward.48} parent=11 // pred_check
          %p207 = pneg %p58
        $region14: #{transformer_forward.48} parent=11 // pred_check_branch
          %209 = sbr.rel (%p207) target = $region16
        $region15: #{transformer_forward.48} parent=11 // pred_region
          %s210 = smul.u32 2, %s21
          %p211 = scmp.lt.s32.totalorder %s210, 1
          %s212 = scalar_select %p211, %s210, 1
          %p213 = scmp.lt.s32.totalorder %s23, 0
          %s214 = scalar_select %p213, %s23, 0
          %s215 = sadd.s32 %s214, %s212
          %s216 = smul.addr %s215, 8
          %s217 = scalar_lea.vmem %s0, %s216
          %s218 = smul.u32 2, %s21
        $region16: #{transformer_forward.48} parent=11 // pred_fallthru
          _
        // Predicated region
        $region17: #{transformer_forward.48} parent=11 // pred_check
          %p219 = pneg %p138
        $region18: #{transformer_forward.48} parent=11 // pred_check_branch
          %221 = sbr.rel (%p219) target = $region20
        $region19: #{transformer_forward.48} parent=11 // pred_region
          %p222 = scmp.lt.s32.totalorder %s23, 0
          %s223 = scalar_select %p222, %s23, 0
          %s224 = scalar_lea.vmem %s3, %s223
        $region20: #{transformer_forward.48} parent=11 // pred_fallthru
          _
        // Predicated region
        $region21: #{transformer_forward.48} parent=11 // pred_check
          %p225 = pneg %p164
        $region22: #{transformer_forward.48} parent=11 // pred_check_branch
          %227 = sbr.rel (%p225) target = $region24
        $region23: #{transformer_forward.48} parent=11 // pred_region
          %p228 = scmp.lt.s32.totalorder %s23, 0
          %s229 = scalar_select %p228, %s23, 0
          %s230 = scalar_lea.vmem %s4, %s229
        $region24: #{transformer_forward.48} parent=11 // pred_fallthru
          _
      $region12: #{transformer_forward.48} parent=5 // pred_fallthru
        _
      %p231 = scmp.lt.s32.totalorder %s11, 4
      // Predicated region
      $region25: #{transformer_forward.48} parent=5 // pred_check
        %p232 = pneg %p231
      $region26: #{transformer_forward.48} parent=5 // pred_check_branch
        %234 = sbr.rel (%p232) target = $region28
      $region27: #{transformer_forward.48} parent=5 // pred_region
        // Predicated region
        $region29: #{transformer_forward.48} parent=27 // pred_check
          %p235 = pneg %p80
        $region30: #{transformer_forward.48} parent=27 // pred_check_branch
          %237 = sbr.rel (%p235) target = $region32
        $region31: #{transformer_forward.48} parent=27 // pred_region
          %s238 = sand.u32 %s70, 1
          %s239 = sand.u32 %s70, 1
          %s240 = smul.addr %s239, 64
          %s241 = scalar_lea.vmem [#allocation3], %s240
          %s242 = smul.u32 4, %s20
          %s243 = smul.u32 4, %s19
          %s244 = smul.addr %s242, 16
          %s245 = sadd.s32 %s243, %s244
          %s246 = smul.addr %s245, 4
          %s247 = scalar_lea.vmem %s1, %s246
          // Predicated region
          $region33: #{transformer_forward.48} parent=31 // pred_check
            _
          $region34: #{transformer_forward.48} parent=31 // pred_check_branch
            %249 = sbr.rel (0) target = $region36
          $region35: #{transformer_forward.48} parent=31 // pred_region
            // Predicated region
            $region37: #{transformer_forward.48} parent=35 // pred_check
              _
            $region38: #{transformer_forward.48} parent=35 // pred_check_branch
              %251 = sbr.rel (0) target = $region40
            $region39: #{transformer_forward.48} parent=35 // pred_region
              loop: start=0, step=1, limit=1
              $region41: #{transformer_forward.48} parent=39 // loop_pre_header
                _
              $region42: #{transformer_forward.48} parent=39 // loop_header
                %s253 = sphi 0, %s257
                %p254 = scmp.ge.s32.totalorder %s253, 1
                %s258 = sphi %s247, %s247
                %s259 = sphi %s241, %s241
              $region43: #{transformer_forward.48} parent=39 // loop_header_branch
                %256 = sbr.rel (%p254) target = $region47
              $region44: #{transformer_forward.48} parent=39 // loop_body
                %v260 = vld [vmem:[%s258] sm:$0xff]
                %261 = vst [vmem:[%s259] sm:$0xff] %v260
                %v262 = vld [vmem:[%s258 + $0x8] sm:$0xff]
                %263 = vst [vmem:[%s259 + $0x8] sm:$0xff] %v262
                %v264 = vld [vmem:[%s258 + $0x40] sm:$0xff]
                %265 = vst [vmem:[%s259 + $0x10] sm:$0xff] %v264
                %v266 = vld [vmem:[%s258 + $0x48] sm:$0xff]
                %267 = vst [vmem:[%s259 + $0x18] sm:$0xff] %v266
                %v268 = vld [vmem:[%s258 + $0x80] sm:$0xff]
                %269 = vst [vmem:[%s259 + $0x20] sm:$0xff] %v268
                %v270 = vld [vmem:[%s258 + $0x88] sm:$0xff]
                %271 = vst [vmem:[%s259 + $0x28] sm:$0xff] %v270
                %v272 = vld [vmem:[%s258 + $0xc0] sm:$0xff]
                %273 = vst [vmem:[%s259 + $0x30] sm:$0xff] %v272
                %v274 = vld [vmem:[%s258 + $0xc8] sm:$0xff]
                %275 = vst [vmem:[%s259 + $0x38] sm:$0xff] %v274
              $region45: #{transformer_forward.48} parent=39 // loop_footer
                %s257 = sadd.s32 1, %s253
              $region46: #{transformer_forward.48} parent=39 // loop_footer_branch
                %252 = sbr.rel target = $region42
              $region47: #{transformer_forward.48} parent=39 // loop_exit
                _
            $region40: #{transformer_forward.48} parent=35 // pred_fallthru
              _
            // Predicated region
            $region48: #{transformer_forward.48} parent=35 // pred_check
              _
            $region49: #{transformer_forward.48} parent=35 // pred_check_branch
              %277 = sbr.rel target = $region51
            $region50: #{transformer_forward.48} parent=35 // pred_region
              _
            $region51: #{transformer_forward.48} parent=35 // pred_fallthru
              _
          $region36: #{transformer_forward.48} parent=31 // pred_fallthru
            _
          %278 = vnop
        $region32: #{transformer_forward.48} parent=27 // pred_fallthru
          _
        // Predicated region
        $region52: #{transformer_forward.48} parent=27 // pred_check
          %p279 = pneg %p106
        $region53: #{transformer_forward.48} parent=27 // pred_check_branch
          %281 = sbr.rel (%p279) target = $region55
        $region54: #{transformer_forward.48} parent=27 // pred_region
          %s282 = smul.u32 4, %s19
          %p283 = scmp.lt.s32.totalorder %s282, 15
          %s284 = scalar_select %p283, %s282, 15
          %s285 = scalar_lea.vmem %s2, %s284
          %s286 = smul.u32 4, %s19
        $region55: #{transformer_forward.48} parent=27 // pred_fallthru
          _
      $region28: #{transformer_forward.48} parent=5 // pred_fallthru
        _
      %p287 = scmp.le.s32.totalorder 1, %s11
      %p288 = scmp.lt.s32.totalorder %s11, 5
      %p289 = pnand %p287, %p288
      %p290 = pneg %p289
      // Predicated region
      $region56: #{transformer_forward.48} parent=5 // pred_check
        _
      $region57: #{transformer_forward.48} parent=5 // pred_check_branch
        %292 = sbr.rel (%p289) target = $region59
      $region58: #{transformer_forward.48} parent=5 // pred_region
        %s293 = ssub.s32 %s11, 1
        %s294 = sand.u32 %s73, 1
        %s295 = sand.u32 %s73, 1
        %s296 = smul.addr %s295, 64
        %s297 = scalar_lea.vmem [#allocation3], %s296
        // Predicated region
        $region60: #{transformer_forward.48} parent=58 // pred_check
          %p298 = pneg %p86
        $region61: #{transformer_forward.48} parent=58 // pred_check_branch
          %300 = sbr.rel (%p298) target = $region63
        $region62: #{transformer_forward.48} parent=58 // pred_region
          _
        $region63: #{transformer_forward.48} parent=58 // pred_fallthru
          _
        %s301 = smul.u32 2, %s21
        %p302 = scmp.lt.s32.totalorder %s301, 1
        %s303 = scalar_select %p302, %s301, 1
        %p304 = scmp.lt.s32.totalorder %s23, 0
        %s305 = scalar_select %p304, %s23, 0
        %s306 = sadd.s32 %s305, %s303
        %s307 = smul.addr %s306, 8
        %s308 = scalar_lea.vmem %s0, %s307
        %p309 = pneg %p58
        %p310 = pneg %p55
        %s311 = sand.u32 %s73, 1
        %s312 = sand.u32 %s73, 1
        %s313 = smul.addr %s312, 64
        %s314 = scalar_lea.vmem [#allocation3], %s313
        %p315 = pneg %p86
        %p316 = pneg %p83
        %s317 = smul.u32 4, %s22
        %p318 = scmp.lt.s32.totalorder %s317, 15
        %s319 = scalar_select %p318, %s317, 15
        %s320 = scalar_lea.vmem %s2, %s319
        %p321 = pneg %p112
        %p322 = pneg %p109
        %p323 = scmp.lt.s32.totalorder %s23, 0
        %s324 = scalar_select %p323, %s23, 0
        %s325 = scalar_lea.vmem %s3, %s324
        %p326 = pneg %p138
        %p327 = pneg %p135
        %p328 = scmp.lt.s32.totalorder %s23, 0
        %s329 = scalar_select %p328, %s23, 0
        %s330 = scalar_lea.vmem %s4, %s329
        %p331 = pneg %p164
        %p332 = pneg %p161
        %p333 = pneg %p192
        %p334 = pneg %p189
        %s335 = sand.u32 %s179, 1
        %s336 = sand.u32 %s179, 1
        %s337 = smul.addr %s336, 64
        %s338 = scalar_lea.vmem [#allocation4], %s337
        %s339 = smul.u32 2, %s21
        %p340 = scmp.lt.s32.totalorder %s339, 1
        %s341 = scalar_select %p340, %s339, 1
        %p342 = scmp.lt.s32.totalorder %s23, 0
        %s343 = scalar_select %p342, %s23, 0
        %s344 = sadd.s32 %s343, %s341
        %s345 = smul.addr %s344, 8
        %s346 = scalar_lea.vmem %s0, %s345
        %s347 = smul.u32 2, %s21
        %s348 = smul.u32 4, %s23
        %s349 = smul.u32 4, %s22
        %s350 = smul.u32 4, %s22
        %p351 = scmp.lt.s32.totalorder %s350, 15
        %s352 = scalar_select %p351, %s350, 15
        %s353 = scalar_lea.vmem %s2, %s352
        %s354 = smul.u32 4, %s22
        %p355 = scmp.lt.s32.totalorder %s23, 0
        %s356 = scalar_select %p355, %s23, 0
        %s357 = scalar_lea.vmem %s3, %s356
        %p358 = scmp.lt.s32.totalorder %s23, 0
        %s359 = scalar_select %p358, %s23, 0
        %s360 = scalar_lea.vmem %s4, %s359
        %s361 = smul.u32 2, %s21
        %s362 = smul.u32 4, %s22
        %p364 = scmp.eq.s32.totalorder %s23, 0
        // Predicated region
        $region64: #{transformer_forward.48} parent=58 // pred_check
          %p365 = pneg %p364
        $region65: #{transformer_forward.48} parent=58 // pred_check_branch
          %367 = sbr.rel (%p365) target = $region67
        $region66: #{transformer_forward.48} parent=58 // pred_region
          %368 = vst [vmem:[#allocation2] sm:$0xff] 0.0
          %369 = vst [vmem:[#allocation2 + $0x8] sm:$0xff] 0.0
          %370 = vst [vmem:[#allocation2 + $0x10] sm:$0xff] 0.0
          %371 = vst [vmem:[#allocation2 + $0x18] sm:$0xff] 0.0
          %372 = vst [vmem:[#allocation2 + $0x20] sm:$0xff] 0.0
          %373 = vst [vmem:[#allocation2 + $0x28] sm:$0xff] 0.0
          %374 = vst [vmem:[#allocation2 + $0x30] sm:$0xff] 0.0
          %375 = vst [vmem:[#allocation2 + $0x38] sm:$0xff] 0.0
        $region67: #{transformer_forward.48} parent=58 // pred_fallthru
          _
        %v376 = vld [vmem:[%s346] sm:$0xff]
        %v377 = vld [vmem:[%s346 + $0x8] sm:$0xff]
        %vm378 = vcmask 261120
        %v379 = vsel %vm378, %v376, 0.0
        %380 = vadd.xlane.f32.xlu0 %v379
        %v381 = vpop.xlane.xlu0 %380
        %v382 = vsel %vm378, %v377, 0.0
        %383 = vadd.xlane.f32.xlu0 %v382
        %v384 = vpop.xlane.xlu0 %383
        %v385 = vrcp.pop 32.0
        %v386 = vmul.f32 32.0, %v385
        %v387 = vsub.f32 1.0, %v386
        %v388 = vmul.f32 %v385, %v387
        %v389 = vadd.f32 %v385, %v388
        %vm390 = vweird.f32 %v385
        %v391 = vsel %vm390, %v385, %v389
        %v392 = vmul.f32 %v381, %v391
        %v393 = vmul.f32 %v384, %v391
        %v394 = vsub.f32 %v376, %v392
        %v395 = vsub.f32 %v377, %v393
        %v396 = vmul.f32 %v394, %v394
        %v397 = vmul.f32 %v395, %v395
        %v398 = vsel %vm378, %v396, 0.0
        %399 = vadd.xlane.f32.xlu0 %v398
        %v400 = vpop.xlane.xlu0 %399
        %v401 = vsel %vm378, %v397, 0.0
        %402 = vadd.xlane.f32.xlu0 %v401
        %v403 = vpop.xlane.xlu0 %402
        %v404 = vmul.f32 %v400, 0.032258064
        %v405 = vmul.f32 %v403, 0.032258064
        %v406 = vrsqrt.pop %v404
        %v407 = vmul.f32 %v406, %v404
        %v408 = vmul.f32 %v407, %v406
        %v409 = vmul.f32 0.5, %v408
        %v410 = vsub.f32 1.5, %v409
        %v411 = vmul.f32 %v406, %v410
        %v412 = vmul.f32 %v404, %v411
        %vm413 = vcmp.eq.f32.partialorder %v404, inf
        %v414 = vsel %vm413, %v404, %v412
        %vm415 = vcmp.eq.f32.partialorder %v404, 0.0
        %v416 = vand.u32 %v404, 2147483648
        %v417 = vsel %vm415, %v416, %v414
        %v418 = vrsqrt.pop %v405
        %v419 = vmul.f32 %v418, %v405
        %v420 = vmul.f32 %v419, %v418
        %v421 = vmul.f32 0.5, %v420
        %v422 = vsub.f32 1.5, %v421
        %v423 = vmul.f32 %v418, %v422
        %v424 = vmul.f32 %v405, %v423
        %vm425 = vcmp.eq.f32.partialorder %v405, inf
        %v426 = vsel %vm425, %v405, %v424
        %vm427 = vcmp.eq.f32.partialorder %v405, 0.0
        %v428 = vand.u32 %v405, 2147483648
        %v429 = vsel %vm427, %v428, %v426
        %v430 = vadd.f32 %v417, 1e-06
        %v431 = vadd.f32 %v429, 1e-06
        %v432 = vrcp.pop %v430
        %v433 = vrcp.pop %v431
        %v434 = vld [vmem:[%s357] sm:$0x1]
        %v436 = vperm.slane %v434, 0
        %v438 = vmul.f32 %v436, %v394
        %v439 = vmul.f32 %v436, %v395
        %v440 = vmul.f32 %v438, %v432
        %v441 = vmul.f32 %v439, %v433
        %v442 = vld [vmem:[%s360] sm:$0x1]
        %v444 = vperm.slane %v442, 0
        %v446 = vadd.f32 %v440, %v444
        %v447 = vadd.f32 %v441, %v444
        %v448 = vld [vmem:[#allocation2] sm:$0xff]
        %v449 = vld [vmem:[#allocation2 + $0x8] sm:$0xff]
        %v450 = vld [vmem:[#allocation2 + $0x10] sm:$0xff]
        %v451 = vld [vmem:[#allocation2 + $0x18] sm:$0xff]
        %v452 = vld [vmem:[#allocation2 + $0x20] sm:$0xff]
        %v453 = vld [vmem:[#allocation2 + $0x28] sm:$0xff]
        %v454 = vld [vmem:[#allocation2 + $0x30] sm:$0xff]
        %v455 = vld [vmem:[#allocation2 + $0x38] sm:$0xff]
        %v456 = vpack.c.bf16 %v447, %v446
        %v457 = vld [vmem:[%s297] sm:$0xff]
        %v458 = vld [vmem:[%s297 + $0x8] sm:$0xff]
        %v459 = vld [vmem:[%s297 + $0x10] sm:$0xff]
        %v460 = vld [vmem:[%s297 + $0x18] sm:$0xff]
        %v461 = vld [vmem:[%s297 + $0x20] sm:$0xff]
        %v462 = vld [vmem:[%s297 + $0x28] sm:$0xff]
        %v463 = vld [vmem:[%s297 + $0x30] sm:$0xff]
        %v464 = vld [vmem:[%s297 + $0x38] sm:$0xff]
        %v473 = vunpack.c.l.b16 %v457
        %v474 = vunpack.c.h.b16 %v457
        %v475 = vunpack.c.l.b16 %v458
        %v476 = vunpack.c.h.b16 %v458
        %v477 = vunpack.c.l.b16 %v459
        %v478 = vunpack.c.h.b16 %v459
        %v479 = vunpack.c.l.b16 %v460
        %v480 = vunpack.c.h.b16 %v460
        %v481 = vunpack.c.l.b16 %v461
        %v482 = vunpack.c.h.b16 %v461
        %v483 = vunpack.c.l.b16 %v462
        %v484 = vunpack.c.h.b16 %v462
        %v485 = vunpack.c.l.b16 %v463
        %v486 = vunpack.c.h.b16 %v463
        %v487 = vunpack.c.l.b16 %v464
        %v488 = vunpack.c.h.b16 %v464
        %v489 = vpack.c.b16 %v477, %v473
        %v490 = vpack.c.b16 %v478, %v474
        %v491 = vpack.c.b16 %v479, %v475
        %v492 = vpack.c.b16 %v480, %v476
        %v493 = vpack.c.b16 %v485, %v481
        %v494 = vpack.c.b16 %v486, %v482
        %v495 = vpack.c.b16 %v487, %v483
        %v496 = vpack.c.b16 %v488, %v484
        %v506 = vsel %vm378, %v456, 0
        %508 = vmatpush.bf16.msra.mxu0 0
        %509 = vmatpush.bf16.msra.mxu0 0
        %510 = vmatpush.bf16.msra.mxu0 0
        %511 = vmatpush.bf16.msra.mxu0 0
        %512 = vmatpush.bf16.msra.mxu0 0
        %513 = vmatpush.bf16.msra.mxu0 0
        %514 = vmatpush.bf16.msra.mxu0 %v493
        %515 = vmatpush.bf16.msra.mxu0 %v489
        %516 = vmatmul.bf16.gmra.mxu0 %v506
        %v517 = vpop.f32.mrf.mxu0
        %v518 = vadd.f32 0.0, %v517
        %v519 = vpop.f32.mrf.mxu0
        %v520 = vadd.f32 0.0, %v519
        %521 = vdwg.mxu0
        %522 = vmatpush.bf16.msra.mxu0 0
        %523 = vmatpush.bf16.msra.mxu0 0
        %524 = vmatpush.bf16.msra.mxu0 0
        %525 = vmatpush.bf16.msra.mxu0 0
        %526 = vmatpush.bf16.msra.mxu0 0
        %527 = vmatpush.bf16.msra.mxu0 0
        %528 = vmatpush.bf16.msra.mxu0 %v494
        %529 = vmatpush.bf16.msra.mxu0 %v490
        %530 = vmatmul.bf16.gmra.mxu0 %v506
        %v531 = vpop.f32.mrf.mxu0
        %v532 = vadd.f32 0.0, %v531
        %v533 = vpop.f32.mrf.mxu0
        %v534 = vadd.f32 0.0, %v533
        %535 = vdwg.mxu0
        %536 = vmatpush.bf16.msra.mxu0 0
        %537 = vmatpush.bf16.msra.mxu0 0
        %538 = vmatpush.bf16.msra.mxu0 0
        %539 = vmatpush.bf16.msra.mxu0 0
        %540 = vmatpush.bf16.msra.mxu0 0
        %541 = vmatpush.bf16.msra.mxu0 0
        %542 = vmatpush.bf16.msra.mxu0 %v495
        %543 = vmatpush.bf16.msra.mxu0 %v491
        %544 = vmatmul.bf16.gmra.mxu0 %v506
        %v545 = vpop.f32.mrf.mxu0
        %v546 = vadd.f32 0.0, %v545
        %v547 = vpop.f32.mrf.mxu0
        %v548 = vadd.f32 0.0, %v547
        %549 = vdwg.mxu0
        %550 = vmatpush.bf16.msra.mxu0 0
        %551 = vmatpush.bf16.msra.mxu0 0
        %552 = vmatpush.bf16.msra.mxu0 0
        %553 = vmatpush.bf16.msra.mxu0 0
        %554 = vmatpush.bf16.msra.mxu0 0
        %555 = vmatpush.bf16.msra.mxu0 0
        %556 = vmatpush.bf16.msra.mxu0 %v496
        %557 = vmatpush.bf16.msra.mxu0 %v492
        %558 = vmatmul.bf16.gmra.mxu0 %v506
        %v559 = vpop.f32.mrf.mxu0
        %v560 = vadd.f32 0.0, %v559
        %v561 = vpop.f32.mrf.mxu0
        %v562 = vadd.f32 0.0, %v561
        %563 = vdwg.mxu0
        %v564 = vadd.f32 %v448, %v518
        %v565 = vadd.f32 %v449, %v532
        %v566 = vadd.f32 %v450, %v546
        %v567 = vadd.f32 %v451, %v560
        %v568 = vadd.f32 %v452, %v520
        %v569 = vadd.f32 %v453, %v534
        %v570 = vadd.f32 %v454, %v548
        %v571 = vadd.f32 %v455, %v562
        %572 = vst [vmem:[#allocation2] sm:$0xff] %v564
        %573 = vst [vmem:[#allocation2 + $0x8] sm:$0xff] %v565
        %574 = vst [vmem:[#allocation2 + $0x10] sm:$0xff] %v566
        %575 = vst [vmem:[#allocation2 + $0x18] sm:$0xff] %v567
        %576 = vst [vmem:[#allocation2 + $0x20] sm:$0xff] %v568
        %577 = vst [vmem:[#allocation2 + $0x28] sm:$0xff] %v569
        %578 = vst [vmem:[#allocation2 + $0x30] sm:$0xff] %v570
        %579 = vst [vmem:[#allocation2 + $0x38] sm:$0xff] %v571
        // Predicated region
        $region68: #{transformer_forward.48} parent=58 // pred_check
          %p580 = pneg %p364
        $region69: #{transformer_forward.48} parent=58 // pred_check_branch
          %582 = sbr.rel (%p580) target = $region71
        $region70: #{transformer_forward.48} parent=58 // pred_region
          %v583 = vld [vmem:[#allocation2] sm:$0xff]
          %v584 = vld [vmem:[#allocation2 + $0x8] sm:$0xff]
          %v585 = vld [vmem:[#allocation2 + $0x10] sm:$0xff]
          %v586 = vld [vmem:[#allocation2 + $0x18] sm:$0xff]
          %v587 = vld [vmem:[#allocation2 + $0x20] sm:$0xff]
          %v588 = vld [vmem:[#allocation2 + $0x28] sm:$0xff]
          %v589 = vld [vmem:[#allocation2 + $0x30] sm:$0xff]
          %v590 = vld [vmem:[#allocation2 + $0x38] sm:$0xff]
          %v591 = vld [vmem:[%s353] sm:$0xf]
          %v593 = vperm.slane %v591, 0
          %v594 = vperm.slane %v591, 1
          %v595 = vperm.slane %v591, 2
          %v596 = vperm.slane %v591, 3
          %v601 = vadd.f32 %v583, %v593
          %v602 = vadd.f32 %v584, %v594
          %v603 = vadd.f32 %v585, %v595
          %v604 = vadd.f32 %v586, %v596
          %v605 = vadd.f32 %v587, %v593
          %v606 = vadd.f32 %v588, %v594
          %v607 = vadd.f32 %v589, %v595
          %v608 = vadd.f32 %v590, %v596
          %v609 = vmax.f32 %v601, 0.0
          %v610 = vmax.f32 %v602, 0.0
          %v611 = vmax.f32 %v603, 0.0
          %v612 = vmax.f32 %v604, 0.0
          %v613 = vmax.f32 %v605, 0.0
          %v614 = vmax.f32 %v606, 0.0
          %v615 = vmax.f32 %v607, 0.0
          %v616 = vmax.f32 %v608, 0.0
          %617 = vst [vmem:[%s338] sm:$0xff] %v609
          %618 = vst [vmem:[%s338 + $0x8] sm:$0xff] %v610
          %619 = vst [vmem:[%s338 + $0x10] sm:$0xff] %v611
          %620 = vst [vmem:[%s338 + $0x18] sm:$0xff] %v612
          %621 = vst [vmem:[%s338 + $0x20] sm:$0xff] %v613
          %622 = vst [vmem:[%s338 + $0x28] sm:$0xff] %v614
          %623 = vst [vmem:[%s338 + $0x30] sm:$0xff] %v615
          %624 = vst [vmem:[%s338 + $0x38] sm:$0xff] %v616
        $region71: #{transformer_forward.48} parent=58 // pred_fallthru
          _
        %s625 = sand.u32 %s179, 1
        %s626 = sand.u32 %s179, 1
        %s627 = smul.addr %s626, 64
        %s628 = scalar_lea.vmem [#allocation4], %s627
        // Predicated region
        $region72: #{transformer_forward.48} parent=58 // pred_check
          %p629 = pneg %p189
        $region73: #{transformer_forward.48} parent=58 // pred_check_branch
          %631 = sbr.rel (%p629) target = $region75
        $region74: #{transformer_forward.48} parent=58 // pred_region
          %s632 = smul.u32 2, %s21
          %s633 = smul.u32 4, %s22
          %s634 = smul.addr %s632, 16
          %s635 = sadd.s32 %s633, %s634
          %s636 = smul.addr %s635, 8
          %s637 = scalar_lea.vmem %s5, %s636
          // Predicated region
          $region76: #{transformer_forward.48} parent=74 // pred_check
            _
          $region77: #{transformer_forward.48} parent=74 // pred_check_branch
            %639 = sbr.rel (0) target = $region79
          $region78: #{transformer_forward.48} parent=74 // pred_region
            // Predicated region
            $region80: #{transformer_forward.48} parent=78 // pred_check
              _
            $region81: #{transformer_forward.48} parent=78 // pred_check_branch
              %641 = sbr.rel (0) target = $region83
            $region82: #{transformer_forward.48} parent=78 // pred_region
              loop: start=0, step=1, limit=1
              $region84: #{transformer_forward.48} parent=82 // loop_pre_header
                _
              $region85: #{transformer_forward.48} parent=82 // loop_header
                %s643 = sphi 0, %s647
                %p644 = scmp.ge.s32.totalorder %s643, 1
                %s648 = sphi %s628, %s628
                %s649 = sphi %s637, %s637
              $region86: #{transformer_forward.48} parent=82 // loop_header_branch
                %646 = sbr.rel (%p644) target = $region90
              $region87: #{transformer_forward.48} parent=82 // loop_body
                %v650 = vld [vmem:[%s648] sm:$0xff]
                %651 = vst [vmem:[%s649] sm:$0xff] %v650
                %v652 = vld [vmem:[%s648 + $0x8] sm:$0xff]
                %653 = vst [vmem:[%s649 + $0x8] sm:$0xff] %v652
                %v654 = vld [vmem:[%s648 + $0x10] sm:$0xff]
                %655 = vst [vmem:[%s649 + $0x10] sm:$0xff] %v654
                %v656 = vld [vmem:[%s648 + $0x18] sm:$0xff]
                %657 = vst [vmem:[%s649 + $0x18] sm:$0xff] %v656
                %v658 = vld [vmem:[%s648 + $0x20] sm:$0xff]
                %659 = vst [vmem:[%s649 + $0x80] sm:$0xff] %v658
                %v660 = vld [vmem:[%s648 + $0x28] sm:$0xff]
                %661 = vst [vmem:[%s649 + $0x88] sm:$0xff] %v660
                %v662 = vld [vmem:[%s648 + $0x30] sm:$0xff]
                %663 = vst [vmem:[%s649 + $0x90] sm:$0xff] %v662
                %v664 = vld [vmem:[%s648 + $0x38] sm:$0xff]
                %665 = vst [vmem:[%s649 + $0x98] sm:$0xff] %v664
              $region88: #{transformer_forward.48} parent=82 // loop_footer
                %s647 = sadd.s32 1, %s643
              $region89: #{transformer_forward.48} parent=82 // loop_footer_branch
                %642 = sbr.rel target = $region85
              $region90: #{transformer_forward.48} parent=82 // loop_exit
                _
            $region83: #{transformer_forward.48} parent=78 // pred_fallthru
              _
            // Predicated region
            $region91: #{transformer_forward.48} parent=78 // pred_check
              _
            $region92: #{transformer_forward.48} parent=78 // pred_check_branch
              %667 = sbr.rel target = $region94
            $region93: #{transformer_forward.48} parent=78 // pred_region
              _
            $region94: #{transformer_forward.48} parent=78 // pred_fallthru
              _
          $region79: #{transformer_forward.48} parent=74 // pred_fallthru
            _
          %668 = vnop
        $region75: #{transformer_forward.48} parent=58 // pred_fallthru
          _
      $region59: #{transformer_forward.48} parent=5 // pred_fallthru
        _
      %p669 = scmp.le.s32.totalorder 2, %s11
      // Predicated region
      $region95: #{transformer_forward.48} parent=5 // pred_check
        %p670 = pneg %p669
      $region96: #{transformer_forward.48} parent=5 // pred_check_branch
        %672 = sbr.rel (%p670) target = $region98
      $region97: #{transformer_forward.48} parent=5 // pred_region
        %s673 = ssub.s32 %s11, 2
        // Predicated region
        $region99: #{transformer_forward.48} parent=97 // pred_check
          %p674 = pneg %p195
        $region100: #{transformer_forward.48} parent=97 // pred_check_branch
          %676 = sbr.rel (%p674) target = $region102
        $region101: #{transformer_forward.48} parent=97 // pred_region
          %s677 = sand.u32 %s180, 1
          %s678 = sand.u32 %s180, 1
          %s679 = smul.addr %s678, 64
          %s680 = scalar_lea.vmem [#allocation4], %s679
        $region102: #{transformer_forward.48} parent=97 // pred_fallthru
          _
      $region98: #{transformer_forward.48} parent=5 // pred_fallthru
        _
    $region6: #{transformer_forward.48} parent=1 // loop_footer
      %s15 = sadd.s32 1, %s11
    $region7: #{transformer_forward.48} parent=1 // loop_footer_branch
      %10 = sbr.rel target = $region3
    $region8: #{transformer_forward.48} parent=1 // loop_exit
      _

// kernel: transformer_forward.59
$region0: #{transformer_forward.59}
  #allocation0 [shape = 'u32[]', space=smem, size = 0x4, offset = 0x4, fixed_abs, tag = 'smem constant byte address 0x4 - core index']
  #allocation1 [shape = 'u32[72,128]{1,0:T(1,128)}', space=vmem, size = 0x9000, scoped, tag = 'internal scratch']
  #allocation2 [shape = 'f32[16,41]{1,0:T(8,128)}', space=vmem, size = 0x2000, scoped, tag = 'scratch operand']
  %s0 = inlined_call_operand.vmem [shape: f32[16,32], index: 0, kind: input, shape index: {}]
  %s1 = inlined_call_operand.vmem [shape: bf16[32,41], index: 1, kind: input, shape index: {}]
  %s2 = inlined_call_operand.vmem [shape: f32[1,41], index: 2, kind: input, shape index: {}]
  %s3 = inlined_call_operand.vmem [shape: f32[1,32], index: 3, kind: input, shape index: {}]
  %s4 = inlined_call_operand.vmem [shape: f32[1,32], index: 4, kind: input, shape index: {}]
  %s5 = inlined_call_operand.hbm [shape: f32[16,41], index: 5, kind: output, shape index: {}]
  %s6 = sld [smem:[#allocation0]]
  $region38: #{transformer_forward.59} parent=0
    _
  %s8 = ssub.s32 1, %s6
  %s9 = scalar_select 0, %s8, %s6
  $region1: #{transformer_forward.59} parent=0
    #allocation3 [shape = 'u8[8192]{0}', space=vmem, size = 0x2000, scoped, tag = 'output window, operand 0, single buffered']
    #allocation4 [shape = 's32[1]{0}', space=sflag, size = 0x4, scoped, tag = 'scoped memory for transformer_forward.59']
    %10 = vsyncpa [#allocation4], 0
    // Predicated region
    $region2: #{transformer_forward.59} parent=1 // pred_check
      _
    $region3: #{transformer_forward.59} parent=1 // pred_check_branch
      %12 = sbr.rel (0) target = $region5
    $region4: #{transformer_forward.59} parent=1 // pred_region
      _
    $region5: #{transformer_forward.59} parent=1 // pred_fallthru
      _
    // Predicated region
    $region6: #{transformer_forward.59} parent=1 // pred_check
      _
    $region7: #{transformer_forward.59} parent=1 // pred_check_branch
      %14 = sbr.rel (0) target = $region9
    $region8: #{transformer_forward.59} parent=1 // pred_region
      _
    $region9: #{transformer_forward.59} parent=1 // pred_fallthru
      _
    // Predicated region
    $region10: #{transformer_forward.59} parent=1 // pred_check
      _
    $region11: #{transformer_forward.59} parent=1 // pred_check_branch
      %16 = sbr.rel (0) target = $region13
    $region12: #{transformer_forward.59} parent=1 // pred_region
      _
    $region13: #{transformer_forward.59} parent=1 // pred_fallthru
      _
    // Predicated region
    $region14: #{transformer_forward.59} parent=1 // pred_check
      _
    $region15: #{transformer_forward.59} parent=1 // pred_check_branch
      %18 = sbr.rel (0) target = $region17
    $region16: #{transformer_forward.59} parent=1 // pred_region
      _
    $region17: #{transformer_forward.59} parent=1 // pred_fallthru
      _
    // Predicated region
    $region18: #{transformer_forward.59} parent=1 // pred_check
      _
    $region19: #{transformer_forward.59} parent=1 // pred_check_branch
      %20 = sbr.rel (0) target = $region21
    $region20: #{transformer_forward.59} parent=1 // pred_region
      _
    $region21: #{transformer_forward.59} parent=1 // pred_fallthru
      _
    %p22 = scmp.eq.s32.totalorder 0, 0
    // Predicated region
    $region22: #{transformer_forward.59} parent=1 // pred_check
      %p23 = pneg %p22
    $region23: #{transformer_forward.59} parent=1 // pred_check_branch
      %25 = sbr.rel (%p23) target = $region25
    $region24: #{transformer_forward.59} parent=1 // pred_region
      %vm26 = vcmask 334848
      %27 = vst.msk [vmem:[#allocation2] sm:$0xff] %vm26, 0.0
      %28 = vst.msk [vmem:[#allocation2 + $0x8] sm:$0xff] %vm26, 0.0
    $region25: #{transformer_forward.59} parent=1 // pred_fallthru
      _
    %v29 = vld [vmem:[%s0] sm:$0xff]
    %v30 = vld [vmem:[%s0 + $0x8] sm:$0xff]
    %vm31 = vcmask 261120
    %v32 = vsel %vm31, %v29, 0.0
    %33 = vadd.xlane.f32.xlu0 %v32
    %v34 = vpop.xlane.xlu0 %33
    %v35 = vsel %vm31, %v30, 0.0
    %36 = vadd.xlane.f32.xlu0 %v35
    %v37 = vpop.xlane.xlu0 %36
    %v38 = vrcp.pop 32.0
    %v39 = vmul.f32 32.0, %v38
    %v40 = vsub.f32 1.0, %v39
    %v41 = vmul.f32 %v38, %v40
    %v42 = vadd.f32 %v38, %v41
    %vm43 = vweird.f32 %v38
    %v44 = vsel %vm43, %v38, %v42
    %v45 = vmul.f32 %v34, %v44
    %v46 = vmul.f32 %v37, %v44
    %v47 = vsub.f32 %v29, %v45
    %v48 = vsub.f32 %v30, %v46
    %v49 = vmul.f32 %v47, %v47
    %v50 = vmul.f32 %v48, %v48
    %v51 = vsel %vm31, %v49, 0.0
    %52 = vadd.xlane.f32.xlu0 %v51
    %v53 = vpop.xlane.xlu0 %52
    %v54 = vsel %vm31, %v50, 0.0
    %55 = vadd.xlane.f32.xlu0 %v54
    %v56 = vpop.xlane.xlu0 %55
    %v57 = vmul.f32 %v53, 0.032258064
    %v58 = vmul.f32 %v56, 0.032258064
    %v59 = vrsqrt.pop %v57
    %v60 = vmul.f32 %v59, %v57
    %v61 = vmul.f32 %v60, %v59
    %v62 = vmul.f32 0.5, %v61
    %v63 = vsub.f32 1.5, %v62
    %v64 = vmul.f32 %v59, %v63
    %v65 = vmul.f32 %v57, %v64
    %vm66 = vcmp.eq.f32.partialorder %v57, inf
    %v67 = vsel %vm66, %v57, %v65
    %vm68 = vcmp.eq.f32.partialorder %v57, 0.0
    %v69 = vand.u32 %v57, 2147483648
    %v70 = vsel %vm68, %v69, %v67
    %v71 = vrsqrt.pop %v58
    %v72 = vmul.f32 %v71, %v58
    %v73 = vmul.f32 %v72, %v71
    %v74 = vmul.f32 0.5, %v73
    %v75 = vsub.f32 1.5, %v74
    %v76 = vmul.f32 %v71, %v75
    %v77 = vmul.f32 %v58, %v76
    %vm78 = vcmp.eq.f32.partialorder %v58, inf
    %v79 = vsel %vm78, %v58, %v77
    %vm80 = vcmp.eq.f32.partialorder %v58, 0.0
    %v81 = vand.u32 %v58, 2147483648
    %v82 = vsel %vm80, %v81, %v79
    %v83 = vadd.f32 %v70, 1e-06
    %v84 = vadd.f32 %v82, 1e-06
    %v85 = vrcp.pop %v83
    %v86 = vrcp.pop %v84
    %v87 = vld [vmem:[%s3] sm:$0x1]
    %v89 = vperm.slane %v87, 0
    %v91 = vmul.f32 %v89, %v47
    %v92 = vmul.f32 %v89, %v48
    %v93 = vmul.f32 %v91, %v85
    %v94 = vmul.f32 %v92, %v86
    %v95 = vld [vmem:[%s4] sm:$0x1]
    %v97 = vperm.slane %v95, 0
    %v99 = vadd.f32 %v93, %v97
    %v100 = vadd.f32 %v94, %v97
    %v101 = vld [vmem:[#allocation2] sm:$0xff]
    %v102 = vld [vmem:[#allocation2 + $0x8] sm:$0xff]
    %v103 = vpack.c.bf16 %v100, %v99
    %v104 = vld [vmem:[%s1] sm:$0xf]
    %v105 = vld [vmem:[%s1 + $0x4] sm:$0xf]
    %v106 = vld [vmem:[%s1 + $0x8] sm:$0xf]
    %v107 = vld [vmem:[%s1 + $0xc] sm:$0xf]
    %v112 = vunpack.c.l.b16 %v104
    %v113 = vunpack.c.l.b16 %v105
    %v114 = vunpack.c.l.b16 %v106
    %v115 = vunpack.c.l.b16 %v107
    %v116 = vpack.c.b16 %v113, %v112
    %v117 = vpack.c.b16 %v115, %v114
    %v121 = vsel %vm31, %v103, 0
    %123 = vmatpush.bf16.msra.mxu0 0
    %124 = vmatpush.bf16.msra.mxu0 0
    %125 = vmatpush.bf16.msra.mxu0 0
    %126 = vmatpush.bf16.msra.mxu0 0
    %127 = vmatpush.bf16.msra.mxu0 0
    %128 = vmatpush.bf16.msra.mxu0 0
    %129 = vmatpush.bf16.msra.mxu0 %v117
    %130 = vmatpush.bf16.msra.mxu0 %v116
    %131 = vmatmul.bf16.gmra.mxu0 %v121
    %v132 = vpop.f32.mrf.mxu0
    %v133 = vadd.f32 0.0, %v132
    %v134 = vpop.f32.mrf.mxu0
    %v135 = vadd.f32 0.0, %v134
    %136 = vdwg.mxu0
    %v137 = vadd.f32 %v101, %v133
    %v138 = vadd.f32 %v102, %v135
    %vm139 = vcmask 334848
    %140 = vst.msk [vmem:[#allocation2] sm:$0xff] %vm139, %v137
    %141 = vst.msk [vmem:[#allocation2 + $0x8] sm:$0xff] %vm139, %v138
    // Predicated region
    $region26: #{transformer_forward.59} parent=1 // pred_check
      %p142 = pneg %p22
    $region27: #{transformer_forward.59} parent=1 // pred_check_branch
      %144 = sbr.rel (%p142) target = $region29
    $region28: #{transformer_forward.59} parent=1 // pred_region
      %v145 = vld [vmem:[#allocation2] sm:$0xff]
      %v146 = vld [vmem:[#allocation2 + $0x8] sm:$0xff]
      %v147 = vld [vmem:[%s2] sm:$0x1]
      %v149 = vperm.slane %v147, 0
      %v151 = vadd.f32 %v145, %v149
      %v152 = vadd.f32 %v146, %v149
      %153 = vst.msk [vmem:[#allocation3] sm:$0xff] %vm139, %v151
      %154 = vst.msk [vmem:[#allocation3 + $0x8] sm:$0xff] %vm139, %v152
    $region29: #{transformer_forward.59} parent=1 // pred_fallthru
      _
    // Predicated region
    $region30: #{transformer_forward.59} parent=1 // pred_check
      _
    $region31: #{transformer_forward.59} parent=1 // pred_check_branch
      %156 = sbr.rel (0) target = $region33
    $region32: #{transformer_forward.59} parent=1 // pred_region
      %158 = vsyncadd [#allocation4], 0
      %s159 = sshll.u32 [#allocation3], 4
      %s160 = int_to_ptr.vmem [resolvable:$true] %s159
      %s161 = sshll.u32 %s5, 4
      %s162 = int_to_ptr.hbm [resolvable:$true] %s161
      %167 = dma.vmem_to_hbm [thread:$0]  %s160, 256, %s162, [#allocation4], 128, 128, 8
    $region33: #{transformer_forward.59} parent=1 // pred_fallthru
      _
    // Predicated region
    $region34: #{transformer_forward.59} parent=1 // pred_check
      _
    $region35: #{transformer_forward.59} parent=1 // pred_check_branch
      %169 = sbr.rel (0) target = $region37
    $region36: #{transformer_forward.59} parent=1 // pred_region
      %171 = dma.done [#allocation4], 256
    $region37: #{transformer_forward.59} parent=1 // pred_fallthru
      _
    %172 = vsyncpa [#allocation4], 1

// kernel: transformer_forward.49
$region0: #{transformer_forward.49}
  #allocation0 [shape = 'u32[]', space=smem, size = 0x4, offset = 0x4, fixed_abs, tag = 'smem constant byte address 0x4 - core index']
  #allocation1 [shape = 'u32[72,128]{1,0:T(1,128)}', space=vmem, size = 0x9000, scoped, tag = 'internal scratch']
  #allocation2 [shape = 'f32[16,32]{1,0:T(8,128)}', space=vmem, size = 0x2000, scoped, tag = 'scratch operand']
  %s0 = inlined_call_operand.vmem [shape: f32[16,2048], index: 0, kind: input, shape index: {}]
  %s1 = inlined_call_operand.vmem [shape: bf16[2048,32], index: 1, kind: input, shape index: {}]
  %s2 = inlined_call_operand.vmem [shape: f32[1,32], index: 2, kind: input, shape index: {}]
  %s3 = inlined_call_operand.vmem [shape: f32[16,32], index: 3, kind: input, shape index: {}]
  %s4 = inlined_call_operand.vmem [shape: f32[16,32], index: 4, kind: output, shape index: {}]
  %s5 = sld [smem:[#allocation0]]
  $region80: #{transformer_forward.49} parent=0
    _
  %s7 = ssub.s32 1, %s5
  %s8 = scalar_select 0, %s7, %s5
  $region1: #{transformer_forward.49} parent=0
    #allocation3 [shape = 'u8[65536]{0}', space=vmem, size = 0x10000, scoped, tag = 'input window, operand 0']
    loop: start=0, step=1, limit=6
    $region2: #{transformer_forward.49} parent=1 // loop_pre_header
      _
    $region3: #{transformer_forward.49} parent=1 // loop_header
      %s10 = sphi 0, %s14
      %p11 = scmp.ge.s32.totalorder %s10, 6
      %s17 = sphi 0, %s36
      %s18 = sphi 0, %s32
      %s19 = sphi 0, %s28
      %s20 = sphi 0, %s17
      %s21 = sphi 0, %s18
      %s22 = sphi 0, %s19
      %s23 = sphi 0, %s20
      %s24 = sphi 0, %s21
      %s25 = sphi 0, %s22
      %s41 = sphi 0, %s43
      %s44 = sphi 0, %s41
      %s45 = sphi 0, %s44
      %s61 = sphi 0, %s45
      %s69 = sphi 0, %s71
      %s72 = sphi 0, %s69
      %s73 = sphi 0, %s72
      %s89 = sphi 0, %s73
      %s95 = sphi 0, %s97
      %s98 = sphi 0, %s95
      %s99 = sphi 0, %s98
      %s115 = sphi 0, %s99
      %s123 = sphi 0, %s125
      %s126 = sphi 0, %s123
      %s127 = sphi 0, %s126
      %s143 = sphi 0, %s127
      %s151 = sphi 0, %s153
      %s154 = sphi 0, %s151
      %s155 = sphi 0, %s154
      %s171 = sphi 0, %s155
    $region4: #{transformer_forward.49} parent=1 // loop_header_branch
      %13 = sbr.rel (%p11) target = $region8
    $region5: #{transformer_forward.49} parent=1 // loop_body
      %s15 = ssub.s32 %s10, 1
      %s16 = ssub.s32 %s10, 2
      %s26 = sadd.s32 1, %s19
      %p27 = scmp.ge.s32.totalorder %s26, 4
      %s28 = scalar_select %p27, 0, %s26
      %s29 = sadd.s32 1, %s18
      %s30 = scalar_select %p27, %s29, %s18
      %p31 = scmp.ge.s32.totalorder %s30, 1
      %s32 = scalar_select %p31, 0, %s30
      %s33 = sadd.s32 1, %s17
      %s34 = scalar_select %p31, %s33, %s17
      %p35 = scmp.ge.s32.totalorder %s34, 1
      %s36 = scalar_select %p35, 0, %s34
      %s37 = ssub.s32 %s17, %s36
      %s38 = ssub.s32 %s19, %s28
      %s39 = sor.u32 %s37, %s38
      %p40 = scmp.eq.s32.totalorder %s39, 0
      %s42 = sadd.s32 %s41, 1
      %s43 = scalar_select %p40, %s41, %s42
      %p46 = pneg %p40
      %p47 = scmp.eq.s32.totalorder %s10, 3
      %p48 = por %p46, %p47
      %p49 = scmp.ne.s32.totalorder %s41, %s44
      %p50 = scmp.eq.s32.totalorder %s10, 0
      %p51 = por %p49, %p50
      %p52 = scmp.ne.s32.totalorder %s41, %s44
      %p53 = scmp.eq.s32.totalorder %s15, 3
      %p54 = por %p52, %p53
      %p55 = scmp.ne.s32.totalorder %s44, %s45
      %p56 = scmp.eq.s32.totalorder %s15, 0
      %p57 = por %p55, %p56
      %p58 = scmp.ne.s32.totalorder %s44, %s45
      %p59 = scmp.eq.s32.totalorder %s16, 3
      %p60 = por %p58, %p59
      %p62 = scmp.ne.s32.totalorder %s45, %s61
      %p63 = scmp.eq.s32.totalorder %s16, 0
      %p64 = por %p62, %p63
      %s65 = ssub.s32 %s19, %s28
      %s66 = ssub.s32 %s18, %s32
      %s67 = sor.u32 %s65, %s66
      %p68 = scmp.eq.s32.totalorder %s67, 0
      %s70 = sadd.s32 %s69, 1
      %s71 = scalar_select %p68, %s69, %s70
      %p74 = pneg %p68
      %p75 = scmp.eq.s32.totalorder %s10, 3
      %p76 = por %p74, %p75
      %p77 = scmp.ne.s32.totalorder %s69, %s72
      %p78 = scmp.eq.s32.totalorder %s10, 0
      %p79 = por %p77, %p78
      %p80 = scmp.ne.s32.totalorder %s69, %s72
      %p81 = scmp.eq.s32.totalorder %s15, 3
      %p82 = por %p80, %p81
      %p83 = scmp.ne.s32.totalorder %s72, %s73
      %p84 = scmp.eq.s32.totalorder %s15, 0
      %p85 = por %p83, %p84
      %p86 = scmp.ne.s32.totalorder %s72, %s73
      %p87 = scmp.eq.s32.totalorder %s16, 3
      %p88 = por %p86, %p87
      %p90 = scmp.ne.s32.totalorder %s73, %s89
      %p91 = scmp.eq.s32.totalorder %s16, 0
      %p92 = por %p90, %p91
      %s93 = ssub.s32 %s18, %s32
      %p94 = scmp.eq.s32.totalorder %s93, 0
      %s96 = sadd.s32 %s95, 1
      %s97 = scalar_select %p94, %s95, %s96
      %p100 = pneg %p94
      %p101 = scmp.eq.s32.totalorder %s10, 3
      %p102 = por %p100, %p101
      %p103 = scmp.ne.s32.totalorder %s95, %s98
      %p104 = scmp.eq.s32.totalorder %s10, 0
      %p105 = por %p103, %p104
      %p106 = scmp.ne.s32.totalorder %s95, %s98
      %p107 = scmp.eq.s32.totalorder %s15, 3
      %p108 = por %p106, %p107
      %p109 = scmp.ne.s32.totalorder %s98, %s99
      %p110 = scmp.eq.s32.totalorder %s15, 0
      %p111 = por %p109, %p110
      %p112 = scmp.ne.s32.totalorder %s98, %s99
      %p113 = scmp.eq.s32.totalorder %s16, 3
      %p114 = por %p112, %p113
      %p116 = scmp.ne.s32.totalorder %s99, %s115
      %p117 = scmp.eq.s32.totalorder %s16, 0
      %p118 = por %p116, %p117
      %s119 = ssub.s32 %s17, %s36
      %s120 = ssub.s32 %s18, %s32
      %s121 = sor.u32 %s119, %s120
      %p122 = scmp.eq.s32.totalorder %s121, 0
      %s124 = sadd.s32 %s123, 1
      %s125 = scalar_select %p122, %s123, %s124
      %p128 = pneg %p122
      %p129 = scmp.eq.s32.totalorder %s10, 3
      %p130 = por %p128, %p129
      %p131 = scmp.ne.s32.totalorder %s123, %s126
      %p132 = scmp.eq.s32.totalorder %s10, 0
      %p133 = por %p131, %p132
      %p134 = scmp.ne.s32.totalorder %s123, %s126
      %p135 = scmp.eq.s32.totalorder %s15, 3
      %p136 = por %p134, %p135
      %p137 = scmp.ne.s32.totalorder %s126, %s127
      %p138 = scmp.eq.s32.totalorder %s15, 0
      %p139 = por %p137, %p138
      %p140 = scmp.ne.s32.totalorder %s126, %s127
      %p141 = scmp.eq.s32.totalorder %s16, 3
      %p142 = por %p140, %p141
      %p144 = scmp.ne.s32.totalorder %s127, %s143
      %p145 = scmp.eq.s32.totalorder %s16, 0
      %p146 = por %p144, %p145
      %s147 = ssub.s32 %s17, %s36
      %s148 = ssub.s32 %s18, %s32
      %s149 = sor.u32 %s147, %s148
      %p150 = scmp.eq.s32.totalorder %s149, 0
      %s152 = sadd.s32 %s151, 1
      %s153 = scalar_select %p150, %s151, %s152
      %p156 = pneg %p150
      %p157 = scmp.eq.s32.totalorder %s10, 3
      %p158 = por %p156, %p157
      %p159 = scmp.ne.s32.totalorder %s151, %s154
      %p160 = scmp.eq.s32.totalorder %s10, 0
      %p161 = por %p159, %p160
      %p162 = scmp.ne.s32.totalorder %s151, %s154
      %p163 = scmp.eq.s32.totalorder %s15, 3
      %p164 = por %p162, %p163
      %p165 = scmp.ne.s32.totalorder %s154, %s155
      %p166 = scmp.eq.s32.totalorder %s15, 0
      %p167 = por %p165, %p166
      %p168 = scmp.ne.s32.totalorder %s154, %s155
      %p169 = scmp.eq.s32.totalorder %s16, 3
      %p170 = por %p168, %p169
      %p172 = scmp.ne.s32.totalorder %s155, %s171
      %p173 = scmp.eq.s32.totalorder %s16, 0
      %p174 = por %p172, %p173
      %p175 = scmp.le.s32.totalorder 1, %s10
      %p176 = scmp.lt.s32.totalorder %s10, 5
      %p177 = pnand %p175, %p176
      %p178 = pneg %p177
      // Predicated region
      $region9: #{transformer_forward.49} parent=5 // pred_check
        _
      $region10: #{transformer_forward.49} parent=5 // pred_check_branch
        %180 = sbr.rel (%p177) target = $region12
      $region11: #{transformer_forward.49} parent=5 // pred_region
        %s181 = ssub.s32 %s10, 1
        // Predicated region
        $region13: #{transformer_forward.49} parent=11 // pred_check
          %p182 = pneg %p111
        $region14: #{transformer_forward.49} parent=11 // pred_check_branch
          %184 = sbr.rel (%p182) target = $region16
        $region15: #{transformer_forward.49} parent=11 // pred_region
          %p185 = scmp.lt.s32.totalorder %s21, 0
          %s186 = scalar_select %p185, %s21, 0
          %s187 = scalar_lea.vmem %s2, %s186
        $region16: #{transformer_forward.49} parent=11 // pred_fallthru
          _
        // Predicated region
        $region17: #{transformer_forward.49} parent=11 // pred_check
          %p188 = pneg %p139
        $region18: #{transformer_forward.49} parent=11 // pred_check_branch
          %190 = sbr.rel (%p188) target = $region20
        $region19: #{transformer_forward.49} parent=11 // pred_region
          %s191 = smul.u32 2, %s20
          %p192 = scmp.lt.s32.totalorder %s191, 1
          %s193 = scalar_select %p192, %s191, 1
          %p194 = scmp.lt.s32.totalorder %s21, 0
          %s195 = scalar_select %p194, %s21, 0
          %s196 = sadd.s32 %s195, %s193
          %s197 = smul.addr %s196, 8
          %s198 = scalar_lea.vmem %s3, %s197
          %s199 = smul.u32 2, %s20
        $region20: #{transformer_forward.49} parent=11 // pred_fallthru
          _
      $region12: #{transformer_forward.49} parent=5 // pred_fallthru
        _
      %p200 = scmp.lt.s32.totalorder %s10, 4
      // Predicated region
      $region21: #{transformer_forward.49} parent=5 // pred_check
        %p201 = pneg %p200
      $region22: #{transformer_forward.49} parent=5 // pred_check_branch
        %203 = sbr.rel (%p201) target = $region24
      $region23: #{transformer_forward.49} parent=5 // pred_region
        // Predicated region
        $region25: #{transformer_forward.49} parent=23 // pred_check
          %p204 = pneg %p51
        $region26: #{transformer_forward.49} parent=23 // pred_check_branch
          %206 = sbr.rel (%p204) target = $region28
        $region27: #{transformer_forward.49} parent=23 // pred_region
          %s207 = sand.u32 %s41, 1
          %s208 = sand.u32 %s41, 1
          %s209 = smul.addr %s208, 64
          %s210 = scalar_lea.vmem [#allocation3], %s209
          %s211 = smul.u32 2, %s17
          %s212 = smul.u32 4, %s19
          %s213 = smul.addr %s211, 16
          %s214 = sadd.s32 %s212, %s213
          %s215 = smul.addr %s214, 8
          %s216 = scalar_lea.vmem %s0, %s215
          // Predicated region
          $region29: #{transformer_forward.49} parent=27 // pred_check
            _
          $region30: #{transformer_forward.49} parent=27 // pred_check_branch
            %218 = sbr.rel (0) target = $region32
          $region31: #{transformer_forward.49} parent=27 // pred_region
            // Predicated region
            $region33: #{transformer_forward.49} parent=31 // pred_check
              _
            $region34: #{transformer_forward.49} parent=31 // pred_check_branch
              %220 = sbr.rel (0) target = $region36
            $region35: #{transformer_forward.49} parent=31 // pred_region
              loop: start=0, step=1, limit=1
              $region37: #{transformer_forward.49} parent=35 // loop_pre_header
                _
              $region38: #{transformer_forward.49} parent=35 // loop_header
                %s222 = sphi 0, %s226
                %p223 = scmp.ge.s32.totalorder %s222, 1
                %s227 = sphi %s216, %s216
                %s228 = sphi %s210, %s210
              $region39: #{transformer_forward.49} parent=35 // loop_header_branch
                %225 = sbr.rel (%p223) target = $region43
              $region40: #{transformer_forward.49} parent=35 // loop_body
                %v229 = vld [vmem:[%s227] sm:$0xff]
                %230 = vst [vmem:[%s228] sm:$0xff] %v229
                %v231 = vld [vmem:[%s227 + $0x8] sm:$0xff]
                %232 = vst [vmem:[%s228 + $0x8] sm:$0xff] %v231
                %v233 = vld [vmem:[%s227 + $0x10] sm:$0xff]
                %234 = vst [vmem:[%s228 + $0x10] sm:$0xff] %v233
                %v235 = vld [vmem:[%s227 + $0x18] sm:$0xff]
                %236 = vst [vmem:[%s228 + $0x18] sm:$0xff] %v235
                %v237 = vld [vmem:[%s227 + $0x80] sm:$0xff]
                %238 = vst [vmem:[%s228 + $0x20] sm:$0xff] %v237
                %v239 = vld [vmem:[%s227 + $0x88] sm:$0xff]
                %240 = vst [vmem:[%s228 + $0x28] sm:$0xff] %v239
                %v241 = vld [vmem:[%s227 + $0x90] sm:$0xff]
                %242 = vst [vmem:[%s228 + $0x30] sm:$0xff] %v241
                %v243 = vld [vmem:[%s227 + $0x98] sm:$0xff]
                %244 = vst [vmem:[%s228 + $0x38] sm:$0xff] %v243
              $region41: #{transformer_forward.49} parent=35 // loop_footer
                %s226 = sadd.s32 1, %s222
              $region42: #{transformer_forward.49} parent=35 // loop_footer_branch
                %221 = sbr.rel target = $region38
              $region43: #{transformer_forward.49} parent=35 // loop_exit
                _
            $region36: #{transformer_forward.49} parent=31 // pred_fallthru
              _
            // Predicated region
            $region44: #{transformer_forward.49} parent=31 // pred_check
              _
            $region45: #{transformer_forward.49} parent=31 // pred_check_branch
              %246 = sbr.rel target = $region47
            $region46: #{transformer_forward.49} parent=31 // pred_region
              _
            $region47: #{transformer_forward.49} parent=31 // pred_fallthru
              _
          $region32: #{transformer_forward.49} parent=27 // pred_fallthru
            _
          %247 = vnop
        $region28: #{transformer_forward.49} parent=23 // pred_fallthru
          _
        // Predicated region
        $region48: #{transformer_forward.49} parent=23 // pred_check
          %p248 = pneg %p79
        $region49: #{transformer_forward.49} parent=23 // pred_check_branch
          %250 = sbr.rel (%p248) target = $region51
        $region50: #{transformer_forward.49} parent=23 // pred_region
          %s251 = smul.u32 64, %s19
          %p252 = scmp.lt.s32.totalorder %s251, 255
          %s253 = scalar_select %p252, %s251, 255
          %p254 = scmp.lt.s32.totalorder %s18, 0
          %s255 = scalar_select %p254, %s18, 0
          %s256 = sadd.s32 %s255, %s253
          %s257 = smul.addr %s256, 4
          %s258 = scalar_lea.vmem %s1, %s257
          %s259 = smul.u32 64, %s19
        $region51: #{transformer_forward.49} parent=23 // pred_fallthru
          _
      $region24: #{transformer_forward.49} parent=5 // pred_fallthru
        _
      %p260 = scmp.le.s32.totalorder 1, %s10
      %p261 = scmp.lt.s32.totalorder %s10, 5
      %p262 = pnand %p260, %p261
      %p263 = pneg %p262
      // Predicated region
      $region52: #{transformer_forward.49} parent=5 // pred_check
        _
      $region53: #{transformer_forward.49} parent=5 // pred_check_branch
        %265 = sbr.rel (%p262) target = $region55
      $region54: #{transformer_forward.49} parent=5 // pred_region
        %s266 = ssub.s32 %s10, 1
        %s267 = sand.u32 %s44, 1
        %s268 = sand.u32 %s44, 1
        %s269 = smul.addr %s268, 64
        %s270 = scalar_lea.vmem [#allocation3], %s269
        // Predicated region
        $region56: #{transformer_forward.49} parent=54 // pred_check
          %p271 = pneg %p57
        $region57: #{transformer_forward.49} parent=54 // pred_check_branch
          %273 = sbr.rel (%p271) target = $region59
        $region58: #{transformer_forward.49} parent=54 // pred_region
          _
        $region59: #{transformer_forward.49} parent=54 // pred_fallthru
          _
        %s274 = sand.u32 %s44, 1
        %s275 = sand.u32 %s44, 1
        %s276 = smul.addr %s275, 64
        %s277 = scalar_lea.vmem [#allocation3], %s276
        %p278 = pneg %p57
        %p279 = pneg %p54
        %s280 = smul.u32 64, %s22
        %p281 = scmp.lt.s32.totalorder %s280, 255
        %s282 = scalar_select %p281, %s280, 255
        %p283 = scmp.lt.s32.totalorder %s21, 0
        %s284 = scalar_select %p283, %s21, 0
        %s285 = sadd.s32 %s284, %s282
        %s286 = smul.addr %s285, 4
        %s287 = scalar_lea.vmem %s1, %s286
        %p288 = pneg %p85
        %p289 = pneg %p82
        %p290 = scmp.lt.s32.totalorder %s21, 0
        %s291 = scalar_select %p290, %s21, 0
        %s292 = scalar_lea.vmem %s2, %s291
        %p293 = pneg %p111
        %p294 = pneg %p108
        %s295 = smul.u32 2, %s20
        %p296 = scmp.lt.s32.totalorder %s295, 1
        %s297 = scalar_select %p296, %s295, 1
        %p298 = scmp.lt.s32.totalorder %s21, 0
        %s299 = scalar_select %p298, %s21, 0
        %s300 = sadd.s32 %s299, %s297
        %s301 = smul.addr %s300, 8
        %s302 = scalar_lea.vmem %s3, %s301
        %p303 = pneg %p139
        %p304 = pneg %p136
        %p305 = pneg %p167
        %p306 = pneg %p164
        %s307 = smul.u32 2, %s20
        %p308 = scmp.lt.s32.totalorder %s307, 1
        %s309 = scalar_select %p308, %s307, 1
        %p310 = scmp.lt.s32.totalorder %s21, 0
        %s311 = scalar_select %p310, %s21, 0
        %s312 = sadd.s32 %s311, %s309
        %s313 = smul.addr %s312, 8
        %s314 = scalar_lea.vmem %s4, %s313
        %s315 = smul.u32 2, %s20
        %s316 = smul.u32 4, %s22
        %s317 = smul.u32 64, %s22
        %p318 = scmp.lt.s32.totalorder %s317, 255
        %s319 = scalar_select %p318, %s317, 255
        %p320 = scmp.lt.s32.totalorder %s21, 0
        %s321 = scalar_select %p320, %s21, 0
        %s322 = sadd.s32 %s321, %s319
        %s323 = smul.addr %s322, 4
        %s324 = scalar_lea.vmem %s1, %s323
        %s325 = smul.u32 64, %s22
        %p326 = scmp.lt.s32.totalorder %s21, 0
        %s327 = scalar_select %p326, %s21, 0
        %s328 = scalar_lea.vmem %s2, %s327
        %s329 = smul.u32 2, %s20
        %p330 = scmp.lt.s32.totalorder %s329, 1
        %s331 = scalar_select %p330, %s329, 1
        %p332 = scmp.lt.s32.totalorder %s21, 0
        %s333 = scalar_select %p332, %s21, 0
        %s334 = sadd.s32 %s333, %s331
        %s335 = smul.addr %s334, 8
        %s336 = scalar_lea.vmem %s3, %s335
        %s337 = smul.u32 2, %s20
        %s338 = smul.u32 2, %s20
        %p339 = scmp.lt.s32.totalorder %s338, 1
        %s340 = scalar_select %p339, %s338, 1
        %p341 = scmp.lt.s32.totalorder %s21, 0
        %s342 = scalar_select %p341, %s21, 0
        %s343 = sadd.s32 %s342, %s340
        %s344 = smul.addr %s343, 8
        %s345 = scalar_lea.vmem %s4, %s344
        %s346 = smul.u32 2, %s20
        %p347 = scmp.eq.s32.totalorder %s22, 0
        // Predicated region
        $region60: #{transformer_forward.49} parent=54 // pred_check
          %p348 = pneg %p347
        $region61: #{transformer_forward.49} parent=54 // pred_check_branch
          %350 = sbr.rel (%p348) target = $region63
        $region62: #{transformer_forward.49} parent=54 // pred_region
          %vm351 = vcmask 261120
          %352 = vst.msk [vmem:[#allocation2] sm:$0xff] %vm351, 0.0
          %353 = vst.msk [vmem:[#allocation2 + $0x8] sm:$0xff] %vm351, 0.0
        $region63: #{transformer_forward.49} parent=54 // pred_fallthru
          _
        %v354 = vld [vmem:[%s270] sm:$0xff]
        %v355 = vld [vmem:[%s270 + $0x8] sm:$0xff]
        %v356 = vld [vmem:[%s270 + $0x10] sm:$0xff]
        %v357 = vld [vmem:[%s270 + $0x18] sm:$0xff]
        %v358 = vld [vmem:[%s270 + $0x20] sm:$0xff]
        %v359 = vld [vmem:[%s270 + $0x28] sm:$0xff]
        %v360 = vld [vmem:[%s270 + $0x30] sm:$0xff]
        %v361 = vld [vmem:[%s270 + $0x38] sm:$0xff]
        %v362 = vld [vmem:[#allocation2] sm:$0xff]
        %v363 = vld [vmem:[#allocation2 + $0x8] sm:$0xff]
        %v364 = vpack.c.bf16 %v358, %v354
        %v365 = vpack.c.bf16 %v359, %v355
        %v366 = vpack.c.bf16 %v360, %v356
        %v367 = vpack.c.bf16 %v361, %v357
        %v368 = vld [vmem:[%s324] sm:$0xf]
        %v369 = vld [vmem:[%s324 + $0x4] sm:$0xf]
        %v370 = vld [vmem:[%s324 + $0x8] sm:$0xf]
        %v371 = vld [vmem:[%s324 + $0xc] sm:$0xf]
        %v372 = vld [vmem:[%s324 + $0x10] sm:$0xf]
        %v373 = vld [vmem:[%s324 + $0x14] sm:$0xf]
        %v374 = vld [vmem:[%s324 + $0x18] sm:$0xf]
        %v375 = vld [vmem:[%s324 + $0x1c] sm:$0xf]
        %v376 = vld [vmem:[%s324 + $0x20] sm:$0xf]
        %v377 = vld [vmem:[%s324 + $0x24] sm:$0xf]
        %v378 = vld [vmem:[%s324 + $0x28] sm:$0xf]
        %v379 = vld [vmem:[%s324 + $0x2c] sm:$0xf]
        %v380 = vld [vmem:[%s324 + $0x30] sm:$0xf]
        %v381 = vld [vmem:[%s324 + $0x34] sm:$0xf]
        %v382 = vld [vmem:[%s324 + $0x38] sm:$0xf]
        %v383 = vld [vmem:[%s324 + $0x3c] sm:$0xf]
        %v384 = vld [vmem:[%s324 + $0x40] sm:$0xf]
        %v385 = vld [vmem:[%s324 + $0x44] sm:$0xf]
        %v386 = vld [vmem:[%s324 + $0x48] sm:$0xf]
        %v387 = vld [vmem:[%s324 + $0x4c] sm:$0xf]
        %v388 = vld [vmem:[%s324 + $0x50] sm:$0xf]
        %v389 = vld [vmem:[%s324 + $0x54] sm:$0xf]
        %v390 = vld [vmem:[%s324 + $0x58] sm:$0xf]
        %v391 = vld [vmem:[%s324 + $0x5c] sm:$0xf]
        %v392 = vld [vmem:[%s324 + $0x60] sm:$0xf]
        %v393 = vld [vmem:[%s324 + $0x64] sm:$0xf]
        %v394 = vld [vmem:[%s324 + $0x68] sm:$0xf]
        %v395 = vld [vmem:[%s324 + $0x6c] sm:$0xf]
        %v396 = vld [vmem:[%s324 + $0x70] sm:$0xf]
        %v397 = vld [vmem:[%s324 + $0x74] sm:$0xf]
        %v398 = vld [vmem:[%s324 + $0x78] sm:$0xf]
        %v399 = vld [vmem:[%s324 + $0x7c] sm:$0xf]
        %v400 = vld [vmem:[%s324 + $0x80] sm:$0xf]
        %v401 = vld [vmem:[%s324 + $0x84] sm:$0xf]
        %v402 = vld [vmem:[%s324 + $0x88] sm:$0xf]
        %v403 = vld [vmem:[%s324 + $0x8c] sm:$0xf]
        %v404 = vld [vmem:[%s324 + $0x90] sm:$0xf]
        %v405 = vld [vmem:[%s324 + $0x94] sm:$0xf]
        %v406 = vld [vmem:[%s324 + $0x98] sm:$0xf]
        %v407 = vld [vmem:[%s324 + $0x9c] sm:$0xf]
        %v408 = vld [vmem:[%s324 + $0xa0] sm:$0xf]
        %v409 = vld [vmem:[%s324 + $0xa4] sm:$0xf]
        %v410 = vld [vmem:[%s324 + $0xa8] sm:$0xf]
        %v411 = vld [vmem:[%s324 + $0xac] sm:$0xf]
        %v412 = vld [vmem:[%s324 + $0xb0] sm:$0xf]
        %v413 = vld [vmem:[%s324 + $0xb4] sm:$0xf]
        %v414 = vld [vmem:[%s324 + $0xb8] sm:$0xf]
        %v415 = vld [vmem:[%s324 + $0xbc] sm:$0xf]
        %v416 = vld [vmem:[%s324 + $0xc0] sm:$0xf]
        %v417 = vld [vmem:[%s324 + $0xc4] sm:$0xf]
        %v418 = vld [vmem:[%s324 + $0xc8] sm:$0xf]
        %v419 = vld [vmem:[%s324 + $0xcc] sm:$0xf]
        %v420 = vld [vmem:[%s324 + $0xd0] sm:$0xf]
        %v421 = vld [vmem:[%s324 + $0xd4] sm:$0xf]
        %v422 = vld [vmem:[%s324 + $0xd8] sm:$0xf]
        %v423 = vld [vmem:[%s324 + $0xdc] sm:$0xf]
        %v424 = vld [vmem:[%s324 + $0xe0] sm:$0xf]
        %v425 = vld [vmem:[%s324 + $0xe4] sm:$0xf]
        %v426 = vld [vmem:[%s324 + $0xe8] sm:$0xf]
        %v427 = vld [vmem:[%s324 + $0xec] sm:$0xf]
        %v428 = vld [vmem:[%s324 + $0xf0] sm:$0xf]
        %v429 = vld [vmem:[%s324 + $0xf4] sm:$0xf]
        %v430 = vld [vmem:[%s324 + $0xf8] sm:$0xf]
        %v431 = vld [vmem:[%s324 + $0xfc] sm:$0xf]
        %v496 = vunpack.c.l.b16 %v368
        %v497 = vunpack.c.l.b16 %v369
        %v498 = vunpack.c.l.b16 %v370
        %v499 = vunpack.c.l.b16 %v371
        %v500 = vunpack.c.l.b16 %v372
        %v501 = vunpack.c.l.b16 %v373
        %v502 = vunpack.c.l.b16 %v374
        %v503 = vunpack.c.l.b16 %v375
        %v504 = vunpack.c.l.b16 %v376
        %v505 = vunpack.c.l.b16 %v377
        %v506 = vunpack.c.l.b16 %v378
        %v507 = vunpack.c.l.b16 %v379
        %v508 = vunpack.c.l.b16 %v380
        %v509 = vunpack.c.l.b16 %v381
        %v510 = vunpack.c.l.b16 %v382
        %v511 = vunpack.c.l.b16 %v383
        %v512 = vunpack.c.l.b16 %v384
        %v513 = vunpack.c.l.b16 %v385
        %v514 = vunpack.c.l.b16 %v386
        %v515 = vunpack.c.l.b16 %v387
        %v516 = vunpack.c.l.b16 %v388
        %v517 = vunpack.c.l.b16 %v389
        %v518 = vunpack.c.l.b16 %v390
        %v519 = vunpack.c.l.b16 %v391
        %v520 = vunpack.c.l.b16 %v392
        %v521 = vunpack.c.l.b16 %v393
        %v522 = vunpack.c.l.b16 %v394
        %v523 = vunpack.c.l.b16 %v395
        %v524 = vunpack.c.l.b16 %v396
        %v525 = vunpack.c.l.b16 %v397
        %v526 = vunpack.c.l.b16 %v398
        %v527 = vunpack.c.l.b16 %v399
        %v528 = vunpack.c.l.b16 %v400
        %v529 = vunpack.c.l.b16 %v401
        %v530 = vunpack.c.l.b16 %v402
        %v531 = vunpack.c.l.b16 %v403
        %v532 = vunpack.c.l.b16 %v404
        %v533 = vunpack.c.l.b16 %v405
        %v534 = vunpack.c.l.b16 %v406
        %v535 = vunpack.c.l.b16 %v407
        %v536 = vunpack.c.l.b16 %v408
        %v537 = vunpack.c.l.b16 %v409
        %v538 = vunpack.c.l.b16 %v410
        %v539 = vunpack.c.l.b16 %v411
        %v540 = vunpack.c.l.b16 %v412
        %v541 = vunpack.c.l.b16 %v413
        %v542 = vunpack.c.l.b16 %v414
        %v543 = vunpack.c.l.b16 %v415
        %v544 = vunpack.c.l.b16 %v416
        %v545 = vunpack.c.l.b16 %v417
        %v546 = vunpack.c.l.b16 %v418
        %v547 = vunpack.c.l.b16 %v419
        %v548 = vunpack.c.l.b16 %v420
        %v549 = vunpack.c.l.b16 %v421
        %v550 = vunpack.c.l.b16 %v422
        %v551 = vunpack.c.l.b16 %v423
        %v552 = vunpack.c.l.b16 %v424
        %v553 = vunpack.c.l.b16 %v425
        %v554 = vunpack.c.l.b16 %v426
        %v555 = vunpack.c.l.b16 %v427
        %v556 = vunpack.c.l.b16 %v428
        %v557 = vunpack.c.l.b16 %v429
        %v558 = vunpack.c.l.b16 %v430
        %v559 = vunpack.c.l.b16 %v431
        %v560 = vpack.c.b16 %v497, %v496
        %v561 = vpack.c.b16 %v499, %v498
        %v562 = vpack.c.b16 %v501, %v500
        %v563 = vpack.c.b16 %v503, %v502
        %v564 = vpack.c.b16 %v505, %v504
        %v565 = vpack.c.b16 %v507, %v506
        %v566 = vpack.c.b16 %v509, %v508
        %v567 = vpack.c.b16 %v511, %v510
        %v568 = vpack.c.b16 %v513, %v512
        %v569 = vpack.c.b16 %v515, %v514
        %v570 = vpack.c.b16 %v517, %v516
        %v571 = vpack.c.b16 %v519, %v518
        %v572 = vpack.c.b16 %v521, %v520
        %v573 = vpack.c.b16 %v523, %v522
        %v574 = vpack.c.b16 %v525, %v524
        %v575 = vpack.c.b16 %v527, %v526
        %v576 = vpack.c.b16 %v529, %v528
        %v577 = vpack.c.b16 %v531, %v530
        %v578 = vpack.c.b16 %v533, %v532
        %v579 = vpack.c.b16 %v535, %v534
        %v580 = vpack.c.b16 %v537, %v536
        %v581 = vpack.c.b16 %v539, %v538
        %v582 = vpack.c.b16 %v541, %v540
        %v583 = vpack.c.b16 %v543, %v542
        %v584 = vpack.c.b16 %v545, %v544
        %v585 = vpack.c.b16 %v547, %v546
        %v586 = vpack.c.b16 %v549, %v548
        %v587 = vpack.c.b16 %v551, %v550
        %v588 = vpack.c.b16 %v553, %v552
        %v589 = vpack.c.b16 %v555, %v554
        %v590 = vpack.c.b16 %v557, %v556
        %v591 = vpack.c.b16 %v559, %v558
        %624 = vmatpush.bf16.msra.mxu0 %v567
        %625 = vmatpush.bf16.msra.mxu0 %v566
        %626 = vmatpush.bf16.msra.mxu0 %v565
        %627 = vmatpush.bf16.msra.mxu0 %v564
        %628 = vmatpush.bf16.msra.mxu0 %v563
        %629 = vmatpush.bf16.msra.mxu0 %v562
        %630 = vmatpush.bf16.msra.mxu0 %v561
        %631 = vmatpush.bf16.msra.mxu0 %v560
        %632 = vmatmul.bf16.gmra.mxu0 %v364
        %v633 = vpop.f32.mrf.mxu0
        %v634 = vadd.f32 0.0, %v633
        %v635 = vpop.f32.mrf.mxu0
        %v636 = vadd.f32 0.0, %v635
        %637 = vdwg.mxu0
        %638 = vmatpush.bf16.msra.mxu0 %v575
        %639 = vmatpush.bf16.msra.mxu0 %v574
        %640 = vmatpush.bf16.msra.mxu0 %v573
        %641 = vmatpush.bf16.msra.mxu0 %v572
        %642 = vmatpush.bf16.msra.mxu0 %v571
        %643 = vmatpush.bf16.msra.mxu0 %v570
        %644 = vmatpush.bf16.msra.mxu0 %v569
        %645 = vmatpush.bf16.msra.mxu0 %v568
        %646 = vmatmul.bf16.gmra.mxu0 %v365
        %v647 = vpop.f32.mrf.mxu0
        %v648 = vadd.f32 %v634, %v647
        %v649 = vpop.f32.mrf.mxu0
        %v650 = vadd.f32 %v636, %v649
        %651 = vdwg.mxu0
        %652 = vmatpush.bf16.msra.mxu0 %v583
        %653 = vmatpush.bf16.msra.mxu0 %v582
        %654 = vmatpush.bf16.msra.mxu0 %v581
        %655 = vmatpush.bf16.msra.mxu0 %v580
        %656 = vmatpush.bf16.msra.mxu0 %v579
        %657 = vmatpush.bf16.msra.mxu0 %v578
        %658 = vmatpush.bf16.msra.mxu0 %v577
        %659 = vmatpush.bf16.msra.mxu0 %v576
        %660 = vmatmul.bf16.gmra.mxu0 %v366
        %v661 = vpop.f32.mrf.mxu0
        %v662 = vadd.f32 %v648, %v661
        %v663 = vpop.f32.mrf.mxu0
        %v664 = vadd.f32 %v650, %v663
        %665 = vdwg.mxu0
        %666 = vmatpush.bf16.msra.mxu0 %v591
        %667 = vmatpush.bf16.msra.mxu0 %v590
        %668 = vmatpush.bf16.msra.mxu0 %v589
        %669 = vmatpush.bf16.msra.mxu0 %v588
        %670 = vmatpush.bf16.msra.mxu0 %v587
        %671 = vmatpush.bf16.msra.mxu0 %v586
        %672 = vmatpush.bf16.msra.mxu0 %v585
        %673 = vmatpush.bf16.msra.mxu0 %v584
        %674 = vmatmul.bf16.gmra.mxu0 %v367
        %v675 = vpop.f32.mrf.mxu0
        %v676 = vadd.f32 %v662, %v675
        %v677 = vpop.f32.mrf.mxu0
        %v678 = vadd.f32 %v664, %v677
        %679 = vdwg.mxu0
        %v680 = vadd.f32 %v362, %v676
        %v681 = vadd.f32 %v363, %v678
        %vm682 = vcmask 261120
        %683 = vst.msk [vmem:[#allocation2] sm:$0xff] %vm682, %v680
        %684 = vst.msk [vmem:[#allocation2 + $0x8] sm:$0xff] %vm682, %v681
        %p685 = scmp.eq.s32.totalorder %s22, 3
        // Predicated region
        $region64: #{transformer_forward.49} parent=54 // pred_check
          %p686 = pneg %p685
        $region65: #{transformer_forward.49} parent=54 // pred_check_branch
          %688 = sbr.rel (%p686) target = $region67
        $region66: #{transformer_forward.49} parent=54 // pred_region
          %v689 = vld [vmem:[#allocation2] sm:$0xff]
          %v690 = vld [vmem:[#allocation2 + $0x8] sm:$0xff]
          %v691 = vld [vmem:[%s328] sm:$0x1]
          %v693 = vperm.slane %v691, 0
          %v695 = vadd.f32 %v689, %v693
          %v696 = vadd.f32 %v690, %v693
          %v697 = vld [vmem:[%s336] sm:$0xff]
          %v698 = vld [vmem:[%s336 + $0x8] sm:$0xff]
          %v699 = vadd.f32 %v695, %v697
          %v700 = vadd.f32 %v696, %v698
          %701 = vst.msk [vmem:[%s345] sm:$0xff] %vm682, %v699
          %702 = vst.msk [vmem:[%s345 + $0x8] sm:$0xff] %vm682, %v700
        $region67: #{transformer_forward.49} parent=54 // pred_fallthru
          _
        %s703 = smul.u32 2, %s20
        %p704 = scmp.lt.s32.totalorder %s703, 1
        %s705 = scalar_select %p704, %s703, 1
        %p706 = scmp.lt.s32.totalorder %s21, 0
        %s707 = scalar_select %p706, %s21, 0
        %s708 = sadd.s32 %s707, %s705
        %s709 = smul.addr %s708, 8
        %s710 = scalar_lea.vmem %s4, %s709
        // Predicated region
        $region68: #{transformer_forward.49} parent=54 // pred_check
          %p711 = pneg %p164
        $region69: #{transformer_forward.49} parent=54 // pred_check_branch
          %713 = sbr.rel (%p711) target = $region71
        $region70: #{transformer_forward.49} parent=54 // pred_region
          %s714 = smul.u32 2, %s20
        $region71: #{transformer_forward.49} parent=54 // pred_fallthru
          _
        // Predicated region
        $region72: #{transformer_forward.49} parent=54 // pred_check
          %p715 = pneg %p164
        $region73: #{transformer_forward.49} parent=54 // pred_check_branch
          %717 = sbr.rel (%p715) target = $region75
        $region74: #{transformer_forward.49} parent=54 // pred_region
          %s718 = smul.u32 2, %s20
          %p719 = scmp.lt.s32.totalorder %s718, 1
          %s720 = scalar_select %p719, %s718, 1
          %p721 = scmp.lt.s32.totalorder %s21, 0
          %s722 = scalar_select %p721, %s21, 0
          %s723 = sadd.s32 %s722, %s720
          %s724 = smul.addr %s723, 8
          %s725 = scalar_lea.vmem %s4, %s724
        $region75: #{transformer_forward.49} parent=54 // pred_fallthru
          _
      $region55: #{transformer_forward.49} parent=5 // pred_fallthru
        _
      %p726 = scmp.le.s32.totalorder 2, %s10
      // Predicated region
      $region76: #{transformer_forward.49} parent=5 // pred_check
        %p727 = pneg %p726
      $region77: #{transformer_forward.49} parent=5 // pred_check_branch
        %729 = sbr.rel (%p727) target = $region79
      $region78: #{transformer_forward.49} parent=5 // pred_region
        %s730 = ssub.s32 %s10, 2
      $region79: #{transformer_forward.49} parent=5 // pred_fallthru
        _
    $region6: #{transformer_forward.49} parent=1 // loop_footer
      %s14 = sadd.s32 1, %s10
    $region7: #{transformer_forward.49} parent=1 // loop_footer_branch
      %9 = sbr.rel target = $region3
    $region8: #{transformer_forward.49} parent=1 // loop_exit
      _

</llo_original>
